<compile_context>
chip_gen: v7x
topology: tpu7x:2x2x1
jax: 0.10.0
libtpu: 0.0.40
codegen_flags: <defaults>
</compile_context>

<pallas_src>
import functools

import jax
import jax.numpy as jnp
from jax import lax
from jax.experimental import pallas as pl
from jax.experimental.pallas import tpu as pltpu

EPS = 1e-5
LANE = 128


def _vmem_limit_bytes():
    cap = 128 * 1024 * 1024
    try:
        cap = int(getattr(pltpu.get_tpu_info(), "vmem_capacity_bytes", cap))
    except Exception:
        pass
    # half of physical, clamped: 64 MiB on v5e/v6e (128 MiB), 32 MiB on v7x (64 MiB).
    return int(min(max(cap // 2, 32 * 1024 * 1024), 96 * 1024 * 1024))


VMEM_LIMIT = _vmem_limit_bytes()


def _ceil_to(x, m):
    return ((x + m - 1) // m) * m


def _row_tile(m):
    # Largest divisor first: mem-bound kernels get much closer to the HBM
    # roofline with bigger row tiles (~63% @256 vs ~85% @512 vs ~86% @1024).
    for t in (2048, 1024, 512, 256, 128, 64, 32, 16, 8):
        if m % t == 0:
            return t
    return m  # full-extent fallback (legal, un-pipelined); M = N*H*W is 8-divisible in practice


def _pad_axis(a, axis, new_size):
    if a.shape[axis] == new_size:
        return a
    pads = [(0, 0)] * a.ndim
    pads[axis] = (0, new_size - a.shape[axis])
    return jnp.pad(a, pads)


# --------------------------- fused 3x3 conv kernel ---------------------------

def _conv3x3_kernel(*refs, H, W, input_bn):
    if input_bn:
        x_ref, w_ref, sc_ref, bi_ref, o_ref, st_ref, xcat = refs
    else:
        x_ref, w_ref, o_ref, st_ref, xcat = refs
    Cin = x_ref.shape[-1]
    K3 = 3 * Cin
    Ct = o_ref.shape[-1]

    # Prologue: optional fused BN1+ReLU on the (unpadded) conv2 input tile, f32
    # math, then cast to bf16 for the MXU.  Applying it before the padded-buffer
    # write keeps the zero halo exactly zero.
    if input_bn:
        z = jnp.maximum(x_ref[0].astype(jnp.float32) * sc_ref[...] + bi_ref[...], 0.0)
        z = z.astype(jnp.bfloat16)
    else:
        z = x_ref[0].astype(jnp.bfloat16)

    # Stage the padded image as one (H+2, W, 3*Cin) buffer holding the three
    # kw-shifted copies side-by-side in the channel (lane) dim.  Only the halo
    # is zeroed (cheap, and safe when grid steps are sharded across cores);
    # interior stores are lane-tile aligned (Cin is a multiple of 128).
    zero_row = jnp.zeros((1, W, K3), jnp.bfloat16)
    xcat[pl.ds(0, 1)] = zero_row
    xcat[pl.ds(H + 1, 1)] = zero_row
    zcol = jnp.zeros((H, 1, Cin), jnp.bfloat16)
    xcat[pl.ds(1, H), :, pl.ds(0, Cin)] = jnp.concatenate([zcol, z[:, :W - 1, :]], axis=1)
    xcat[pl.ds(1, H), :, pl.ds(Cin, Cin)] = z
    xcat[pl.ds(1, H), :, pl.ds(2 * Cin, Cin)] = jnp.concatenate([z[:, 1:, :], zcol], axis=1)

    # 3 MXU dots (one per kh, K = 3*Cin), accumulated in registers; each tap is
    # a contiguous leading-axis view of the staged buffer -> single output store.
    acc = jnp.dot(xcat[pl.ds(0, H)].reshape(H * W, K3), w_ref[0],
                  preferred_element_type=jnp.float32)
    acc = acc + jnp.dot(xcat[pl.ds(1, H)].reshape(H * W, K3), w_ref[1],
                        preferred_element_type=jnp.float32)
    acc = acc + jnp.dot(xcat[pl.ds(2, H)].reshape(H * W, K3), w_ref[2],
                        preferred_element_type=jnp.float32)

    o_ref[...] = acc.reshape(1, H, W, Ct).astype(o_ref.dtype)

    # Fused per-channel partial stats for BatchNorm (row 0 = sum, row 1 = sumsq),
    # computed from the f32 accumulator before the bf16 store.
    s = jnp.sum(acc, axis=0, keepdims=True)
    q = jnp.sum(acc * acc, axis=0, keepdims=True)
    rows = lax.broadcasted_iota(jnp.int32, (8, Ct), 0)
    st_ref[...] = jnp.where(rows == 0, s, jnp.where(rows == 1, q, 0.0)).reshape(1, 8, Ct)


def conv3x3_stats(x, w_k, in_scale=None, in_bias=None):
    """Stride-1 3x3 conv (pad=1) of NHWC `x` with pre-packed weights (3, 3*Cin, Cout)
    in bf16, optionally fusing per-channel scale/bias + ReLU on the input, and
    emitting per-channel sum / sum-of-squares of the output. Returns (y, sum, sumsq)."""
    N, H, W, Cin = x.shape
    Cout = w_k.shape[-1]
    ct = Cout if Cout <= LANE else LANE          # Cout blocks: 2nd parallel axis
    nj = Cout // ct
    input_bn = in_scale is not None
    kern = functools.partial(_conv3x3_kernel, H=H, W=W, input_bn=input_bn)

    in_specs = [pl.BlockSpec((1, H, W, Cin), lambda n, j: (n, 0, 0, 0)),
                pl.BlockSpec((3, 3 * Cin, ct), lambda n, j: (0, 0, j))]
    args = [x, w_k]
    if input_bn:
        in_specs += [pl.BlockSpec((1, Cin), lambda n, j: (0, 0)),
                     pl.BlockSpec((1, Cin), lambda n, j: (0, 0))]
        args += [in_scale, in_bias]

    y, st = pl.pallas_call(
        kern,
        out_shape=(jax.ShapeDtypeStruct((N, H, W, Cout), jnp.bfloat16),
                   jax.ShapeDtypeStruct((N, 8, Cout), jnp.float32)),
        grid_spec=pltpu.PrefetchScalarGridSpec(
            num_scalar_prefetch=0,
            grid=(N, nj),
            in_specs=in_specs,
            out_specs=[pl.BlockSpec((1, H, W, ct), lambda n, j: (n, 0, 0, j)),
                       pl.BlockSpec((1, 8, ct), lambda n, j: (n, 0, j))],
            scratch_shapes=[pltpu.VMEM((H + 2, W, 3 * Cin), jnp.bfloat16)]),
        compiler_params=pltpu.CompilerParams(
            dimension_semantics=("parallel", "parallel"),
            vmem_limit_bytes=VMEM_LIMIT),
        cost_estimate=pl.CostEstimate(
            flops=2 * N * H * W * 9 * Cin * Cout,
            transcendentals=0,
            bytes_accessed=(x.size * x.dtype.itemsize + w_k.size * 2
                            + N * H * W * Cout * 2 + N * 8 * Cout * 4)),
    )(*args)
    st = jnp.sum(st, axis=0)                      # combine per-image partials in JAX
    return y, st[0:1], st[1:2]


# --------------------- GEMM + fused stats (1x1 shortcut) ---------------------

def _gemm_stats_kernel(p_ref, w_ref, o_ref, st_ref):
    y = jnp.dot(p_ref[...], w_ref[...], preferred_element_type=jnp.float32)
    o_ref[...] = y.astype(o_ref.dtype)
    C = y.shape[1]
    s = jnp.sum(y, axis=0, keepdims=True)
    q = jnp.sum(y * y, axis=0, keepdims=True)
    rows = lax.broadcasted_iota(jnp.int32, (8, C), 0)
    st_ref[...] = jnp.where(rows == 0, s, jnp.where(rows == 1, q, 0.0)).reshape(1, 8, C)


def gemm_stats(p, w):
    """[M, K] @ [K, C] on the MXU, tiled over rows, fused with per-channel
    sum / sum-of-squares of the result (per-tile partials, combined in JAX).
    Output is bf16; stats are f32 from the f32 MXU accumulator."""
    M, K = p.shape
    C = w.shape[1]
    tm = _row_tile(M)
    nt = M // tm
    y, st = pl.pallas_call(
        _gemm_stats_kernel,
        out_shape=(jax.ShapeDtypeStruct((M, C), jnp.bfloat16),
                   jax.ShapeDtypeStruct((nt, 8, C), jnp.float32)),
        grid_spec=pltpu.PrefetchScalarGridSpec(
            num_scalar_prefetch=0,
            grid=(nt,),
            in_specs=[pl.BlockSpec((tm, K), lambda i: (i, 0)),
                      pl.BlockSpec((K, C), lambda i: (0, 0))],
            out_specs=[pl.BlockSpec((tm, C), lambda i: (i, 0)),
                       pl.BlockSpec((1, 8, C), lambda i: (i, 0, 0))]),
        compiler_params=pltpu.CompilerParams(
            dimension_semantics=("parallel",),
            vmem_limit_bytes=VMEM_LIMIT),
        cost_estimate=pl.CostEstimate(
            flops=2 * M * K * C, transcendentals=0,
            bytes_accessed=M * K * 2 + K * C * 2 + M * C * 2),
    )(p, w)
    st = jnp.sum(st, axis=0)
    return y, st[0:1], st[1:2]


# ------------------------------ fused epilogue -------------------------------

def _bn_add_relu_kernel(*refs, proj_bn):
    if proj_bn:
        y_ref, sy_ref, by_ref, r_ref, sr_ref, br_ref, o_ref = refs
        short = r_ref[...].astype(jnp.float32) * sr_ref[...] + br_ref[...]
    else:
        y_ref, sy_ref, by_ref, r_ref, o_ref = refs
        short = r_ref[...].astype(jnp.float32)    # identity shortcut: no BN math
    o_ref[...] = jnp.maximum(
        y_ref[...].astype(jnp.float32) * sy_ref[...] + by_ref[...] + short, 0.0)


def bn_add_relu(y, sy, by, r, sr=None, br=None):
    M, C = y.shape
    tm = _row_tile(M)
    proj = sr is not None
    kern = functools.partial(_bn_add_relu_kernel, proj_bn=proj)
    mat = lambda i: (i, 0)
    vec = lambda i: (0, 0)
    in_specs = [pl.BlockSpec((tm, C), mat), pl.BlockSpec((1, C), vec),
                pl.BlockSpec((1, C), vec), pl.BlockSpec((tm, C), mat)]
    args = [y, sy, by, r]
    if proj:
        in_specs += [pl.BlockSpec((1, C), vec), pl.BlockSpec((1, C), vec)]
        args += [sr, br]
    return pl.pallas_call(
        kern,
        out_shape=jax.ShapeDtypeStruct((M, C), jnp.float32),
        grid_spec=pltpu.PrefetchScalarGridSpec(
            num_scalar_prefetch=0,
            grid=(M // tm,),
            in_specs=in_specs,
            out_specs=pl.BlockSpec((tm, C), mat)),
        compiler_params=pltpu.CompilerParams(
            dimension_semantics=("parallel",),
            vmem_limit_bytes=VMEM_LIMIT),
    )(*args)


# ------------------------------- glue (JAX) ----------------------------------

def _fold_bn(s, q, count, gamma_p, beta_p):
    mean = s / count
    var = jnp.maximum(q / count - mean * mean, 0.0)   # clamp E[x^2]-E[x]^2 cancellation
    scale = gamma_p.reshape(1, -1) / jnp.sqrt(var + EPS)
    bias = beta_p.reshape(1, -1) - mean * scale
    return scale, bias


def _im2col_3x3(x, stride):
    # TODO(synk): stride>1 conv1 (first block of a ResNet stage) still uses a JAX
    # im2col feeding the Pallas GEMM+stats kernel; the fused kernel covers stride==1.
    N, H, W, C = x.shape
    xp = jnp.pad(x, ((0, 0), (1, 1), (1, 1), (0, 0)))
    Ho = (H - 1) // stride + 1
    Wo = (W - 1) // stride + 1
    cols = []
    for kh in range(3):
        for kw in range(3):
            cols.append(xp[:, kh:kh + (Ho - 1) * stride + 1:stride,
                              kw:kw + (Wo - 1) * stride + 1:stride, :])
    p = jnp.concatenate(cols, axis=-1)
    return p.reshape(N * Ho * Wo, 9 * C), Ho, Wo


def basic_block_forward(x_nchw, prm, stride):
    """Pallas implementation of BasicBlock.forward (training-mode BatchNorm)."""
    planes = prm["g1"].shape[0]
    cip = prm["w1_k"].shape[1] // 3
    cop = prm["w1_k"].shape[-1]

    x = jnp.transpose(x_nchw, (0, 2, 3, 1))                          # NCHW -> NHWC
    N, H, W, _ = x.shape
    xc = _pad_axis(x, 3, cip).astype(jnp.bfloat16)   # lane-dense channels; pad+cast fuse in XLA

    # ---- conv1 (+ fused bn1 statistics) ----
    if stride == 1:
        y1, s1s, s1q = conv3x3_stats(xc, prm["w1_k"])
        Ho, Wo = H, W
    else:
        p1, Ho, Wo = _im2col_3x3(xc, stride)
        y1_flat, s1s, s1q = gemm_stats(p1, prm["w1_k"].reshape(9 * cip, cop))
        y1 = y1_flat.reshape(N, Ho, Wo, cop)
    M = N * Ho * Wo
    sc1, bi1 = _fold_bn(s1s, s1q, M, prm["g1p"], prm["b1p"])

    # ---- conv2 with bn1+ReLU fused into its input (+ fused bn2 statistics) ----
    y2, s2s, s2q = conv3x3_stats(y1, prm["w2_k"], in_scale=sc1, in_bias=bi1)
    sc2, bi2 = _fold_bn(s2s, s2q, M, prm["g2p"], prm["b2p"])

    # ---- shortcut + fused bn2 apply + residual add + ReLU ----
    if prm["ws_k"] is not None:
        xs = xc[:, ::stride, ::stride, :].reshape(M, cip)
        r, rs, rq = gemm_stats(xs, prm["ws_k"])
        scs, bis = _fold_bn(rs, rq, M, prm["gsp"], prm["bsp"])
        out = bn_add_relu(y2.reshape(M, cop), sc2, bi2, r, scs, bis)
    else:
        out = bn_add_relu(y2.reshape(M, cop), sc2, bi2, xc.reshape(M, cip))

    # TODO(synk): when planes % 128 == 0 the channel slice + NHWC->NCHW transpose
    # could be folded into bn_add_relu's out_specs; here planes is small.
    out = out.reshape(N, Ho, Wo, cop)[:, :, :, :planes]
    return jnp.transpose(out, (0, 3, 1, 2))                          # NHWC -> NCHW


def make_params(key, cin, planes, stride):
    """Random params. Conv weights are bf16-representable so the f32 reference and
    the bf16 Pallas kernels see numerically identical operands."""
    ks = jax.random.split(key, 9)
    cip, cop = _ceil_to(cin, LANE), _ceil_to(planes, LANE)

    def bf16_round(a):
        return a.astype(jnp.bfloat16).astype(jnp.float32)

    def pack3x3(w, ci_p, co_p):
        # (3,3,Cin,Cout) -> (3, 3*Cin, Cout): row index = kw*Cin + ci, matching the
        # kw-concatenated channel layout staged inside the conv kernel.
        wp = _pad_axis(_pad_axis(w, 2, ci_p), 3, co_p)
        return wp.reshape(3, 3 * ci_p, co_p).astype(jnp.bfloat16)

    w1 = bf16_round(jax.random.normal(ks[0], (3, 3, cin, planes), jnp.float32) * 0.2)
    w2 = bf16_round(jax.random.normal(ks[1], (3, 3, planes, planes), jnp.float32) * 0.2)
    g1 = 1.0 + 0.1 * jax.random.normal(ks[2], (planes,), jnp.float32)
    b1 = 0.1 * jax.random.normal(ks[3], (planes,), jnp.float32)
    g2 = 1.0 + 0.1 * jax.random.normal(ks[4], (planes,), jnp.float32)
    b2 = 0.1 * jax.random.normal(ks[5], (planes,), jnp.float32)

    prm = dict(
        w1_hwio=w1, w2_hwio=w2,
        w1_k=pack3x3(w1, cip, cop), w2_k=pack3x3(w2, cop, cop),
        g1=g1, b1=b1, g2=g2, b2=b2,
        g1p=_pad_axis(g1, 0, cop), b1p=_pad_axis(b1, 0, cop),
        g2p=_pad_axis(g2, 0, cop), b2p=_pad_axis(b2, 0, cop),
    )
    if stride != 1 or cin != planes:
        ws = bf16_round(jax.random.normal(ks[6], (1, 1, cin, planes), jnp.float32) * 0.2)
        gs = 1.0 + 0.1 * jax.random.normal(ks[7], (planes,), jnp.float32)
        bs = 0.1 * jax.random.normal(ks[8], (planes,), jnp.float32)
        prm.update(ws_hwio=ws, gs=gs, bs=bs,
                   ws_k=_pad_axis(_pad_axis(ws, 2, cip), 3, cop)
                        .reshape(cip, cop).astype(jnp.bfloat16),
                   gsp=_pad_axis(gs, 0, cop), bsp=_pad_axis(bs, 0, cop))
    else:
        prm.update(ws_hwio=None, gs=None, bs=None, ws_k=None, gsp=None, bsp=None)
    return prm


# -------------------------- pure-JAX reference check -------------------------

def ref_basic_block(x, prm, stride):
    """Pure-JAX reference (f32 conv/BN), mirroring the kernel's bf16 storage of the
    intermediates (y1, z1, y2, shortcut) so the comparison isolates implementation
    differences from the precision policy."""
    def conv(inp, w_hwio, s, pad):
        return lax.conv_general_dilated(
            inp, w_hwio, (s, s), ((pad, pad), (pad, pad)),
            dimension_numbers=("NCHW", "HWIO", "NCHW"))

    def bn(y, g, b):
        m = jnp.mean(y, axis=(0, 2, 3), keepdims=True)
        v = jnp.var(y, axis=(0, 2, 3), keepdims=True)   # biased var (training-mode BN)
        return (y - m) / jnp.sqrt(v + EPS) * g.reshape(1, -1, 1, 1) + b.reshape(1, -1, 1, 1)

    def bf(a):
        return a.astype(jnp.bfloat16).astype(jnp.float32)

    y1 = bf(conv(x, prm["w1_hwio"], stride, 1))          # kernel stores y1 as bf16
    z1 = bf(jax.nn.relu(bn(y1, prm["g1"], prm["b1"])))   # conv2 consumes bf16 input
    y2 = bf(conv(z1, prm["w2_hwio"], 1, 1))              # kernel stores y2 as bf16
    out = bn(y2, prm["g2"], prm["b2"])
    if prm["ws_hwio"] is not None:
        r = bf(conv(x, prm["ws_hwio"], stride, 0))       # kernel stores r as bf16
        sc = bn(r, prm["gs"], prm["bs"])
    else:
        sc = x
    return jax.nn.relu(out + sc)


if __name__ == "__main__":
    key = jax.random.PRNGKey(0)
    kx1, kx2, kp1, kp2 = jax.random.split(key, 4)

    def bf16_round(a):
        return a.astype(jnp.bfloat16).astype(jnp.float32)

    fwd = jax.jit(basic_block_forward, static_argnums=2)

    # Config A: projection shortcut (in_planes != planes), stride 1.
    x_a = bf16_round(jax.random.normal(kx1, (2, 4, 16, 16), jnp.float32))
    prm_a = make_params(kp1, 4, 8, 1)
    out_a = jax.block_until_ready(fwd(x_a, prm_a, 1))
    ref_a = ref_basic_block(x_a, prm_a, 1)

    # Config B: identity shortcut (in_planes == planes, stride 1).
    x_b = bf16_round(jax.random.normal(kx2, (2, 8, 16, 16), jnp.float32))
    prm_b = make_params(kp2, 8, 8, 1)
    out_b = jax.block_until_ready(fwd(x_b, prm_b, 1))
    ref_b = ref_basic_block(x_b, prm_b, 1)

    assert out_a.shape == (2, 8, 16, 16) and out_b.shape == (2, 8, 16, 16)
    assert jnp.allclose(out_a, ref_a, rtol=2e-2, atol=2e-2), \
        float(jnp.max(jnp.abs(out_a - ref_a)))
    assert jnp.allclose(out_b, ref_b, rtol=2e-2, atol=2e-2), \
        float(jnp.max(jnp.abs(out_b - ref_b)))
    print("KERNEL_OK")
</pallas_src>

<mosaic_0001>
module attributes {stable_mosaic.version = 11 : i64} {
  func.func @_gemm_stats_kernel(%arg0: i32, %arg1: memref<512x128xbf16, #tpu.memory_space<vmem>>, %arg2: memref<128x128xbf16, #tpu.memory_space<vmem>>, %arg3: memref<512x128xbf16, #tpu.memory_space<vmem>>, %arg4: memref<1x8x128xf32, #tpu.memory_space<vmem>>) attributes {dimension_semantics = [#tpu.dimension_semantics<parallel>], iteration_bounds = array<i64: 1>, scalar_prefetch = 0 : i64, scratch_operands = 0 : i64, tpu.core_type = #tpu.core_type<tc>, window_params = [{transform_indices = @transform_0, window_bounds = array<i64: 512, 128>}, {pipeline_mode = #tpu.pipeline_mode<synchronous>, transform_indices = @transform_1, window_bounds = array<i64: 128, 128>}, {transform_indices = @transform_2, window_bounds = array<i64: 512, 128>}, {transform_indices = @transform_3, window_bounds = array<i64: 1, 8, 128>}]} {
    %c0 = arith.constant 0 : index
    %c0_0 = arith.constant 0 : index
    %0 = vector.load %arg1[%c0, %c0_0] : memref<512x128xbf16, #tpu.memory_space<vmem>>, vector<512x128xbf16>
    %c0_1 = arith.constant 0 : index
    %c0_2 = arith.constant 0 : index
    %1 = vector.load %arg2[%c0_1, %c0_2] : memref<128x128xbf16, #tpu.memory_space<vmem>>, vector<128x128xbf16>
    %cst = arith.constant dense<0.000000e+00> : vector<512x128xf32>
    %2 = tpu.matmul %0, %1, %cst {dimension_numbers = #tpu.dot_dimension_numbers<[1], [0], [0], [1], [0, 0, 1, 1], [], []>} : vector<512x128xbf16>, vector<128x128xbf16>, vector<512x128xf32> -> vector<512x128xf32>
    %3 = arith.truncf %2 : vector<512x128xf32> to vector<512x128xbf16>
    %c0_3 = arith.constant 0 : index
    %c0_4 = arith.constant 0 : index
    %4 = vector.load %arg3[%c0_3, %c0_4] : memref<512x128xbf16, #tpu.memory_space<vmem>>, vector<512x128xbf16>
    tpu.vector_store %arg3[%c0_3, %c0_4], %3 {strides = array<i32>} : memref<512x128xbf16, #tpu.memory_space<vmem>>, vector<512x128xbf16>,
    %cst_5 = arith.constant dense<0.000000e+00> : vector<128xf32>
    %5 = vector.multi_reduction <add>, %2, %cst_5 [0] : vector<512x128xf32> to vector<128xf32>
    %6 = vector.shape_cast %5 : vector<128xf32> to vector<1x128xf32>
    %7 = arith.mulf %2, %2 : vector<512x128xf32>
    %cst_6 = arith.constant dense<0.000000e+00> : vector<128xf32>
    %8 = vector.multi_reduction <add>, %7, %cst_6 [0] : vector<512x128xf32> to vector<128xf32>
    %9 = vector.shape_cast %8 : vector<128xf32> to vector<1x128xf32>
    %10 = tpu.iota {dimensions = array<i32: 0>} : vector<8x128xi32>
    %c0_i32 = arith.constant 0 : i32
    %11 = vector.broadcast %c0_i32 : i32 to vector<8x128xi32>
    %12 = arith.cmpi eq, %10, %11 : vector<8x128xi32>
    %c1_i32 = arith.constant 1 : i32
    %13 = vector.broadcast %c1_i32 : i32 to vector<8x128xi32>
    %14 = arith.cmpi eq, %10, %13 : vector<8x128xi32>
    %cst_7 = arith.constant 0.000000e+00 : f32
    %15 = vector.shape_cast %9 : vector<1x128xf32> to vector<1x128xf32>
    %16 = vector.broadcast %15 : vector<1x128xf32> to vector<8x128xf32>
    %17 = vector.broadcast %cst_7 : f32 to vector<8x128xf32>
    %18 = arith.select %14, %16, %17 : vector<8x128xi1>, vector<8x128xf32>
    %19 = vector.shape_cast %6 : vector<1x128xf32> to vector<1x128xf32>
    %20 = vector.broadcast %19 : vector<1x128xf32> to vector<8x128xf32>
    %21 = arith.select %12, %20, %18 : vector<8x128xi1>, vector<8x128xf32>
    %22 = vector.shape_cast %21 : vector<8x128xf32> to vector<1x8x128xf32>
    %c0_8 = arith.constant 0 : index
    %c0_9 = arith.constant 0 : index
    %c0_10 = arith.constant 0 : index
    %23 = vector.load %arg4[%c0_8, %c0_9, %c0_10] : memref<1x8x128xf32, #tpu.memory_space<vmem>>, vector<1x8x128xf32>
    tpu.vector_store %arg4[%c0_8, %c0_9, %c0_10], %22 {strides = array<i32>} : memref<1x8x128xf32, #tpu.memory_space<vmem>>, vector<1x8x128xf32>,
    return
  }
  func.func @transform_0(%arg0: i32) -> (i32, i32) {
    %c0_i32 = arith.constant 0 : i32
    %c0_i32_0 = arith.constant 0 : i32
    return %arg0, %c0_i32 : i32, i32
  }
  func.func @transform_1(%arg0: i32) -> (i32, i32) {
    %c0_i32 = arith.constant 0 : i32
    %c0_i32_0 = arith.constant 0 : i32
    %c0_i32_1 = arith.constant 0 : i32
    return %c0_i32, %c0_i32_0 : i32, i32
  }
  func.func @transform_2(%arg0: i32) -> (i32, i32) {
    %c0_i32 = arith.constant 0 : i32
    %c0_i32_0 = arith.constant 0 : i32
    return %arg0, %c0_i32 : i32, i32
  }
  func.func @transform_3(%arg0: i32) -> (i32, i32, i32) {
    %c0_i32 = arith.constant 0 : i32
    %c0_i32_0 = arith.constant 0 : i32
    %c0_i32_1 = arith.constant 0 : i32
    return %arg0, %c0_i32, %c0_i32_0 : i32, i32, i32
  }
}

module attributes {stable_mosaic.version = 11 : i64} {
  func.func @_conv3x3_kernel(%arg0: i32, %arg1: i32, %arg2: memref<1x16x16x128xbf16, #tpu.memory_space<vmem>>, %arg3: memref<3x384x128xbf16, #tpu.memory_space<vmem>>, %arg4: memref<1x16x16x128xbf16, #tpu.memory_space<vmem>>, %arg5: memref<1x8x128xf32, #tpu.memory_space<vmem>>, %arg6: memref<18x16x384xbf16, #tpu.memory_space<vmem>>) attributes {dimension_semantics = [#tpu.dimension_semantics<parallel>, #tpu.dimension_semantics<parallel>], iteration_bounds = array<i64: 2, 1>, scalar_prefetch = 0 : i64, scratch_operands = 1 : i64, tpu.core_type = #tpu.core_type<tc>, window_params = [{transform_indices = @transform_0, window_bounds = array<i64: 1, 16, 16, 128>}, {transform_indices = @transform_1, window_bounds = array<i64: 3, 384, 128>}, {transform_indices = @transform_2, window_bounds = array<i64: 1, 16, 16, 128>}, {transform_indices = @transform_3, window_bounds = array<i64: 1, 8, 128>}]} {
    %c0 = arith.constant 0 : index
    %c0_0 = arith.constant 0 : index
    %c0_1 = arith.constant 0 : index
    %c0_2 = arith.constant 0 : index
    %0 = vector.load %arg2[%c0, %c0_0, %c0_1, %c0_2] : memref<1x16x16x128xbf16, #tpu.memory_space<vmem>>, vector<1x16x16x128xbf16>
    %1 = vector.shape_cast %0 : vector<1x16x16x128xbf16> to vector<16x16x128xbf16>
    %cst = arith.constant 0.000000e+00 : bf16
    %2 = vector.broadcast %cst : bf16 to vector<1x16x384xbf16>
    %c0_3 = arith.constant 0 : index
    %c0_4 = arith.constant 0 : index
    %c0_5 = arith.constant 0 : index
    %3 = vector.load %arg6[%c0_3, %c0_4, %c0_5] : memref<18x16x384xbf16, #tpu.memory_space<vmem>>, vector<1x16x384xbf16>
    tpu.vector_store %arg6[%c0_3, %c0_4, %c0_5], %2 {strides = array<i32>} : memref<18x16x384xbf16, #tpu.memory_space<vmem>>, vector<1x16x384xbf16>,
    %c17 = arith.constant 17 : index
    %c0_6 = arith.constant 0 : index
    %c0_7 = arith.constant 0 : index
    %4 = vector.load %arg6[%c17, %c0_6, %c0_7] : memref<18x16x384xbf16, #tpu.memory_space<vmem>>, vector<1x16x384xbf16>
    tpu.vector_store %arg6[%c17, %c0_6, %c0_7], %2 {strides = array<i32>} : memref<18x16x384xbf16, #tpu.memory_space<vmem>>, vector<1x16x384xbf16>,
    %cst_8 = arith.constant 0.000000e+00 : bf16
    %5 = vector.broadcast %cst_8 : bf16 to vector<16x1x128xbf16>
    %6 = vector.extract_strided_slice %1 {offsets = [0, 0, 0], sizes = [16, 15, 128], strides = [1, 1, 1]} : vector<16x16x128xbf16> to vector<16x15x128xbf16>
    %7 = tpu.concatenate %5, %6 in 1 : vector<16x1x128xbf16>, vector<16x15x128xbf16> -> vector<16x16x128xbf16>
    %c1 = arith.constant 1 : index
    %c0_9 = arith.constant 0 : index
    %c0_10 = arith.constant 0 : index
    %8 = vector.load %arg6[%c1, %c0_9, %c0_10] : memref<18x16x384xbf16, #tpu.memory_space<vmem>>, vector<16x16x128xbf16>
    tpu.vector_store %arg6[%c1, %c0_9, %c0_10], %7 {strides = array<i32>} : memref<18x16x384xbf16, #tpu.memory_space<vmem>>, vector<16x16x128xbf16>,
    %c1_11 = arith.constant 1 : index
    %c0_12 = arith.constant 0 : index
    %c128 = arith.constant 128 : index
    %9 = vector.load %arg6[%c1_11, %c0_12, %c128] : memref<18x16x384xbf16, #tpu.memory_space<vmem>>, vector<16x16x128xbf16>
    tpu.vector_store %arg6[%c1_11, %c0_12, %c128], %1 {strides = array<i32>} : memref<18x16x384xbf16, #tpu.memory_space<vmem>>, vector<16x16x128xbf16>,
    %10 = vector.extract_strided_slice %1 {offsets = [0, 1, 0], sizes = [16, 15, 128], strides = [1, 1, 1]} : vector<16x16x128xbf16> to vector<16x15x128xbf16>
    %11 = tpu.concatenate %10, %5 in 1 : vector<16x15x128xbf16>, vector<16x1x128xbf16> -> vector<16x16x128xbf16>
    %c1_13 = arith.constant 1 : index
    %c0_14 = arith.constant 0 : index
    %c256 = arith.constant 256 : index
    %12 = vector.load %arg6[%c1_13, %c0_14, %c256] : memref<18x16x384xbf16, #tpu.memory_space<vmem>>, vector<16x16x128xbf16>
    tpu.vector_store %arg6[%c1_13, %c0_14, %c256], %11 {strides = array<i32>} : memref<18x16x384xbf16, #tpu.memory_space<vmem>>, vector<16x16x128xbf16>,
    %c0_15 = arith.constant 0 : index
    %c0_16 = arith.constant 0 : index
    %c0_17 = arith.constant 0 : index
    %13 = vector.load %arg6[%c0_15, %c0_16, %c0_17] : memref<18x16x384xbf16, #tpu.memory_space<vmem>>, vector<16x16x384xbf16>
    %14 = vector.shape_cast %13 : vector<16x16x384xbf16> to vector<256x384xbf16>
    %c0_18 = arith.constant 0 : index
    %c0_19 = arith.constant 0 : index
    %c0_20 = arith.constant 0 : index
    %15 = vector.load %arg3[%c0_18, %c0_19, %c0_20] : memref<3x384x128xbf16, #tpu.memory_space<vmem>>, vector<1x384x128xbf16>
    %16 = vector.shape_cast %15 : vector<1x384x128xbf16> to vector<384x128xbf16>
    %cst_21 = arith.constant dense<0.000000e+00> : vector<256x128xf32>
    %17 = tpu.matmul %14, %16, %cst_21 {dimension_numbers = #tpu.dot_dimension_numbers<[1], [0], [0], [1], [0, 0, 1, 1], [], []>} : vector<256x384xbf16>, vector<384x128xbf16>, vector<256x128xf32> -> vector<256x128xf32>
    %c1_22 = arith.constant 1 : index
    %c0_23 = arith.constant 0 : index
    %c0_24 = arith.constant 0 : index
    %18 = vector.load %arg6[%c1_22, %c0_23, %c0_24] : memref<18x16x384xbf16, #tpu.memory_space<vmem>>, vector<16x16x384xbf16>
    %19 = vector.shape_cast %18 : vector<16x16x384xbf16> to vector<256x384xbf16>
    %c1_25 = arith.constant 1 : index
    %c0_26 = arith.constant 0 : index
    %c0_27 = arith.constant 0 : index
    %20 = vector.load %arg3[%c1_25, %c0_26, %c0_27] : memref<3x384x128xbf16, #tpu.memory_space<vmem>>, vector<1x384x128xbf16>
    %21 = vector.shape_cast %20 : vector<1x384x128xbf16> to vector<384x128xbf16>
    %cst_28 = arith.constant dense<0.000000e+00> : vector<256x128xf32>
    %22 = tpu.matmul %19, %21, %cst_28 {dimension_numbers = #tpu.dot_dimension_numbers<[1], [0], [0], [1], [0, 0, 1, 1], [], []>} : vector<256x384xbf16>, vector<384x128xbf16>, vector<256x128xf32> -> vector<256x128xf32>
    %23 = arith.addf %17, %22 : vector<256x128xf32>
    %c2 = arith.constant 2 : index
    %c0_29 = arith.constant 0 : index
    %c0_30 = arith.constant 0 : index
    %24 = vector.load %arg6[%c2, %c0_29, %c0_30] : memref<18x16x384xbf16, #tpu.memory_space<vmem>>, vector<16x16x384xbf16>
    %25 = vector.shape_cast %24 : vector<16x16x384xbf16> to vector<256x384xbf16>
    %c2_31 = arith.constant 2 : index
    %c0_32 = arith.constant 0 : index
    %c0_33 = arith.constant 0 : index
    %26 = vector.load %arg3[%c2_31, %c0_32, %c0_33] : memref<3x384x128xbf16, #tpu.memory_space<vmem>>, vector<1x384x128xbf16>
    %27 = vector.shape_cast %26 : vector<1x384x128xbf16> to vector<384x128xbf16>
    %cst_34 = arith.constant dense<0.000000e+00> : vector<256x128xf32>
    %28 = tpu.matmul %25, %27, %cst_34 {dimension_numbers = #tpu.dot_dimension_numbers<[1], [0], [0], [1], [0, 0, 1, 1], [], []>} : vector<256x384xbf16>, vector<384x128xbf16>, vector<256x128xf32> -> vector<256x128xf32>
    %29 = arith.addf %23, %28 : vector<256x128xf32>
    %30 = vector.shape_cast %29 : vector<256x128xf32> to vector<1x16x16x128xf32>
    %31 = arith.truncf %30 : vector<1x16x16x128xf32> to vector<1x16x16x128xbf16>
    %c0_35 = arith.constant 0 : index
    %c0_36 = arith.constant 0 : index
    %c0_37 = arith.constant 0 : index
    %c0_38 = arith.constant 0 : index
    %32 = vector.load %arg4[%c0_35, %c0_36, %c0_37, %c0_38] : memref<1x16x16x128xbf16, #tpu.memory_space<vmem>>, vector<1x16x16x128xbf16>
    tpu.vector_store %arg4[%c0_35, %c0_36, %c0_37, %c0_38], %31 {strides = array<i32>} : memref<1x16x16x128xbf16, #tpu.memory_space<vmem>>, vector<1x16x16x128xbf16>,
    %cst_39 = arith.constant dense<0.000000e+00> : vector<128xf32>
    %33 = vector.multi_reduction <add>, %29, %cst_39 [0] : vector<256x128xf32> to vector<128xf32>
    %34 = vector.shape_cast %33 : vector<128xf32> to vector<1x128xf32>
    %35 = arith.mulf %29, %29 : vector<256x128xf32>
    %cst_40 = arith.constant dense<0.000000e+00> : vector<128xf32>
    %36 = vector.multi_reduction <add>, %35, %cst_40 [0] : vector<256x128xf32> to vector<128xf32>
    %37 = vector.shape_cast %36 : vector<128xf32> to vector<1x128xf32>
    %38 = tpu.iota {dimensions = array<i32: 0>} : vector<8x128xi32>
    %c0_i32 = arith.constant 0 : i32
    %39 = vector.broadcast %c0_i32 : i32 to vector<8x128xi32>
    %40 = arith.cmpi eq, %38, %39 : vector<8x128xi32>
    %c1_i32 = arith.constant 1 : i32
    %41 = vector.broadcast %c1_i32 : i32 to vector<8x128xi32>
    %42 = arith.cmpi eq, %38, %41 : vector<8x128xi32>
    %cst_41 = arith.constant 0.000000e+00 : f32
    %43 = vector.shape_cast %37 : vector<1x128xf32> to vector<1x128xf32>
    %44 = vector.broadcast %43 : vector<1x128xf32> to vector<8x128xf32>
    %45 = vector.broadcast %cst_41 : f32 to vector<8x128xf32>
    %46 = arith.select %42, %44, %45 : vector<8x128xi1>, vector<8x128xf32>
    %47 = vector.shape_cast %34 : vector<1x128xf32> to vector<1x128xf32>
    %48 = vector.broadcast %47 : vector<1x128xf32> to vector<8x128xf32>
    %49 = arith.select %40, %48, %46 : vector<8x128xi1>, vector<8x128xf32>
    %50 = vector.shape_cast %49 : vector<8x128xf32> to vector<1x8x128xf32>
    %c0_42 = arith.constant 0 : index
    %c0_43 = arith.constant 0 : index
    %c0_44 = arith.constant 0 : index
    %51 = vector.load %arg5[%c0_42, %c0_43, %c0_44] : memref<1x8x128xf32, #tpu.memory_space<vmem>>, vector<1x8x128xf32>
    tpu.vector_store %arg5[%c0_42, %c0_43, %c0_44], %50 {strides = array<i32>} : memref<1x8x128xf32, #tpu.memory_space<vmem>>, vector<1x8x128xf32>,
    return
  }
  func.func @transform_0(%arg0: i32, %arg1: i32) -> (i32, i32, i32, i32) {
    %c0_i32 = arith.constant 0 : i32
    %c0_i32_0 = arith.constant 0 : i32
    %c0_i32_1 = arith.constant 0 : i32
    %c0_i32_2 = arith.constant 0 : i32
    return %arg0, %c0_i32, %c0_i32_0, %c0_i32_1 : i32, i32, i32, i32
  }
  func.func @transform_1(%arg0: i32, %arg1: i32) -> (i32, i32, i32) {
    %c0_i32 = arith.constant 0 : i32
    %c0_i32_0 = arith.constant 0 : i32
    %c0_i32_1 = arith.constant 0 : i32
    return %c0_i32, %c0_i32_0, %arg1 : i32, i32, i32
  }
  func.func @transform_2(%arg0: i32, %arg1: i32) -> (i32, i32, i32, i32) {
    %c0_i32 = arith.constant 0 : i32
    %c0_i32_0 = arith.constant 0 : i32
    %c0_i32_1 = arith.constant 0 : i32
    return %arg0, %c0_i32, %c0_i32_0, %arg1 : i32, i32, i32, i32
  }
  func.func @transform_3(%arg0: i32, %arg1: i32) -> (i32, i32, i32) {
    %c0_i32 = arith.constant 0 : i32
    %c0_i32_0 = arith.constant 0 : i32
    return %arg0, %c0_i32, %arg1 : i32, i32, i32
  }
}

module attributes {stable_mosaic.version = 11 : i64} {
  func.func @_conv3x3_kernel(%arg0: i32, %arg1: i32, %arg2: memref<1x16x16x128xbf16, #tpu.memory_space<vmem>>, %arg3: memref<3x384x128xbf16, #tpu.memory_space<vmem>>, %arg4: memref<1x128xf32, #tpu.memory_space<vmem>>, %arg5: memref<1x128xf32, #tpu.memory_space<vmem>>, %arg6: memref<1x16x16x128xbf16, #tpu.memory_space<vmem>>, %arg7: memref<1x8x128xf32, #tpu.memory_space<vmem>>, %arg8: memref<18x16x384xbf16, #tpu.memory_space<vmem>>) attributes {dimension_semantics = [#tpu.dimension_semantics<parallel>, #tpu.dimension_semantics<parallel>], iteration_bounds = array<i64: 2, 1>, scalar_prefetch = 0 : i64, scratch_operands = 1 : i64, tpu.core_type = #tpu.core_type<tc>, window_params = [{transform_indices = @transform_0, window_bounds = array<i64: 1, 16, 16, 128>}, {transform_indices = @transform_1, window_bounds = array<i64: 3, 384, 128>}, {pipeline_mode = #tpu.pipeline_mode<synchronous>, transform_indices = @transform_2, window_bounds = array<i64: 1, 128>}, {pipeline_mode = #tpu.pipeline_mode<synchronous>, transform_indices = @transform_3, window_bounds = array<i64: 1, 128>}, {transform_indices = @transform_4, window_bounds = array<i64: 1, 16, 16, 128>}, {transform_indices = @transform_5, window_bounds = array<i64: 1, 8, 128>}]} {
    %c0 = arith.constant 0 : index
    %c0_0 = arith.constant 0 : index
    %c0_1 = arith.constant 0 : index
    %c0_2 = arith.constant 0 : index
    %0 = vector.load %arg2[%c0, %c0_0, %c0_1, %c0_2] : memref<1x16x16x128xbf16, #tpu.memory_space<vmem>>, vector<1x16x16x128xbf16>
    %1 = vector.shape_cast %0 : vector<1x16x16x128xbf16> to vector<16x16x128xbf16>
    %2 = arith.extf %1 : vector<16x16x128xbf16> to vector<16x16x128xf32>
    %c0_3 = arith.constant 0 : index
    %c0_4 = arith.constant 0 : index
    %3 = vector.load %arg4[%c0_3, %c0_4] : memref<1x128xf32, #tpu.memory_space<vmem>>, vector<1x128xf32>
    %4 = vector.shape_cast %3 : vector<1x128xf32> to vector<1x1x128xf32>
    %5 = vector.broadcast %4 : vector<1x1x128xf32> to vector<16x16x128xf32>
    %6 = arith.mulf %2, %5 : vector<16x16x128xf32>
    %c0_5 = arith.constant 0 : index
    %c0_6 = arith.constant 0 : index
    %7 = vector.load %arg5[%c0_5, %c0_6] : memref<1x128xf32, #tpu.memory_space<vmem>>, vector<1x128xf32>
    %8 = vector.shape_cast %7 : vector<1x128xf32> to vector<1x1x128xf32>
    %9 = vector.broadcast %8 : vector<1x1x128xf32> to vector<16x16x128xf32>
    %10 = arith.addf %6, %9 : vector<16x16x128xf32>
    %cst = arith.constant 0.000000e+00 : f32
    %11 = vector.broadcast %cst : f32 to vector<16x16x128xf32>
    %12 = arith.maximumf %10, %11 : vector<16x16x128xf32>
    %13 = arith.truncf %12 : vector<16x16x128xf32> to vector<16x16x128xbf16>
    %cst_7 = arith.constant 0.000000e+00 : bf16
    %14 = vector.broadcast %cst_7 : bf16 to vector<1x16x384xbf16>
    %c0_8 = arith.constant 0 : index
    %c0_9 = arith.constant 0 : index
    %c0_10 = arith.constant 0 : index
    %15 = vector.load %arg8[%c0_8, %c0_9, %c0_10] : memref<18x16x384xbf16, #tpu.memory_space<vmem>>, vector<1x16x384xbf16>
    tpu.vector_store %arg8[%c0_8, %c0_9, %c0_10], %14 {strides = array<i32>} : memref<18x16x384xbf16, #tpu.memory_space<vmem>>, vector<1x16x384xbf16>,
    %c17 = arith.constant 17 : index
    %c0_11 = arith.constant 0 : index
    %c0_12 = arith.constant 0 : index
    %16 = vector.load %arg8[%c17, %c0_11, %c0_12] : memref<18x16x384xbf16, #tpu.memory_space<vmem>>, vector<1x16x384xbf16>
    tpu.vector_store %arg8[%c17, %c0_11, %c0_12], %14 {strides = array<i32>} : memref<18x16x384xbf16, #tpu.memory_space<vmem>>, vector<1x16x384xbf16>,
    %cst_13 = arith.constant 0.000000e+00 : bf16
    %17 = vector.broadcast %cst_13 : bf16 to vector<16x1x128xbf16>
    %18 = vector.extract_strided_slice %13 {offsets = [0, 0, 0], sizes = [16, 15, 128], strides = [1, 1, 1]} : vector<16x16x128xbf16> to vector<16x15x128xbf16>
    %19 = tpu.concatenate %17, %18 in 1 : vector<16x1x128xbf16>, vector<16x15x128xbf16> -> vector<16x16x128xbf16>
    %c1 = arith.constant 1 : index
    %c0_14 = arith.constant 0 : index
    %c0_15 = arith.constant 0 : index
    %20 = vector.load %arg8[%c1, %c0_14, %c0_15] : memref<18x16x384xbf16, #tpu.memory_space<vmem>>, vector<16x16x128xbf16>
    tpu.vector_store %arg8[%c1, %c0_14, %c0_15], %19 {strides = array<i32>} : memref<18x16x384xbf16, #tpu.memory_space<vmem>>, vector<16x16x128xbf16>,
    %c1_16 = arith.constant 1 : index
    %c0_17 = arith.constant 0 : index
    %c128 = arith.constant 128 : index
    %21 = vector.load %arg8[%c1_16, %c0_17, %c128] : memref<18x16x384xbf16, #tpu.memory_space<vmem>>, vector<16x16x128xbf16>
    tpu.vector_store %arg8[%c1_16, %c0_17, %c128], %13 {strides = array<i32>} : memref<18x16x384xbf16, #tpu.memory_space<vmem>>, vector<16x16x128xbf16>,
    %22 = vector.extract_strided_slice %13 {offsets = [0, 1, 0], sizes = [16, 15, 128], strides = [1, 1, 1]} : vector<16x16x128xbf16> to vector<16x15x128xbf16>
    %23 = tpu.concatenate %22, %17 in 1 : vector<16x15x128xbf16>, vector<16x1x128xbf16> -> vector<16x16x128xbf16>
    %c1_18 = arith.constant 1 : index
    %c0_19 = arith.constant 0 : index
    %c256 = arith.constant 256 : index
    %24 = vector.load %arg8[%c1_18, %c0_19, %c256] : memref<18x16x384xbf16, #tpu.memory_space<vmem>>, vector<16x16x128xbf16>
    tpu.vector_store %arg8[%c1_18, %c0_19, %c256], %23 {strides = array<i32>} : memref<18x16x384xbf16, #tpu.memory_space<vmem>>, vector<16x16x128xbf16>,
    %c0_20 = arith.constant 0 : index
    %c0_21 = arith.constant 0 : index
    %c0_22 = arith.constant 0 : index
    %25 = vector.load %arg8[%c0_20, %c0_21, %c0_22] : memref<18x16x384xbf16, #tpu.memory_space<vmem>>, vector<16x16x384xbf16>
    %26 = vector.shape_cast %25 : vector<16x16x384xbf16> to vector<256x384xbf16>
    %c0_23 = arith.constant 0 : index
    %c0_24 = arith.constant 0 : index
    %c0_25 = arith.constant 0 : index
    %27 = vector.load %arg3[%c0_23, %c0_24, %c0_25] : memref<3x384x128xbf16, #tpu.memory_space<vmem>>, vector<1x384x128xbf16>
    %28 = vector.shape_cast %27 : vector<1x384x128xbf16> to vector<384x128xbf16>
    %cst_26 = arith.constant dense<0.000000e+00> : vector<256x128xf32>
    %29 = tpu.matmul %26, %28, %cst_26 {dimension_numbers = #tpu.dot_dimension_numbers<[1], [0], [0], [1], [0, 0, 1, 1], [], []>} : vector<256x384xbf16>, vector<384x128xbf16>, vector<256x128xf32> -> vector<256x128xf32>
    %c1_27 = arith.constant 1 : index
    %c0_28 = arith.constant 0 : index
    %c0_29 = arith.constant 0 : index
    %30 = vector.load %arg8[%c1_27, %c0_28, %c0_29] : memref<18x16x384xbf16, #tpu.memory_space<vmem>>, vector<16x16x384xbf16>
    %31 = vector.shape_cast %30 : vector<16x16x384xbf16> to vector<256x384xbf16>
    %c1_30 = arith.constant 1 : index
    %c0_31 = arith.constant 0 : index
    %c0_32 = arith.constant 0 : index
    %32 = vector.load %arg3[%c1_30, %c0_31, %c0_32] : memref<3x384x128xbf16, #tpu.memory_space<vmem>>, vector<1x384x128xbf16>
    %33 = vector.shape_cast %32 : vector<1x384x128xbf16> to vector<384x128xbf16>
    %cst_33 = arith.constant dense<0.000000e+00> : vector<256x128xf32>
    %34 = tpu.matmul %31, %33, %cst_33 {dimension_numbers = #tpu.dot_dimension_numbers<[1], [0], [0], [1], [0, 0, 1, 1], [], []>} : vector<256x384xbf16>, vector<384x128xbf16>, vector<256x128xf32> -> vector<256x128xf32>
    %35 = arith.addf %29, %34 : vector<256x128xf32>
    %c2 = arith.constant 2 : index
    %c0_34 = arith.constant 0 : index
    %c0_35 = arith.constant 0 : index
    %36 = vector.load %arg8[%c2, %c0_34, %c0_35] : memref<18x16x384xbf16, #tpu.memory_space<vmem>>, vector<16x16x384xbf16>
    %37 = vector.shape_cast %36 : vector<16x16x384xbf16> to vector<256x384xbf16>
    %c2_36 = arith.constant 2 : index
    %c0_37 = arith.constant 0 : index
    %c0_38 = arith.constant 0 : index
    %38 = vector.load %arg3[%c2_36, %c0_37, %c0_38] : memref<3x384x128xbf16, #tpu.memory_space<vmem>>, vector<1x384x128xbf16>
    %39 = vector.shape_cast %38 : vector<1x384x128xbf16> to vector<384x128xbf16>
    %cst_39 = arith.constant dense<0.000000e+00> : vector<256x128xf32>
    %40 = tpu.matmul %37, %39, %cst_39 {dimension_numbers = #tpu.dot_dimension_numbers<[1], [0], [0], [1], [0, 0, 1, 1], [], []>} : vector<256x384xbf16>, vector<384x128xbf16>, vector<256x128xf32> -> vector<256x128xf32>
    %41 = arith.addf %35, %40 : vector<256x128xf32>
    %42 = vector.shape_cast %41 : vector<256x128xf32> to vector<1x16x16x128xf32>
    %43 = arith.truncf %42 : vector<1x16x16x128xf32> to vector<1x16x16x128xbf16>
    %c0_40 = arith.constant 0 : index
    %c0_41 = arith.constant 0 : index
    %c0_42 = arith.constant 0 : index
    %c0_43 = arith.constant 0 : index
    %44 = vector.load %arg6[%c0_40, %c0_41, %c0_42, %c0_43] : memref<1x16x16x128xbf16, #tpu.memory_space<vmem>>, vector<1x16x16x128xbf16>
    tpu.vector_store %arg6[%c0_40, %c0_41, %c0_42, %c0_43], %43 {strides = array<i32>} : memref<1x16x16x128xbf16, #tpu.memory_space<vmem>>, vector<1x16x16x128xbf16>,
    %cst_44 = arith.constant dense<0.000000e+00> : vector<128xf32>
    %45 = vector.multi_reduction <add>, %41, %cst_44 [0] : vector<256x128xf32> to vector<128xf32>
    %46 = vector.shape_cast %45 : vector<128xf32> to vector<1x128xf32>
    %47 = arith.mulf %41, %41 : vector<256x128xf32>
    %cst_45 = arith.constant dense<0.000000e+00> : vector<128xf32>
    %48 = vector.multi_reduction <add>, %47, %cst_45 [0] : vector<256x128xf32> to vector<128xf32>
    %49 = vector.shape_cast %48 : vector<128xf32> to vector<1x128xf32>
    %50 = tpu.iota {dimensions = array<i32: 0>} : vector<8x128xi32>
    %c0_i32 = arith.constant 0 : i32
    %51 = vector.broadcast %c0_i32 : i32 to vector<8x128xi32>
    %52 = arith.cmpi eq, %50, %51 : vector<8x128xi32>
    %c1_i32 = arith.constant 1 : i32
    %53 = vector.broadcast %c1_i32 : i32 to vector<8x128xi32>
    %54 = arith.cmpi eq, %50, %53 : vector<8x128xi32>
    %cst_46 = arith.constant 0.000000e+00 : f32
    %55 = vector.shape_cast %49 : vector<1x128xf32> to vector<1x128xf32>
    %56 = vector.broadcast %55 : vector<1x128xf32> to vector<8x128xf32>
    %57 = vector.broadcast %cst_46 : f32 to vector<8x128xf32>
    %58 = arith.select %54, %56, %57 : vector<8x128xi1>, vector<8x128xf32>
    %59 = vector.shape_cast %46 : vector<1x128xf32> to vector<1x128xf32>
    %60 = vector.broadcast %59 : vector<1x128xf32> to vector<8x128xf32>
    %61 = arith.select %52, %60, %58 : vector<8x128xi1>, vector<8x128xf32>
    %62 = vector.shape_cast %61 : vector<8x128xf32> to vector<1x8x128xf32>
    %c0_47 = arith.constant 0 : index
    %c0_48 = arith.constant 0 : index
    %c0_49 = arith.constant 0 : index
    %63 = vector.load %arg7[%c0_47, %c0_48, %c0_49] : memref<1x8x128xf32, #tpu.memory_space<vmem>>, vector<1x8x128xf32>
    tpu.vector_store %arg7[%c0_47, %c0_48, %c0_49], %62 {strides = array<i32>} : memref<1x8x128xf32, #tpu.memory_space<vmem>>, vector<1x8x128xf32>,
    return
  }
  func.func @transform_0(%arg0: i32, %arg1: i32) -> (i32, i32, i32, i32) {
    %c0_i32 = arith.constant 0 : i32
    %c0_i32_0 = arith.constant 0 : i32
    %c0_i32_1 = arith.constant 0 : i32
    %c0_i32_2 = arith.constant 0 : i32
    return %arg0, %c0_i32, %c0_i32_0, %c0_i32_1 : i32, i32, i32, i32
  }
  func.func @transform_1(%arg0: i32, %arg1: i32) -> (i32, i32, i32) {
    %c0_i32 = arith.constant 0 : i32
    %c0_i32_0 = arith.constant 0 : i32
    %c0_i32_1 = arith.constant 0 : i32
    return %c0_i32, %c0_i32_0, %arg1 : i32, i32, i32
  }
  func.func @transform_2(%arg0: i32, %arg1: i32) -> (i32, i32) {
    %c0_i32 = arith.constant 0 : i32
    %c0_i32_0 = arith.constant 0 : i32
    %c0_i32_1 = arith.constant 0 : i32
    return %c0_i32, %c0_i32_0 : i32, i32
  }
  func.func @transform_3(%arg0: i32, %arg1: i32) -> (i32, i32) {
    %c0_i32 = arith.constant 0 : i32
    %c0_i32_0 = arith.constant 0 : i32
    %c0_i32_1 = arith.constant 0 : i32
    return %c0_i32, %c0_i32_0 : i32, i32
  }
  func.func @transform_4(%arg0: i32, %arg1: i32) -> (i32, i32, i32, i32) {
    %c0_i32 = arith.constant 0 : i32
    %c0_i32_0 = arith.constant 0 : i32
    %c0_i32_1 = arith.constant 0 : i32
    return %arg0, %c0_i32, %c0_i32_0, %arg1 : i32, i32, i32, i32
  }
  func.func @transform_5(%arg0: i32, %arg1: i32) -> (i32, i32, i32) {
    %c0_i32 = arith.constant 0 : i32
    %c0_i32_0 = arith.constant 0 : i32
    return %arg0, %c0_i32, %arg1 : i32, i32, i32
  }
}

module attributes {stable_mosaic.version = 11 : i64} {
  func.func @_bn_add_relu_kernel(%arg0: i32, %arg1: memref<512x128xbf16, #tpu.memory_space<vmem>>, %arg2: memref<1x128xf32, #tpu.memory_space<vmem>>, %arg3: memref<1x128xf32, #tpu.memory_space<vmem>>, %arg4: memref<512x128xbf16, #tpu.memory_space<vmem>>, %arg5: memref<1x128xf32, #tpu.memory_space<vmem>>, %arg6: memref<1x128xf32, #tpu.memory_space<vmem>>, %arg7: memref<512x128xf32, #tpu.memory_space<vmem>>) attributes {dimension_semantics = [#tpu.dimension_semantics<parallel>], iteration_bounds = array<i64: 1>, scalar_prefetch = 0 : i64, scratch_operands = 0 : i64, tpu.core_type = #tpu.core_type<tc>, window_params = [{transform_indices = @transform_0, window_bounds = array<i64: 512, 128>}, {pipeline_mode = #tpu.pipeline_mode<synchronous>, transform_indices = @transform_1, window_bounds = array<i64: 1, 128>}, {pipeline_mode = #tpu.pipeline_mode<synchronous>, transform_indices = @transform_2, window_bounds = array<i64: 1, 128>}, {transform_indices = @transform_3, window_bounds = array<i64: 512, 128>}, {pipeline_mode = #tpu.pipeline_mode<synchronous>, transform_indices = @transform_4, window_bounds = array<i64: 1, 128>}, {pipeline_mode = #tpu.pipeline_mode<synchronous>, transform_indices = @transform_5, window_bounds = array<i64: 1, 128>}, {transform_indices = @transform_6, window_bounds = array<i64: 512, 128>}]} {
    %c0 = arith.constant 0 : index
    %c0_0 = arith.constant 0 : index
    %0 = vector.load %arg4[%c0, %c0_0] : memref<512x128xbf16, #tpu.memory_space<vmem>>, vector<512x128xbf16>
    %1 = arith.extf %0 : vector<512x128xbf16> to vector<512x128xf32>
    %c0_1 = arith.constant 0 : index
    %c0_2 = arith.constant 0 : index
    %2 = vector.load %arg5[%c0_1, %c0_2] : memref<1x128xf32, #tpu.memory_space<vmem>>, vector<1x128xf32>
    %3 = vector.broadcast %2 : vector<1x128xf32> to vector<512x128xf32>
    %4 = arith.mulf %1, %3 : vector<512x128xf32>
    %c0_3 = arith.constant 0 : index
    %c0_4 = arith.constant 0 : index
    %5 = vector.load %arg6[%c0_3, %c0_4] : memref<1x128xf32, #tpu.memory_space<vmem>>, vector<1x128xf32>
    %6 = vector.broadcast %5 : vector<1x128xf32> to vector<512x128xf32>
    %7 = arith.addf %4, %6 : vector<512x128xf32>
    %c0_5 = arith.constant 0 : index
    %c0_6 = arith.constant 0 : index
    %8 = vector.load %arg1[%c0_5, %c0_6] : memref<512x128xbf16, #tpu.memory_space<vmem>>, vector<512x128xbf16>
    %9 = arith.extf %8 : vector<512x128xbf16> to vector<512x128xf32>
    %c0_7 = arith.constant 0 : index
    %c0_8 = arith.constant 0 : index
    %10 = vector.load %arg2[%c0_7, %c0_8] : memref<1x128xf32, #tpu.memory_space<vmem>>, vector<1x128xf32>
    %11 = vector.broadcast %10 : vector<1x128xf32> to vector<512x128xf32>
    %12 = arith.mulf %9, %11 : vector<512x128xf32>
    %c0_9 = arith.constant 0 : index
    %c0_10 = arith.constant 0 : index
    %13 = vector.load %arg3[%c0_9, %c0_10] : memref<1x128xf32, #tpu.memory_space<vmem>>, vector<1x128xf32>
    %14 = vector.broadcast %13 : vector<1x128xf32> to vector<512x128xf32>
    %15 = arith.addf %12, %14 : vector<512x128xf32>
    %16 = arith.addf %15, %7 : vector<512x128xf32>
    %cst = arith.constant 0.000000e+00 : f32
    %17 = vector.broadcast %cst : f32 to vector<512x128xf32>
    %18 = arith.maximumf %16, %17 : vector<512x128xf32>
    %c0_11 = arith.constant 0 : index
    %c0_12 = arith.constant 0 : index
    %19 = vector.load %arg7[%c0_11, %c0_12] : memref<512x128xf32, #tpu.memory_space<vmem>>, vector<512x128xf32>
    tpu.vector_store %arg7[%c0_11, %c0_12], %18 {strides = array<i32>} : memref<512x128xf32, #tpu.memory_space<vmem>>, vector<512x128xf32>,
    return
  }
  func.func @transform_0(%arg0: i32) -> (i32, i32) {
    %c0_i32 = arith.constant 0 : i32
    %c0_i32_0 = arith.constant 0 : i32
    return %arg0, %c0_i32 : i32, i32
  }
  func.func @transform_1(%arg0: i32) -> (i32, i32) {
    %c0_i32 = arith.constant 0 : i32
    %c0_i32_0 = arith.constant 0 : i32
    %c0_i32_1 = arith.constant 0 : i32
    return %c0_i32, %c0_i32_0 : i32, i32
  }
  func.func @transform_2(%arg0: i32) -> (i32, i32) {
    %c0_i32 = arith.constant 0 : i32
    %c0_i32_0 = arith.constant 0 : i32
    %c0_i32_1 = arith.constant 0 : i32
    return %c0_i32, %c0_i32_0 : i32, i32
  }
  func.func @transform_3(%arg0: i32) -> (i32, i32) {
    %c0_i32 = arith.constant 0 : i32
    %c0_i32_0 = arith.constant 0 : i32
    return %arg0, %c0_i32 : i32, i32
  }
  func.func @transform_4(%arg0: i32) -> (i32, i32) {
    %c0_i32 = arith.constant 0 : i32
    %c0_i32_0 = arith.constant 0 : i32
    %c0_i32_1 = arith.constant 0 : i32
    return %c0_i32, %c0_i32_0 : i32, i32
  }
  func.func @transform_5(%arg0: i32) -> (i32, i32) {
    %c0_i32 = arith.constant 0 : i32
    %c0_i32_0 = arith.constant 0 : i32
    %c0_i32_1 = arith.constant 0 : i32
    return %c0_i32, %c0_i32_0 : i32, i32
  }
  func.func @transform_6(%arg0: i32) -> (i32, i32) {
    %c0_i32 = arith.constant 0 : i32
    %c0_i32_0 = arith.constant 0 : i32
    return %arg0, %c0_i32 : i32, i32
  }
}

</mosaic_0001>

<llo_original>
// kernel: basic_block_forward.6
$region0: #{basic_block_forward.6}
  #allocation0 [shape = 'u32[]', space=smem, size = 0x4, offset = 0x4, fixed_abs, tag = 'smem constant byte address 0x4 - core index']
  #allocation1 [shape = 'u32[144,128]{1,0:T(1,128)}', space=vmem, size = 0x12000, scoped, tag = 'internal scratch']
  %s0 = inlined_call_operand.hbm [shape: bf16[512,128], index: 0, kind: input, shape index: {}]
  %s1 = inlined_call_operand.hbm [shape: bf16[128,128], index: 1, kind: input, shape index: {}]
  %s2 = inlined_call_operand.hbm [shape: bf16[512,128], index: 2, kind: output, shape index: {0}]
  %s3 = inlined_call_operand.hbm [shape: f32[1,8,128], index: 3, kind: output, shape index: {1}]
  %4 = xla_tuple %s2, %s3
  %s5 = sld [smem:[#allocation0]]
  $region34: #{basic_block_forward.6} parent=0
    _
  %s7 = ssub.s32 1, %s5
  %s8 = scalar_select 0, %s7, %s5
  $region1: #{basic_block_forward.6} parent=0
    #allocation2 [shape = 'u8[131072]{0}', space=vmem, size = 0x20000, scoped, tag = 'input window, operand 0, single buffered']
    #allocation3 [shape = 's32[1]{0}', space=sflag, size = 0x4, scoped, tag = 'scoped memory for basic_block_forward.6']
    #allocation4 [shape = 's32[1]{0}', space=sflag, size = 0x4, scoped, tag = 'scoped memory for basic_block_forward.6']
    #allocation5 [shape = 'u8[32768]{0}', space=vmem, size = 0x8000, scoped, tag = 'input window, operand 1, single buffered']
    #allocation6 [shape = 's32[1]{0}', space=sflag, size = 0x4, scoped, tag = 'scoped memory for basic_block_forward.6']
    #allocation7 [shape = 'u8[131072]{0}', space=vmem, size = 0x20000, scoped, tag = 'output window, operand 0, single buffered']
    #allocation8 [shape = 'u8[4096]{0}', space=vmem, size = 0x1000, scoped, tag = 'output window, operand 1, single buffered']
    #allocation9 [shape = 's32[1]{0}', space=sflag, size = 0x4, scoped, tag = 'scoped memory for basic_block_forward.6']
    %9 = vsyncpa [#allocation3], 0
    %10 = vsyncpa [#allocation6], 0
    %11 = vsyncpa [#allocation4], 0
    %12 = vsyncpa [#allocation9], 0
    // Predicated region
    $region2: #{basic_block_forward.6} parent=1 // pred_check
      _
    $region3: #{basic_block_forward.6} parent=1 // pred_check_branch
      %14 = sbr.rel (0) target = $region5
    $region4: #{basic_block_forward.6} parent=1 // pred_region
      %s16 = ssub.s32 4096, 4096
      %17 = vsyncadd [#allocation3], %s16
      %s18 = sshll.u32 [#allocation2], 4
      %s19 = int_to_ptr.vmem [resolvable:$true] %s18
      %24 = dma.hbm_to_vmem [thread:$0]  %s0, 4096, %s19, [#allocation3], 64, 64, 4
    $region5: #{basic_block_forward.6} parent=1 // pred_fallthru
      _
    // Predicated region
    $region6: #{basic_block_forward.6} parent=1 // pred_check
      _
    $region7: #{basic_block_forward.6} parent=1 // pred_check_branch
      %26 = sbr.rel (0) target = $region9
    $region8: #{basic_block_forward.6} parent=1 // pred_region
      %s28 = ssub.s32 1024, 1024
      %29 = vsyncadd [#allocation6], %s28
      %s30 = sshll.u32 [#allocation5], 4
      %s31 = int_to_ptr.vmem [resolvable:$true] %s30
      %36 = dma.hbm_to_vmem [thread:$0]  %s1, 1024, %s31, [#allocation6], 64, 64, 4
    $region9: #{basic_block_forward.6} parent=1 // pred_fallthru
      _
    // Predicated region
    $region10: #{basic_block_forward.6} parent=1 // pred_check
      _
    $region11: #{basic_block_forward.6} parent=1 // pred_check_branch
      %38 = sbr.rel (0) target = $region13
    $region12: #{basic_block_forward.6} parent=1 // pred_region
      %39 = dma.done [#allocation3], 4096
    $region13: #{basic_block_forward.6} parent=1 // pred_fallthru
      _
    // Predicated region
    $region14: #{basic_block_forward.6} parent=1 // pred_check
      _
    $region15: #{basic_block_forward.6} parent=1 // pred_check_branch
      %41 = sbr.rel (0) target = $region17
    $region16: #{basic_block_forward.6} parent=1 // pred_region
      %42 = dma.done [#allocation6], 1024
    $region17: #{basic_block_forward.6} parent=1 // pred_fallthru
      _
    %v44 = vld [vmem:[#allocation2] sm:$0xf]
    %v45 = vld [vmem:[#allocation2 + $0x4] sm:$0xf]
    %v46 = vld [vmem:[#allocation2 + $0x8] sm:$0xf]
    %v47 = vld [vmem:[#allocation2 + $0xc] sm:$0xf]
    %v48 = vld [vmem:[#allocation2 + $0x10] sm:$0xf]
    %v49 = vld [vmem:[#allocation2 + $0x14] sm:$0xf]
    %v50 = vld [vmem:[#allocation2 + $0x18] sm:$0xf]
    %v51 = vld [vmem:[#allocation2 + $0x1c] sm:$0xf]
    %v52 = vld [vmem:[#allocation2 + $0x20] sm:$0xf]
    %v53 = vld [vmem:[#allocation2 + $0x24] sm:$0xf]
    %v54 = vld [vmem:[#allocation2 + $0x28] sm:$0xf]
    %v55 = vld [vmem:[#allocation2 + $0x2c] sm:$0xf]
    %v56 = vld [vmem:[#allocation2 + $0x30] sm:$0xf]
    %v57 = vld [vmem:[#allocation2 + $0x34] sm:$0xf]
    %v58 = vld [vmem:[#allocation2 + $0x38] sm:$0xf]
    %v59 = vld [vmem:[#allocation2 + $0x3c] sm:$0xf]
    %v60 = vld [vmem:[#allocation2 + $0x40] sm:$0xf]
    %v61 = vld [vmem:[#allocation2 + $0x44] sm:$0xf]
    %v62 = vld [vmem:[#allocation2 + $0x48] sm:$0xf]
    %v63 = vld [vmem:[#allocation2 + $0x4c] sm:$0xf]
    %v64 = vld [vmem:[#allocation2 + $0x50] sm:$0xf]
    %v65 = vld [vmem:[#allocation2 + $0x54] sm:$0xf]
    %v66 = vld [vmem:[#allocation2 + $0x58] sm:$0xf]
    %v67 = vld [vmem:[#allocation2 + $0x5c] sm:$0xf]
    %v68 = vld [vmem:[#allocation2 + $0x60] sm:$0xf]
    %v69 = vld [vmem:[#allocation2 + $0x64] sm:$0xf]
    %v70 = vld [vmem:[#allocation2 + $0x68] sm:$0xf]
    %v71 = vld [vmem:[#allocation2 + $0x6c] sm:$0xf]
    %v72 = vld [vmem:[#allocation2 + $0x70] sm:$0xf]
    %v73 = vld [vmem:[#allocation2 + $0x74] sm:$0xf]
    %v74 = vld [vmem:[#allocation2 + $0x78] sm:$0xf]
    %v75 = vld [vmem:[#allocation2 + $0x7c] sm:$0xf]
    %v76 = vld [vmem:[#allocation2 + $0x80] sm:$0xf]
    %v77 = vld [vmem:[#allocation2 + $0x84] sm:$0xf]
    %v78 = vld [vmem:[#allocation2 + $0x88] sm:$0xf]
    %v79 = vld [vmem:[#allocation2 + $0x8c] sm:$0xf]
    %v80 = vld [vmem:[#allocation2 + $0x90] sm:$0xf]
    %v81 = vld [vmem:[#allocation2 + $0x94] sm:$0xf]
    %v82 = vld [vmem:[#allocation2 + $0x98] sm:$0xf]
    %v83 = vld [vmem:[#allocation2 + $0x9c] sm:$0xf]
    %v84 = vld [vmem:[#allocation2 + $0xa0] sm:$0xf]
    %v85 = vld [vmem:[#allocation2 + $0xa4] sm:$0xf]
    %v86 = vld [vmem:[#allocation2 + $0xa8] sm:$0xf]
    %v87 = vld [vmem:[#allocation2 + $0xac] sm:$0xf]
    %v88 = vld [vmem:[#allocation2 + $0xb0] sm:$0xf]
    %v89 = vld [vmem:[#allocation2 + $0xb4] sm:$0xf]
    %v90 = vld [vmem:[#allocation2 + $0xb8] sm:$0xf]
    %v91 = vld [vmem:[#allocation2 + $0xbc] sm:$0xf]
    %v92 = vld [vmem:[#allocation2 + $0xc0] sm:$0xf]
    %v93 = vld [vmem:[#allocation2 + $0xc4] sm:$0xf]
    %v94 = vld [vmem:[#allocation2 + $0xc8] sm:$0xf]
    %v95 = vld [vmem:[#allocation2 + $0xcc] sm:$0xf]
    %v96 = vld [vmem:[#allocation2 + $0xd0] sm:$0xf]
    %v97 = vld [vmem:[#allocation2 + $0xd4] sm:$0xf]
    %v98 = vld [vmem:[#allocation2 + $0xd8] sm:$0xf]
    %v99 = vld [vmem:[#allocation2 + $0xdc] sm:$0xf]
    %v100 = vld [vmem:[#allocation2 + $0xe0] sm:$0xf]
    %v101 = vld [vmem:[#allocation2 + $0xe4] sm:$0xf]
    %v102 = vld [vmem:[#allocation2 + $0xe8] sm:$0xf]
    %v103 = vld [vmem:[#allocation2 + $0xec] sm:$0xf]
    %v104 = vld [vmem:[#allocation2 + $0xf0] sm:$0xf]
    %v105 = vld [vmem:[#allocation2 + $0xf4] sm:$0xf]
    %v106 = vld [vmem:[#allocation2 + $0xf8] sm:$0xf]
    %v107 = vld [vmem:[#allocation2 + $0xfc] sm:$0xf]
    %v108 = vld [vmem:[#allocation5] sm:$0xf]
    %v109 = vld [vmem:[#allocation5 + $0x4] sm:$0xf]
    %v110 = vld [vmem:[#allocation5 + $0x8] sm:$0xf]
    %v111 = vld [vmem:[#allocation5 + $0xc] sm:$0xf]
    %v112 = vld [vmem:[#allocation5 + $0x10] sm:$0xf]
    %v113 = vld [vmem:[#allocation5 + $0x14] sm:$0xf]
    %v114 = vld [vmem:[#allocation5 + $0x18] sm:$0xf]
    %v115 = vld [vmem:[#allocation5 + $0x1c] sm:$0xf]
    %v116 = vld [vmem:[#allocation5 + $0x20] sm:$0xf]
    %v117 = vld [vmem:[#allocation5 + $0x24] sm:$0xf]
    %v118 = vld [vmem:[#allocation5 + $0x28] sm:$0xf]
    %v119 = vld [vmem:[#allocation5 + $0x2c] sm:$0xf]
    %v120 = vld [vmem:[#allocation5 + $0x30] sm:$0xf]
    %v121 = vld [vmem:[#allocation5 + $0x34] sm:$0xf]
    %v122 = vld [vmem:[#allocation5 + $0x38] sm:$0xf]
    %v123 = vld [vmem:[#allocation5 + $0x3c] sm:$0xf]
    %v188 = vunpack.c.l.b16 %v44
    %v189 = vunpack.c.l.b16 %v45
    %v190 = vunpack.c.l.b16 %v46
    %v191 = vunpack.c.l.b16 %v47
    %v192 = vunpack.c.l.b16 %v48
    %v193 = vunpack.c.l.b16 %v49
    %v194 = vunpack.c.l.b16 %v50
    %v195 = vunpack.c.l.b16 %v51
    %v196 = vunpack.c.l.b16 %v52
    %v197 = vunpack.c.l.b16 %v53
    %v198 = vunpack.c.l.b16 %v54
    %v199 = vunpack.c.l.b16 %v55
    %v200 = vunpack.c.l.b16 %v56
    %v201 = vunpack.c.l.b16 %v57
    %v202 = vunpack.c.l.b16 %v58
    %v203 = vunpack.c.l.b16 %v59
    %v204 = vunpack.c.l.b16 %v60
    %v205 = vunpack.c.l.b16 %v61
    %v206 = vunpack.c.l.b16 %v62
    %v207 = vunpack.c.l.b16 %v63
    %v208 = vunpack.c.l.b16 %v64
    %v209 = vunpack.c.l.b16 %v65
    %v210 = vunpack.c.l.b16 %v66
    %v211 = vunpack.c.l.b16 %v67
    %v212 = vunpack.c.l.b16 %v68
    %v213 = vunpack.c.l.b16 %v69
    %v214 = vunpack.c.l.b16 %v70
    %v215 = vunpack.c.l.b16 %v71
    %v216 = vunpack.c.l.b16 %v72
    %v217 = vunpack.c.l.b16 %v73
    %v218 = vunpack.c.l.b16 %v74
    %v219 = vunpack.c.l.b16 %v75
    %v220 = vunpack.c.l.b16 %v76
    %v221 = vunpack.c.l.b16 %v77
    %v222 = vunpack.c.l.b16 %v78
    %v223 = vunpack.c.l.b16 %v79
    %v224 = vunpack.c.l.b16 %v80
    %v225 = vunpack.c.l.b16 %v81
    %v226 = vunpack.c.l.b16 %v82
    %v227 = vunpack.c.l.b16 %v83
    %v228 = vunpack.c.l.b16 %v84
    %v229 = vunpack.c.l.b16 %v85
    %v230 = vunpack.c.l.b16 %v86
    %v231 = vunpack.c.l.b16 %v87
    %v232 = vunpack.c.l.b16 %v88
    %v233 = vunpack.c.l.b16 %v89
    %v234 = vunpack.c.l.b16 %v90
    %v235 = vunpack.c.l.b16 %v91
    %v236 = vunpack.c.l.b16 %v92
    %v237 = vunpack.c.l.b16 %v93
    %v238 = vunpack.c.l.b16 %v94
    %v239 = vunpack.c.l.b16 %v95
    %v240 = vunpack.c.l.b16 %v96
    %v241 = vunpack.c.l.b16 %v97
    %v242 = vunpack.c.l.b16 %v98
    %v243 = vunpack.c.l.b16 %v99
    %v244 = vunpack.c.l.b16 %v100
    %v245 = vunpack.c.l.b16 %v101
    %v246 = vunpack.c.l.b16 %v102
    %v247 = vunpack.c.l.b16 %v103
    %v248 = vunpack.c.l.b16 %v104
    %v249 = vunpack.c.l.b16 %v105
    %v250 = vunpack.c.l.b16 %v106
    %v251 = vunpack.c.l.b16 %v107
    %v252 = vpack.c.b16 %v189, %v188
    %v253 = vpack.c.b16 %v191, %v190
    %v254 = vpack.c.b16 %v193, %v192
    %v255 = vpack.c.b16 %v195, %v194
    %v256 = vpack.c.b16 %v197, %v196
    %v257 = vpack.c.b16 %v199, %v198
    %v258 = vpack.c.b16 %v201, %v200
    %v259 = vpack.c.b16 %v203, %v202
    %v260 = vpack.c.b16 %v205, %v204
    %v261 = vpack.c.b16 %v207, %v206
    %v262 = vpack.c.b16 %v209, %v208
    %v263 = vpack.c.b16 %v211, %v210
    %v264 = vpack.c.b16 %v213, %v212
    %v265 = vpack.c.b16 %v215, %v214
    %v266 = vpack.c.b16 %v217, %v216
    %v267 = vpack.c.b16 %v219, %v218
    %v268 = vpack.c.b16 %v221, %v220
    %v269 = vpack.c.b16 %v223, %v222
    %v270 = vpack.c.b16 %v225, %v224
    %v271 = vpack.c.b16 %v227, %v226
    %v272 = vpack.c.b16 %v229, %v228
    %v273 = vpack.c.b16 %v231, %v230
    %v274 = vpack.c.b16 %v233, %v232
    %v275 = vpack.c.b16 %v235, %v234
    %v276 = vpack.c.b16 %v237, %v236
    %v277 = vpack.c.b16 %v239, %v238
    %v278 = vpack.c.b16 %v241, %v240
    %v279 = vpack.c.b16 %v243, %v242
    %v280 = vpack.c.b16 %v245, %v244
    %v281 = vpack.c.b16 %v247, %v246
    %v282 = vpack.c.b16 %v249, %v248
    %v283 = vpack.c.b16 %v251, %v250
    %v332 = vunpack.c.l.b16 %v108
    %v333 = vunpack.c.l.b16 %v109
    %v334 = vunpack.c.l.b16 %v110
    %v335 = vunpack.c.l.b16 %v111
    %v336 = vunpack.c.l.b16 %v112
    %v337 = vunpack.c.l.b16 %v113
    %v338 = vunpack.c.l.b16 %v114
    %v339 = vunpack.c.l.b16 %v115
    %v340 = vunpack.c.l.b16 %v116
    %v341 = vunpack.c.l.b16 %v117
    %v342 = vunpack.c.l.b16 %v118
    %v343 = vunpack.c.l.b16 %v119
    %v344 = vunpack.c.l.b16 %v120
    %v345 = vunpack.c.l.b16 %v121
    %v346 = vunpack.c.l.b16 %v122
    %v347 = vunpack.c.l.b16 %v123
    %v348 = vpack.c.b16 %v333, %v332
    %v349 = vpack.c.b16 %v335, %v334
    %v350 = vpack.c.b16 %v337, %v336
    %v351 = vpack.c.b16 %v339, %v338
    %v352 = vpack.c.b16 %v341, %v340
    %v353 = vpack.c.b16 %v343, %v342
    %v354 = vpack.c.b16 %v345, %v344
    %v355 = vpack.c.b16 %v347, %v346
    %364 = vmatprep.subr.bf16.mxu0 0
    %365 = vmatpush1.bf16.msra.mxu0 %v348
    %366 = vmatprep.subr.bf16.mxu0 0
    %367 = vmatpush1.bf16.msra.mxu0 %v349
    %368 = vmatprep.subr.bf16.mxu0 0
    %369 = vmatpush1.bf16.msra.mxu0 %v350
    %370 = vmatprep.subr.bf16.mxu0 0
    %371 = vmatpush1.bf16.msra.mxu0 %v351
    %372 = vmatprep.subr.bf16.mxu0 0
    %373 = vmatpush1.bf16.msra.mxu0 %v352
    %374 = vmatprep.subr.bf16.mxu0 0
    %375 = vmatpush1.bf16.msra.mxu0 %v353
    %376 = vmatprep.subr.bf16.mxu0 0
    %377 = vmatpush1.bf16.msra.mxu0 %v354
    %378 = vmatprep.subr.bf16.mxu0 0
    %379 = vmatpush1.bf16.msra.mxu0 %v355
    %380 = vmatprep.subr.bf16.mxu0 0
    %381 = vmatpush1.bf16.msra.mxu0 0
    %382 = vmatprep.subr.bf16.mxu0 0
    %383 = vmatpush1.bf16.msra.mxu0 0
    %384 = vmatprep.subr.bf16.mxu0 0
    %385 = vmatpush1.bf16.msra.mxu0 0
    %386 = vmatprep.subr.bf16.mxu0 0
    %387 = vmatpush1.bf16.msra.mxu0 0
    %388 = vmatprep.subr.bf16.mxu0 0
    %389 = vmatpush1.bf16.msra.mxu0 0
    %390 = vmatprep.subr.bf16.mxu0 0
    %391 = vmatpush1.bf16.msra.mxu0 0
    %392 = vmatprep.subr.bf16.mxu0 0
    %393 = vmatpush1.bf16.msra.mxu0 0
    %394 = vmatprep.subr.bf16.mxu0 0
    %395 = vmatpush1.bf16.msra.mxu0 0
    %396 = vmatprep.mubr.bf16.mxu0 0
    %397 = vmatmul.mubr.bf16.gmra.mrb[0].mxu0 %v252
    %v398 = vpop.f32.mrb[0].mxu0
    %v399 = vadd.f32 0.0, %v398
    %v400 = vpop.f32.mrb[0].mxu0
    %v401 = vpop.f32.mrb[0].mxu0
    %v402 = vadd.f32 0.0, %v401
    %v403 = vpop.f32.mrb[0].mxu0
    %404 = vmatprep.mubr.bf16.mxu0 0
    %405 = vmatmul.mubr.bf16.gmra.mrb[0].mxu0 %v253
    %v406 = vpop.f32.mrb[0].mxu0
    %v407 = vadd.f32 0.0, %v406
    %v408 = vpop.f32.mrb[0].mxu0
    %v409 = vpop.f32.mrb[0].mxu0
    %v410 = vadd.f32 0.0, %v409
    %v411 = vpop.f32.mrb[0].mxu0
    %412 = vmatprep.mubr.bf16.mxu0 0
    %413 = vmatmul.mubr.bf16.gmra.mrb[0].mxu0 %v254
    %v414 = vpop.f32.mrb[0].mxu0
    %v415 = vadd.f32 0.0, %v414
    %v416 = vpop.f32.mrb[0].mxu0
    %v417 = vpop.f32.mrb[0].mxu0
    %v418 = vadd.f32 0.0, %v417
    %v419 = vpop.f32.mrb[0].mxu0
    %420 = vmatprep.mubr.bf16.mxu0 0
    %421 = vmatmul.mubr.bf16.gmra.mrb[0].mxu0 %v255
    %v422 = vpop.f32.mrb[0].mxu0
    %v423 = vadd.f32 0.0, %v422
    %v424 = vpop.f32.mrb[0].mxu0
    %v425 = vpop.f32.mrb[0].mxu0
    %v426 = vadd.f32 0.0, %v425
    %v427 = vpop.f32.mrb[0].mxu0
    %428 = vmatprep.mubr.bf16.mxu0 0
    %429 = vmatmul.mubr.bf16.gmra.mrb[0].mxu0 %v256
    %v430 = vpop.f32.mrb[0].mxu0
    %v431 = vadd.f32 0.0, %v430
    %v432 = vpop.f32.mrb[0].mxu0
    %v433 = vpop.f32.mrb[0].mxu0
    %v434 = vadd.f32 0.0, %v433
    %v435 = vpop.f32.mrb[0].mxu0
    %436 = vmatprep.mubr.bf16.mxu0 0
    %437 = vmatmul.mubr.bf16.gmra.mrb[0].mxu0 %v257
    %v438 = vpop.f32.mrb[0].mxu0
    %v439 = vadd.f32 0.0, %v438
    %v440 = vpop.f32.mrb[0].mxu0
    %v441 = vpop.f32.mrb[0].mxu0
    %v442 = vadd.f32 0.0, %v441
    %v443 = vpop.f32.mrb[0].mxu0
    %444 = vmatprep.mubr.bf16.mxu0 0
    %445 = vmatmul.mubr.bf16.gmra.mrb[0].mxu0 %v258
    %v446 = vpop.f32.mrb[0].mxu0
    %v447 = vadd.f32 0.0, %v446
    %v448 = vpop.f32.mrb[0].mxu0
    %v449 = vpop.f32.mrb[0].mxu0
    %v450 = vadd.f32 0.0, %v449
    %v451 = vpop.f32.mrb[0].mxu0
    %452 = vmatprep.mubr.bf16.mxu0 0
    %453 = vmatmul.mubr.bf16.gmra.mrb[0].mxu0 %v259
    %v454 = vpop.f32.mrb[0].mxu0
    %v455 = vadd.f32 0.0, %v454
    %v456 = vpop.f32.mrb[0].mxu0
    %v457 = vpop.f32.mrb[0].mxu0
    %v458 = vadd.f32 0.0, %v457
    %v459 = vpop.f32.mrb[0].mxu0
    %460 = vmatprep.mubr.bf16.mxu0 0
    %461 = vmatmul.mubr.bf16.gmra.mrb[0].mxu0 %v260
    %v462 = vpop.f32.mrb[0].mxu0
    %v463 = vadd.f32 0.0, %v462
    %v464 = vpop.f32.mrb[0].mxu0
    %v465 = vpop.f32.mrb[0].mxu0
    %v466 = vadd.f32 0.0, %v465
    %v467 = vpop.f32.mrb[0].mxu0
    %468 = vmatprep.mubr.bf16.mxu0 0
    %469 = vmatmul.mubr.bf16.gmra.mrb[0].mxu0 %v261
    %v470 = vpop.f32.mrb[0].mxu0
    %v471 = vadd.f32 0.0, %v470
    %v472 = vpop.f32.mrb[0].mxu0
    %v473 = vpop.f32.mrb[0].mxu0
    %v474 = vadd.f32 0.0, %v473
    %v475 = vpop.f32.mrb[0].mxu0
    %476 = vmatprep.mubr.bf16.mxu0 0
    %477 = vmatmul.mubr.bf16.gmra.mrb[0].mxu0 %v262
    %v478 = vpop.f32.mrb[0].mxu0
    %v479 = vadd.f32 0.0, %v478
    %v480 = vpop.f32.mrb[0].mxu0
    %v481 = vpop.f32.mrb[0].mxu0
    %v482 = vadd.f32 0.0, %v481
    %v483 = vpop.f32.mrb[0].mxu0
    %484 = vmatprep.mubr.bf16.mxu0 0
    %485 = vmatmul.mubr.bf16.gmra.mrb[0].mxu0 %v263
    %v486 = vpop.f32.mrb[0].mxu0
    %v487 = vadd.f32 0.0, %v486
    %v488 = vpop.f32.mrb[0].mxu0
    %v489 = vpop.f32.mrb[0].mxu0
    %v490 = vadd.f32 0.0, %v489
    %v491 = vpop.f32.mrb[0].mxu0
    %492 = vmatprep.mubr.bf16.mxu0 0
    %493 = vmatmul.mubr.bf16.gmra.mrb[0].mxu0 %v264
    %v494 = vpop.f32.mrb[0].mxu0
    %v495 = vadd.f32 0.0, %v494
    %v496 = vpop.f32.mrb[0].mxu0
    %v497 = vpop.f32.mrb[0].mxu0
    %v498 = vadd.f32 0.0, %v497
    %v499 = vpop.f32.mrb[0].mxu0
    %500 = vmatprep.mubr.bf16.mxu0 0
    %501 = vmatmul.mubr.bf16.gmra.mrb[0].mxu0 %v265
    %v502 = vpop.f32.mrb[0].mxu0
    %v503 = vadd.f32 0.0, %v502
    %v504 = vpop.f32.mrb[0].mxu0
    %v505 = vpop.f32.mrb[0].mxu0
    %v506 = vadd.f32 0.0, %v505
    %v507 = vpop.f32.mrb[0].mxu0
    %508 = vmatprep.mubr.bf16.mxu0 0
    %509 = vmatmul.mubr.bf16.gmra.mrb[0].mxu0 %v266
    %v510 = vpop.f32.mrb[0].mxu0
    %v511 = vadd.f32 0.0, %v510
    %v512 = vpop.f32.mrb[0].mxu0
    %v513 = vpop.f32.mrb[0].mxu0
    %v514 = vadd.f32 0.0, %v513
    %v515 = vpop.f32.mrb[0].mxu0
    %516 = vmatprep.mubr.bf16.mxu0 0
    %517 = vmatmul.mubr.bf16.gmra.mrb[0].mxu0 %v267
    %v518 = vpop.f32.mrb[0].mxu0
    %v519 = vadd.f32 0.0, %v518
    %v520 = vpop.f32.mrb[0].mxu0
    %v521 = vpop.f32.mrb[0].mxu0
    %v522 = vadd.f32 0.0, %v521
    %v523 = vpop.f32.mrb[0].mxu0
    %524 = vmatprep.mubr.bf16.mxu0 0
    %525 = vmatmul.mubr.bf16.gmra.mrb[0].mxu0 %v268
    %v526 = vpop.f32.mrb[0].mxu0
    %v527 = vadd.f32 0.0, %v526
    %v528 = vpop.f32.mrb[0].mxu0
    %v529 = vpop.f32.mrb[0].mxu0
    %v530 = vadd.f32 0.0, %v529
    %v531 = vpop.f32.mrb[0].mxu0
    %532 = vmatprep.mubr.bf16.mxu0 0
    %533 = vmatmul.mubr.bf16.gmra.mrb[0].mxu0 %v269
    %v534 = vpop.f32.mrb[0].mxu0
    %v535 = vadd.f32 0.0, %v534
    %v536 = vpop.f32.mrb[0].mxu0
    %v537 = vpop.f32.mrb[0].mxu0
    %v538 = vadd.f32 0.0, %v537
    %v539 = vpop.f32.mrb[0].mxu0
    %540 = vmatprep.mubr.bf16.mxu0 0
    %541 = vmatmul.mubr.bf16.gmra.mrb[0].mxu0 %v270
    %v542 = vpop.f32.mrb[0].mxu0
    %v543 = vadd.f32 0.0, %v542
    %v544 = vpop.f32.mrb[0].mxu0
    %v545 = vpop.f32.mrb[0].mxu0
    %v546 = vadd.f32 0.0, %v545
    %v547 = vpop.f32.mrb[0].mxu0
    %548 = vmatprep.mubr.bf16.mxu0 0
    %549 = vmatmul.mubr.bf16.gmra.mrb[0].mxu0 %v271
    %v550 = vpop.f32.mrb[0].mxu0
    %v551 = vadd.f32 0.0, %v550
    %v552 = vpop.f32.mrb[0].mxu0
    %v553 = vpop.f32.mrb[0].mxu0
    %v554 = vadd.f32 0.0, %v553
    %v555 = vpop.f32.mrb[0].mxu0
    %556 = vmatprep.mubr.bf16.mxu0 0
    %557 = vmatmul.mubr.bf16.gmra.mrb[0].mxu0 %v272
    %v558 = vpop.f32.mrb[0].mxu0
    %v559 = vadd.f32 0.0, %v558
    %v560 = vpop.f32.mrb[0].mxu0
    %v561 = vpop.f32.mrb[0].mxu0
    %v562 = vadd.f32 0.0, %v561
    %v563 = vpop.f32.mrb[0].mxu0
    %564 = vmatprep.mubr.bf16.mxu0 0
    %565 = vmatmul.mubr.bf16.gmra.mrb[0].mxu0 %v273
    %v566 = vpop.f32.mrb[0].mxu0
    %v567 = vadd.f32 0.0, %v566
    %v568 = vpop.f32.mrb[0].mxu0
    %v569 = vpop.f32.mrb[0].mxu0
    %v570 = vadd.f32 0.0, %v569
    %v571 = vpop.f32.mrb[0].mxu0
    %572 = vmatprep.mubr.bf16.mxu0 0
    %573 = vmatmul.mubr.bf16.gmra.mrb[0].mxu0 %v274
    %v574 = vpop.f32.mrb[0].mxu0
    %v575 = vadd.f32 0.0, %v574
    %v576 = vpop.f32.mrb[0].mxu0
    %v577 = vpop.f32.mrb[0].mxu0
    %v578 = vadd.f32 0.0, %v577
    %v579 = vpop.f32.mrb[0].mxu0
    %580 = vmatprep.mubr.bf16.mxu0 0
    %581 = vmatmul.mubr.bf16.gmra.mrb[0].mxu0 %v275
    %v582 = vpop.f32.mrb[0].mxu0
    %v583 = vadd.f32 0.0, %v582
    %v584 = vpop.f32.mrb[0].mxu0
    %v585 = vpop.f32.mrb[0].mxu0
    %v586 = vadd.f32 0.0, %v585
    %v587 = vpop.f32.mrb[0].mxu0
    %588 = vmatprep.mubr.bf16.mxu0 0
    %589 = vmatmul.mubr.bf16.gmra.mrb[0].mxu0 %v276
    %v590 = vpop.f32.mrb[0].mxu0
    %v591 = vadd.f32 0.0, %v590
    %v592 = vpop.f32.mrb[0].mxu0
    %v593 = vpop.f32.mrb[0].mxu0
    %v594 = vadd.f32 0.0, %v593
    %v595 = vpop.f32.mrb[0].mxu0
    %596 = vmatprep.mubr.bf16.mxu0 0
    %597 = vmatmul.mubr.bf16.gmra.mrb[0].mxu0 %v277
    %v598 = vpop.f32.mrb[0].mxu0
    %v599 = vadd.f32 0.0, %v598
    %v600 = vpop.f32.mrb[0].mxu0
    %v601 = vpop.f32.mrb[0].mxu0
    %v602 = vadd.f32 0.0, %v601
    %v603 = vpop.f32.mrb[0].mxu0
    %604 = vmatprep.mubr.bf16.mxu0 0
    %605 = vmatmul.mubr.bf16.gmra.mrb[0].mxu0 %v278
    %v606 = vpop.f32.mrb[0].mxu0
    %v607 = vadd.f32 0.0, %v606
    %v608 = vpop.f32.mrb[0].mxu0
    %v609 = vpop.f32.mrb[0].mxu0
    %v610 = vadd.f32 0.0, %v609
    %v611 = vpop.f32.mrb[0].mxu0
    %612 = vmatprep.mubr.bf16.mxu0 0
    %613 = vmatmul.mubr.bf16.gmra.mrb[0].mxu0 %v279
    %v614 = vpop.f32.mrb[0].mxu0
    %v615 = vadd.f32 0.0, %v614
    %v616 = vpop.f32.mrb[0].mxu0
    %v617 = vpop.f32.mrb[0].mxu0
    %v618 = vadd.f32 0.0, %v617
    %v619 = vpop.f32.mrb[0].mxu0
    %620 = vmatprep.mubr.bf16.mxu0 0
    %621 = vmatmul.mubr.bf16.gmra.mrb[0].mxu0 %v280
    %v622 = vpop.f32.mrb[0].mxu0
    %v623 = vadd.f32 0.0, %v622
    %v624 = vpop.f32.mrb[0].mxu0
    %v625 = vpop.f32.mrb[0].mxu0
    %v626 = vadd.f32 0.0, %v625
    %v627 = vpop.f32.mrb[0].mxu0
    %628 = vmatprep.mubr.bf16.mxu0 0
    %629 = vmatmul.mubr.bf16.gmra.mrb[0].mxu0 %v281
    %v630 = vpop.f32.mrb[0].mxu0
    %v631 = vadd.f32 0.0, %v630
    %v632 = vpop.f32.mrb[0].mxu0
    %v633 = vpop.f32.mrb[0].mxu0
    %v634 = vadd.f32 0.0, %v633
    %v635 = vpop.f32.mrb[0].mxu0
    %636 = vmatprep.mubr.bf16.mxu0 0
    %637 = vmatmul.mubr.bf16.gmra.mrb[0].mxu0 %v282
    %v638 = vpop.f32.mrb[0].mxu0
    %v639 = vadd.f32 0.0, %v638
    %v640 = vpop.f32.mrb[0].mxu0
    %v641 = vpop.f32.mrb[0].mxu0
    %v642 = vadd.f32 0.0, %v641
    %v643 = vpop.f32.mrb[0].mxu0
    %644 = vmatprep.mubr.bf16.mxu0 0
    %645 = vmatmul.mubr.bf16.gmra.mrb[0].mxu0 %v283
    %v646 = vpop.f32.mrb[0].mxu0
    %v647 = vadd.f32 0.0, %v646
    %v648 = vpop.f32.mrb[0].mxu0
    %v649 = vpop.f32.mrb[0].mxu0
    %v650 = vadd.f32 0.0, %v649
    %v651 = vpop.f32.mrb[0].mxu0
    %652 = vdwg.mxu0
    %v653 = vpack.c.bf16 %v402, %v399
    %v654 = vpack.c.bf16 %v410, %v407
    %v655 = vpack.c.bf16 %v418, %v415
    %v656 = vpack.c.bf16 %v426, %v423
    %v657 = vpack.c.bf16 %v434, %v431
    %v658 = vpack.c.bf16 %v442, %v439
    %v659 = vpack.c.bf16 %v450, %v447
    %v660 = vpack.c.bf16 %v458, %v455
    %v661 = vpack.c.bf16 %v466, %v463
    %v662 = vpack.c.bf16 %v474, %v471
    %v663 = vpack.c.bf16 %v482, %v479
    %v664 = vpack.c.bf16 %v490, %v487
    %v665 = vpack.c.bf16 %v498, %v495
    %v666 = vpack.c.bf16 %v506, %v503
    %v667 = vpack.c.bf16 %v514, %v511
    %v668 = vpack.c.bf16 %v522, %v519
    %v669 = vpack.c.bf16 %v530, %v527
    %v670 = vpack.c.bf16 %v538, %v535
    %v671 = vpack.c.bf16 %v546, %v543
    %v672 = vpack.c.bf16 %v554, %v551
    %v673 = vpack.c.bf16 %v562, %v559
    %v674 = vpack.c.bf16 %v570, %v567
    %v675 = vpack.c.bf16 %v578, %v575
    %v676 = vpack.c.bf16 %v586, %v583
    %v677 = vpack.c.bf16 %v594, %v591
    %v678 = vpack.c.bf16 %v602, %v599
    %v679 = vpack.c.bf16 %v610, %v607
    %v680 = vpack.c.bf16 %v618, %v615
    %v681 = vpack.c.bf16 %v626, %v623
    %v682 = vpack.c.bf16 %v634, %v631
    %v683 = vpack.c.bf16 %v642, %v639
    %v684 = vpack.c.bf16 %v650, %v647
    %v717 = vunpack.c.l.b16 %v653
    %v718 = vunpack.c.h.b16 %v653
    %v719 = vunpack.c.l.b16 %v654
    %v720 = vunpack.c.h.b16 %v654
    %v721 = vunpack.c.l.b16 %v655
    %v722 = vunpack.c.h.b16 %v655
    %v723 = vunpack.c.l.b16 %v656
    %v724 = vunpack.c.h.b16 %v656
    %v725 = vunpack.c.l.b16 %v657
    %v726 = vunpack.c.h.b16 %v657
    %v727 = vunpack.c.l.b16 %v658
    %v728 = vunpack.c.h.b16 %v658
    %v729 = vunpack.c.l.b16 %v659
    %v730 = vunpack.c.h.b16 %v659
    %v731 = vunpack.c.l.b16 %v660
    %v732 = vunpack.c.h.b16 %v660
    %v733 = vunpack.c.l.b16 %v661
    %v734 = vunpack.c.h.b16 %v661
    %v735 = vunpack.c.l.b16 %v662
    %v736 = vunpack.c.h.b16 %v662
    %v737 = vunpack.c.l.b16 %v663
    %v738 = vunpack.c.h.b16 %v663
    %v739 = vunpack.c.l.b16 %v664
    %v740 = vunpack.c.h.b16 %v664
    %v741 = vunpack.c.l.b16 %v665
    %v742 = vunpack.c.h.b16 %v665
    %v743 = vunpack.c.l.b16 %v666
    %v744 = vunpack.c.h.b16 %v666
    %v745 = vunpack.c.l.b16 %v667
    %v746 = vunpack.c.h.b16 %v667
    %v747 = vunpack.c.l.b16 %v668
    %v748 = vunpack.c.h.b16 %v668
    %v749 = vunpack.c.l.b16 %v669
    %v750 = vunpack.c.h.b16 %v669
    %v751 = vunpack.c.l.b16 %v670
    %v752 = vunpack.c.h.b16 %v670
    %v753 = vunpack.c.l.b16 %v671
    %v754 = vunpack.c.h.b16 %v671
    %v755 = vunpack.c.l.b16 %v672
    %v756 = vunpack.c.h.b16 %v672
    %v757 = vunpack.c.l.b16 %v673
    %v758 = vunpack.c.h.b16 %v673
    %v759 = vunpack.c.l.b16 %v674
    %v760 = vunpack.c.h.b16 %v674
    %v761 = vunpack.c.l.b16 %v675
    %v762 = vunpack.c.h.b16 %v675
    %v763 = vunpack.c.l.b16 %v676
    %v764 = vunpack.c.h.b16 %v676
    %v765 = vunpack.c.l.b16 %v677
    %v766 = vunpack.c.h.b16 %v677
    %v767 = vunpack.c.l.b16 %v678
    %v768 = vunpack.c.h.b16 %v678
    %v769 = vunpack.c.l.b16 %v679
    %v770 = vunpack.c.h.b16 %v679
    %v771 = vunpack.c.l.b16 %v680
    %v772 = vunpack.c.h.b16 %v680
    %v773 = vunpack.c.l.b16 %v681
    %v774 = vunpack.c.h.b16 %v681
    %v775 = vunpack.c.l.b16 %v682
    %v776 = vunpack.c.h.b16 %v682
    %v777 = vunpack.c.l.b16 %v683
    %v778 = vunpack.c.h.b16 %v683
    %v779 = vunpack.c.l.b16 %v684
    %v780 = vunpack.c.h.b16 %v684
    %v781 = vpack.c.b16 %v717, %v717
    %v782 = vpack.c.b16 %v718, %v718
    %v783 = vpack.c.b16 %v719, %v719
    %v784 = vpack.c.b16 %v720, %v720
    %v785 = vpack.c.b16 %v721, %v721
    %v786 = vpack.c.b16 %v722, %v722
    %v787 = vpack.c.b16 %v723, %v723
    %v788 = vpack.c.b16 %v724, %v724
    %v789 = vpack.c.b16 %v725, %v725
    %v790 = vpack.c.b16 %v726, %v726
    %v791 = vpack.c.b16 %v727, %v727
    %v792 = vpack.c.b16 %v728, %v728
    %v793 = vpack.c.b16 %v729, %v729
    %v794 = vpack.c.b16 %v730, %v730
    %v795 = vpack.c.b16 %v731, %v731
    %v796 = vpack.c.b16 %v732, %v732
    %v797 = vpack.c.b16 %v733, %v733
    %v798 = vpack.c.b16 %v734, %v734
    %v799 = vpack.c.b16 %v735, %v735
    %v800 = vpack.c.b16 %v736, %v736
    %v801 = vpack.c.b16 %v737, %v737
    %v802 = vpack.c.b16 %v738, %v738
    %v803 = vpack.c.b16 %v739, %v739
    %v804 = vpack.c.b16 %v740, %v740
    %v805 = vpack.c.b16 %v741, %v741
    %v806 = vpack.c.b16 %v742, %v742
    %v807 = vpack.c.b16 %v743, %v743
    %v808 = vpack.c.b16 %v744, %v744
    %v809 = vpack.c.b16 %v745, %v745
    %v810 = vpack.c.b16 %v746, %v746
    %v811 = vpack.c.b16 %v747, %v747
    %v812 = vpack.c.b16 %v748, %v748
    %v813 = vpack.c.b16 %v749, %v749
    %v814 = vpack.c.b16 %v750, %v750
    %v815 = vpack.c.b16 %v751, %v751
    %v816 = vpack.c.b16 %v752, %v752
    %v817 = vpack.c.b16 %v753, %v753
    %v818 = vpack.c.b16 %v754, %v754
    %v819 = vpack.c.b16 %v755, %v755
    %v820 = vpack.c.b16 %v756, %v756
    %v821 = vpack.c.b16 %v757, %v757
    %v822 = vpack.c.b16 %v758, %v758
    %v823 = vpack.c.b16 %v759, %v759
    %v824 = vpack.c.b16 %v760, %v760
    %v825 = vpack.c.b16 %v761, %v761
    %v826 = vpack.c.b16 %v762, %v762
    %v827 = vpack.c.b16 %v763, %v763
    %v828 = vpack.c.b16 %v764, %v764
    %v829 = vpack.c.b16 %v765, %v765
    %v830 = vpack.c.b16 %v766, %v766
    %v831 = vpack.c.b16 %v767, %v767
    %v832 = vpack.c.b16 %v768, %v768
    %v833 = vpack.c.b16 %v769, %v769
    %v834 = vpack.c.b16 %v770, %v770
    %v835 = vpack.c.b16 %v771, %v771
    %v836 = vpack.c.b16 %v772, %v772
    %v837 = vpack.c.b16 %v773, %v773
    %v838 = vpack.c.b16 %v774, %v774
    %v839 = vpack.c.b16 %v775, %v775
    %v840 = vpack.c.b16 %v776, %v776
    %v841 = vpack.c.b16 %v777, %v777
    %v842 = vpack.c.b16 %v778, %v778
    %v843 = vpack.c.b16 %v779, %v779
    %v844 = vpack.c.b16 %v780, %v780
    %909 = vst [vmem:[#allocation7] sm:$0xf] %v781
    %910 = vst [vmem:[#allocation7 + $0x4] sm:$0xf] %v782
    %911 = vst [vmem:[#allocation7 + $0x8] sm:$0xf] %v783
    %912 = vst [vmem:[#allocation7 + $0xc] sm:$0xf] %v784
    %913 = vst [vmem:[#allocation7 + $0x10] sm:$0xf] %v785
    %914 = vst [vmem:[#allocation7 + $0x14] sm:$0xf] %v786
    %915 = vst [vmem:[#allocation7 + $0x18] sm:$0xf] %v787
    %916 = vst [vmem:[#allocation7 + $0x1c] sm:$0xf] %v788
    %917 = vst [vmem:[#allocation7 + $0x20] sm:$0xf] %v789
    %918 = vst [vmem:[#allocation7 + $0x24] sm:$0xf] %v790
    %919 = vst [vmem:[#allocation7 + $0x28] sm:$0xf] %v791
    %920 = vst [vmem:[#allocation7 + $0x2c] sm:$0xf] %v792
    %921 = vst [vmem:[#allocation7 + $0x30] sm:$0xf] %v793
    %922 = vst [vmem:[#allocation7 + $0x34] sm:$0xf] %v794
    %923 = vst [vmem:[#allocation7 + $0x38] sm:$0xf] %v795
    %924 = vst [vmem:[#allocation7 + $0x3c] sm:$0xf] %v796
    %925 = vst [vmem:[#allocation7 + $0x40] sm:$0xf] %v797
    %926 = vst [vmem:[#allocation7 + $0x44] sm:$0xf] %v798
    %927 = vst [vmem:[#allocation7 + $0x48] sm:$0xf] %v799
    %928 = vst [vmem:[#allocation7 + $0x4c] sm:$0xf] %v800
    %929 = vst [vmem:[#allocation7 + $0x50] sm:$0xf] %v801
    %930 = vst [vmem:[#allocation7 + $0x54] sm:$0xf] %v802
    %931 = vst [vmem:[#allocation7 + $0x58] sm:$0xf] %v803
    %932 = vst [vmem:[#allocation7 + $0x5c] sm:$0xf] %v804
    %933 = vst [vmem:[#allocation7 + $0x60] sm:$0xf] %v805
    %934 = vst [vmem:[#allocation7 + $0x64] sm:$0xf] %v806
    %935 = vst [vmem:[#allocation7 + $0x68] sm:$0xf] %v807
    %936 = vst [vmem:[#allocation7 + $0x6c] sm:$0xf] %v808
    %937 = vst [vmem:[#allocation7 + $0x70] sm:$0xf] %v809
    %938 = vst [vmem:[#allocation7 + $0x74] sm:$0xf] %v810
    %939 = vst [vmem:[#allocation7 + $0x78] sm:$0xf] %v811
    %940 = vst [vmem:[#allocation7 + $0x7c] sm:$0xf] %v812
    %941 = vst [vmem:[#allocation7 + $0x80] sm:$0xf] %v813
    %942 = vst [vmem:[#allocation7 + $0x84] sm:$0xf] %v814
    %943 = vst [vmem:[#allocation7 + $0x88] sm:$0xf] %v815
    %944 = vst [vmem:[#allocation7 + $0x8c] sm:$0xf] %v816
    %945 = vst [vmem:[#allocation7 + $0x90] sm:$0xf] %v817
    %946 = vst [vmem:[#allocation7 + $0x94] sm:$0xf] %v818
    %947 = vst [vmem:[#allocation7 + $0x98] sm:$0xf] %v819
    %948 = vst [vmem:[#allocation7 + $0x9c] sm:$0xf] %v820
    %949 = vst [vmem:[#allocation7 + $0xa0] sm:$0xf] %v821
    %950 = vst [vmem:[#allocation7 + $0xa4] sm:$0xf] %v822
    %951 = vst [vmem:[#allocation7 + $0xa8] sm:$0xf] %v823
    %952 = vst [vmem:[#allocation7 + $0xac] sm:$0xf] %v824
    %953 = vst [vmem:[#allocation7 + $0xb0] sm:$0xf] %v825
    %954 = vst [vmem:[#allocation7 + $0xb4] sm:$0xf] %v826
    %955 = vst [vmem:[#allocation7 + $0xb8] sm:$0xf] %v827
    %956 = vst [vmem:[#allocation7 + $0xbc] sm:$0xf] %v828
    %957 = vst [vmem:[#allocation7 + $0xc0] sm:$0xf] %v829
    %958 = vst [vmem:[#allocation7 + $0xc4] sm:$0xf] %v830
    %959 = vst [vmem:[#allocation7 + $0xc8] sm:$0xf] %v831
    %960 = vst [vmem:[#allocation7 + $0xcc] sm:$0xf] %v832
    %961 = vst [vmem:[#allocation7 + $0xd0] sm:$0xf] %v833
    %962 = vst [vmem:[#allocation7 + $0xd4] sm:$0xf] %v834
    %963 = vst [vmem:[#allocation7 + $0xd8] sm:$0xf] %v835
    %964 = vst [vmem:[#allocation7 + $0xdc] sm:$0xf] %v836
    %965 = vst [vmem:[#allocation7 + $0xe0] sm:$0xf] %v837
    %966 = vst [vmem:[#allocation7 + $0xe4] sm:$0xf] %v838
    %967 = vst [vmem:[#allocation7 + $0xe8] sm:$0xf] %v839
    %968 = vst [vmem:[#allocation7 + $0xec] sm:$0xf] %v840
    %969 = vst [vmem:[#allocation7 + $0xf0] sm:$0xf] %v841
    %970 = vst [vmem:[#allocation7 + $0xf4] sm:$0xf] %v842
    %971 = vst [vmem:[#allocation7 + $0xf8] sm:$0xf] %v843
    %972 = vst [vmem:[#allocation7 + $0xfc] sm:$0xf] %v844
    %v973 = vadd.f32 %v399, %v402
    %v974 = vadd.f32 %v973, %v407
    %v975 = vadd.f32 %v974, %v410
    %v976 = vadd.f32 %v975, %v415
    %v977 = vadd.f32 %v976, %v418
    %v978 = vadd.f32 %v977, %v423
    %v979 = vadd.f32 %v978, %v426
    %v980 = vadd.f32 %v979, %v431
    %v981 = vadd.f32 %v980, %v434
    %v982 = vadd.f32 %v981, %v439
    %v983 = vadd.f32 %v982, %v442
    %v984 = vadd.f32 %v983, %v447
    %v985 = vadd.f32 %v984, %v450
    %v986 = vadd.f32 %v985, %v455
    %v987 = vadd.f32 %v986, %v458
    %v988 = vadd.f32 %v987, %v463
    %v989 = vadd.f32 %v988, %v466
    %v990 = vadd.f32 %v989, %v471
    %v991 = vadd.f32 %v990, %v474
    %v992 = vadd.f32 %v991, %v479
    %v993 = vadd.f32 %v992, %v482
    %v994 = vadd.f32 %v993, %v487
    %v995 = vadd.f32 %v994, %v490
    %v996 = vadd.f32 %v995, %v495
    %v997 = vadd.f32 %v996, %v498
    %v998 = vadd.f32 %v997, %v503
    %v999 = vadd.f32 %v998, %v506
    %v1000 = vadd.f32 %v999, %v511
    %v1001 = vadd.f32 %v1000, %v514
    %v1002 = vadd.f32 %v1001, %v519
    %v1003 = vadd.f32 %v1002, %v522
    %v1004 = vadd.f32 %v1003, %v527
    %v1005 = vadd.f32 %v1004, %v530
    %v1006 = vadd.f32 %v1005, %v535
    %v1007 = vadd.f32 %v1006, %v538
    %v1008 = vadd.f32 %v1007, %v543
    %v1009 = vadd.f32 %v1008, %v546
    %v1010 = vadd.f32 %v1009, %v551
    %v1011 = vadd.f32 %v1010, %v554
    %v1012 = vadd.f32 %v1011, %v559
    %v1013 = vadd.f32 %v1012, %v562
    %v1014 = vadd.f32 %v1013, %v567
    %v1015 = vadd.f32 %v1014, %v570
    %v1016 = vadd.f32 %v1015, %v575
    %v1017 = vadd.f32 %v1016, %v578
    %v1018 = vadd.f32 %v1017, %v583
    %v1019 = vadd.f32 %v1018, %v586
    %v1020 = vadd.f32 %v1019, %v591
    %v1021 = vadd.f32 %v1020, %v594
    %v1022 = vadd.f32 %v1021, %v599
    %v1023 = vadd.f32 %v1022, %v602
    %v1024 = vadd.f32 %v1023, %v607
    %v1025 = vadd.f32 %v1024, %v610
    %v1026 = vadd.f32 %v1025, %v615
    %v1027 = vadd.f32 %v1026, %v618
    %v1028 = vadd.f32 %v1027, %v623
    %v1029 = vadd.f32 %v1028, %v626
    %v1030 = vadd.f32 %v1029, %v631
    %v1031 = vadd.f32 %v1030, %v634
    %v1032 = vadd.f32 %v1031, %v639
    %v1033 = vadd.f32 %v1032, %v642
    %v1034 = vadd.f32 %v1033, %v647
    %v1035 = vadd.f32 %v1034, %v650
    %v1036 = vrot.slane %v1035, 4
    %v1037 = vadd.f32 %v1035, %v1036
    %v1038 = vrot.slane %v1037, 2
    %v1039 = vadd.f32 %v1037, %v1038
    %v1040 = vrot.slane %v1039, 1
    %v1041 = vadd.f32 %v1039, %v1040
    %v1042 = vmul.f32 %v399, %v399
    %v1043 = vmul.f32 %v402, %v402
    %v1044 = vmul.f32 %v407, %v407
    %v1045 = vmul.f32 %v410, %v410
    %v1046 = vmul.f32 %v415, %v415
    %v1047 = vmul.f32 %v418, %v418
    %v1048 = vmul.f32 %v423, %v423
    %v1049 = vmul.f32 %v426, %v426
    %v1050 = vmul.f32 %v431, %v431
    %v1051 = vmul.f32 %v434, %v434
    %v1052 = vmul.f32 %v439, %v439
    %v1053 = vmul.f32 %v442, %v442
    %v1054 = vmul.f32 %v447, %v447
    %v1055 = vmul.f32 %v450, %v450
    %v1056 = vmul.f32 %v455, %v455
    %v1057 = vmul.f32 %v458, %v458
    %v1058 = vmul.f32 %v463, %v463
    %v1059 = vmul.f32 %v466, %v466
    %v1060 = vmul.f32 %v471, %v471
    %v1061 = vmul.f32 %v474, %v474
    %v1062 = vmul.f32 %v479, %v479
    %v1063 = vmul.f32 %v482, %v482
    %v1064 = vmul.f32 %v487, %v487
    %v1065 = vmul.f32 %v490, %v490
    %v1066 = vmul.f32 %v495, %v495
    %v1067 = vmul.f32 %v498, %v498
    %v1068 = vmul.f32 %v503, %v503
    %v1069 = vmul.f32 %v506, %v506
    %v1070 = vmul.f32 %v511, %v511
    %v1071 = vmul.f32 %v514, %v514
    %v1072 = vmul.f32 %v519, %v519
    %v1073 = vmul.f32 %v522, %v522
    %v1074 = vmul.f32 %v527, %v527
    %v1075 = vmul.f32 %v530, %v530
    %v1076 = vmul.f32 %v535, %v535
    %v1077 = vmul.f32 %v538, %v538
    %v1078 = vmul.f32 %v543, %v543
    %v1079 = vmul.f32 %v546, %v546
    %v1080 = vmul.f32 %v551, %v551
    %v1081 = vmul.f32 %v554, %v554
    %v1082 = vmul.f32 %v559, %v559
    %v1083 = vmul.f32 %v562, %v562
    %v1084 = vmul.f32 %v567, %v567
    %v1085 = vmul.f32 %v570, %v570
    %v1086 = vmul.f32 %v575, %v575
    %v1087 = vmul.f32 %v578, %v578
    %v1088 = vmul.f32 %v583, %v583
    %v1089 = vmul.f32 %v586, %v586
    %v1090 = vmul.f32 %v591, %v591
    %v1091 = vmul.f32 %v594, %v594
    %v1092 = vmul.f32 %v599, %v599
    %v1093 = vmul.f32 %v602, %v602
    %v1094 = vmul.f32 %v607, %v607
    %v1095 = vmul.f32 %v610, %v610
    %v1096 = vmul.f32 %v615, %v615
    %v1097 = vmul.f32 %v618, %v618
    %v1098 = vmul.f32 %v623, %v623
    %v1099 = vmul.f32 %v626, %v626
    %v1100 = vmul.f32 %v631, %v631
    %v1101 = vmul.f32 %v634, %v634
    %v1102 = vmul.f32 %v639, %v639
    %v1103 = vmul.f32 %v642, %v642
    %v1104 = vmul.f32 %v647, %v647
    %v1105 = vmul.f32 %v650, %v650
    %v1106 = vadd.f32 %v1042, %v1043
    %v1107 = vadd.f32 %v1106, %v1044
    %v1108 = vadd.f32 %v1107, %v1045
    %v1109 = vadd.f32 %v1108, %v1046
    %v1110 = vadd.f32 %v1109, %v1047
    %v1111 = vadd.f32 %v1110, %v1048
    %v1112 = vadd.f32 %v1111, %v1049
    %v1113 = vadd.f32 %v1112, %v1050
    %v1114 = vadd.f32 %v1113, %v1051
    %v1115 = vadd.f32 %v1114, %v1052
    %v1116 = vadd.f32 %v1115, %v1053
    %v1117 = vadd.f32 %v1116, %v1054
    %v1118 = vadd.f32 %v1117, %v1055
    %v1119 = vadd.f32 %v1118, %v1056
    %v1120 = vadd.f32 %v1119, %v1057
    %v1121 = vadd.f32 %v1120, %v1058
    %v1122 = vadd.f32 %v1121, %v1059
    %v1123 = vadd.f32 %v1122, %v1060
    %v1124 = vadd.f32 %v1123, %v1061
    %v1125 = vadd.f32 %v1124, %v1062
    %v1126 = vadd.f32 %v1125, %v1063
    %v1127 = vadd.f32 %v1126, %v1064
    %v1128 = vadd.f32 %v1127, %v1065
    %v1129 = vadd.f32 %v1128, %v1066
    %v1130 = vadd.f32 %v1129, %v1067
    %v1131 = vadd.f32 %v1130, %v1068
    %v1132 = vadd.f32 %v1131, %v1069
    %v1133 = vadd.f32 %v1132, %v1070
    %v1134 = vadd.f32 %v1133, %v1071
    %v1135 = vadd.f32 %v1134, %v1072
    %v1136 = vadd.f32 %v1135, %v1073
    %v1137 = vadd.f32 %v1136, %v1074
    %v1138 = vadd.f32 %v1137, %v1075
    %v1139 = vadd.f32 %v1138, %v1076
    %v1140 = vadd.f32 %v1139, %v1077
    %v1141 = vadd.f32 %v1140, %v1078
    %v1142 = vadd.f32 %v1141, %v1079
    %v1143 = vadd.f32 %v1142, %v1080
    %v1144 = vadd.f32 %v1143, %v1081
    %v1145 = vadd.f32 %v1144, %v1082
    %v1146 = vadd.f32 %v1145, %v1083
    %v1147 = vadd.f32 %v1146, %v1084
    %v1148 = vadd.f32 %v1147, %v1085
    %v1149 = vadd.f32 %v1148, %v1086
    %v1150 = vadd.f32 %v1149, %v1087
    %v1151 = vadd.f32 %v1150, %v1088
    %v1152 = vadd.f32 %v1151, %v1089
    %v1153 = vadd.f32 %v1152, %v1090
    %v1154 = vadd.f32 %v1153, %v1091
    %v1155 = vadd.f32 %v1154, %v1092
    %v1156 = vadd.f32 %v1155, %v1093
    %v1157 = vadd.f32 %v1156, %v1094
    %v1158 = vadd.f32 %v1157, %v1095
    %v1159 = vadd.f32 %v1158, %v1096
    %v1160 = vadd.f32 %v1159, %v1097
    %v1161 = vadd.f32 %v1160, %v1098
    %v1162 = vadd.f32 %v1161, %v1099
    %v1163 = vadd.f32 %v1162, %v1100
    %v1164 = vadd.f32 %v1163, %v1101
    %v1165 = vadd.f32 %v1164, %v1102
    %v1166 = vadd.f32 %v1165, %v1103
    %v1167 = vadd.f32 %v1166, %v1104
    %v1168 = vadd.f32 %v1167, %v1105
    %v1169 = vrot.slane %v1168, 4
    %v1170 = vadd.f32 %v1168, %v1169
    %v1171 = vrot.slane %v1170, 2
    %v1172 = vadd.f32 %v1170, %v1171
    %v1173 = vrot.slane %v1172, 1
    %v1174 = vadd.f32 %v1172, %v1173
    %v1175 = vlaneseq
    %v1176 = vshrl.u32 %v1175, 7
    %vm1177 = vcmp.eq.s32.totalorder %v1176, 0
    %vm1178 = vcmp.eq.s32.totalorder %v1176, 1
    %v1179 = vsel %vm1178, %v1174, 0.0
    %v1180 = vsel %vm1177, %v1041, %v1179
    %1181 = vst [vmem:[#allocation8] sm:$0xff] %v1180
    // Predicated region
    $region18: #{basic_block_forward.6} parent=1 // pred_check
      _
    $region19: #{basic_block_forward.6} parent=1 // pred_check_branch
      %1183 = sbr.rel (0) target = $region21
    $region20: #{basic_block_forward.6} parent=1 // pred_region
      %s1185 = ssub.s32 4096, 4096
      %1186 = vsyncadd [#allocation4], %s1185
      %s1187 = sshll.u32 [#allocation7], 4
      %s1188 = int_to_ptr.vmem [resolvable:$true] %s1187
      %1193 = dma.vmem_to_hbm [thread:$0]  %s1188, 4096, %s2, [#allocation4], 64, 64, 4
    $region21: #{basic_block_forward.6} parent=1 // pred_fallthru
      _
    // Predicated region
    $region22: #{basic_block_forward.6} parent=1 // pred_check
      _
    $region23: #{basic_block_forward.6} parent=1 // pred_check_branch
      %1195 = sbr.rel (0) target = $region25
    $region24: #{basic_block_forward.6} parent=1 // pred_region
      %s1197 = ssub.s32 128, 128
      %1198 = vsyncadd [#allocation9], %s1197
      %s1200 = sshll.u32 [#allocation8], 4
      %s1201 = int_to_ptr.vmem [resolvable:$true] %s1200
      %1203 = dma.vmem_to_hbm [thread:$0]  %s1201, 128, %s3, [#allocation9]
    $region25: #{basic_block_forward.6} parent=1 // pred_fallthru
      _
    // Predicated region
    $region26: #{basic_block_forward.6} parent=1 // pred_check
      _
    $region27: #{basic_block_forward.6} parent=1 // pred_check_branch
      %1205 = sbr.rel (0) target = $region29
    $region28: #{basic_block_forward.6} parent=1 // pred_region
      %1206 = dma.done [#allocation4], 4096
    $region29: #{basic_block_forward.6} parent=1 // pred_fallthru
      _
    // Predicated region
    $region30: #{basic_block_forward.6} parent=1 // pred_check
      _
    $region31: #{basic_block_forward.6} parent=1 // pred_check_branch
      %1208 = sbr.rel (0) target = $region33
    $region32: #{basic_block_forward.6} parent=1 // pred_region
      %1209 = dma.done [#allocation9], 128
    $region33: #{basic_block_forward.6} parent=1 // pred_fallthru
      _
    %1210 = vsyncpa [#allocation3], 1
    %1211 = vsyncpa [#allocation6], 1
    %1212 = vsyncpa [#allocation4], 1
    %1213 = vsyncpa [#allocation9], 1

// kernel: basic_block_forward.7
$region0: #{basic_block_forward.7}
  #allocation0 [shape = 'u32[]', space=smem, size = 0x4, offset = 0x4, fixed_abs, tag = 'smem constant byte address 0x4 - core index']
  #allocation1 [shape = 'u32[144,128]{1,0:T(1,128)}', space=vmem, size = 0x12000, scoped, tag = 'internal scratch']
  %s0 = inlined_call_operand.hbm [shape: bf16[512,128], index: 0, kind: input, shape index: {}]
  %s1 = inlined_call_operand.hbm [shape: f32[1,128], index: 1, kind: input, shape index: {}]
  %s2 = inlined_call_operand.hbm [shape: f32[1,128], index: 2, kind: input, shape index: {}]
  %s3 = inlined_call_operand.hbm [shape: bf16[512,128], index: 3, kind: input, shape index: {}]
  %s4 = inlined_call_operand.hbm [shape: f32[1,128], index: 4, kind: input, shape index: {}]
  %s5 = inlined_call_operand.hbm [shape: f32[1,128], index: 5, kind: input, shape index: {}]
  %s6 = inlined_call_operand.hbm [shape: f32[512,128], index: 6, kind: output, shape index: {}]
  %s7 = sld [smem:[#allocation0]]
  $region58: #{basic_block_forward.7} parent=0
    _
  %s9 = ssub.s32 1, %s7
  %s10 = scalar_select 0, %s9, %s7
  $region1: #{basic_block_forward.7} parent=0
    #allocation2 [shape = 'u8[131072]{0}', space=vmem, size = 0x20000, scoped, tag = 'input window, operand 0, single buffered']
    #allocation3 [shape = 's32[1]{0}', space=sflag, size = 0x4, scoped, tag = 'scoped memory for basic_block_forward.7']
    #allocation4 [shape = 's32[1]{0}', space=sflag, size = 0x4, scoped, tag = 'scoped memory for basic_block_forward.7']
    #allocation5 [shape = 'u8[512]{0}', space=vmem, size = 0x400, scoped, tag = 'input window, operand 1, single buffered']
    #allocation6 [shape = 's32[1]{0}', space=sflag, size = 0x4, scoped, tag = 'scoped memory for basic_block_forward.7']
    #allocation7 [shape = 'u8[512]{0}', space=vmem, size = 0x400, scoped, tag = 'input window, operand 2, single buffered']
    #allocation8 [shape = 'u8[131072]{0}', space=vmem, size = 0x20000, scoped, tag = 'input window, operand 3, single buffered']
    #allocation9 [shape = 's32[1]{0}', space=sflag, size = 0x4, scoped, tag = 'scoped memory for basic_block_forward.7']
    #allocation10 [shape = 'u8[512]{0}', space=vmem, size = 0x400, scoped, tag = 'input window, operand 4, single buffered']
    #allocation11 [shape = 'u8[512]{0}', space=vmem, size = 0x400, scoped, tag = 'input window, operand 5, single buffered']
    #allocation12 [shape = 's32[1]{0}', space=sflag, size = 0x4, scoped, tag = 'scoped memory for basic_block_forward.7']
    #allocation13 [shape = 'u8[262144]{0}', space=vmem, size = 0x40000, scoped, tag = 'output window, operand 0, single buffered']
    %11 = vsyncpa [#allocation3], 0
    %12 = vsyncpa [#allocation6], 0
    %13 = vsyncpa [#allocation9], 0
    %14 = vsyncpa [#allocation12], 0
    %15 = vsyncpa [#allocation4], 0
    // Predicated region
    $region2: #{basic_block_forward.7} parent=1 // pred_check
      _
    $region3: #{basic_block_forward.7} parent=1 // pred_check_branch
      %17 = sbr.rel (0) target = $region5
    $region4: #{basic_block_forward.7} parent=1 // pred_region
      %s19 = ssub.s32 4096, 4096
      %20 = vsyncadd [#allocation3], %s19
      %s21 = sshll.u32 [#allocation2], 4
      %s22 = int_to_ptr.vmem [resolvable:$true] %s21
      %27 = dma.hbm_to_vmem [thread:$0]  %s0, 4096, %s22, [#allocation3], 64, 64, 4
    $region5: #{basic_block_forward.7} parent=1 // pred_fallthru
      _
    // Predicated region
    $region6: #{basic_block_forward.7} parent=1 // pred_check
      _
    $region7: #{basic_block_forward.7} parent=1 // pred_check_branch
      %29 = sbr.rel (0) target = $region9
    $region8: #{basic_block_forward.7} parent=1 // pred_region
      %s31 = ssub.s32 16, 16
      %32 = vsyncadd [#allocation6], %s31
      %s34 = sshll.u32 [#allocation5], 4
      %s35 = int_to_ptr.vmem [resolvable:$true] %s34
      %37 = dma.hbm_to_vmem [thread:$0]  %s1, 16, %s35, [#allocation6]
    $region9: #{basic_block_forward.7} parent=1 // pred_fallthru
      _
    // Predicated region
    $region10: #{basic_block_forward.7} parent=1 // pred_check
      _
    $region11: #{basic_block_forward.7} parent=1 // pred_check_branch
      %39 = sbr.rel (0) target = $region13
    $region12: #{basic_block_forward.7} parent=1 // pred_region
      %s41 = ssub.s32 16, 16
      %42 = vsyncadd [#allocation6], %s41
      %s44 = sshll.u32 [#allocation7], 4
      %s45 = int_to_ptr.vmem [resolvable:$true] %s44
      %47 = dma.hbm_to_vmem [thread:$0]  %s2, 16, %s45, [#allocation6]
    $region13: #{basic_block_forward.7} parent=1 // pred_fallthru
      _
    // Predicated region
    $region14: #{basic_block_forward.7} parent=1 // pred_check
      _
    $region15: #{basic_block_forward.7} parent=1 // pred_check_branch
      %49 = sbr.rel (0) target = $region17
    $region16: #{basic_block_forward.7} parent=1 // pred_region
      %s51 = ssub.s32 4096, 4096
      %52 = vsyncadd [#allocation9], %s51
      %s53 = sshll.u32 [#allocation8], 4
      %s54 = int_to_ptr.vmem [resolvable:$true] %s53
      %59 = dma.hbm_to_vmem [thread:$0]  %s3, 4096, %s54, [#allocation9], 64, 64, 4
    $region17: #{basic_block_forward.7} parent=1 // pred_fallthru
      _
    // Predicated region
    $region18: #{basic_block_forward.7} parent=1 // pred_check
      _
    $region19: #{basic_block_forward.7} parent=1 // pred_check_branch
      %61 = sbr.rel (0) target = $region21
    $region20: #{basic_block_forward.7} parent=1 // pred_region
      %s63 = ssub.s32 16, 16
      %64 = vsyncadd [#allocation9], %s63
      %s66 = sshll.u32 [#allocation10], 4
      %s67 = int_to_ptr.vmem [resolvable:$true] %s66
      %69 = dma.hbm_to_vmem [thread:$0]  %s4, 16, %s67, [#allocation9]
    $region21: #{basic_block_forward.7} parent=1 // pred_fallthru
      _
    // Predicated region
    $region22: #{basic_block_forward.7} parent=1 // pred_check
      _
    $region23: #{basic_block_forward.7} parent=1 // pred_check_branch
      %71 = sbr.rel (0) target = $region25
    $region24: #{basic_block_forward.7} parent=1 // pred_region
      %s73 = ssub.s32 16, 16
      %74 = vsyncadd [#allocation12], %s73
      %s76 = sshll.u32 [#allocation11], 4
      %s77 = int_to_ptr.vmem [resolvable:$true] %s76
      %79 = dma.hbm_to_vmem [thread:$0]  %s5, 16, %s77, [#allocation12]
    $region25: #{basic_block_forward.7} parent=1 // pred_fallthru
      _
    // Predicated region
    $region26: #{basic_block_forward.7} parent=1 // pred_check
      _
    $region27: #{basic_block_forward.7} parent=1 // pred_check_branch
      %81 = sbr.rel (0) target = $region29
    $region28: #{basic_block_forward.7} parent=1 // pred_region
      %82 = dma.done [#allocation3], 4096
    $region29: #{basic_block_forward.7} parent=1 // pred_fallthru
      _
    // Predicated region
    $region30: #{basic_block_forward.7} parent=1 // pred_check
      _
    $region31: #{basic_block_forward.7} parent=1 // pred_check_branch
      %84 = sbr.rel (0) target = $region33
    $region32: #{basic_block_forward.7} parent=1 // pred_region
      %85 = dma.done [#allocation6], 16
    $region33: #{basic_block_forward.7} parent=1 // pred_fallthru
      _
    // Predicated region
    $region34: #{basic_block_forward.7} parent=1 // pred_check
      _
    $region35: #{basic_block_forward.7} parent=1 // pred_check_branch
      %87 = sbr.rel (0) target = $region37
    $region36: #{basic_block_forward.7} parent=1 // pred_region
      %88 = dma.done [#allocation6], 16
    $region37: #{basic_block_forward.7} parent=1 // pred_fallthru
      _
    // Predicated region
    $region38: #{basic_block_forward.7} parent=1 // pred_check
      _
    $region39: #{basic_block_forward.7} parent=1 // pred_check_branch
      %90 = sbr.rel (0) target = $region41
    $region40: #{basic_block_forward.7} parent=1 // pred_region
      %91 = dma.done [#allocation9], 4096
    $region41: #{basic_block_forward.7} parent=1 // pred_fallthru
      _
    // Predicated region
    $region42: #{basic_block_forward.7} parent=1 // pred_check
      _
    $region43: #{basic_block_forward.7} parent=1 // pred_check_branch
      %93 = sbr.rel (0) target = $region45
    $region44: #{basic_block_forward.7} parent=1 // pred_region
      %94 = dma.done [#allocation9], 16
    $region45: #{basic_block_forward.7} parent=1 // pred_fallthru
      _
    // Predicated region
    $region46: #{basic_block_forward.7} parent=1 // pred_check
      _
    $region47: #{basic_block_forward.7} parent=1 // pred_check_branch
      %96 = sbr.rel (0) target = $region49
    $region48: #{basic_block_forward.7} parent=1 // pred_region
      %97 = dma.done [#allocation12], 16
    $region49: #{basic_block_forward.7} parent=1 // pred_fallthru
      _
    %v98 = vld [vmem:[#allocation8] sm:$0xf]
    %v99 = vld [vmem:[#allocation8 + $0x4] sm:$0xf]
    %v100 = vld [vmem:[#allocation8 + $0x8] sm:$0xf]
    %v101 = vld [vmem:[#allocation8 + $0xc] sm:$0xf]
    %v102 = vld [vmem:[#allocation8 + $0x10] sm:$0xf]
    %v103 = vld [vmem:[#allocation8 + $0x14] sm:$0xf]
    %v104 = vld [vmem:[#allocation8 + $0x18] sm:$0xf]
    %v105 = vld [vmem:[#allocation8 + $0x1c] sm:$0xf]
    %v106 = vld [vmem:[#allocation8 + $0x20] sm:$0xf]
    %v107 = vld [vmem:[#allocation8 + $0x24] sm:$0xf]
    %v108 = vld [vmem:[#allocation8 + $0x28] sm:$0xf]
    %v109 = vld [vmem:[#allocation8 + $0x2c] sm:$0xf]
    %v110 = vld [vmem:[#allocation8 + $0x30] sm:$0xf]
    %v111 = vld [vmem:[#allocation8 + $0x34] sm:$0xf]
    %v112 = vld [vmem:[#allocation8 + $0x38] sm:$0xf]
    %v113 = vld [vmem:[#allocation8 + $0x3c] sm:$0xf]
    %v114 = vld [vmem:[#allocation8 + $0x40] sm:$0xf]
    %v115 = vld [vmem:[#allocation8 + $0x44] sm:$0xf]
    %v116 = vld [vmem:[#allocation8 + $0x48] sm:$0xf]
    %v117 = vld [vmem:[#allocation8 + $0x4c] sm:$0xf]
    %v118 = vld [vmem:[#allocation8 + $0x50] sm:$0xf]
    %v119 = vld [vmem:[#allocation8 + $0x54] sm:$0xf]
    %v120 = vld [vmem:[#allocation8 + $0x58] sm:$0xf]
    %v121 = vld [vmem:[#allocation8 + $0x5c] sm:$0xf]
    %v122 = vld [vmem:[#allocation8 + $0x60] sm:$0xf]
    %v123 = vld [vmem:[#allocation8 + $0x64] sm:$0xf]
    %v124 = vld [vmem:[#allocation8 + $0x68] sm:$0xf]
    %v125 = vld [vmem:[#allocation8 + $0x6c] sm:$0xf]
    %v126 = vld [vmem:[#allocation8 + $0x70] sm:$0xf]
    %v127 = vld [vmem:[#allocation8 + $0x74] sm:$0xf]
    %v128 = vld [vmem:[#allocation8 + $0x78] sm:$0xf]
    %v129 = vld [vmem:[#allocation8 + $0x7c] sm:$0xf]
    %v130 = vld [vmem:[#allocation8 + $0x80] sm:$0xf]
    %v131 = vld [vmem:[#allocation8 + $0x84] sm:$0xf]
    %v132 = vld [vmem:[#allocation8 + $0x88] sm:$0xf]
    %v133 = vld [vmem:[#allocation8 + $0x8c] sm:$0xf]
    %v134 = vld [vmem:[#allocation8 + $0x90] sm:$0xf]
    %v135 = vld [vmem:[#allocation8 + $0x94] sm:$0xf]
    %v136 = vld [vmem:[#allocation8 + $0x98] sm:$0xf]
    %v137 = vld [vmem:[#allocation8 + $0x9c] sm:$0xf]
    %v138 = vld [vmem:[#allocation8 + $0xa0] sm:$0xf]
    %v139 = vld [vmem:[#allocation8 + $0xa4] sm:$0xf]
    %v140 = vld [vmem:[#allocation8 + $0xa8] sm:$0xf]
    %v141 = vld [vmem:[#allocation8 + $0xac] sm:$0xf]
    %v142 = vld [vmem:[#allocation8 + $0xb0] sm:$0xf]
    %v143 = vld [vmem:[#allocation8 + $0xb4] sm:$0xf]
    %v144 = vld [vmem:[#allocation8 + $0xb8] sm:$0xf]
    %v145 = vld [vmem:[#allocation8 + $0xbc] sm:$0xf]
    %v146 = vld [vmem:[#allocation8 + $0xc0] sm:$0xf]
    %v147 = vld [vmem:[#allocation8 + $0xc4] sm:$0xf]
    %v148 = vld [vmem:[#allocation8 + $0xc8] sm:$0xf]
    %v149 = vld [vmem:[#allocation8 + $0xcc] sm:$0xf]
    %v150 = vld [vmem:[#allocation8 + $0xd0] sm:$0xf]
    %v151 = vld [vmem:[#allocation8 + $0xd4] sm:$0xf]
    %v152 = vld [vmem:[#allocation8 + $0xd8] sm:$0xf]
    %v153 = vld [vmem:[#allocation8 + $0xdc] sm:$0xf]
    %v154 = vld [vmem:[#allocation8 + $0xe0] sm:$0xf]
    %v155 = vld [vmem:[#allocation8 + $0xe4] sm:$0xf]
    %v156 = vld [vmem:[#allocation8 + $0xe8] sm:$0xf]
    %v157 = vld [vmem:[#allocation8 + $0xec] sm:$0xf]
    %v158 = vld [vmem:[#allocation8 + $0xf0] sm:$0xf]
    %v159 = vld [vmem:[#allocation8 + $0xf4] sm:$0xf]
    %v160 = vld [vmem:[#allocation8 + $0xf8] sm:$0xf]
    %v161 = vld [vmem:[#allocation8 + $0xfc] sm:$0xf]
    %v162 = vunpack.c.l.bf16 %v98
    %v163 = vunpack.c.l.bf16 %v99
    %v164 = vunpack.c.l.bf16 %v100
    %v165 = vunpack.c.l.bf16 %v101
    %v166 = vunpack.c.l.bf16 %v102
    %v167 = vunpack.c.l.bf16 %v103
    %v168 = vunpack.c.l.bf16 %v104
    %v169 = vunpack.c.l.bf16 %v105
    %v170 = vunpack.c.l.bf16 %v106
    %v171 = vunpack.c.l.bf16 %v107
    %v172 = vunpack.c.l.bf16 %v108
    %v173 = vunpack.c.l.bf16 %v109
    %v174 = vunpack.c.l.bf16 %v110
    %v175 = vunpack.c.l.bf16 %v111
    %v176 = vunpack.c.l.bf16 %v112
    %v177 = vunpack.c.l.bf16 %v113
    %v178 = vunpack.c.l.bf16 %v114
    %v179 = vunpack.c.l.bf16 %v115
    %v180 = vunpack.c.l.bf16 %v116
    %v181 = vunpack.c.l.bf16 %v117
    %v182 = vunpack.c.l.bf16 %v118
    %v183 = vunpack.c.l.bf16 %v119
    %v184 = vunpack.c.l.bf16 %v120
    %v185 = vunpack.c.l.bf16 %v121
    %v186 = vunpack.c.l.bf16 %v122
    %v187 = vunpack.c.l.bf16 %v123
    %v188 = vunpack.c.l.bf16 %v124
    %v189 = vunpack.c.l.bf16 %v125
    %v190 = vunpack.c.l.bf16 %v126
    %v191 = vunpack.c.l.bf16 %v127
    %v192 = vunpack.c.l.bf16 %v128
    %v193 = vunpack.c.l.bf16 %v129
    %v194 = vunpack.c.l.bf16 %v130
    %v195 = vunpack.c.l.bf16 %v131
    %v196 = vunpack.c.l.bf16 %v132
    %v197 = vunpack.c.l.bf16 %v133
    %v198 = vunpack.c.l.bf16 %v134
    %v199 = vunpack.c.l.bf16 %v135
    %v200 = vunpack.c.l.bf16 %v136
    %v201 = vunpack.c.l.bf16 %v137
    %v202 = vunpack.c.l.bf16 %v138
    %v203 = vunpack.c.l.bf16 %v139
    %v204 = vunpack.c.l.bf16 %v140
    %v205 = vunpack.c.l.bf16 %v141
    %v206 = vunpack.c.l.bf16 %v142
    %v207 = vunpack.c.l.bf16 %v143
    %v208 = vunpack.c.l.bf16 %v144
    %v209 = vunpack.c.l.bf16 %v145
    %v210 = vunpack.c.l.bf16 %v146
    %v211 = vunpack.c.l.bf16 %v147
    %v212 = vunpack.c.l.bf16 %v148
    %v213 = vunpack.c.l.bf16 %v149
    %v214 = vunpack.c.l.bf16 %v150
    %v215 = vunpack.c.l.bf16 %v151
    %v216 = vunpack.c.l.bf16 %v152
    %v217 = vunpack.c.l.bf16 %v153
    %v218 = vunpack.c.l.bf16 %v154
    %v219 = vunpack.c.l.bf16 %v155
    %v220 = vunpack.c.l.bf16 %v156
    %v221 = vunpack.c.l.bf16 %v157
    %v222 = vunpack.c.l.bf16 %v158
    %v223 = vunpack.c.l.bf16 %v159
    %v224 = vunpack.c.l.bf16 %v160
    %v225 = vunpack.c.l.bf16 %v161
    %v226 = vld [vmem:[#allocation10] sm:$0x1]
    %v228 = vlaneseq
    %v229 = vshrl.u32 %v228, 7
    %v230 = vsub.s32 0, %v229
    %v231 = vrot.slane %v226, %v230
    %v233 = vmul.f32 %v162, %v231
    %v234 = vmul.f32 %v163, %v231
    %v235 = vmul.f32 %v164, %v231
    %v236 = vmul.f32 %v165, %v231
    %v237 = vmul.f32 %v166, %v231
    %v238 = vmul.f32 %v167, %v231
    %v239 = vmul.f32 %v168, %v231
    %v240 = vmul.f32 %v169, %v231
    %v241 = vmul.f32 %v170, %v231
    %v242 = vmul.f32 %v171, %v231
    %v243 = vmul.f32 %v172, %v231
    %v244 = vmul.f32 %v173, %v231
    %v245 = vmul.f32 %v174, %v231
    %v246 = vmul.f32 %v175, %v231
    %v247 = vmul.f32 %v176, %v231
    %v248 = vmul.f32 %v177, %v231
    %v249 = vmul.f32 %v178, %v231
    %v250 = vmul.f32 %v179, %v231
    %v251 = vmul.f32 %v180, %v231
    %v252 = vmul.f32 %v181, %v231
    %v253 = vmul.f32 %v182, %v231
    %v254 = vmul.f32 %v183, %v231
    %v255 = vmul.f32 %v184, %v231
    %v256 = vmul.f32 %v185, %v231
    %v257 = vmul.f32 %v186, %v231
    %v258 = vmul.f32 %v187, %v231
    %v259 = vmul.f32 %v188, %v231
    %v260 = vmul.f32 %v189, %v231
    %v261 = vmul.f32 %v190, %v231
    %v262 = vmul.f32 %v191, %v231
    %v263 = vmul.f32 %v192, %v231
    %v264 = vmul.f32 %v193, %v231
    %v265 = vmul.f32 %v194, %v231
    %v266 = vmul.f32 %v195, %v231
    %v267 = vmul.f32 %v196, %v231
    %v268 = vmul.f32 %v197, %v231
    %v269 = vmul.f32 %v198, %v231
    %v270 = vmul.f32 %v199, %v231
    %v271 = vmul.f32 %v200, %v231
    %v272 = vmul.f32 %v201, %v231
    %v273 = vmul.f32 %v202, %v231
    %v274 = vmul.f32 %v203, %v231
    %v275 = vmul.f32 %v204, %v231
    %v276 = vmul.f32 %v205, %v231
    %v277 = vmul.f32 %v206, %v231
    %v278 = vmul.f32 %v207, %v231
    %v279 = vmul.f32 %v208, %v231
    %v280 = vmul.f32 %v209, %v231
    %v281 = vmul.f32 %v210, %v231
    %v282 = vmul.f32 %v211, %v231
    %v283 = vmul.f32 %v212, %v231
    %v284 = vmul.f32 %v213, %v231
    %v285 = vmul.f32 %v214, %v231
    %v286 = vmul.f32 %v215, %v231
    %v287 = vmul.f32 %v216, %v231
    %v288 = vmul.f32 %v217, %v231
    %v289 = vmul.f32 %v218, %v231
    %v290 = vmul.f32 %v219, %v231
    %v291 = vmul.f32 %v220, %v231
    %v292 = vmul.f32 %v221, %v231
    %v293 = vmul.f32 %v222, %v231
    %v294 = vmul.f32 %v223, %v231
    %v295 = vmul.f32 %v224, %v231
    %v296 = vmul.f32 %v225, %v231
    %v297 = vld [vmem:[#allocation11] sm:$0x1]
    %v299 = vlaneseq
    %v300 = vshrl.u32 %v299, 7
    %v301 = vsub.s32 0, %v300
    %v302 = vrot.slane %v297, %v301
    %v304 = vadd.f32 %v233, %v302
    %v305 = vadd.f32 %v234, %v302
    %v306 = vadd.f32 %v235, %v302
    %v307 = vadd.f32 %v236, %v302
    %v308 = vadd.f32 %v237, %v302
    %v309 = vadd.f32 %v238, %v302
    %v310 = vadd.f32 %v239, %v302
    %v311 = vadd.f32 %v240, %v302
    %v312 = vadd.f32 %v241, %v302
    %v313 = vadd.f32 %v242, %v302
    %v314 = vadd.f32 %v243, %v302
    %v315 = vadd.f32 %v244, %v302
    %v316 = vadd.f32 %v245, %v302
    %v317 = vadd.f32 %v246, %v302
    %v318 = vadd.f32 %v247, %v302
    %v319 = vadd.f32 %v248, %v302
    %v320 = vadd.f32 %v249, %v302
    %v321 = vadd.f32 %v250, %v302
    %v322 = vadd.f32 %v251, %v302
    %v323 = vadd.f32 %v252, %v302
    %v324 = vadd.f32 %v253, %v302
    %v325 = vadd.f32 %v254, %v302
    %v326 = vadd.f32 %v255, %v302
    %v327 = vadd.f32 %v256, %v302
    %v328 = vadd.f32 %v257, %v302
    %v329 = vadd.f32 %v258, %v302
    %v330 = vadd.f32 %v259, %v302
    %v331 = vadd.f32 %v260, %v302
    %v332 = vadd.f32 %v261, %v302
    %v333 = vadd.f32 %v262, %v302
    %v334 = vadd.f32 %v263, %v302
    %v335 = vadd.f32 %v264, %v302
    %v336 = vadd.f32 %v265, %v302
    %v337 = vadd.f32 %v266, %v302
    %v338 = vadd.f32 %v267, %v302
    %v339 = vadd.f32 %v268, %v302
    %v340 = vadd.f32 %v269, %v302
    %v341 = vadd.f32 %v270, %v302
    %v342 = vadd.f32 %v271, %v302
    %v343 = vadd.f32 %v272, %v302
    %v344 = vadd.f32 %v273, %v302
    %v345 = vadd.f32 %v274, %v302
    %v346 = vadd.f32 %v275, %v302
    %v347 = vadd.f32 %v276, %v302
    %v348 = vadd.f32 %v277, %v302
    %v349 = vadd.f32 %v278, %v302
    %v350 = vadd.f32 %v279, %v302
    %v351 = vadd.f32 %v280, %v302
    %v352 = vadd.f32 %v281, %v302
    %v353 = vadd.f32 %v282, %v302
    %v354 = vadd.f32 %v283, %v302
    %v355 = vadd.f32 %v284, %v302
    %v356 = vadd.f32 %v285, %v302
    %v357 = vadd.f32 %v286, %v302
    %v358 = vadd.f32 %v287, %v302
    %v359 = vadd.f32 %v288, %v302
    %v360 = vadd.f32 %v289, %v302
    %v361 = vadd.f32 %v290, %v302
    %v362 = vadd.f32 %v291, %v302
    %v363 = vadd.f32 %v292, %v302
    %v364 = vadd.f32 %v293, %v302
    %v365 = vadd.f32 %v294, %v302
    %v366 = vadd.f32 %v295, %v302
    %v367 = vadd.f32 %v296, %v302
    %v368 = vld [vmem:[#allocation2] sm:$0xf]
    %v369 = vld [vmem:[#allocation2 + $0x4] sm:$0xf]
    %v370 = vld [vmem:[#allocation2 + $0x8] sm:$0xf]
    %v371 = vld [vmem:[#allocation2 + $0xc] sm:$0xf]
    %v372 = vld [vmem:[#allocation2 + $0x10] sm:$0xf]
    %v373 = vld [vmem:[#allocation2 + $0x14] sm:$0xf]
    %v374 = vld [vmem:[#allocation2 + $0x18] sm:$0xf]
    %v375 = vld [vmem:[#allocation2 + $0x1c] sm:$0xf]
    %v376 = vld [vmem:[#allocation2 + $0x20] sm:$0xf]
    %v377 = vld [vmem:[#allocation2 + $0x24] sm:$0xf]
    %v378 = vld [vmem:[#allocation2 + $0x28] sm:$0xf]
    %v379 = vld [vmem:[#allocation2 + $0x2c] sm:$0xf]
    %v380 = vld [vmem:[#allocation2 + $0x30] sm:$0xf]
    %v381 = vld [vmem:[#allocation2 + $0x34] sm:$0xf]
    %v382 = vld [vmem:[#allocation2 + $0x38] sm:$0xf]
    %v383 = vld [vmem:[#allocation2 + $0x3c] sm:$0xf]
    %v384 = vld [vmem:[#allocation2 + $0x40] sm:$0xf]
    %v385 = vld [vmem:[#allocation2 + $0x44] sm:$0xf]
    %v386 = vld [vmem:[#allocation2 + $0x48] sm:$0xf]
    %v387 = vld [vmem:[#allocation2 + $0x4c] sm:$0xf]
    %v388 = vld [vmem:[#allocation2 + $0x50] sm:$0xf]
    %v389 = vld [vmem:[#allocation2 + $0x54] sm:$0xf]
    %v390 = vld [vmem:[#allocation2 + $0x58] sm:$0xf]
    %v391 = vld [vmem:[#allocation2 + $0x5c] sm:$0xf]
    %v392 = vld [vmem:[#allocation2 + $0x60] sm:$0xf]
    %v393 = vld [vmem:[#allocation2 + $0x64] sm:$0xf]
    %v394 = vld [vmem:[#allocation2 + $0x68] sm:$0xf]
    %v395 = vld [vmem:[#allocation2 + $0x6c] sm:$0xf]
    %v396 = vld [vmem:[#allocation2 + $0x70] sm:$0xf]
    %v397 = vld [vmem:[#allocation2 + $0x74] sm:$0xf]
    %v398 = vld [vmem:[#allocation2 + $0x78] sm:$0xf]
    %v399 = vld [vmem:[#allocation2 + $0x7c] sm:$0xf]
    %v400 = vld [vmem:[#allocation2 + $0x80] sm:$0xf]
    %v401 = vld [vmem:[#allocation2 + $0x84] sm:$0xf]
    %v402 = vld [vmem:[#allocation2 + $0x88] sm:$0xf]
    %v403 = vld [vmem:[#allocation2 + $0x8c] sm:$0xf]
    %v404 = vld [vmem:[#allocation2 + $0x90] sm:$0xf]
    %v405 = vld [vmem:[#allocation2 + $0x94] sm:$0xf]
    %v406 = vld [vmem:[#allocation2 + $0x98] sm:$0xf]
    %v407 = vld [vmem:[#allocation2 + $0x9c] sm:$0xf]
    %v408 = vld [vmem:[#allocation2 + $0xa0] sm:$0xf]
    %v409 = vld [vmem:[#allocation2 + $0xa4] sm:$0xf]
    %v410 = vld [vmem:[#allocation2 + $0xa8] sm:$0xf]
    %v411 = vld [vmem:[#allocation2 + $0xac] sm:$0xf]
    %v412 = vld [vmem:[#allocation2 + $0xb0] sm:$0xf]
    %v413 = vld [vmem:[#allocation2 + $0xb4] sm:$0xf]
    %v414 = vld [vmem:[#allocation2 + $0xb8] sm:$0xf]
    %v415 = vld [vmem:[#allocation2 + $0xbc] sm:$0xf]
    %v416 = vld [vmem:[#allocation2 + $0xc0] sm:$0xf]
    %v417 = vld [vmem:[#allocation2 + $0xc4] sm:$0xf]
    %v418 = vld [vmem:[#allocation2 + $0xc8] sm:$0xf]
    %v419 = vld [vmem:[#allocation2 + $0xcc] sm:$0xf]
    %v420 = vld [vmem:[#allocation2 + $0xd0] sm:$0xf]
    %v421 = vld [vmem:[#allocation2 + $0xd4] sm:$0xf]
    %v422 = vld [vmem:[#allocation2 + $0xd8] sm:$0xf]
    %v423 = vld [vmem:[#allocation2 + $0xdc] sm:$0xf]
    %v424 = vld [vmem:[#allocation2 + $0xe0] sm:$0xf]
    %v425 = vld [vmem:[#allocation2 + $0xe4] sm:$0xf]
    %v426 = vld [vmem:[#allocation2 + $0xe8] sm:$0xf]
    %v427 = vld [vmem:[#allocation2 + $0xec] sm:$0xf]
    %v428 = vld [vmem:[#allocation2 + $0xf0] sm:$0xf]
    %v429 = vld [vmem:[#allocation2 + $0xf4] sm:$0xf]
    %v430 = vld [vmem:[#allocation2 + $0xf8] sm:$0xf]
    %v431 = vld [vmem:[#allocation2 + $0xfc] sm:$0xf]
    %v432 = vunpack.c.l.bf16 %v368
    %v433 = vunpack.c.l.bf16 %v369
    %v434 = vunpack.c.l.bf16 %v370
    %v435 = vunpack.c.l.bf16 %v371
    %v436 = vunpack.c.l.bf16 %v372
    %v437 = vunpack.c.l.bf16 %v373
    %v438 = vunpack.c.l.bf16 %v374
    %v439 = vunpack.c.l.bf16 %v375
    %v440 = vunpack.c.l.bf16 %v376
    %v441 = vunpack.c.l.bf16 %v377
    %v442 = vunpack.c.l.bf16 %v378
    %v443 = vunpack.c.l.bf16 %v379
    %v444 = vunpack.c.l.bf16 %v380
    %v445 = vunpack.c.l.bf16 %v381
    %v446 = vunpack.c.l.bf16 %v382
    %v447 = vunpack.c.l.bf16 %v383
    %v448 = vunpack.c.l.bf16 %v384
    %v449 = vunpack.c.l.bf16 %v385
    %v450 = vunpack.c.l.bf16 %v386
    %v451 = vunpack.c.l.bf16 %v387
    %v452 = vunpack.c.l.bf16 %v388
    %v453 = vunpack.c.l.bf16 %v389
    %v454 = vunpack.c.l.bf16 %v390
    %v455 = vunpack.c.l.bf16 %v391
    %v456 = vunpack.c.l.bf16 %v392
    %v457 = vunpack.c.l.bf16 %v393
    %v458 = vunpack.c.l.bf16 %v394
    %v459 = vunpack.c.l.bf16 %v395
    %v460 = vunpack.c.l.bf16 %v396
    %v461 = vunpack.c.l.bf16 %v397
    %v462 = vunpack.c.l.bf16 %v398
    %v463 = vunpack.c.l.bf16 %v399
    %v464 = vunpack.c.l.bf16 %v400
    %v465 = vunpack.c.l.bf16 %v401
    %v466 = vunpack.c.l.bf16 %v402
    %v467 = vunpack.c.l.bf16 %v403
    %v468 = vunpack.c.l.bf16 %v404
    %v469 = vunpack.c.l.bf16 %v405
    %v470 = vunpack.c.l.bf16 %v406
    %v471 = vunpack.c.l.bf16 %v407
    %v472 = vunpack.c.l.bf16 %v408
    %v473 = vunpack.c.l.bf16 %v409
    %v474 = vunpack.c.l.bf16 %v410
    %v475 = vunpack.c.l.bf16 %v411
    %v476 = vunpack.c.l.bf16 %v412
    %v477 = vunpack.c.l.bf16 %v413
    %v478 = vunpack.c.l.bf16 %v414
    %v479 = vunpack.c.l.bf16 %v415
    %v480 = vunpack.c.l.bf16 %v416
    %v481 = vunpack.c.l.bf16 %v417
    %v482 = vunpack.c.l.bf16 %v418
    %v483 = vunpack.c.l.bf16 %v419
    %v484 = vunpack.c.l.bf16 %v420
    %v485 = vunpack.c.l.bf16 %v421
    %v486 = vunpack.c.l.bf16 %v422
    %v487 = vunpack.c.l.bf16 %v423
    %v488 = vunpack.c.l.bf16 %v424
    %v489 = vunpack.c.l.bf16 %v425
    %v490 = vunpack.c.l.bf16 %v426
    %v491 = vunpack.c.l.bf16 %v427
    %v492 = vunpack.c.l.bf16 %v428
    %v493 = vunpack.c.l.bf16 %v429
    %v494 = vunpack.c.l.bf16 %v430
    %v495 = vunpack.c.l.bf16 %v431
    %v496 = vld [vmem:[#allocation5] sm:$0x1]
    %v498 = vlaneseq
    %v499 = vshrl.u32 %v498, 7
    %v500 = vsub.s32 0, %v499
    %v501 = vrot.slane %v496, %v500
    %v503 = vmul.f32 %v432, %v501
    %v504 = vmul.f32 %v433, %v501
    %v505 = vmul.f32 %v434, %v501
    %v506 = vmul.f32 %v435, %v501
    %v507 = vmul.f32 %v436, %v501
    %v508 = vmul.f32 %v437, %v501
    %v509 = vmul.f32 %v438, %v501
    %v510 = vmul.f32 %v439, %v501
    %v511 = vmul.f32 %v440, %v501
    %v512 = vmul.f32 %v441, %v501
    %v513 = vmul.f32 %v442, %v501
    %v514 = vmul.f32 %v443, %v501
    %v515 = vmul.f32 %v444, %v501
    %v516 = vmul.f32 %v445, %v501
    %v517 = vmul.f32 %v446, %v501
    %v518 = vmul.f32 %v447, %v501
    %v519 = vmul.f32 %v448, %v501
    %v520 = vmul.f32 %v449, %v501
    %v521 = vmul.f32 %v450, %v501
    %v522 = vmul.f32 %v451, %v501
    %v523 = vmul.f32 %v452, %v501
    %v524 = vmul.f32 %v453, %v501
    %v525 = vmul.f32 %v454, %v501
    %v526 = vmul.f32 %v455, %v501
    %v527 = vmul.f32 %v456, %v501
    %v528 = vmul.f32 %v457, %v501
    %v529 = vmul.f32 %v458, %v501
    %v530 = vmul.f32 %v459, %v501
    %v531 = vmul.f32 %v460, %v501
    %v532 = vmul.f32 %v461, %v501
    %v533 = vmul.f32 %v462, %v501
    %v534 = vmul.f32 %v463, %v501
    %v535 = vmul.f32 %v464, %v501
    %v536 = vmul.f32 %v465, %v501
    %v537 = vmul.f32 %v466, %v501
    %v538 = vmul.f32 %v467, %v501
    %v539 = vmul.f32 %v468, %v501
    %v540 = vmul.f32 %v469, %v501
    %v541 = vmul.f32 %v470, %v501
    %v542 = vmul.f32 %v471, %v501
    %v543 = vmul.f32 %v472, %v501
    %v544 = vmul.f32 %v473, %v501
    %v545 = vmul.f32 %v474, %v501
    %v546 = vmul.f32 %v475, %v501
    %v547 = vmul.f32 %v476, %v501
    %v548 = vmul.f32 %v477, %v501
    %v549 = vmul.f32 %v478, %v501
    %v550 = vmul.f32 %v479, %v501
    %v551 = vmul.f32 %v480, %v501
    %v552 = vmul.f32 %v481, %v501
    %v553 = vmul.f32 %v482, %v501
    %v554 = vmul.f32 %v483, %v501
    %v555 = vmul.f32 %v484, %v501
    %v556 = vmul.f32 %v485, %v501
    %v557 = vmul.f32 %v486, %v501
    %v558 = vmul.f32 %v487, %v501
    %v559 = vmul.f32 %v488, %v501
    %v560 = vmul.f32 %v489, %v501
    %v561 = vmul.f32 %v490, %v501
    %v562 = vmul.f32 %v491, %v501
    %v563 = vmul.f32 %v492, %v501
    %v564 = vmul.f32 %v493, %v501
    %v565 = vmul.f32 %v494, %v501
    %v566 = vmul.f32 %v495, %v501
    %v567 = vld [vmem:[#allocation7] sm:$0x1]
    %v569 = vlaneseq
    %v570 = vshrl.u32 %v569, 7
    %v571 = vsub.s32 0, %v570
    %v572 = vrot.slane %v567, %v571
    %v574 = vadd.f32 %v503, %v572
    %v575 = vadd.f32 %v504, %v572
    %v576 = vadd.f32 %v505, %v572
    %v577 = vadd.f32 %v506, %v572
    %v578 = vadd.f32 %v507, %v572
    %v579 = vadd.f32 %v508, %v572
    %v580 = vadd.f32 %v509, %v572
    %v581 = vadd.f32 %v510, %v572
    %v582 = vadd.f32 %v511, %v572
    %v583 = vadd.f32 %v512, %v572
    %v584 = vadd.f32 %v513, %v572
    %v585 = vadd.f32 %v514, %v572
    %v586 = vadd.f32 %v515, %v572
    %v587 = vadd.f32 %v516, %v572
    %v588 = vadd.f32 %v517, %v572
    %v589 = vadd.f32 %v518, %v572
    %v590 = vadd.f32 %v519, %v572
    %v591 = vadd.f32 %v520, %v572
    %v592 = vadd.f32 %v521, %v572
    %v593 = vadd.f32 %v522, %v572
    %v594 = vadd.f32 %v523, %v572
    %v595 = vadd.f32 %v524, %v572
    %v596 = vadd.f32 %v525, %v572
    %v597 = vadd.f32 %v526, %v572
    %v598 = vadd.f32 %v527, %v572
    %v599 = vadd.f32 %v528, %v572
    %v600 = vadd.f32 %v529, %v572
    %v601 = vadd.f32 %v530, %v572
    %v602 = vadd.f32 %v531, %v572
    %v603 = vadd.f32 %v532, %v572
    %v604 = vadd.f32 %v533, %v572
    %v605 = vadd.f32 %v534, %v572
    %v606 = vadd.f32 %v535, %v572
    %v607 = vadd.f32 %v536, %v572
    %v608 = vadd.f32 %v537, %v572
    %v609 = vadd.f32 %v538, %v572
    %v610 = vadd.f32 %v539, %v572
    %v611 = vadd.f32 %v540, %v572
    %v612 = vadd.f32 %v541, %v572
    %v613 = vadd.f32 %v542, %v572
    %v614 = vadd.f32 %v543, %v572
    %v615 = vadd.f32 %v544, %v572
    %v616 = vadd.f32 %v545, %v572
    %v617 = vadd.f32 %v546, %v572
    %v618 = vadd.f32 %v547, %v572
    %v619 = vadd.f32 %v548, %v572
    %v620 = vadd.f32 %v549, %v572
    %v621 = vadd.f32 %v550, %v572
    %v622 = vadd.f32 %v551, %v572
    %v623 = vadd.f32 %v552, %v572
    %v624 = vadd.f32 %v553, %v572
    %v625 = vadd.f32 %v554, %v572
    %v626 = vadd.f32 %v555, %v572
    %v627 = vadd.f32 %v556, %v572
    %v628 = vadd.f32 %v557, %v572
    %v629 = vadd.f32 %v558, %v572
    %v630 = vadd.f32 %v559, %v572
    %v631 = vadd.f32 %v560, %v572
    %v632 = vadd.f32 %v561, %v572
    %v633 = vadd.f32 %v562, %v572
    %v634 = vadd.f32 %v563, %v572
    %v635 = vadd.f32 %v564, %v572
    %v636 = vadd.f32 %v565, %v572
    %v637 = vadd.f32 %v566, %v572
    %v638 = vadd.f32 %v574, %v304
    %v639 = vadd.f32 %v575, %v305
    %v640 = vadd.f32 %v576, %v306
    %v641 = vadd.f32 %v577, %v307
    %v642 = vadd.f32 %v578, %v308
    %v643 = vadd.f32 %v579, %v309
    %v644 = vadd.f32 %v580, %v310
    %v645 = vadd.f32 %v581, %v311
    %v646 = vadd.f32 %v582, %v312
    %v647 = vadd.f32 %v583, %v313
    %v648 = vadd.f32 %v584, %v314
    %v649 = vadd.f32 %v585, %v315
    %v650 = vadd.f32 %v586, %v316
    %v651 = vadd.f32 %v587, %v317
    %v652 = vadd.f32 %v588, %v318
    %v653 = vadd.f32 %v589, %v319
    %v654 = vadd.f32 %v590, %v320
    %v655 = vadd.f32 %v591, %v321
    %v656 = vadd.f32 %v592, %v322
    %v657 = vadd.f32 %v593, %v323
    %v658 = vadd.f32 %v594, %v324
    %v659 = vadd.f32 %v595, %v325
    %v660 = vadd.f32 %v596, %v326
    %v661 = vadd.f32 %v597, %v327
    %v662 = vadd.f32 %v598, %v328
    %v663 = vadd.f32 %v599, %v329
    %v664 = vadd.f32 %v600, %v330
    %v665 = vadd.f32 %v601, %v331
    %v666 = vadd.f32 %v602, %v332
    %v667 = vadd.f32 %v603, %v333
    %v668 = vadd.f32 %v604, %v334
    %v669 = vadd.f32 %v605, %v335
    %v670 = vadd.f32 %v606, %v336
    %v671 = vadd.f32 %v607, %v337
    %v672 = vadd.f32 %v608, %v338
    %v673 = vadd.f32 %v609, %v339
    %v674 = vadd.f32 %v610, %v340
    %v675 = vadd.f32 %v611, %v341
    %v676 = vadd.f32 %v612, %v342
    %v677 = vadd.f32 %v613, %v343
    %v678 = vadd.f32 %v614, %v344
    %v679 = vadd.f32 %v615, %v345
    %v680 = vadd.f32 %v616, %v346
    %v681 = vadd.f32 %v617, %v347
    %v682 = vadd.f32 %v618, %v348
    %v683 = vadd.f32 %v619, %v349
    %v684 = vadd.f32 %v620, %v350
    %v685 = vadd.f32 %v621, %v351
    %v686 = vadd.f32 %v622, %v352
    %v687 = vadd.f32 %v623, %v353
    %v688 = vadd.f32 %v624, %v354
    %v689 = vadd.f32 %v625, %v355
    %v690 = vadd.f32 %v626, %v356
    %v691 = vadd.f32 %v627, %v357
    %v692 = vadd.f32 %v628, %v358
    %v693 = vadd.f32 %v629, %v359
    %v694 = vadd.f32 %v630, %v360
    %v695 = vadd.f32 %v631, %v361
    %v696 = vadd.f32 %v632, %v362
    %v697 = vadd.f32 %v633, %v363
    %v698 = vadd.f32 %v634, %v364
    %v699 = vadd.f32 %v635, %v365
    %v700 = vadd.f32 %v636, %v366
    %v701 = vadd.f32 %v637, %v367
    %v702 = vmax.f32 %v638, 0.0
    %v703 = vmax.f32 %v639, 0.0
    %v704 = vmax.f32 %v640, 0.0
    %v705 = vmax.f32 %v641, 0.0
    %v706 = vmax.f32 %v642, 0.0
    %v707 = vmax.f32 %v643, 0.0
    %v708 = vmax.f32 %v644, 0.0
    %v709 = vmax.f32 %v645, 0.0
    %v710 = vmax.f32 %v646, 0.0
    %v711 = vmax.f32 %v647, 0.0
    %v712 = vmax.f32 %v648, 0.0
    %v713 = vmax.f32 %v649, 0.0
    %v714 = vmax.f32 %v650, 0.0
    %v715 = vmax.f32 %v651, 0.0
    %v716 = vmax.f32 %v652, 0.0
    %v717 = vmax.f32 %v653, 0.0
    %v718 = vmax.f32 %v654, 0.0
    %v719 = vmax.f32 %v655, 0.0
    %v720 = vmax.f32 %v656, 0.0
    %v721 = vmax.f32 %v657, 0.0
    %v722 = vmax.f32 %v658, 0.0
    %v723 = vmax.f32 %v659, 0.0
    %v724 = vmax.f32 %v660, 0.0
    %v725 = vmax.f32 %v661, 0.0
    %v726 = vmax.f32 %v662, 0.0
    %v727 = vmax.f32 %v663, 0.0
    %v728 = vmax.f32 %v664, 0.0
    %v729 = vmax.f32 %v665, 0.0
    %v730 = vmax.f32 %v666, 0.0
    %v731 = vmax.f32 %v667, 0.0
    %v732 = vmax.f32 %v668, 0.0
    %v733 = vmax.f32 %v669, 0.0
    %v734 = vmax.f32 %v670, 0.0
    %v735 = vmax.f32 %v671, 0.0
    %v736 = vmax.f32 %v672, 0.0
    %v737 = vmax.f32 %v673, 0.0
    %v738 = vmax.f32 %v674, 0.0
    %v739 = vmax.f32 %v675, 0.0
    %v740 = vmax.f32 %v676, 0.0
    %v741 = vmax.f32 %v677, 0.0
    %v742 = vmax.f32 %v678, 0.0
    %v743 = vmax.f32 %v679, 0.0
    %v744 = vmax.f32 %v680, 0.0
    %v745 = vmax.f32 %v681, 0.0
    %v746 = vmax.f32 %v682, 0.0
    %v747 = vmax.f32 %v683, 0.0
    %v748 = vmax.f32 %v684, 0.0
    %v749 = vmax.f32 %v685, 0.0
    %v750 = vmax.f32 %v686, 0.0
    %v751 = vmax.f32 %v687, 0.0
    %v752 = vmax.f32 %v688, 0.0
    %v753 = vmax.f32 %v689, 0.0
    %v754 = vmax.f32 %v690, 0.0
    %v755 = vmax.f32 %v691, 0.0
    %v756 = vmax.f32 %v692, 0.0
    %v757 = vmax.f32 %v693, 0.0
    %v758 = vmax.f32 %v694, 0.0
    %v759 = vmax.f32 %v695, 0.0
    %v760 = vmax.f32 %v696, 0.0
    %v761 = vmax.f32 %v697, 0.0
    %v762 = vmax.f32 %v698, 0.0
    %v763 = vmax.f32 %v699, 0.0
    %v764 = vmax.f32 %v700, 0.0
    %v765 = vmax.f32 %v701, 0.0
    %766 = vst [vmem:[#allocation13] sm:$0xff] %v702
    %767 = vst [vmem:[#allocation13 + $0x8] sm:$0xff] %v703
    %768 = vst [vmem:[#allocation13 + $0x10] sm:$0xff] %v704
    %769 = vst [vmem:[#allocation13 + $0x18] sm:$0xff] %v705
    %770 = vst [vmem:[#allocation13 + $0x20] sm:$0xff] %v706
    %771 = vst [vmem:[#allocation13 + $0x28] sm:$0xff] %v707
    %772 = vst [vmem:[#allocation13 + $0x30] sm:$0xff] %v708
    %773 = vst [vmem:[#allocation13 + $0x38] sm:$0xff] %v709
    %774 = vst [vmem:[#allocation13 + $0x40] sm:$0xff] %v710
    %775 = vst [vmem:[#allocation13 + $0x48] sm:$0xff] %v711
    %776 = vst [vmem:[#allocation13 + $0x50] sm:$0xff] %v712
    %777 = vst [vmem:[#allocation13 + $0x58] sm:$0xff] %v713
    %778 = vst [vmem:[#allocation13 + $0x60] sm:$0xff] %v714
    %779 = vst [vmem:[#allocation13 + $0x68] sm:$0xff] %v715
    %780 = vst [vmem:[#allocation13 + $0x70] sm:$0xff] %v716
    %781 = vst [vmem:[#allocation13 + $0x78] sm:$0xff] %v717
    %782 = vst [vmem:[#allocation13 + $0x80] sm:$0xff] %v718
    %783 = vst [vmem:[#allocation13 + $0x88] sm:$0xff] %v719
    %784 = vst [vmem:[#allocation13 + $0x90] sm:$0xff] %v720
    %785 = vst [vmem:[#allocation13 + $0x98] sm:$0xff] %v721
    %786 = vst [vmem:[#allocation13 + $0xa0] sm:$0xff] %v722
    %787 = vst [vmem:[#allocation13 + $0xa8] sm:$0xff] %v723
    %788 = vst [vmem:[#allocation13 + $0xb0] sm:$0xff] %v724
    %789 = vst [vmem:[#allocation13 + $0xb8] sm:$0xff] %v725
    %790 = vst [vmem:[#allocation13 + $0xc0] sm:$0xff] %v726
    %791 = vst [vmem:[#allocation13 + $0xc8] sm:$0xff] %v727
    %792 = vst [vmem:[#allocation13 + $0xd0] sm:$0xff] %v728
    %793 = vst [vmem:[#allocation13 + $0xd8] sm:$0xff] %v729
    %794 = vst [vmem:[#allocation13 + $0xe0] sm:$0xff] %v730
    %795 = vst [vmem:[#allocation13 + $0xe8] sm:$0xff] %v731
    %796 = vst [vmem:[#allocation13 + $0xf0] sm:$0xff] %v732
    %797 = vst [vmem:[#allocation13 + $0xf8] sm:$0xff] %v733
    %798 = vst [vmem:[#allocation13 + $0x100] sm:$0xff] %v734
    %799 = vst [vmem:[#allocation13 + $0x108] sm:$0xff] %v735
    %800 = vst [vmem:[#allocation13 + $0x110] sm:$0xff] %v736
    %801 = vst [vmem:[#allocation13 + $0x118] sm:$0xff] %v737
    %802 = vst [vmem:[#allocation13 + $0x120] sm:$0xff] %v738
    %803 = vst [vmem:[#allocation13 + $0x128] sm:$0xff] %v739
    %804 = vst [vmem:[#allocation13 + $0x130] sm:$0xff] %v740
    %805 = vst [vmem:[#allocation13 + $0x138] sm:$0xff] %v741
    %806 = vst [vmem:[#allocation13 + $0x140] sm:$0xff] %v742
    %807 = vst [vmem:[#allocation13 + $0x148] sm:$0xff] %v743
    %808 = vst [vmem:[#allocation13 + $0x150] sm:$0xff] %v744
    %809 = vst [vmem:[#allocation13 + $0x158] sm:$0xff] %v745
    %810 = vst [vmem:[#allocation13 + $0x160] sm:$0xff] %v746
    %811 = vst [vmem:[#allocation13 + $0x168] sm:$0xff] %v747
    %812 = vst [vmem:[#allocation13 + $0x170] sm:$0xff] %v748
    %813 = vst [vmem:[#allocation13 + $0x178] sm:$0xff] %v749
    %814 = vst [vmem:[#allocation13 + $0x180] sm:$0xff] %v750
    %815 = vst [vmem:[#allocation13 + $0x188] sm:$0xff] %v751
    %816 = vst [vmem:[#allocation13 + $0x190] sm:$0xff] %v752
    %817 = vst [vmem:[#allocation13 + $0x198] sm:$0xff] %v753
    %818 = vst [vmem:[#allocation13 + $0x1a0] sm:$0xff] %v754
    %819 = vst [vmem:[#allocation13 + $0x1a8] sm:$0xff] %v755
    %820 = vst [vmem:[#allocation13 + $0x1b0] sm:$0xff] %v756
    %821 = vst [vmem:[#allocation13 + $0x1b8] sm:$0xff] %v757
    %822 = vst [vmem:[#allocation13 + $0x1c0] sm:$0xff] %v758
    %823 = vst [vmem:[#allocation13 + $0x1c8] sm:$0xff] %v759
    %824 = vst [vmem:[#allocation13 + $0x1d0] sm:$0xff] %v760
    %825 = vst [vmem:[#allocation13 + $0x1d8] sm:$0xff] %v761
    %826 = vst [vmem:[#allocation13 + $0x1e0] sm:$0xff] %v762
    %827 = vst [vmem:[#allocation13 + $0x1e8] sm:$0xff] %v763
    %828 = vst [vmem:[#allocation13 + $0x1f0] sm:$0xff] %v764
    %829 = vst [vmem:[#allocation13 + $0x1f8] sm:$0xff] %v765
    // Predicated region
    $region50: #{basic_block_forward.7} parent=1 // pred_check
      _
    $region51: #{basic_block_forward.7} parent=1 // pred_check_branch
      %831 = sbr.rel (0) target = $region53
    $region52: #{basic_block_forward.7} parent=1 // pred_region
      %s833 = ssub.s32 8192, 8192
      %834 = vsyncadd [#allocation4], %s833
      %s835 = sshll.u32 [#allocation13], 4
      %s836 = int_to_ptr.vmem [resolvable:$true] %s835
      %841 = dma.vmem_to_hbm [thread:$0]  %s836, 8192, %s6, [#allocation4], 128, 128, 8
    $region53: #{basic_block_forward.7} parent=1 // pred_fallthru
      _
    // Predicated region
    $region54: #{basic_block_forward.7} parent=1 // pred_check
      _
    $region55: #{basic_block_forward.7} parent=1 // pred_check_branch
      %843 = sbr.rel (0) target = $region57
    $region56: #{basic_block_forward.7} parent=1 // pred_region
      %844 = dma.done [#allocation4], 8192
    $region57: #{basic_block_forward.7} parent=1 // pred_fallthru
      _
    %845 = vsyncpa [#allocation3], 1
    %846 = vsyncpa [#allocation6], 1
    %847 = vsyncpa [#allocation9], 1
    %848 = vsyncpa [#allocation12], 1
    %849 = vsyncpa [#allocation4], 1

// kernel: basic_block_forward.4
$region0: #{basic_block_forward.4}
  #allocation0 [shape = 'u32[]', space=smem, size = 0x4, offset = 0x4, fixed_abs, tag = 'smem constant byte address 0x4 - core index']
  #allocation1 [shape = 'u32[144,128]{1,0:T(1,128)}', space=vmem, size = 0x12000, scoped, tag = 'internal scratch']
  #allocation2 [shape = 'bf16[18,16,384]{2,1,0:T(16,128)(2,1)}', space=vmem, size = 0x36000, scoped, tag = 'scratch operand']
  %s0 = inlined_call_operand.hbm [shape: bf16[2,16,16,128], index: 0, kind: input, shape index: {}]
  %s1 = inlined_call_operand.hbm [shape: bf16[3,384,128], index: 1, kind: input, shape index: {}]
  %s2 = inlined_call_operand.hbm [shape: bf16[2,16,16,128], index: 2, kind: output, shape index: {0}]
  %s3 = inlined_call_operand.hbm [shape: f32[2,8,128], index: 3, kind: output, shape index: {1}]
  %4 = xla_tuple %s2, %s3
  %s5 = sld [smem:[#allocation0]]
  $region57: #{basic_block_forward.4} parent=0
    _
  %s7 = ssub.s32 1, %s5
  %s8 = scalar_select 0, %s7, %s5
  $region1: #{basic_block_forward.4} parent=0
    #allocation3 [shape = 'u8[131072]{0}', space=vmem, size = 0x20000, scoped, tag = 'input window, operand 0']
    #allocation4 [shape = 's32[2]{0}', space=sflag, size = 0x8, scoped, tag = 'scoped memory for basic_block_forward.4']
    #allocation5 [shape = 's32[2]{0}', space=sflag, size = 0x8, scoped, tag = 'scoped memory for basic_block_forward.4']
    #allocation6 [shape = 'u8[294912]{0}', space=vmem, size = 0x48000, scoped, tag = 'input window, operand 1, single buffered']
    #allocation7 [shape = 's32[1]{0}', space=sflag, size = 0x4, scoped, tag = 'scoped memory for basic_block_forward.4']
    #allocation8 [shape = 'u8[131072]{0}', space=vmem, size = 0x20000, scoped, tag = 'output window, operand 0']
    #allocation9 [shape = 'u8[8192]{0}', space=vmem, size = 0x2000, scoped, tag = 'output window, operand 1']
    #allocation10 [shape = 's32[2]{0}', space=sflag, size = 0x8, scoped, tag = 'scoped memory for basic_block_forward.4']
    %9 = vsyncpa [#allocation4], 0
    %s10 = scalar_lea.sflag [#allocation4], 1
    %11 = vsyncpa %s10, 0
    %12 = vsyncpa [#allocation7], 0
    %13 = vsyncpa [#allocation5], 0
    %s14 = scalar_lea.sflag [#allocation5], 1
    %15 = vsyncpa %s14, 0
    %16 = vsyncpa [#allocation10], 0
    %s17 = scalar_lea.sflag [#allocation10], 1
    %18 = vsyncpa %s17, 0
    loop: start=0, step=1, limit=4
    $region2: #{basic_block_forward.4} parent=1 // loop_pre_header
      _
    $region3: #{basic_block_forward.4} parent=1 // loop_header
      %s20 = sphi 0, %s24
      %p21 = scmp.ge.s32.totalorder %s20, 4
      %s27 = sphi 0, %s39
      %s28 = sphi 0, %s35
      %s29 = sphi 0, %s27
      %s30 = sphi 0, %s28
      %s31 = sphi 0, %s29
      %s32 = sphi 0, %s30
      %s42 = sphi 0, %s44
      %s45 = sphi 0, %s42
      %s46 = sphi 0, %s45
      %s62 = sphi 0, %s46
      %s68 = sphi 0, %s70
      %s71 = sphi 0, %s68
      %s72 = sphi 0, %s71
      %s88 = sphi 0, %s72
      %s96 = sphi 0, %s98
      %s99 = sphi 0, %s96
      %s100 = sphi 0, %s99
      %s116 = sphi 0, %s100
      %s124 = sphi 0, %s126
      %s127 = sphi 0, %s124
      %s128 = sphi 0, %s127
      %s144 = sphi 0, %s128
    $region4: #{basic_block_forward.4} parent=1 // loop_header_branch
      %23 = sbr.rel (%p21) target = $region8
    $region5: #{basic_block_forward.4} parent=1 // loop_body
      %s25 = ssub.s32 %s20, 1
      %s26 = ssub.s32 %s20, 2
      %s33 = sadd.s32 1, %s28
      %p34 = scmp.ge.s32.totalorder %s33, 1
      %s35 = scalar_select %p34, 0, %s33
      %s36 = sadd.s32 1, %s27
      %s37 = scalar_select %p34, %s36, %s27
      %p38 = scmp.ge.s32.totalorder %s37, 2
      %s39 = scalar_select %p38, 0, %s37
      %s40 = ssub.s32 %s27, %s39
      %p41 = scmp.eq.s32.totalorder %s40, 0
      %s43 = sadd.s32 %s42, 1
      %s44 = scalar_select %p41, %s42, %s43
      %p47 = pneg %p41
      %p48 = scmp.eq.s32.totalorder %s20, 1
      %p49 = por %p47, %p48
      %p50 = scmp.ne.s32.totalorder %s42, %s45
      %p51 = scmp.eq.s32.totalorder %s20, 0
      %p52 = por %p50, %p51
      %p53 = scmp.ne.s32.totalorder %s42, %s45
      %p54 = scmp.eq.s32.totalorder %s25, 1
      %p55 = por %p53, %p54
      %p56 = scmp.ne.s32.totalorder %s45, %s46
      %p57 = scmp.eq.s32.totalorder %s25, 0
      %p58 = por %p56, %p57
      %p59 = scmp.ne.s32.totalorder %s45, %s46
      %p60 = scmp.eq.s32.totalorder %s26, 1
      %p61 = por %p59, %p60
      %p63 = scmp.ne.s32.totalorder %s46, %s62
      %p64 = scmp.eq.s32.totalorder %s26, 0
      %p65 = por %p63, %p64
      %s66 = ssub.s32 %s28, %s35
      %p67 = scmp.eq.s32.totalorder %s66, 0
      %s69 = sadd.s32 %s68, 1
      %s70 = scalar_select %p67, %s68, %s69
      %p73 = pneg %p67
      %p74 = scmp.eq.s32.totalorder %s20, 1
      %p75 = por %p73, %p74
      %p76 = scmp.ne.s32.totalorder %s68, %s71
      %p77 = scmp.eq.s32.totalorder %s20, 0
      %p78 = por %p76, %p77
      %p79 = scmp.ne.s32.totalorder %s68, %s71
      %p80 = scmp.eq.s32.totalorder %s25, 1
      %p81 = por %p79, %p80
      %p82 = scmp.ne.s32.totalorder %s71, %s72
      %p83 = scmp.eq.s32.totalorder %s25, 0
      %p84 = por %p82, %p83
      %p85 = scmp.ne.s32.totalorder %s71, %s72
      %p86 = scmp.eq.s32.totalorder %s26, 1
      %p87 = por %p85, %p86
      %p89 = scmp.ne.s32.totalorder %s72, %s88
      %p90 = scmp.eq.s32.totalorder %s26, 0
      %p91 = por %p89, %p90
      %s92 = ssub.s32 %s27, %s39
      %s93 = ssub.s32 %s28, %s35
      %s94 = sor.u32 %s92, %s93
      %p95 = scmp.eq.s32.totalorder %s94, 0
      %s97 = sadd.s32 %s96, 1
      %s98 = scalar_select %p95, %s96, %s97
      %p101 = pneg %p95
      %p102 = scmp.eq.s32.totalorder %s20, 1
      %p103 = por %p101, %p102
      %p104 = scmp.ne.s32.totalorder %s96, %s99
      %p105 = scmp.eq.s32.totalorder %s20, 0
      %p106 = por %p104, %p105
      %p107 = scmp.ne.s32.totalorder %s96, %s99
      %p108 = scmp.eq.s32.totalorder %s25, 1
      %p109 = por %p107, %p108
      %p110 = scmp.ne.s32.totalorder %s99, %s100
      %p111 = scmp.eq.s32.totalorder %s25, 0
      %p112 = por %p110, %p111
      %p113 = scmp.ne.s32.totalorder %s99, %s100
      %p114 = scmp.eq.s32.totalorder %s26, 1
      %p115 = por %p113, %p114
      %p117 = scmp.ne.s32.totalorder %s100, %s116
      %p118 = scmp.eq.s32.totalorder %s26, 0
      %p119 = por %p117, %p118
      %s120 = ssub.s32 %s27, %s39
      %s121 = ssub.s32 %s28, %s35
      %s122 = sor.u32 %s120, %s121
      %p123 = scmp.eq.s32.totalorder %s122, 0
      %s125 = sadd.s32 %s124, 1
      %s126 = scalar_select %p123, %s124, %s125
      %p129 = pneg %p123
      %p130 = scmp.eq.s32.totalorder %s20, 1
      %p131 = por %p129, %p130
      %p132 = scmp.ne.s32.totalorder %s124, %s127
      %p133 = scmp.eq.s32.totalorder %s20, 0
      %p134 = por %p132, %p133
      %p135 = scmp.ne.s32.totalorder %s124, %s127
      %p136 = scmp.eq.s32.totalorder %s25, 1
      %p137 = por %p135, %p136
      %p138 = scmp.ne.s32.totalorder %s127, %s128
      %p139 = scmp.eq.s32.totalorder %s25, 0
      %p140 = por %p138, %p139
      %p141 = scmp.ne.s32.totalorder %s127, %s128
      %p142 = scmp.eq.s32.totalorder %s26, 1
      %p143 = por %p141, %p142
      %p145 = scmp.ne.s32.totalorder %s128, %s144
      %p146 = scmp.eq.s32.totalorder %s26, 0
      %p147 = por %p145, %p146
      %p148 = scmp.le.s32.totalorder 1, %s20
      %p149 = scmp.lt.s32.totalorder %s20, 3
      %p150 = pnand %p148, %p149
      %p151 = pneg %p150
      // Predicated region
      $region9: #{basic_block_forward.4} parent=5 // pred_check
        _
      $region10: #{basic_block_forward.4} parent=5 // pred_check_branch
        %153 = sbr.rel (%p150) target = $region12
      $region11: #{basic_block_forward.4} parent=5 // pred_region
        %s154 = ssub.s32 %s20, 1
        // Predicated region
        $region13: #{basic_block_forward.4} parent=11 // pred_check
          %p155 = pneg %p84
        $region14: #{basic_block_forward.4} parent=11 // pred_check_branch
          %157 = sbr.rel (%p155) target = $region16
        $region15: #{basic_block_forward.4} parent=11 // pred_region
          %s159 = ssub.s32 9216, 9216
          %160 = vsyncadd [#allocation7], %s159
          %s161 = smul.addr %s30, 64
          %s162 = scalar_lea.hbm %s1, %s161
          %s163 = sshll.u32 [#allocation6], 4
          %s164 = int_to_ptr.vmem [resolvable:$true] %s163
          %169 = dma.hbm_to_vmem [thread:$0]  %s162, 9216, %s164, [#allocation7], 64, 64, 4
        $region16: #{basic_block_forward.4} parent=11 // pred_fallthru
          _
      $region12: #{basic_block_forward.4} parent=5 // pred_fallthru
        _
      %p170 = scmp.lt.s32.totalorder %s20, 2
      // Predicated region
      $region17: #{basic_block_forward.4} parent=5 // pred_check
        %p171 = pneg %p170
      $region18: #{basic_block_forward.4} parent=5 // pred_check_branch
        %173 = sbr.rel (%p171) target = $region20
      $region19: #{basic_block_forward.4} parent=5 // pred_region
        // Predicated region
        $region21: #{basic_block_forward.4} parent=19 // pred_check
          %p174 = pneg %p52
        $region22: #{basic_block_forward.4} parent=19 // pred_check_branch
          %176 = sbr.rel (%p174) target = $region24
        $region23: #{basic_block_forward.4} parent=19 // pred_region
          %s177 = sand.u32 %s42, 1
          %s178 = scalar_lea.sflag [#allocation4], %s177
          %s179 = sand.u32 %s42, 1
          %s180 = smul.addr %s179, 128
          %s181 = scalar_lea.vmem [#allocation3], %s180
          %s183 = ssub.s32 2048, 2048
          %184 = vsyncadd %s178, %s183
          %s185 = smul.addr %s27, 32
          %s186 = smul.addr %s185, 64
          %s187 = scalar_lea.hbm %s0, %s186
          %s188 = sshll.u32 %s181, 4
          %s189 = int_to_ptr.vmem [resolvable:$true] %s188
          %194 = dma.hbm_to_vmem [thread:$0]  %s187, 2048, %s189, %s178, 64, 64, 4
        $region24: #{basic_block_forward.4} parent=19 // pred_fallthru
          _
      $region20: #{basic_block_forward.4} parent=5 // pred_fallthru
        _
      %p195 = scmp.le.s32.totalorder 1, %s20
      %p196 = scmp.lt.s32.totalorder %s20, 3
      %p197 = pnand %p195, %p196
      %p198 = pneg %p197
      // Predicated region
      $region25: #{basic_block_forward.4} parent=5 // pred_check
        _
      $region26: #{basic_block_forward.4} parent=5 // pred_check_branch
        %200 = sbr.rel (%p197) target = $region28
      $region27: #{basic_block_forward.4} parent=5 // pred_region
        %s201 = ssub.s32 %s20, 1
        %s202 = sand.u32 %s45, 1
        %s203 = scalar_lea.sflag [#allocation4], %s202
        %s204 = sand.u32 %s45, 1
        %s205 = smul.addr %s204, 128
        %s206 = scalar_lea.vmem [#allocation3], %s205
        // Predicated region
        $region29: #{basic_block_forward.4} parent=27 // pred_check
          %p207 = pneg %p58
        $region30: #{basic_block_forward.4} parent=27 // pred_check_branch
          %209 = sbr.rel (%p207) target = $region32
        $region31: #{basic_block_forward.4} parent=27 // pred_region
          %210 = dma.done %s203, 2048
        $region32: #{basic_block_forward.4} parent=27 // pred_fallthru
          _
        // Predicated region
        $region33: #{basic_block_forward.4} parent=27 // pred_check
          %p211 = pneg %p84
        $region34: #{basic_block_forward.4} parent=27 // pred_check_branch
          %213 = sbr.rel (%p211) target = $region36
        $region35: #{basic_block_forward.4} parent=27 // pred_region
          %214 = dma.done [#allocation7], 9216
        $region36: #{basic_block_forward.4} parent=27 // pred_fallthru
          _
        %s215 = sand.u32 %s45, 1
        %s216 = scalar_lea.sflag [#allocation4], %s215
        %s217 = sand.u32 %s45, 1
        %s218 = smul.addr %s217, 128
        %s219 = scalar_lea.vmem [#allocation3], %s218
        %p220 = pneg %p58
        %p221 = pneg %p55
        %p222 = pneg %p84
        %p223 = pneg %p81
        %p224 = pneg %p112
        %p225 = pneg %p109
        %s226 = sand.u32 %s99, 1
        %s227 = scalar_lea.sflag [#allocation5], %s226
        %s228 = sand.u32 %s99, 1
        %s229 = smul.addr %s228, 128
        %s230 = scalar_lea.vmem [#allocation8], %s229
        %p231 = pneg %p140
        %p232 = pneg %p137
        %s233 = sand.u32 %s127, 1
        %s234 = scalar_lea.sflag [#allocation10], %s233
        %s235 = sand.u32 %s127, 1
        %s236 = smul.addr %s235, 8
        %s237 = scalar_lea.vmem [#allocation9], %s236
        %v239 = vld [vmem:[%s206] sm:$0xf]
        %v240 = vld [vmem:[%s206 + $0x4] sm:$0xf]
        %v241 = vld [vmem:[%s206 + $0x8] sm:$0xf]
        %v242 = vld [vmem:[%s206 + $0xc] sm:$0xf]
        %v243 = vld [vmem:[%s206 + $0x10] sm:$0xf]
        %v244 = vld [vmem:[%s206 + $0x14] sm:$0xf]
        %v245 = vld [vmem:[%s206 + $0x18] sm:$0xf]
        %v246 = vld [vmem:[%s206 + $0x1c] sm:$0xf]
        %v247 = vld [vmem:[%s206 + $0x20] sm:$0xf]
        %v248 = vld [vmem:[%s206 + $0x24] sm:$0xf]
        %v249 = vld [vmem:[%s206 + $0x28] sm:$0xf]
        %v250 = vld [vmem:[%s206 + $0x2c] sm:$0xf]
        %v251 = vld [vmem:[%s206 + $0x30] sm:$0xf]
        %v252 = vld [vmem:[%s206 + $0x34] sm:$0xf]
        %v253 = vld [vmem:[%s206 + $0x38] sm:$0xf]
        %v254 = vld [vmem:[%s206 + $0x3c] sm:$0xf]
        %v255 = vld [vmem:[%s206 + $0x40] sm:$0xf]
        %v256 = vld [vmem:[%s206 + $0x44] sm:$0xf]
        %v257 = vld [vmem:[%s206 + $0x48] sm:$0xf]
        %v258 = vld [vmem:[%s206 + $0x4c] sm:$0xf]
        %v259 = vld [vmem:[%s206 + $0x50] sm:$0xf]
        %v260 = vld [vmem:[%s206 + $0x54] sm:$0xf]
        %v261 = vld [vmem:[%s206 + $0x58] sm:$0xf]
        %v262 = vld [vmem:[%s206 + $0x5c] sm:$0xf]
        %v263 = vld [vmem:[%s206 + $0x60] sm:$0xf]
        %v264 = vld [vmem:[%s206 + $0x64] sm:$0xf]
        %v265 = vld [vmem:[%s206 + $0x68] sm:$0xf]
        %v266 = vld [vmem:[%s206 + $0x6c] sm:$0xf]
        %v267 = vld [vmem:[%s206 + $0x70] sm:$0xf]
        %v268 = vld [vmem:[%s206 + $0x74] sm:$0xf]
        %v269 = vld [vmem:[%s206 + $0x78] sm:$0xf]
        %v270 = vld [vmem:[%s206 + $0x7c] sm:$0xf]
        %271 = vst [vmem:[#allocation2] sm:$0xff] 0
        %272 = vst [vmem:[#allocation2 + $0x8] sm:$0xff] 0
        %273 = vst [vmem:[#allocation2 + $0x10] sm:$0xff] 0
        %s274 = scalar_lea.vmem [#allocation2], 408
        %275 = vst [vmem:[%s274] sm:$0xff] 0
        %276 = vst [vmem:[%s274 + $0x8] sm:$0xff] 0
        %277 = vst [vmem:[%s274 + $0x10] sm:$0xff] 0
        %v310 = vunpack.c.l.b16 %v239
        %v311 = vunpack.c.l.b16 %v240
        %v312 = vunpack.c.l.b16 %v241
        %v313 = vunpack.c.l.b16 %v242
        %v314 = vunpack.c.l.b16 %v243
        %v315 = vunpack.c.l.b16 %v244
        %v316 = vunpack.c.l.b16 %v245
        %v317 = vunpack.c.l.b16 %v246
        %v318 = vunpack.c.l.b16 %v247
        %v319 = vunpack.c.l.b16 %v248
        %v320 = vunpack.c.l.b16 %v249
        %v321 = vunpack.c.l.b16 %v250
        %v322 = vunpack.c.l.b16 %v251
        %v323 = vunpack.c.l.b16 %v252
        %v324 = vunpack.c.l.b16 %v253
        %v325 = vunpack.c.l.b16 %v254
        %v326 = vunpack.c.l.b16 %v255
        %v327 = vunpack.c.l.b16 %v256
        %v328 = vunpack.c.l.b16 %v257
        %v329 = vunpack.c.l.b16 %v258
        %v330 = vunpack.c.l.b16 %v259
        %v331 = vunpack.c.l.b16 %v260
        %v332 = vunpack.c.l.b16 %v261
        %v333 = vunpack.c.l.b16 %v262
        %v334 = vunpack.c.l.b16 %v263
        %v335 = vunpack.c.l.b16 %v264
        %v336 = vunpack.c.l.b16 %v265
        %v337 = vunpack.c.l.b16 %v266
        %v338 = vunpack.c.l.b16 %v267
        %v339 = vunpack.c.l.b16 %v268
        %v340 = vunpack.c.l.b16 %v269
        %v341 = vunpack.c.l.b16 %v270
        %v342 = vpack.c.b16 %v311, %v310
        %v343 = vpack.c.b16 %v313, %v312
        %v344 = vpack.c.b16 %v315, %v314
        %v345 = vpack.c.b16 %v317, %v316
        %v346 = vpack.c.b16 %v319, %v318
        %v347 = vpack.c.b16 %v321, %v320
        %v348 = vpack.c.b16 %v323, %v322
        %v349 = vpack.c.b16 %v325, %v324
        %v350 = vpack.c.b16 %v327, %v326
        %v351 = vpack.c.b16 %v329, %v328
        %v352 = vpack.c.b16 %v331, %v330
        %v353 = vpack.c.b16 %v333, %v332
        %v354 = vpack.c.b16 %v335, %v334
        %v355 = vpack.c.b16 %v337, %v336
        %v356 = vpack.c.b16 %v339, %v338
        %v357 = vpack.c.b16 %v341, %v340
        %v359 = vshrl.u32 %v342, 16
        %v361 = vrot.slane %v359, 7
        %v362 = vshll.u32 %v342, 16
        %v364 = vor.u32 %v361, %v362
        %v366 = vshrl.u32 %v343, 16
        %v368 = vrot.slane %v366, 7
        %v369 = vshll.u32 %v343, 16
        %v371 = vor.u32 %v368, %v369
        %v373 = vshrl.u32 %v344, 16
        %v375 = vrot.slane %v373, 7
        %v376 = vshll.u32 %v344, 16
        %v378 = vor.u32 %v375, %v376
        %v380 = vshrl.u32 %v345, 16
        %v382 = vrot.slane %v380, 7
        %v383 = vshll.u32 %v345, 16
        %v385 = vor.u32 %v382, %v383
        %v387 = vshrl.u32 %v346, 16
        %v389 = vrot.slane %v387, 7
        %v390 = vshll.u32 %v346, 16
        %v392 = vor.u32 %v389, %v390
        %v394 = vshrl.u32 %v347, 16
        %v396 = vrot.slane %v394, 7
        %v397 = vshll.u32 %v347, 16
        %v399 = vor.u32 %v396, %v397
        %v401 = vshrl.u32 %v348, 16
        %v403 = vrot.slane %v401, 7
        %v404 = vshll.u32 %v348, 16
        %v406 = vor.u32 %v403, %v404
        %v408 = vshrl.u32 %v349, 16
        %v410 = vrot.slane %v408, 7
        %v411 = vshll.u32 %v349, 16
        %v413 = vor.u32 %v410, %v411
        %v415 = vshrl.u32 %v350, 16
        %v417 = vrot.slane %v415, 7
        %v418 = vshll.u32 %v350, 16
        %v420 = vor.u32 %v417, %v418
        %v422 = vshrl.u32 %v351, 16
        %v424 = vrot.slane %v422, 7
        %v425 = vshll.u32 %v351, 16
        %v427 = vor.u32 %v424, %v425
        %v429 = vshrl.u32 %v352, 16
        %v431 = vrot.slane %v429, 7
        %v432 = vshll.u32 %v352, 16
        %v434 = vor.u32 %v431, %v432
        %v436 = vshrl.u32 %v353, 16
        %v438 = vrot.slane %v436, 7
        %v439 = vshll.u32 %v353, 16
        %v441 = vor.u32 %v438, %v439
        %v443 = vshrl.u32 %v354, 16
        %v445 = vrot.slane %v443, 7
        %v446 = vshll.u32 %v354, 16
        %v448 = vor.u32 %v445, %v446
        %v450 = vshrl.u32 %v355, 16
        %v452 = vrot.slane %v450, 7
        %v453 = vshll.u32 %v355, 16
        %v455 = vor.u32 %v452, %v453
        %v457 = vshrl.u32 %v356, 16
        %v459 = vrot.slane %v457, 7
        %v460 = vshll.u32 %v356, 16
        %v462 = vor.u32 %v459, %v460
        %v464 = vshrl.u32 %v357, 16
        %v466 = vrot.slane %v464, 7
        %v467 = vshll.u32 %v357, 16
        %v469 = vor.u32 %v466, %v467
        %vm486 = vcmask 1040384
        %vm487 = vsmask.f32 256
        %vm488 = vmand %vm486, %vm487
        %v489 = vsel %vm488, 0, %v364
        %v490 = vsel %vm488, 0, %v371
        %v491 = vsel %vm488, 0, %v378
        %v492 = vsel %vm488, 0, %v385
        %v493 = vsel %vm488, 0, %v392
        %v494 = vsel %vm488, 0, %v399
        %v495 = vsel %vm488, 0, %v406
        %v496 = vsel %vm488, 0, %v413
        %v497 = vsel %vm488, 0, %v420
        %v498 = vsel %vm488, 0, %v427
        %v499 = vsel %vm488, 0, %v434
        %v500 = vsel %vm488, 0, %v441
        %v501 = vsel %vm488, 0, %v448
        %v502 = vsel %vm488, 0, %v455
        %v503 = vsel %vm488, 0, %v462
        %v504 = vsel %vm488, 0, %v469
        %s505 = scalar_lea.vmem [#allocation2], 24
        %506 = vst [vmem:[%s505] sm:$0xff] %v489
        %507 = vst [vmem:[%s505 + $0x18] sm:$0xff] %v490
        %508 = vst [vmem:[%s505 + $0x30] sm:$0xff] %v491
        %509 = vst [vmem:[%s505 + $0x48] sm:$0xff] %v492
        %510 = vst [vmem:[%s505 + $0x60] sm:$0xff] %v493
        %511 = vst [vmem:[%s505 + $0x78] sm:$0xff] %v494
        %512 = vst [vmem:[%s505 + $0x90] sm:$0xff] %v495
        %513 = vst [vmem:[%s505 + $0xa8] sm:$0xff] %v496
        %514 = vst [vmem:[%s505 + $0xc0] sm:$0xff] %v497
        %515 = vst [vmem:[%s505 + $0xd8] sm:$0xff] %v498
        %516 = vst [vmem:[%s505 + $0xf0] sm:$0xff] %v499
        %517 = vst [vmem:[%s505 + $0x108] sm:$0xff] %v500
        %518 = vst [vmem:[%s505 + $0x120] sm:$0xff] %v501
        %519 = vst [vmem:[%s505 + $0x138] sm:$0xff] %v502
        %520 = vst [vmem:[%s505 + $0x150] sm:$0xff] %v503
        %521 = vst [vmem:[%s505 + $0x168] sm:$0xff] %v504
        %538 = vst [vmem:[%s505 + $0x8] sm:$0xff] %v342
        %539 = vst [vmem:[%s505 + $0x20] sm:$0xff] %v343
        %540 = vst [vmem:[%s505 + $0x38] sm:$0xff] %v344
        %541 = vst [vmem:[%s505 + $0x50] sm:$0xff] %v345
        %542 = vst [vmem:[%s505 + $0x68] sm:$0xff] %v346
        %543 = vst [vmem:[%s505 + $0x80] sm:$0xff] %v347
        %544 = vst [vmem:[%s505 + $0x98] sm:$0xff] %v348
        %545 = vst [vmem:[%s505 + $0xb0] sm:$0xff] %v349
        %546 = vst [vmem:[%s505 + $0xc8] sm:$0xff] %v350
        %547 = vst [vmem:[%s505 + $0xe0] sm:$0xff] %v351
        %548 = vst [vmem:[%s505 + $0xf8] sm:$0xff] %v352
        %549 = vst [vmem:[%s505 + $0x110] sm:$0xff] %v353
        %550 = vst [vmem:[%s505 + $0x128] sm:$0xff] %v354
        %551 = vst [vmem:[%s505 + $0x140] sm:$0xff] %v355
        %552 = vst [vmem:[%s505 + $0x158] sm:$0xff] %v356
        %553 = vst [vmem:[%s505 + $0x170] sm:$0xff] %v357
        %v554 = vrot.slane %v362, 1
        %v555 = vor.u32 %v359, %v554
        %v556 = vrot.slane %v369, 1
        %v557 = vor.u32 %v366, %v556
        %v558 = vrot.slane %v376, 1
        %v559 = vor.u32 %v373, %v558
        %v560 = vrot.slane %v383, 1
        %v561 = vor.u32 %v380, %v560
        %v562 = vrot.slane %v390, 1
        %v563 = vor.u32 %v387, %v562
        %v564 = vrot.slane %v397, 1
        %v565 = vor.u32 %v394, %v564
        %v566 = vrot.slane %v404, 1
        %v567 = vor.u32 %v401, %v566
        %v568 = vrot.slane %v411, 1
        %v569 = vor.u32 %v408, %v568
        %v570 = vrot.slane %v418, 1
        %v571 = vor.u32 %v415, %v570
        %v572 = vrot.slane %v425, 1
        %v573 = vor.u32 %v422, %v572
        %v574 = vrot.slane %v432, 1
        %v575 = vor.u32 %v429, %v574
        %v576 = vrot.slane %v439, 1
        %v577 = vor.u32 %v436, %v576
        %v578 = vrot.slane %v446, 1
        %v579 = vor.u32 %v443, %v578
        %v580 = vrot.slane %v453, 1
        %v581 = vor.u32 %v450, %v580
        %v582 = vrot.slane %v460, 1
        %v583 = vor.u32 %v457, %v582
        %v584 = vrot.slane %v467, 1
        %v585 = vor.u32 %v464, %v584
        %vm602 = vcmask 1047552
        %vm603 = vsmask.f32 7424
        %vm604 = vmand %vm602, %vm603
        %v605 = vsel %vm604, %v555, 0
        %v606 = vsel %vm604, %v557, 0
        %v607 = vsel %vm604, %v559, 0
        %v608 = vsel %vm604, %v561, 0
        %v609 = vsel %vm604, %v563, 0
        %v610 = vsel %vm604, %v565, 0
        %v611 = vsel %vm604, %v567, 0
        %v612 = vsel %vm604, %v569, 0
        %v613 = vsel %vm604, %v571, 0
        %v614 = vsel %vm604, %v573, 0
        %v615 = vsel %vm604, %v575, 0
        %v616 = vsel %vm604, %v577, 0
        %v617 = vsel %vm604, %v579, 0
        %v618 = vsel %vm604, %v581, 0
        %v619 = vsel %vm604, %v583, 0
        %v620 = vsel %vm604, %v585, 0
        %621 = vst [vmem:[%s505 + $0x10] sm:$0xff] %v605
        %622 = vst [vmem:[%s505 + $0x28] sm:$0xff] %v606
        %623 = vst [vmem:[%s505 + $0x40] sm:$0xff] %v607
        %624 = vst [vmem:[%s505 + $0x58] sm:$0xff] %v608
        %625 = vst [vmem:[%s505 + $0x70] sm:$0xff] %v609
        %626 = vst [vmem:[%s505 + $0x88] sm:$0xff] %v610
        %627 = vst [vmem:[%s505 + $0xa0] sm:$0xff] %v611
        %628 = vst [vmem:[%s505 + $0xb8] sm:$0xff] %v612
        %629 = vst [vmem:[%s505 + $0xd0] sm:$0xff] %v613
        %630 = vst [vmem:[%s505 + $0xe8] sm:$0xff] %v614
        %631 = vst [vmem:[%s505 + $0x100] sm:$0xff] %v615
        %632 = vst [vmem:[%s505 + $0x118] sm:$0xff] %v616
        %633 = vst [vmem:[%s505 + $0x130] sm:$0xff] %v617
        %634 = vst [vmem:[%s505 + $0x148] sm:$0xff] %v618
        %635 = vst [vmem:[%s505 + $0x160] sm:$0xff] %v619
        %636 = vst [vmem:[%s505 + $0x178] sm:$0xff] %v620
        %v637 = vld [vmem:[#allocation2] sm:$0xff]
        %v638 = vld [vmem:[#allocation2 + $0x8] sm:$0xff]
        %v639 = vld [vmem:[#allocation2 + $0x10] sm:$0xff]
        %v640 = vld [vmem:[#allocation2 + $0x18] sm:$0xff]
        %v641 = vld [vmem:[#allocation2 + $0x20] sm:$0xff]
        %v642 = vld [vmem:[#allocation2 + $0x28] sm:$0xff]
        %v643 = vld [vmem:[#allocation2 + $0x30] sm:$0xff]
        %v644 = vld [vmem:[#allocation2 + $0x38] sm:$0xff]
        %v645 = vld [vmem:[#allocation2 + $0x40] sm:$0xff]
        %v646 = vld [vmem:[#allocation2 + $0x48] sm:$0xff]
        %v647 = vld [vmem:[#allocation2 + $0x50] sm:$0xff]
        %v648 = vld [vmem:[#allocation2 + $0x58] sm:$0xff]
        %v649 = vld [vmem:[#allocation2 + $0x60] sm:$0xff]
        %v650 = vld [vmem:[#allocation2 + $0x68] sm:$0xff]
        %v651 = vld [vmem:[#allocation2 + $0x70] sm:$0xff]
        %v652 = vld [vmem:[#allocation2 + $0x78] sm:$0xff]
        %v653 = vld [vmem:[#allocation2 + $0x80] sm:$0xff]
        %v654 = vld [vmem:[#allocation2 + $0x88] sm:$0xff]
        %v655 = vld [vmem:[#allocation2 + $0x90] sm:$0xff]
        %v656 = vld [vmem:[#allocation2 + $0x98] sm:$0xff]
        %v657 = vld [vmem:[#allocation2 + $0xa0] sm:$0xff]
        %v658 = vld [vmem:[#allocation2 + $0xa8] sm:$0xff]
        %v659 = vld [vmem:[#allocation2 + $0xb0] sm:$0xff]
        %v660 = vld [vmem:[#allocation2 + $0xb8] sm:$0xff]
        %v661 = vld [vmem:[#allocation2 + $0xc0] sm:$0xff]
        %v662 = vld [vmem:[#allocation2 + $0xc8] sm:$0xff]
        %v663 = vld [vmem:[#allocation2 + $0xd0] sm:$0xff]
        %v664 = vld [vmem:[#allocation2 + $0xd8] sm:$0xff]
        %v665 = vld [vmem:[#allocation2 + $0xe0] sm:$0xff]
        %v666 = vld [vmem:[#allocation2 + $0xe8] sm:$0xff]
        %v667 = vld [vmem:[#allocation2 + $0xf0] sm:$0xff]
        %v668 = vld [vmem:[#allocation2 + $0xf8] sm:$0xff]
        %v669 = vld [vmem:[#allocation2 + $0x100] sm:$0xff]
        %v670 = vld [vmem:[#allocation2 + $0x108] sm:$0xff]
        %v671 = vld [vmem:[#allocation2 + $0x110] sm:$0xff]
        %v672 = vld [vmem:[#allocation2 + $0x118] sm:$0xff]
        %v673 = vld [vmem:[#allocation2 + $0x120] sm:$0xff]
        %v674 = vld [vmem:[#allocation2 + $0x128] sm:$0xff]
        %v675 = vld [vmem:[#allocation2 + $0x130] sm:$0xff]
        %v676 = vld [vmem:[#allocation2 + $0x138] sm:$0xff]
        %v677 = vld [vmem:[#allocation2 + $0x140] sm:$0xff]
        %v678 = vld [vmem:[#allocation2 + $0x148] sm:$0xff]
        %v679 = vld [vmem:[#allocation2 + $0x150] sm:$0xff]
        %v680 = vld [vmem:[#allocation2 + $0x158] sm:$0xff]
        %v681 = vld [vmem:[#allocation2 + $0x160] sm:$0xff]
        %v682 = vld [vmem:[#allocation2 + $0x168] sm:$0xff]
        %v683 = vld [vmem:[#allocation2 + $0x170] sm:$0xff]
        %v684 = vld [vmem:[#allocation2 + $0x178] sm:$0xff]
        %v685 = vld [vmem:[#allocation6] sm:$0xf]
        %v686 = vld [vmem:[#allocation6 + $0x4] sm:$0xf]
        %v687 = vld [vmem:[#allocation6 + $0x8] sm:$0xf]
        %v688 = vld [vmem:[#allocation6 + $0xc] sm:$0xf]
        %v689 = vld [vmem:[#allocation6 + $0x10] sm:$0xf]
        %v690 = vld [vmem:[#allocation6 + $0x14] sm:$0xf]
        %v691 = vld [vmem:[#allocation6 + $0x18] sm:$0xf]
        %v692 = vld [vmem:[#allocation6 + $0x1c] sm:$0xf]
        %v693 = vld [vmem:[#allocation6 + $0x20] sm:$0xf]
        %v694 = vld [vmem:[#allocation6 + $0x24] sm:$0xf]
        %v695 = vld [vmem:[#allocation6 + $0x28] sm:$0xf]
        %v696 = vld [vmem:[#allocation6 + $0x2c] sm:$0xf]
        %v697 = vld [vmem:[#allocation6 + $0x30] sm:$0xf]
        %v698 = vld [vmem:[#allocation6 + $0x34] sm:$0xf]
        %v699 = vld [vmem:[#allocation6 + $0x38] sm:$0xf]
        %v700 = vld [vmem:[#allocation6 + $0x3c] sm:$0xf]
        %v701 = vld [vmem:[#allocation6 + $0x40] sm:$0xf]
        %v702 = vld [vmem:[#allocation6 + $0x44] sm:$0xf]
        %v703 = vld [vmem:[#allocation6 + $0x48] sm:$0xf]
        %v704 = vld [vmem:[#allocation6 + $0x4c] sm:$0xf]
        %v705 = vld [vmem:[#allocation6 + $0x50] sm:$0xf]
        %v706 = vld [vmem:[#allocation6 + $0x54] sm:$0xf]
        %v707 = vld [vmem:[#allocation6 + $0x58] sm:$0xf]
        %v708 = vld [vmem:[#allocation6 + $0x5c] sm:$0xf]
        %v709 = vld [vmem:[#allocation6 + $0x60] sm:$0xf]
        %v710 = vld [vmem:[#allocation6 + $0x64] sm:$0xf]
        %v711 = vld [vmem:[#allocation6 + $0x68] sm:$0xf]
        %v712 = vld [vmem:[#allocation6 + $0x6c] sm:$0xf]
        %v713 = vld [vmem:[#allocation6 + $0x70] sm:$0xf]
        %v714 = vld [vmem:[#allocation6 + $0x74] sm:$0xf]
        %v715 = vld [vmem:[#allocation6 + $0x78] sm:$0xf]
        %v716 = vld [vmem:[#allocation6 + $0x7c] sm:$0xf]
        %v717 = vld [vmem:[#allocation6 + $0x80] sm:$0xf]
        %v718 = vld [vmem:[#allocation6 + $0x84] sm:$0xf]
        %v719 = vld [vmem:[#allocation6 + $0x88] sm:$0xf]
        %v720 = vld [vmem:[#allocation6 + $0x8c] sm:$0xf]
        %v721 = vld [vmem:[#allocation6 + $0x90] sm:$0xf]
        %v722 = vld [vmem:[#allocation6 + $0x94] sm:$0xf]
        %v723 = vld [vmem:[#allocation6 + $0x98] sm:$0xf]
        %v724 = vld [vmem:[#allocation6 + $0x9c] sm:$0xf]
        %v725 = vld [vmem:[#allocation6 + $0xa0] sm:$0xf]
        %v726 = vld [vmem:[#allocation6 + $0xa4] sm:$0xf]
        %v727 = vld [vmem:[#allocation6 + $0xa8] sm:$0xf]
        %v728 = vld [vmem:[#allocation6 + $0xac] sm:$0xf]
        %v729 = vld [vmem:[#allocation6 + $0xb0] sm:$0xf]
        %v730 = vld [vmem:[#allocation6 + $0xb4] sm:$0xf]
        %v731 = vld [vmem:[#allocation6 + $0xb8] sm:$0xf]
        %v732 = vld [vmem:[#allocation6 + $0xbc] sm:$0xf]
        %v733 = vld [vmem:[%s505] sm:$0xff]
        %v734 = vld [vmem:[%s505 + $0x8] sm:$0xff]
        %v735 = vld [vmem:[%s505 + $0x10] sm:$0xff]
        %v736 = vld [vmem:[%s505 + $0x18] sm:$0xff]
        %v737 = vld [vmem:[%s505 + $0x20] sm:$0xff]
        %v738 = vld [vmem:[%s505 + $0x28] sm:$0xff]
        %v739 = vld [vmem:[%s505 + $0x30] sm:$0xff]
        %v740 = vld [vmem:[%s505 + $0x38] sm:$0xff]
        %v741 = vld [vmem:[%s505 + $0x40] sm:$0xff]
        %v742 = vld [vmem:[%s505 + $0x48] sm:$0xff]
        %v743 = vld [vmem:[%s505 + $0x50] sm:$0xff]
        %v744 = vld [vmem:[%s505 + $0x58] sm:$0xff]
        %v745 = vld [vmem:[%s505 + $0x60] sm:$0xff]
        %v746 = vld [vmem:[%s505 + $0x68] sm:$0xff]
        %v747 = vld [vmem:[%s505 + $0x70] sm:$0xff]
        %v748 = vld [vmem:[%s505 + $0x78] sm:$0xff]
        %v749 = vld [vmem:[%s505 + $0x80] sm:$0xff]
        %v750 = vld [vmem:[%s505 + $0x88] sm:$0xff]
        %v751 = vld [vmem:[%s505 + $0x90] sm:$0xff]
        %v752 = vld [vmem:[%s505 + $0x98] sm:$0xff]
        %v753 = vld [vmem:[%s505 + $0xa0] sm:$0xff]
        %v754 = vld [vmem:[%s505 + $0xa8] sm:$0xff]
        %v755 = vld [vmem:[%s505 + $0xb0] sm:$0xff]
        %v756 = vld [vmem:[%s505 + $0xb8] sm:$0xff]
        %v757 = vld [vmem:[%s505 + $0xc0] sm:$0xff]
        %v758 = vld [vmem:[%s505 + $0xc8] sm:$0xff]
        %v759 = vld [vmem:[%s505 + $0xd0] sm:$0xff]
        %v760 = vld [vmem:[%s505 + $0xd8] sm:$0xff]
        %v761 = vld [vmem:[%s505 + $0xe0] sm:$0xff]
        %v762 = vld [vmem:[%s505 + $0xe8] sm:$0xff]
        %v763 = vld [vmem:[%s505 + $0xf0] sm:$0xff]
        %v764 = vld [vmem:[%s505 + $0xf8] sm:$0xff]
        %v765 = vld [vmem:[%s505 + $0x100] sm:$0xff]
        %v766 = vld [vmem:[%s505 + $0x108] sm:$0xff]
        %v767 = vld [vmem:[%s505 + $0x110] sm:$0xff]
        %v768 = vld [vmem:[%s505 + $0x118] sm:$0xff]
        %v769 = vld [vmem:[%s505 + $0x120] sm:$0xff]
        %v770 = vld [vmem:[%s505 + $0x128] sm:$0xff]
        %v771 = vld [vmem:[%s505 + $0x130] sm:$0xff]
        %v772 = vld [vmem:[%s505 + $0x138] sm:$0xff]
        %v773 = vld [vmem:[%s505 + $0x140] sm:$0xff]
        %v774 = vld [vmem:[%s505 + $0x148] sm:$0xff]
        %v775 = vld [vmem:[%s505 + $0x150] sm:$0xff]
        %v776 = vld [vmem:[%s505 + $0x158] sm:$0xff]
        %v777 = vld [vmem:[%s505 + $0x160] sm:$0xff]
        %v778 = vld [vmem:[%s505 + $0x168] sm:$0xff]
        %v779 = vld [vmem:[%s505 + $0x170] sm:$0xff]
        %v780 = vld [vmem:[%s505 + $0x178] sm:$0xff]
        %s781 = scalar_lea.vmem [#allocation6], 192
        %v782 = vld [vmem:[%s781] sm:$0xf]
        %v783 = vld [vmem:[%s781 + $0x4] sm:$0xf]
        %v784 = vld [vmem:[%s781 + $0x8] sm:$0xf]
        %v785 = vld [vmem:[%s781 + $0xc] sm:$0xf]
        %v786 = vld [vmem:[%s781 + $0x10] sm:$0xf]
        %v787 = vld [vmem:[%s781 + $0x14] sm:$0xf]
        %v788 = vld [vmem:[%s781 + $0x18] sm:$0xf]
        %v789 = vld [vmem:[%s781 + $0x1c] sm:$0xf]
        %v790 = vld [vmem:[%s781 + $0x20] sm:$0xf]
        %v791 = vld [vmem:[%s781 + $0x24] sm:$0xf]
        %v792 = vld [vmem:[%s781 + $0x28] sm:$0xf]
        %v793 = vld [vmem:[%s781 + $0x2c] sm:$0xf]
        %v794 = vld [vmem:[%s781 + $0x30] sm:$0xf]
        %v795 = vld [vmem:[%s781 + $0x34] sm:$0xf]
        %v796 = vld [vmem:[%s781 + $0x38] sm:$0xf]
        %v797 = vld [vmem:[%s781 + $0x3c] sm:$0xf]
        %v798 = vld [vmem:[%s781 + $0x40] sm:$0xf]
        %v799 = vld [vmem:[%s781 + $0x44] sm:$0xf]
        %v800 = vld [vmem:[%s781 + $0x48] sm:$0xf]
        %v801 = vld [vmem:[%s781 + $0x4c] sm:$0xf]
        %v802 = vld [vmem:[%s781 + $0x50] sm:$0xf]
        %v803 = vld [vmem:[%s781 + $0x54] sm:$0xf]
        %v804 = vld [vmem:[%s781 + $0x58] sm:$0xf]
        %v805 = vld [vmem:[%s781 + $0x5c] sm:$0xf]
        %v806 = vld [vmem:[%s781 + $0x60] sm:$0xf]
        %v807 = vld [vmem:[%s781 + $0x64] sm:$0xf]
        %v808 = vld [vmem:[%s781 + $0x68] sm:$0xf]
        %v809 = vld [vmem:[%s781 + $0x6c] sm:$0xf]
        %v810 = vld [vmem:[%s781 + $0x70] sm:$0xf]
        %v811 = vld [vmem:[%s781 + $0x74] sm:$0xf]
        %v812 = vld [vmem:[%s781 + $0x78] sm:$0xf]
        %v813 = vld [vmem:[%s781 + $0x7c] sm:$0xf]
        %v814 = vld [vmem:[%s781 + $0x80] sm:$0xf]
        %v815 = vld [vmem:[%s781 + $0x84] sm:$0xf]
        %v816 = vld [vmem:[%s781 + $0x88] sm:$0xf]
        %v817 = vld [vmem:[%s781 + $0x8c] sm:$0xf]
        %v818 = vld [vmem:[%s781 + $0x90] sm:$0xf]
        %v819 = vld [vmem:[%s781 + $0x94] sm:$0xf]
        %v820 = vld [vmem:[%s781 + $0x98] sm:$0xf]
        %v821 = vld [vmem:[%s781 + $0x9c] sm:$0xf]
        %v822 = vld [vmem:[%s781 + $0xa0] sm:$0xf]
        %v823 = vld [vmem:[%s781 + $0xa4] sm:$0xf]
        %v824 = vld [vmem:[%s781 + $0xa8] sm:$0xf]
        %v825 = vld [vmem:[%s781 + $0xac] sm:$0xf]
        %v826 = vld [vmem:[%s781 + $0xb0] sm:$0xf]
        %v827 = vld [vmem:[%s781 + $0xb4] sm:$0xf]
        %v828 = vld [vmem:[%s781 + $0xb8] sm:$0xf]
        %v829 = vld [vmem:[%s781 + $0xbc] sm:$0xf]
        %v878 = vunpack.c.l.b16 %v782
        %v879 = vunpack.c.l.b16 %v783
        %v880 = vunpack.c.l.b16 %v784
        %v881 = vunpack.c.l.b16 %v785
        %v882 = vunpack.c.l.b16 %v786
        %v883 = vunpack.c.l.b16 %v787
        %v884 = vunpack.c.l.b16 %v788
        %v885 = vunpack.c.l.b16 %v789
        %v886 = vunpack.c.l.b16 %v790
        %v887 = vunpack.c.l.b16 %v791
        %v888 = vunpack.c.l.b16 %v792
        %v889 = vunpack.c.l.b16 %v793
        %v890 = vunpack.c.l.b16 %v794
        %v891 = vunpack.c.l.b16 %v795
        %v892 = vunpack.c.l.b16 %v796
        %v893 = vunpack.c.l.b16 %v797
        %v894 = vunpack.c.l.b16 %v798
        %v895 = vunpack.c.l.b16 %v799
        %v896 = vunpack.c.l.b16 %v800
        %v897 = vunpack.c.l.b16 %v801
        %v898 = vunpack.c.l.b16 %v802
        %v899 = vunpack.c.l.b16 %v803
        %v900 = vunpack.c.l.b16 %v804
        %v901 = vunpack.c.l.b16 %v805
        %v902 = vunpack.c.l.b16 %v806
        %v903 = vunpack.c.l.b16 %v807
        %v904 = vunpack.c.l.b16 %v808
        %v905 = vunpack.c.l.b16 %v809
        %v906 = vunpack.c.l.b16 %v810
        %v907 = vunpack.c.l.b16 %v811
        %v908 = vunpack.c.l.b16 %v812
        %v909 = vunpack.c.l.b16 %v813
        %v910 = vunpack.c.l.b16 %v814
        %v911 = vunpack.c.l.b16 %v815
        %v912 = vunpack.c.l.b16 %v816
        %v913 = vunpack.c.l.b16 %v817
        %v914 = vunpack.c.l.b16 %v818
        %v915 = vunpack.c.l.b16 %v819
        %v916 = vunpack.c.l.b16 %v820
        %v917 = vunpack.c.l.b16 %v821
        %v918 = vunpack.c.l.b16 %v822
        %v919 = vunpack.c.l.b16 %v823
        %v920 = vunpack.c.l.b16 %v824
        %v921 = vunpack.c.l.b16 %v825
        %v922 = vunpack.c.l.b16 %v826
        %v923 = vunpack.c.l.b16 %v827
        %v924 = vunpack.c.l.b16 %v828
        %v925 = vunpack.c.l.b16 %v829
        %v926 = vpack.c.b16 %v879, %v878
        %v927 = vpack.c.b16 %v881, %v880
        %v928 = vpack.c.b16 %v883, %v882
        %v929 = vpack.c.b16 %v885, %v884
        %v930 = vpack.c.b16 %v887, %v886
        %v931 = vpack.c.b16 %v889, %v888
        %v932 = vpack.c.b16 %v891, %v890
        %v933 = vpack.c.b16 %v893, %v892
        %v934 = vpack.c.b16 %v895, %v894
        %v935 = vpack.c.b16 %v897, %v896
        %v936 = vpack.c.b16 %v899, %v898
        %v937 = vpack.c.b16 %v901, %v900
        %v938 = vpack.c.b16 %v903, %v902
        %v939 = vpack.c.b16 %v905, %v904
        %v940 = vpack.c.b16 %v907, %v906
        %v941 = vpack.c.b16 %v909, %v908
        %v942 = vpack.c.b16 %v911, %v910
        %v943 = vpack.c.b16 %v913, %v912
        %v944 = vpack.c.b16 %v915, %v914
        %v945 = vpack.c.b16 %v917, %v916
        %v946 = vpack.c.b16 %v919, %v918
        %v947 = vpack.c.b16 %v921, %v920
        %v948 = vpack.c.b16 %v923, %v922
        %v949 = vpack.c.b16 %v925, %v924
        %974 = vmatprep.subr.bf16.mxu0 0
        %975 = vmatpush1.bf16.msra.mxu0 %v926
        %976 = vmatprep.subr.bf16.mxu0 0
        %977 = vmatpush1.bf16.msra.mxu0 %v927
        %978 = vmatprep.subr.bf16.mxu0 0
        %979 = vmatpush1.bf16.msra.mxu0 %v928
        %980 = vmatprep.subr.bf16.mxu0 0
        %981 = vmatpush1.bf16.msra.mxu0 %v929
        %982 = vmatprep.subr.bf16.mxu0 0
        %983 = vmatpush1.bf16.msra.mxu0 %v930
        %984 = vmatprep.subr.bf16.mxu0 0
        %985 = vmatpush1.bf16.msra.mxu0 %v931
        %986 = vmatprep.subr.bf16.mxu0 0
        %987 = vmatpush1.bf16.msra.mxu0 %v932
        %988 = vmatprep.subr.bf16.mxu0 0
        %989 = vmatpush1.bf16.msra.mxu0 %v933
        %990 = vmatprep.subr.bf16.mxu0 0
        %991 = vmatpush1.bf16.msra.mxu0 %v934
        %992 = vmatprep.subr.bf16.mxu0 0
        %993 = vmatpush1.bf16.msra.mxu0 %v935
        %994 = vmatprep.subr.bf16.mxu0 0
        %995 = vmatpush1.bf16.msra.mxu0 %v936
        %996 = vmatprep.subr.bf16.mxu0 0
        %997 = vmatpush1.bf16.msra.mxu0 %v937
        %998 = vmatprep.subr.bf16.mxu0 0
        %999 = vmatpush1.bf16.msra.mxu0 %v938
        %1000 = vmatprep.subr.bf16.mxu0 0
        %1001 = vmatpush1.bf16.msra.mxu0 %v939
        %1002 = vmatprep.subr.bf16.mxu0 0
        %1003 = vmatpush1.bf16.msra.mxu0 %v940
        %1004 = vmatprep.subr.bf16.mxu0 0
        %1005 = vmatpush1.bf16.msra.mxu0 %v941
        %1006 = vmatprep.mubr.bf16.mxu0 %v734
        %1007 = vmatmul.mubr.bf16.gmra.mrb[0].mxu0 %v733
        %v1008 = vpop.f32.mrb[0].mxu0
        %v1009 = vadd.f32 0.0, %v1008
        %v1010 = vpop.f32.mrb[0].mxu0
        %v1011 = vpop.f32.mrb[0].mxu0
        %v1012 = vadd.f32 0.0, %v1011
        %v1013 = vpop.f32.mrb[0].mxu0
        %1014 = vmatprep.mubr.bf16.mxu0 %v737
        %1015 = vmatmul.mubr.bf16.gmra.mrb[0].mxu0 %v736
        %v1016 = vpop.f32.mrb[0].mxu0
        %v1017 = vadd.f32 0.0, %v1016
        %v1018 = vpop.f32.mrb[0].mxu0
        %v1019 = vpop.f32.mrb[0].mxu0
        %v1020 = vadd.f32 0.0, %v1019
        %v1021 = vpop.f32.mrb[0].mxu0
        %1022 = vmatprep.mubr.bf16.mxu0 %v740
        %1023 = vmatmul.mubr.bf16.gmra.mrb[0].mxu0 %v739
        %v1024 = vpop.f32.mrb[0].mxu0
        %v1025 = vadd.f32 0.0, %v1024
        %v1026 = vpop.f32.mrb[0].mxu0
        %v1027 = vpop.f32.mrb[0].mxu0
        %v1028 = vadd.f32 0.0, %v1027
        %v1029 = vpop.f32.mrb[0].mxu0
        %1030 = vmatprep.mubr.bf16.mxu0 %v743
        %1031 = vmatmul.mubr.bf16.gmra.mrb[0].mxu0 %v742
        %v1032 = vpop.f32.mrb[0].mxu0
        %v1033 = vadd.f32 0.0, %v1032
        %v1034 = vpop.f32.mrb[0].mxu0
        %v1035 = vpop.f32.mrb[0].mxu0
        %v1036 = vadd.f32 0.0, %v1035
        %v1037 = vpop.f32.mrb[0].mxu0
        %1038 = vmatprep.mubr.bf16.mxu0 %v746
        %1039 = vmatmul.mubr.bf16.gmra.mrb[0].mxu0 %v745
        %v1040 = vpop.f32.mrb[0].mxu0
        %v1041 = vadd.f32 0.0, %v1040
        %v1042 = vpop.f32.mrb[0].mxu0
        %v1043 = vpop.f32.mrb[0].mxu0
        %v1044 = vadd.f32 0.0, %v1043
        %v1045 = vpop.f32.mrb[0].mxu0
        %1046 = vmatprep.mubr.bf16.mxu0 %v749
        %1047 = vmatmul.mubr.bf16.gmra.mrb[0].mxu0 %v748
        %v1048 = vpop.f32.mrb[0].mxu0
        %v1049 = vadd.f32 0.0, %v1048
        %v1050 = vpop.f32.mrb[0].mxu0
        %v1051 = vpop.f32.mrb[0].mxu0
        %v1052 = vadd.f32 0.0, %v1051
        %v1053 = vpop.f32.mrb[0].mxu0
        %1054 = vmatprep.mubr.bf16.mxu0 %v752
        %1055 = vmatmul.mubr.bf16.gmra.mrb[0].mxu0 %v751
        %v1056 = vpop.f32.mrb[0].mxu0
        %v1057 = vadd.f32 0.0, %v1056
        %v1058 = vpop.f32.mrb[0].mxu0
        %v1059 = vpop.f32.mrb[0].mxu0
        %v1060 = vadd.f32 0.0, %v1059
        %v1061 = vpop.f32.mrb[0].mxu0
        %1062 = vmatprep.mubr.bf16.mxu0 %v755
        %1063 = vmatmul.mubr.bf16.gmra.mrb[0].mxu0 %v754
        %v1064 = vpop.f32.mrb[0].mxu0
        %v1065 = vadd.f32 0.0, %v1064
        %v1066 = vpop.f32.mrb[0].mxu0
        %v1067 = vpop.f32.mrb[0].mxu0
        %v1068 = vadd.f32 0.0, %v1067
        %v1069 = vpop.f32.mrb[0].mxu0
        %1070 = vmatprep.mubr.bf16.mxu0 %v758
        %1071 = vmatmul.mubr.bf16.gmra.mrb[0].mxu0 %v757
        %v1072 = vpop.f32.mrb[0].mxu0
        %v1073 = vadd.f32 0.0, %v1072
        %v1074 = vpop.f32.mrb[0].mxu0
        %v1075 = vpop.f32.mrb[0].mxu0
        %v1076 = vadd.f32 0.0, %v1075
        %v1077 = vpop.f32.mrb[0].mxu0
        %1078 = vmatprep.mubr.bf16.mxu0 %v761
        %1079 = vmatmul.mubr.bf16.gmra.mrb[0].mxu0 %v760
        %v1080 = vpop.f32.mrb[0].mxu0
        %v1081 = vadd.f32 0.0, %v1080
        %v1082 = vpop.f32.mrb[0].mxu0
        %v1083 = vpop.f32.mrb[0].mxu0
        %v1084 = vadd.f32 0.0, %v1083
        %v1085 = vpop.f32.mrb[0].mxu0
        %1086 = vmatprep.mubr.bf16.mxu0 %v764
        %1087 = vmatmul.mubr.bf16.gmra.mrb[0].mxu0 %v763
        %v1088 = vpop.f32.mrb[0].mxu0
        %v1089 = vadd.f32 0.0, %v1088
        %v1090 = vpop.f32.mrb[0].mxu0
        %v1091 = vpop.f32.mrb[0].mxu0
        %v1092 = vadd.f32 0.0, %v1091
        %v1093 = vpop.f32.mrb[0].mxu0
        %1094 = vmatprep.mubr.bf16.mxu0 %v767
        %1095 = vmatmul.mubr.bf16.gmra.mrb[0].mxu0 %v766
        %v1096 = vpop.f32.mrb[0].mxu0
        %v1097 = vadd.f32 0.0, %v1096
        %v1098 = vpop.f32.mrb[0].mxu0
        %v1099 = vpop.f32.mrb[0].mxu0
        %v1100 = vadd.f32 0.0, %v1099
        %v1101 = vpop.f32.mrb[0].mxu0
        %1102 = vmatprep.mubr.bf16.mxu0 %v770
        %1103 = vmatmul.mubr.bf16.gmra.mrb[0].mxu0 %v769
        %v1104 = vpop.f32.mrb[0].mxu0
        %v1105 = vadd.f32 0.0, %v1104
        %v1106 = vpop.f32.mrb[0].mxu0
        %v1107 = vpop.f32.mrb[0].mxu0
        %v1108 = vadd.f32 0.0, %v1107
        %v1109 = vpop.f32.mrb[0].mxu0
        %1110 = vmatprep.mubr.bf16.mxu0 %v773
        %1111 = vmatmul.mubr.bf16.gmra.mrb[0].mxu0 %v772
        %v1112 = vpop.f32.mrb[0].mxu0
        %v1113 = vadd.f32 0.0, %v1112
        %v1114 = vpop.f32.mrb[0].mxu0
        %v1115 = vpop.f32.mrb[0].mxu0
        %v1116 = vadd.f32 0.0, %v1115
        %v1117 = vpop.f32.mrb[0].mxu0
        %1118 = vmatprep.mubr.bf16.mxu0 %v776
        %1119 = vmatmul.mubr.bf16.gmra.mrb[0].mxu0 %v775
        %v1120 = vpop.f32.mrb[0].mxu0
        %v1121 = vadd.f32 0.0, %v1120
        %v1122 = vpop.f32.mrb[0].mxu0
        %v1123 = vpop.f32.mrb[0].mxu0
        %v1124 = vadd.f32 0.0, %v1123
        %v1125 = vpop.f32.mrb[0].mxu0
        %1126 = vmatprep.mubr.bf16.mxu0 %v779
        %1127 = vmatmul.mubr.bf16.gmra.mrb[0].mxu0 %v778
        %v1128 = vpop.f32.mrb[0].mxu0
        %v1129 = vadd.f32 0.0, %v1128
        %v1130 = vpop.f32.mrb[0].mxu0
        %v1131 = vpop.f32.mrb[0].mxu0
        %v1132 = vadd.f32 0.0, %v1131
        %v1133 = vpop.f32.mrb[0].mxu0
        %1134 = vdwg.mxu0
        %1135 = vmatprep.subr.bf16.mxu0 0
        %1136 = vmatpush1.bf16.msra.mxu0 %v942
        %1137 = vmatprep.subr.bf16.mxu0 0
        %1138 = vmatpush1.bf16.msra.mxu0 %v943
        %1139 = vmatprep.subr.bf16.mxu0 0
        %1140 = vmatpush1.bf16.msra.mxu0 %v944
        %1141 = vmatprep.subr.bf16.mxu0 0
        %1142 = vmatpush1.bf16.msra.mxu0 %v945
        %1143 = vmatprep.subr.bf16.mxu0 0
        %1144 = vmatpush1.bf16.msra.mxu0 %v946
        %1145 = vmatprep.subr.bf16.mxu0 0
        %1146 = vmatpush1.bf16.msra.mxu0 %v947
        %1147 = vmatprep.subr.bf16.mxu0 0
        %1148 = vmatpush1.bf16.msra.mxu0 %v948
        %1149 = vmatprep.subr.bf16.mxu0 0
        %1150 = vmatpush1.bf16.msra.mxu0 %v949
        %1151 = vmatprep.subr.bf16.mxu0 0
        %1152 = vmatpush1.bf16.msra.mxu0 0
        %1153 = vmatprep.subr.bf16.mxu0 0
        %1154 = vmatpush1.bf16.msra.mxu0 0
        %1155 = vmatprep.subr.bf16.mxu0 0
        %1156 = vmatpush1.bf16.msra.mxu0 0
        %1157 = vmatprep.subr.bf16.mxu0 0
        %1158 = vmatpush1.bf16.msra.mxu0 0
        %1159 = vmatprep.subr.bf16.mxu0 0
        %1160 = vmatpush1.bf16.msra.mxu0 0
        %1161 = vmatprep.subr.bf16.mxu0 0
        %1162 = vmatpush1.bf16.msra.mxu0 0
        %1163 = vmatprep.subr.bf16.mxu0 0
        %1164 = vmatpush1.bf16.msra.mxu0 0
        %1165 = vmatprep.subr.bf16.mxu0 0
        %1166 = vmatpush1.bf16.msra.mxu0 0
        %1167 = vmatprep.mubr.bf16.mxu0 0
        %1168 = vmatmul.mubr.bf16.gmra.mrb[0].mxu0 %v735
        %v1169 = vpop.f32.mrb[0].mxu0
        %v1170 = vadd.f32 %v1009, %v1169
        %v1171 = vpop.f32.mrb[0].mxu0
        %v1172 = vpop.f32.mrb[0].mxu0
        %v1173 = vadd.f32 %v1012, %v1172
        %v1174 = vpop.f32.mrb[0].mxu0
        %1175 = vmatprep.mubr.bf16.mxu0 0
        %1176 = vmatmul.mubr.bf16.gmra.mrb[0].mxu0 %v738
        %v1177 = vpop.f32.mrb[0].mxu0
        %v1178 = vadd.f32 %v1017, %v1177
        %v1179 = vpop.f32.mrb[0].mxu0
        %v1180 = vpop.f32.mrb[0].mxu0
        %v1181 = vadd.f32 %v1020, %v1180
        %v1182 = vpop.f32.mrb[0].mxu0
        %1183 = vmatprep.mubr.bf16.mxu0 0
        %1184 = vmatmul.mubr.bf16.gmra.mrb[0].mxu0 %v741
        %v1185 = vpop.f32.mrb[0].mxu0
        %v1186 = vadd.f32 %v1025, %v1185
        %v1187 = vpop.f32.mrb[0].mxu0
        %v1188 = vpop.f32.mrb[0].mxu0
        %v1189 = vadd.f32 %v1028, %v1188
        %v1190 = vpop.f32.mrb[0].mxu0
        %1191 = vmatprep.mubr.bf16.mxu0 0
        %1192 = vmatmul.mubr.bf16.gmra.mrb[0].mxu0 %v744
        %v1193 = vpop.f32.mrb[0].mxu0
        %v1194 = vadd.f32 %v1033, %v1193
        %v1195 = vpop.f32.mrb[0].mxu0
        %v1196 = vpop.f32.mrb[0].mxu0
        %v1197 = vadd.f32 %v1036, %v1196
        %v1198 = vpop.f32.mrb[0].mxu0
        %1199 = vmatprep.mubr.bf16.mxu0 0
        %1200 = vmatmul.mubr.bf16.gmra.mrb[0].mxu0 %v747
        %v1201 = vpop.f32.mrb[0].mxu0
        %v1202 = vadd.f32 %v1041, %v1201
        %v1203 = vpop.f32.mrb[0].mxu0
        %v1204 = vpop.f32.mrb[0].mxu0
        %v1205 = vadd.f32 %v1044, %v1204
        %v1206 = vpop.f32.mrb[0].mxu0
        %1207 = vmatprep.mubr.bf16.mxu0 0
        %1208 = vmatmul.mubr.bf16.gmra.mrb[0].mxu0 %v750
        %v1209 = vpop.f32.mrb[0].mxu0
        %v1210 = vadd.f32 %v1049, %v1209
        %v1211 = vpop.f32.mrb[0].mxu0
        %v1212 = vpop.f32.mrb[0].mxu0
        %v1213 = vadd.f32 %v1052, %v1212
        %v1214 = vpop.f32.mrb[0].mxu0
        %1215 = vmatprep.mubr.bf16.mxu0 0
        %1216 = vmatmul.mubr.bf16.gmra.mrb[0].mxu0 %v753
        %v1217 = vpop.f32.mrb[0].mxu0
        %v1218 = vadd.f32 %v1057, %v1217
        %v1219 = vpop.f32.mrb[0].mxu0
        %v1220 = vpop.f32.mrb[0].mxu0
        %v1221 = vadd.f32 %v1060, %v1220
        %v1222 = vpop.f32.mrb[0].mxu0
        %1223 = vmatprep.mubr.bf16.mxu0 0
        %1224 = vmatmul.mubr.bf16.gmra.mrb[0].mxu0 %v756
        %v1225 = vpop.f32.mrb[0].mxu0
        %v1226 = vadd.f32 %v1065, %v1225
        %v1227 = vpop.f32.mrb[0].mxu0
        %v1228 = vpop.f32.mrb[0].mxu0
        %v1229 = vadd.f32 %v1068, %v1228
        %v1230 = vpop.f32.mrb[0].mxu0
        %1231 = vmatprep.mubr.bf16.mxu0 0
        %1232 = vmatmul.mubr.bf16.gmra.mrb[0].mxu0 %v759
        %v1233 = vpop.f32.mrb[0].mxu0
        %v1234 = vadd.f32 %v1073, %v1233
        %v1235 = vpop.f32.mrb[0].mxu0
        %v1236 = vpop.f32.mrb[0].mxu0
        %v1237 = vadd.f32 %v1076, %v1236
        %v1238 = vpop.f32.mrb[0].mxu0
        %1239 = vmatprep.mubr.bf16.mxu0 0
        %1240 = vmatmul.mubr.bf16.gmra.mrb[0].mxu0 %v762
        %v1241 = vpop.f32.mrb[0].mxu0
        %v1242 = vadd.f32 %v1081, %v1241
        %v1243 = vpop.f32.mrb[0].mxu0
        %v1244 = vpop.f32.mrb[0].mxu0
        %v1245 = vadd.f32 %v1084, %v1244
        %v1246 = vpop.f32.mrb[0].mxu0
        %1247 = vmatprep.mubr.bf16.mxu0 0
        %1248 = vmatmul.mubr.bf16.gmra.mrb[0].mxu0 %v765
        %v1249 = vpop.f32.mrb[0].mxu0
        %v1250 = vadd.f32 %v1089, %v1249
        %v1251 = vpop.f32.mrb[0].mxu0
        %v1252 = vpop.f32.mrb[0].mxu0
        %v1253 = vadd.f32 %v1092, %v1252
        %v1254 = vpop.f32.mrb[0].mxu0
        %1255 = vmatprep.mubr.bf16.mxu0 0
        %1256 = vmatmul.mubr.bf16.gmra.mrb[0].mxu0 %v768
        %v1257 = vpop.f32.mrb[0].mxu0
        %v1258 = vadd.f32 %v1097, %v1257
        %v1259 = vpop.f32.mrb[0].mxu0
        %v1260 = vpop.f32.mrb[0].mxu0
        %v1261 = vadd.f32 %v1100, %v1260
        %v1262 = vpop.f32.mrb[0].mxu0
        %1263 = vmatprep.mubr.bf16.mxu0 0
        %1264 = vmatmul.mubr.bf16.gmra.mrb[0].mxu0 %v771
        %v1265 = vpop.f32.mrb[0].mxu0
        %v1266 = vadd.f32 %v1105, %v1265
        %v1267 = vpop.f32.mrb[0].mxu0
        %v1268 = vpop.f32.mrb[0].mxu0
        %v1269 = vadd.f32 %v1108, %v1268
        %v1270 = vpop.f32.mrb[0].mxu0
        %1271 = vmatprep.mubr.bf16.mxu0 0
        %1272 = vmatmul.mubr.bf16.gmra.mrb[0].mxu0 %v774
        %v1273 = vpop.f32.mrb[0].mxu0
        %v1274 = vadd.f32 %v1113, %v1273
        %v1275 = vpop.f32.mrb[0].mxu0
        %v1276 = vpop.f32.mrb[0].mxu0
        %v1277 = vadd.f32 %v1116, %v1276
        %v1278 = vpop.f32.mrb[0].mxu0
        %1279 = vmatprep.mubr.bf16.mxu0 0
        %1280 = vmatmul.mubr.bf16.gmra.mrb[0].mxu0 %v777
        %v1281 = vpop.f32.mrb[0].mxu0
        %v1282 = vadd.f32 %v1121, %v1281
        %v1283 = vpop.f32.mrb[0].mxu0
        %v1284 = vpop.f32.mrb[0].mxu0
        %v1285 = vadd.f32 %v1124, %v1284
        %v1286 = vpop.f32.mrb[0].mxu0
        %1287 = vmatprep.mubr.bf16.mxu0 0
        %1288 = vmatmul.mubr.bf16.gmra.mrb[0].mxu0 %v780
        %v1289 = vpop.f32.mrb[0].mxu0
        %v1290 = vadd.f32 %v1129, %v1289
        %v1291 = vpop.f32.mrb[0].mxu0
        %v1292 = vpop.f32.mrb[0].mxu0
        %v1293 = vadd.f32 %v1132, %v1292
        %v1294 = vpop.f32.mrb[0].mxu0
        %1295 = vdwg.mxu0
        %v1344 = vunpack.c.l.b16 %v685
        %v1345 = vunpack.c.l.b16 %v686
        %v1346 = vunpack.c.l.b16 %v687
        %v1347 = vunpack.c.l.b16 %v688
        %v1348 = vunpack.c.l.b16 %v689
        %v1349 = vunpack.c.l.b16 %v690
        %v1350 = vunpack.c.l.b16 %v691
        %v1351 = vunpack.c.l.b16 %v692
        %v1352 = vunpack.c.l.b16 %v693
        %v1353 = vunpack.c.l.b16 %v694
        %v1354 = vunpack.c.l.b16 %v695
        %v1355 = vunpack.c.l.b16 %v696
        %v1356 = vunpack.c.l.b16 %v697
        %v1357 = vunpack.c.l.b16 %v698
        %v1358 = vunpack.c.l.b16 %v699
        %v1359 = vunpack.c.l.b16 %v700
        %v1360 = vunpack.c.l.b16 %v701
        %v1361 = vunpack.c.l.b16 %v702
        %v1362 = vunpack.c.l.b16 %v703
        %v1363 = vunpack.c.l.b16 %v704
        %v1364 = vunpack.c.l.b16 %v705
        %v1365 = vunpack.c.l.b16 %v706
        %v1366 = vunpack.c.l.b16 %v707
        %v1367 = vunpack.c.l.b16 %v708
        %v1368 = vunpack.c.l.b16 %v709
        %v1369 = vunpack.c.l.b16 %v710
        %v1370 = vunpack.c.l.b16 %v711
        %v1371 = vunpack.c.l.b16 %v712
        %v1372 = vunpack.c.l.b16 %v713
        %v1373 = vunpack.c.l.b16 %v714
        %v1374 = vunpack.c.l.b16 %v715
        %v1375 = vunpack.c.l.b16 %v716
        %v1376 = vunpack.c.l.b16 %v717
        %v1377 = vunpack.c.l.b16 %v718
        %v1378 = vunpack.c.l.b16 %v719
        %v1379 = vunpack.c.l.b16 %v720
        %v1380 = vunpack.c.l.b16 %v721
        %v1381 = vunpack.c.l.b16 %v722
        %v1382 = vunpack.c.l.b16 %v723
        %v1383 = vunpack.c.l.b16 %v724
        %v1384 = vunpack.c.l.b16 %v725
        %v1385 = vunpack.c.l.b16 %v726
        %v1386 = vunpack.c.l.b16 %v727
        %v1387 = vunpack.c.l.b16 %v728
        %v1388 = vunpack.c.l.b16 %v729
        %v1389 = vunpack.c.l.b16 %v730
        %v1390 = vunpack.c.l.b16 %v731
        %v1391 = vunpack.c.l.b16 %v732
        %v1392 = vpack.c.b16 %v1345, %v1344
        %v1393 = vpack.c.b16 %v1347, %v1346
        %v1394 = vpack.c.b16 %v1349, %v1348
        %v1395 = vpack.c.b16 %v1351, %v1350
        %v1396 = vpack.c.b16 %v1353, %v1352
        %v1397 = vpack.c.b16 %v1355, %v1354
        %v1398 = vpack.c.b16 %v1357, %v1356
        %v1399 = vpack.c.b16 %v1359, %v1358
        %v1400 = vpack.c.b16 %v1361, %v1360
        %v1401 = vpack.c.b16 %v1363, %v1362
        %v1402 = vpack.c.b16 %v1365, %v1364
        %v1403 = vpack.c.b16 %v1367, %v1366
        %v1404 = vpack.c.b16 %v1369, %v1368
        %v1405 = vpack.c.b16 %v1371, %v1370
        %v1406 = vpack.c.b16 %v1373, %v1372
        %v1407 = vpack.c.b16 %v1375, %v1374
        %v1408 = vpack.c.b16 %v1377, %v1376
        %v1409 = vpack.c.b16 %v1379, %v1378
        %v1410 = vpack.c.b16 %v1381, %v1380
        %v1411 = vpack.c.b16 %v1383, %v1382
        %v1412 = vpack.c.b16 %v1385, %v1384
        %v1413 = vpack.c.b16 %v1387, %v1386
        %v1414 = vpack.c.b16 %v1389, %v1388
        %v1415 = vpack.c.b16 %v1391, %v1390
        %1440 = vmatprep.subr.bf16.mxu0 0
        %1441 = vmatpush1.bf16.msra.mxu0 %v1392
        %1442 = vmatprep.subr.bf16.mxu0 0
        %1443 = vmatpush1.bf16.msra.mxu0 %v1393
        %1444 = vmatprep.subr.bf16.mxu0 0
        %1445 = vmatpush1.bf16.msra.mxu0 %v1394
        %1446 = vmatprep.subr.bf16.mxu0 0
        %1447 = vmatpush1.bf16.msra.mxu0 %v1395
        %1448 = vmatprep.subr.bf16.mxu0 0
        %1449 = vmatpush1.bf16.msra.mxu0 %v1396
        %1450 = vmatprep.subr.bf16.mxu0 0
        %1451 = vmatpush1.bf16.msra.mxu0 %v1397
        %1452 = vmatprep.subr.bf16.mxu0 0
        %1453 = vmatpush1.bf16.msra.mxu0 %v1398
        %1454 = vmatprep.subr.bf16.mxu0 0
        %1455 = vmatpush1.bf16.msra.mxu0 %v1399
        %1456 = vmatprep.subr.bf16.mxu0 0
        %1457 = vmatpush1.bf16.msra.mxu0 %v1400
        %1458 = vmatprep.subr.bf16.mxu0 0
        %1459 = vmatpush1.bf16.msra.mxu0 %v1401
        %1460 = vmatprep.subr.bf16.mxu0 0
        %1461 = vmatpush1.bf16.msra.mxu0 %v1402
        %1462 = vmatprep.subr.bf16.mxu0 0
        %1463 = vmatpush1.bf16.msra.mxu0 %v1403
        %1464 = vmatprep.subr.bf16.mxu0 0
        %1465 = vmatpush1.bf16.msra.mxu0 %v1404
        %1466 = vmatprep.subr.bf16.mxu0 0
        %1467 = vmatpush1.bf16.msra.mxu0 %v1405
        %1468 = vmatprep.subr.bf16.mxu0 0
        %1469 = vmatpush1.bf16.msra.mxu0 %v1406
        %1470 = vmatprep.subr.bf16.mxu0 0
        %1471 = vmatpush1.bf16.msra.mxu0 %v1407
        %1472 = vmatprep.mubr.bf16.mxu0 %v638
        %1473 = vmatmul.mubr.bf16.gmra.mrb[0].mxu0 %v637
        %v1474 = vpop.f32.mrb[0].mxu0
        %v1475 = vadd.f32 %v1170, %v1474
        %v1476 = vpop.f32.mrb[0].mxu0
        %v1477 = vpop.f32.mrb[0].mxu0
        %v1478 = vadd.f32 %v1173, %v1477
        %v1479 = vpop.f32.mrb[0].mxu0
        %1480 = vmatprep.mubr.bf16.mxu0 %v641
        %1481 = vmatmul.mubr.bf16.gmra.mrb[0].mxu0 %v640
        %v1482 = vpop.f32.mrb[0].mxu0
        %v1483 = vadd.f32 %v1178, %v1482
        %v1484 = vpop.f32.mrb[0].mxu0
        %v1485 = vpop.f32.mrb[0].mxu0
        %v1486 = vadd.f32 %v1181, %v1485
        %v1487 = vpop.f32.mrb[0].mxu0
        %1488 = vmatprep.mubr.bf16.mxu0 %v644
        %1489 = vmatmul.mubr.bf16.gmra.mrb[0].mxu0 %v643
        %v1490 = vpop.f32.mrb[0].mxu0
        %v1491 = vadd.f32 %v1186, %v1490
        %v1492 = vpop.f32.mrb[0].mxu0
        %v1493 = vpop.f32.mrb[0].mxu0
        %v1494 = vadd.f32 %v1189, %v1493
        %v1495 = vpop.f32.mrb[0].mxu0
        %1496 = vmatprep.mubr.bf16.mxu0 %v647
        %1497 = vmatmul.mubr.bf16.gmra.mrb[0].mxu0 %v646
        %v1498 = vpop.f32.mrb[0].mxu0
        %v1499 = vadd.f32 %v1194, %v1498
        %v1500 = vpop.f32.mrb[0].mxu0
        %v1501 = vpop.f32.mrb[0].mxu0
        %v1502 = vadd.f32 %v1197, %v1501
        %v1503 = vpop.f32.mrb[0].mxu0
        %1504 = vmatprep.mubr.bf16.mxu0 %v650
        %1505 = vmatmul.mubr.bf16.gmra.mrb[0].mxu0 %v649
        %v1506 = vpop.f32.mrb[0].mxu0
        %v1507 = vadd.f32 %v1202, %v1506
        %v1508 = vpop.f32.mrb[0].mxu0
        %v1509 = vpop.f32.mrb[0].mxu0
        %v1510 = vadd.f32 %v1205, %v1509
        %v1511 = vpop.f32.mrb[0].mxu0
        %1512 = vmatprep.mubr.bf16.mxu0 %v653
        %1513 = vmatmul.mubr.bf16.gmra.mrb[0].mxu0 %v652
        %v1514 = vpop.f32.mrb[0].mxu0
        %v1515 = vadd.f32 %v1210, %v1514
        %v1516 = vpop.f32.mrb[0].mxu0
        %v1517 = vpop.f32.mrb[0].mxu0
        %v1518 = vadd.f32 %v1213, %v1517
        %v1519 = vpop.f32.mrb[0].mxu0
        %1520 = vmatprep.mubr.bf16.mxu0 %v656
        %1521 = vmatmul.mubr.bf16.gmra.mrb[0].mxu0 %v655
        %v1522 = vpop.f32.mrb[0].mxu0
        %v1523 = vadd.f32 %v1218, %v1522
        %v1524 = vpop.f32.mrb[0].mxu0
        %v1525 = vpop.f32.mrb[0].mxu0
        %v1526 = vadd.f32 %v1221, %v1525
        %v1527 = vpop.f32.mrb[0].mxu0
        %1528 = vmatprep.mubr.bf16.mxu0 %v659
        %1529 = vmatmul.mubr.bf16.gmra.mrb[0].mxu0 %v658
        %v1530 = vpop.f32.mrb[0].mxu0
        %v1531 = vadd.f32 %v1226, %v1530
        %v1532 = vpop.f32.mrb[0].mxu0
        %v1533 = vpop.f32.mrb[0].mxu0
        %v1534 = vadd.f32 %v1229, %v1533
        %v1535 = vpop.f32.mrb[0].mxu0
        %1536 = vmatprep.mubr.bf16.mxu0 %v662
        %1537 = vmatmul.mubr.bf16.gmra.mrb[0].mxu0 %v661
        %v1538 = vpop.f32.mrb[0].mxu0
        %v1539 = vadd.f32 %v1234, %v1538
        %v1540 = vpop.f32.mrb[0].mxu0
        %v1541 = vpop.f32.mrb[0].mxu0
        %v1542 = vadd.f32 %v1237, %v1541
        %v1543 = vpop.f32.mrb[0].mxu0
        %1544 = vmatprep.mubr.bf16.mxu0 %v665
        %1545 = vmatmul.mubr.bf16.gmra.mrb[0].mxu0 %v664
        %v1546 = vpop.f32.mrb[0].mxu0
        %v1547 = vadd.f32 %v1242, %v1546
        %v1548 = vpop.f32.mrb[0].mxu0
        %v1549 = vpop.f32.mrb[0].mxu0
        %v1550 = vadd.f32 %v1245, %v1549
        %v1551 = vpop.f32.mrb[0].mxu0
        %1552 = vmatprep.mubr.bf16.mxu0 %v668
        %1553 = vmatmul.mubr.bf16.gmra.mrb[0].mxu0 %v667
        %v1554 = vpop.f32.mrb[0].mxu0
        %v1555 = vadd.f32 %v1250, %v1554
        %v1556 = vpop.f32.mrb[0].mxu0
        %v1557 = vpop.f32.mrb[0].mxu0
        %v1558 = vadd.f32 %v1253, %v1557
        %v1559 = vpop.f32.mrb[0].mxu0
        %1560 = vmatprep.mubr.bf16.mxu0 %v671
        %1561 = vmatmul.mubr.bf16.gmra.mrb[0].mxu0 %v670
        %v1562 = vpop.f32.mrb[0].mxu0
        %v1563 = vadd.f32 %v1258, %v1562
        %v1564 = vpop.f32.mrb[0].mxu0
        %v1565 = vpop.f32.mrb[0].mxu0
        %v1566 = vadd.f32 %v1261, %v1565
        %v1567 = vpop.f32.mrb[0].mxu0
        %1568 = vmatprep.mubr.bf16.mxu0 %v674
        %1569 = vmatmul.mubr.bf16.gmra.mrb[0].mxu0 %v673
        %v1570 = vpop.f32.mrb[0].mxu0
        %v1571 = vadd.f32 %v1266, %v1570
        %v1572 = vpop.f32.mrb[0].mxu0
        %v1573 = vpop.f32.mrb[0].mxu0
        %v1574 = vadd.f32 %v1269, %v1573
        %v1575 = vpop.f32.mrb[0].mxu0
        %1576 = vmatprep.mubr.bf16.mxu0 %v677
        %1577 = vmatmul.mubr.bf16.gmra.mrb[0].mxu0 %v676
        %v1578 = vpop.f32.mrb[0].mxu0
        %v1579 = vadd.f32 %v1274, %v1578
        %v1580 = vpop.f32.mrb[0].mxu0
        %v1581 = vpop.f32.mrb[0].mxu0
        %v1582 = vadd.f32 %v1277, %v1581
        %v1583 = vpop.f32.mrb[0].mxu0
        %1584 = vmatprep.mubr.bf16.mxu0 %v680
        %1585 = vmatmul.mubr.bf16.gmra.mrb[0].mxu0 %v679
        %v1586 = vpop.f32.mrb[0].mxu0
        %v1587 = vadd.f32 %v1282, %v1586
        %v1588 = vpop.f32.mrb[0].mxu0
        %v1589 = vpop.f32.mrb[0].mxu0
        %v1590 = vadd.f32 %v1285, %v1589
        %v1591 = vpop.f32.mrb[0].mxu0
        %1592 = vmatprep.mubr.bf16.mxu0 %v683
        %1593 = vmatmul.mubr.bf16.gmra.mrb[0].mxu0 %v682
        %v1594 = vpop.f32.mrb[0].mxu0
        %v1595 = vadd.f32 %v1290, %v1594
        %v1596 = vpop.f32.mrb[0].mxu0
        %v1597 = vpop.f32.mrb[0].mxu0
        %v1598 = vadd.f32 %v1293, %v1597
        %v1599 = vpop.f32.mrb[0].mxu0
        %1600 = vdwg.mxu0
        %1601 = vmatprep.subr.bf16.mxu0 0
        %1602 = vmatpush1.bf16.msra.mxu0 %v1408
        %1603 = vmatprep.subr.bf16.mxu0 0
        %1604 = vmatpush1.bf16.msra.mxu0 %v1409
        %1605 = vmatprep.subr.bf16.mxu0 0
        %1606 = vmatpush1.bf16.msra.mxu0 %v1410
        %1607 = vmatprep.subr.bf16.mxu0 0
        %1608 = vmatpush1.bf16.msra.mxu0 %v1411
        %1609 = vmatprep.subr.bf16.mxu0 0
        %1610 = vmatpush1.bf16.msra.mxu0 %v1412
        %1611 = vmatprep.subr.bf16.mxu0 0
        %1612 = vmatpush1.bf16.msra.mxu0 %v1413
        %1613 = vmatprep.subr.bf16.mxu0 0
        %1614 = vmatpush1.bf16.msra.mxu0 %v1414
        %1615 = vmatprep.subr.bf16.mxu0 0
        %1616 = vmatpush1.bf16.msra.mxu0 %v1415
        %1617 = vmatprep.subr.bf16.mxu0 0
        %1618 = vmatpush1.bf16.msra.mxu0 0
        %1619 = vmatprep.subr.bf16.mxu0 0
        %1620 = vmatpush1.bf16.msra.mxu0 0
        %1621 = vmatprep.subr.bf16.mxu0 0
        %1622 = vmatpush1.bf16.msra.mxu0 0
        %1623 = vmatprep.subr.bf16.mxu0 0
        %1624 = vmatpush1.bf16.msra.mxu0 0
        %1625 = vmatprep.subr.bf16.mxu0 0
        %1626 = vmatpush1.bf16.msra.mxu0 0
        %1627 = vmatprep.subr.bf16.mxu0 0
        %1628 = vmatpush1.bf16.msra.mxu0 0
        %1629 = vmatprep.subr.bf16.mxu0 0
        %1630 = vmatpush1.bf16.msra.mxu0 0
        %1631 = vmatprep.subr.bf16.mxu0 0
        %1632 = vmatpush1.bf16.msra.mxu0 0
        %1633 = vmatprep.mubr.bf16.mxu0 0
        %1634 = vmatmul.mubr.bf16.gmra.mrb[0].mxu0 %v639
        %v1635 = vpop.f32.mrb[0].mxu0
        %v1636 = vadd.f32 %v1475, %v1635
        %v1637 = vpop.f32.mrb[0].mxu0
        %v1638 = vpop.f32.mrb[0].mxu0
        %v1639 = vadd.f32 %v1478, %v1638
        %v1640 = vpop.f32.mrb[0].mxu0
        %1641 = vmatprep.mubr.bf16.mxu0 0
        %1642 = vmatmul.mubr.bf16.gmra.mrb[0].mxu0 %v642
        %v1643 = vpop.f32.mrb[0].mxu0
        %v1644 = vadd.f32 %v1483, %v1643
        %v1645 = vpop.f32.mrb[0].mxu0
        %v1646 = vpop.f32.mrb[0].mxu0
        %v1647 = vadd.f32 %v1486, %v1646
        %v1648 = vpop.f32.mrb[0].mxu0
        %1649 = vmatprep.mubr.bf16.mxu0 0
        %1650 = vmatmul.mubr.bf16.gmra.mrb[0].mxu0 %v645
        %v1651 = vpop.f32.mrb[0].mxu0
        %v1652 = vadd.f32 %v1491, %v1651
        %v1653 = vpop.f32.mrb[0].mxu0
        %v1654 = vpop.f32.mrb[0].mxu0
        %v1655 = vadd.f32 %v1494, %v1654
        %v1656 = vpop.f32.mrb[0].mxu0
        %1657 = vmatprep.mubr.bf16.mxu0 0
        %1658 = vmatmul.mubr.bf16.gmra.mrb[0].mxu0 %v648
        %v1659 = vpop.f32.mrb[0].mxu0
        %v1660 = vadd.f32 %v1499, %v1659
        %v1661 = vpop.f32.mrb[0].mxu0
        %v1662 = vpop.f32.mrb[0].mxu0
        %v1663 = vadd.f32 %v1502, %v1662
        %v1664 = vpop.f32.mrb[0].mxu0
        %1665 = vmatprep.mubr.bf16.mxu0 0
        %1666 = vmatmul.mubr.bf16.gmra.mrb[0].mxu0 %v651
        %v1667 = vpop.f32.mrb[0].mxu0
        %v1668 = vadd.f32 %v1507, %v1667
        %v1669 = vpop.f32.mrb[0].mxu0
        %v1670 = vpop.f32.mrb[0].mxu0
        %v1671 = vadd.f32 %v1510, %v1670
        %v1672 = vpop.f32.mrb[0].mxu0
        %1673 = vmatprep.mubr.bf16.mxu0 0
        %1674 = vmatmul.mubr.bf16.gmra.mrb[0].mxu0 %v654
        %v1675 = vpop.f32.mrb[0].mxu0
        %v1676 = vadd.f32 %v1515, %v1675
        %v1677 = vpop.f32.mrb[0].mxu0
        %v1678 = vpop.f32.mrb[0].mxu0
        %v1679 = vadd.f32 %v1518, %v1678
        %v1680 = vpop.f32.mrb[0].mxu0
        %1681 = vmatprep.mubr.bf16.mxu0 0
        %1682 = vmatmul.mubr.bf16.gmra.mrb[0].mxu0 %v657
        %v1683 = vpop.f32.mrb[0].mxu0
        %v1684 = vadd.f32 %v1523, %v1683
        %v1685 = vpop.f32.mrb[0].mxu0
        %v1686 = vpop.f32.mrb[0].mxu0
        %v1687 = vadd.f32 %v1526, %v1686
        %v1688 = vpop.f32.mrb[0].mxu0
        %1689 = vmatprep.mubr.bf16.mxu0 0
        %1690 = vmatmul.mubr.bf16.gmra.mrb[0].mxu0 %v660
        %v1691 = vpop.f32.mrb[0].mxu0
        %v1692 = vadd.f32 %v1531, %v1691
        %v1693 = vpop.f32.mrb[0].mxu0
        %v1694 = vpop.f32.mrb[0].mxu0
        %v1695 = vadd.f32 %v1534, %v1694
        %v1696 = vpop.f32.mrb[0].mxu0
        %1697 = vmatprep.mubr.bf16.mxu0 0
        %1698 = vmatmul.mubr.bf16.gmra.mrb[0].mxu0 %v663
        %v1699 = vpop.f32.mrb[0].mxu0
        %v1700 = vadd.f32 %v1539, %v1699
        %v1701 = vpop.f32.mrb[0].mxu0
        %v1702 = vpop.f32.mrb[0].mxu0
        %v1703 = vadd.f32 %v1542, %v1702
        %v1704 = vpop.f32.mrb[0].mxu0
        %1705 = vmatprep.mubr.bf16.mxu0 0
        %1706 = vmatmul.mubr.bf16.gmra.mrb[0].mxu0 %v666
        %v1707 = vpop.f32.mrb[0].mxu0
        %v1708 = vadd.f32 %v1547, %v1707
        %v1709 = vpop.f32.mrb[0].mxu0
        %v1710 = vpop.f32.mrb[0].mxu0
        %v1711 = vadd.f32 %v1550, %v1710
        %v1712 = vpop.f32.mrb[0].mxu0
        %1713 = vmatprep.mubr.bf16.mxu0 0
        %1714 = vmatmul.mubr.bf16.gmra.mrb[0].mxu0 %v669
        %v1715 = vpop.f32.mrb[0].mxu0
        %v1716 = vadd.f32 %v1555, %v1715
        %v1717 = vpop.f32.mrb[0].mxu0
        %v1718 = vpop.f32.mrb[0].mxu0
        %v1719 = vadd.f32 %v1558, %v1718
        %v1720 = vpop.f32.mrb[0].mxu0
        %1721 = vmatprep.mubr.bf16.mxu0 0
        %1722 = vmatmul.mubr.bf16.gmra.mrb[0].mxu0 %v672
        %v1723 = vpop.f32.mrb[0].mxu0
        %v1724 = vadd.f32 %v1563, %v1723
        %v1725 = vpop.f32.mrb[0].mxu0
        %v1726 = vpop.f32.mrb[0].mxu0
        %v1727 = vadd.f32 %v1566, %v1726
        %v1728 = vpop.f32.mrb[0].mxu0
        %1729 = vmatprep.mubr.bf16.mxu0 0
        %1730 = vmatmul.mubr.bf16.gmra.mrb[0].mxu0 %v675
        %v1731 = vpop.f32.mrb[0].mxu0
        %v1732 = vadd.f32 %v1571, %v1731
        %v1733 = vpop.f32.mrb[0].mxu0
        %v1734 = vpop.f32.mrb[0].mxu0
        %v1735 = vadd.f32 %v1574, %v1734
        %v1736 = vpop.f32.mrb[0].mxu0
        %1737 = vmatprep.mubr.bf16.mxu0 0
        %1738 = vmatmul.mubr.bf16.gmra.mrb[0].mxu0 %v678
        %v1739 = vpop.f32.mrb[0].mxu0
        %v1740 = vadd.f32 %v1579, %v1739
        %v1741 = vpop.f32.mrb[0].mxu0
        %v1742 = vpop.f32.mrb[0].mxu0
        %v1743 = vadd.f32 %v1582, %v1742
        %v1744 = vpop.f32.mrb[0].mxu0
        %1745 = vmatprep.mubr.bf16.mxu0 0
        %1746 = vmatmul.mubr.bf16.gmra.mrb[0].mxu0 %v681
        %v1747 = vpop.f32.mrb[0].mxu0
        %v1748 = vadd.f32 %v1587, %v1747
        %v1749 = vpop.f32.mrb[0].mxu0
        %v1750 = vpop.f32.mrb[0].mxu0
        %v1751 = vadd.f32 %v1590, %v1750
        %v1752 = vpop.f32.mrb[0].mxu0
        %1753 = vmatprep.mubr.bf16.mxu0 0
        %1754 = vmatmul.mubr.bf16.gmra.mrb[0].mxu0 %v684
        %v1755 = vpop.f32.mrb[0].mxu0
        %v1756 = vadd.f32 %v1595, %v1755
        %v1757 = vpop.f32.mrb[0].mxu0
        %v1758 = vpop.f32.mrb[0].mxu0
        %v1759 = vadd.f32 %v1598, %v1758
        %v1760 = vpop.f32.mrb[0].mxu0
        %1761 = vdwg.mxu0
        %s1762 = scalar_lea.vmem [#allocation2], 48
        %v1763 = vld [vmem:[%s1762] sm:$0xff]
        %v1764 = vld [vmem:[%s1762 + $0x8] sm:$0xff]
        %v1765 = vld [vmem:[%s1762 + $0x10] sm:$0xff]
        %v1766 = vld [vmem:[%s1762 + $0x18] sm:$0xff]
        %v1767 = vld [vmem:[%s1762 + $0x20] sm:$0xff]
        %v1768 = vld [vmem:[%s1762 + $0x28] sm:$0xff]
        %v1769 = vld [vmem:[%s1762 + $0x30] sm:$0xff]
        %v1770 = vld [vmem:[%s1762 + $0x38] sm:$0xff]
        %v1771 = vld [vmem:[%s1762 + $0x40] sm:$0xff]
        %v1772 = vld [vmem:[%s1762 + $0x48] sm:$0xff]
        %v1773 = vld [vmem:[%s1762 + $0x50] sm:$0xff]
        %v1774 = vld [vmem:[%s1762 + $0x58] sm:$0xff]
        %v1775 = vld [vmem:[%s1762 + $0x60] sm:$0xff]
        %v1776 = vld [vmem:[%s1762 + $0x68] sm:$0xff]
        %v1777 = vld [vmem:[%s1762 + $0x70] sm:$0xff]
        %v1778 = vld [vmem:[%s1762 + $0x78] sm:$0xff]
        %v1779 = vld [vmem:[%s1762 + $0x80] sm:$0xff]
        %v1780 = vld [vmem:[%s1762 + $0x88] sm:$0xff]
        %v1781 = vld [vmem:[%s1762 + $0x90] sm:$0xff]
        %v1782 = vld [vmem:[%s1762 + $0x98] sm:$0xff]
        %v1783 = vld [vmem:[%s1762 + $0xa0] sm:$0xff]
        %v1784 = vld [vmem:[%s1762 + $0xa8] sm:$0xff]
        %v1785 = vld [vmem:[%s1762 + $0xb0] sm:$0xff]
        %v1786 = vld [vmem:[%s1762 + $0xb8] sm:$0xff]
        %v1787 = vld [vmem:[%s1762 + $0xc0] sm:$0xff]
        %v1788 = vld [vmem:[%s1762 + $0xc8] sm:$0xff]
        %v1789 = vld [vmem:[%s1762 + $0xd0] sm:$0xff]
        %v1790 = vld [vmem:[%s1762 + $0xd8] sm:$0xff]
        %v1791 = vld [vmem:[%s1762 + $0xe0] sm:$0xff]
        %v1792 = vld [vmem:[%s1762 + $0xe8] sm:$0xff]
        %v1793 = vld [vmem:[%s1762 + $0xf0] sm:$0xff]
        %v1794 = vld [vmem:[%s1762 + $0xf8] sm:$0xff]
        %v1795 = vld [vmem:[%s1762 + $0x100] sm:$0xff]
        %v1796 = vld [vmem:[%s1762 + $0x108] sm:$0xff]
        %v1797 = vld [vmem:[%s1762 + $0x110] sm:$0xff]
        %v1798 = vld [vmem:[%s1762 + $0x118] sm:$0xff]
        %v1799 = vld [vmem:[%s1762 + $0x120] sm:$0xff]
        %v1800 = vld [vmem:[%s1762 + $0x128] sm:$0xff]
        %v1801 = vld [vmem:[%s1762 + $0x130] sm:$0xff]
        %v1802 = vld [vmem:[%s1762 + $0x138] sm:$0xff]
        %v1803 = vld [vmem:[%s1762 + $0x140] sm:$0xff]
        %v1804 = vld [vmem:[%s1762 + $0x148] sm:$0xff]
        %v1805 = vld [vmem:[%s1762 + $0x150] sm:$0xff]
        %v1806 = vld [vmem:[%s1762 + $0x158] sm:$0xff]
        %v1807 = vld [vmem:[%s1762 + $0x160] sm:$0xff]
        %v1808 = vld [vmem:[%s1762 + $0x168] sm:$0xff]
        %v1809 = vld [vmem:[%s1762 + $0x170] sm:$0xff]
        %v1810 = vld [vmem:[%s1762 + $0x178] sm:$0xff]
        %s1811 = scalar_lea.vmem [#allocation6], 384
        %v1812 = vld [vmem:[%s1811] sm:$0xf]
        %v1813 = vld [vmem:[%s1811 + $0x4] sm:$0xf]
        %v1814 = vld [vmem:[%s1811 + $0x8] sm:$0xf]
        %v1815 = vld [vmem:[%s1811 + $0xc] sm:$0xf]
        %v1816 = vld [vmem:[%s1811 + $0x10] sm:$0xf]
        %v1817 = vld [vmem:[%s1811 + $0x14] sm:$0xf]
        %v1818 = vld [vmem:[%s1811 + $0x18] sm:$0xf]
        %v1819 = vld [vmem:[%s1811 + $0x1c] sm:$0xf]
        %v1820 = vld [vmem:[%s1811 + $0x20] sm:$0xf]
        %v1821 = vld [vmem:[%s1811 + $0x24] sm:$0xf]
        %v1822 = vld [vmem:[%s1811 + $0x28] sm:$0xf]
        %v1823 = vld [vmem:[%s1811 + $0x2c] sm:$0xf]
        %v1824 = vld [vmem:[%s1811 + $0x30] sm:$0xf]
        %v1825 = vld [vmem:[%s1811 + $0x34] sm:$0xf]
        %v1826 = vld [vmem:[%s1811 + $0x38] sm:$0xf]
        %v1827 = vld [vmem:[%s1811 + $0x3c] sm:$0xf]
        %v1828 = vld [vmem:[%s1811 + $0x40] sm:$0xf]
        %v1829 = vld [vmem:[%s1811 + $0x44] sm:$0xf]
        %v1830 = vld [vmem:[%s1811 + $0x48] sm:$0xf]
        %v1831 = vld [vmem:[%s1811 + $0x4c] sm:$0xf]
        %v1832 = vld [vmem:[%s1811 + $0x50] sm:$0xf]
        %v1833 = vld [vmem:[%s1811 + $0x54] sm:$0xf]
        %v1834 = vld [vmem:[%s1811 + $0x58] sm:$0xf]
        %v1835 = vld [vmem:[%s1811 + $0x5c] sm:$0xf]
        %v1836 = vld [vmem:[%s1811 + $0x60] sm:$0xf]
        %v1837 = vld [vmem:[%s1811 + $0x64] sm:$0xf]
        %v1838 = vld [vmem:[%s1811 + $0x68] sm:$0xf]
        %v1839 = vld [vmem:[%s1811 + $0x6c] sm:$0xf]
        %v1840 = vld [vmem:[%s1811 + $0x70] sm:$0xf]
        %v1841 = vld [vmem:[%s1811 + $0x74] sm:$0xf]
        %v1842 = vld [vmem:[%s1811 + $0x78] sm:$0xf]
        %v1843 = vld [vmem:[%s1811 + $0x7c] sm:$0xf]
        %v1844 = vld [vmem:[%s1811 + $0x80] sm:$0xf]
        %v1845 = vld [vmem:[%s1811 + $0x84] sm:$0xf]
        %v1846 = vld [vmem:[%s1811 + $0x88] sm:$0xf]
        %v1847 = vld [vmem:[%s1811 + $0x8c] sm:$0xf]
        %v1848 = vld [vmem:[%s1811 + $0x90] sm:$0xf]
        %v1849 = vld [vmem:[%s1811 + $0x94] sm:$0xf]
        %v1850 = vld [vmem:[%s1811 + $0x98] sm:$0xf]
        %v1851 = vld [vmem:[%s1811 + $0x9c] sm:$0xf]
        %v1852 = vld [vmem:[%s1811 + $0xa0] sm:$0xf]
        %v1853 = vld [vmem:[%s1811 + $0xa4] sm:$0xf]
        %v1854 = vld [vmem:[%s1811 + $0xa8] sm:$0xf]
        %v1855 = vld [vmem:[%s1811 + $0xac] sm:$0xf]
        %v1856 = vld [vmem:[%s1811 + $0xb0] sm:$0xf]
        %v1857 = vld [vmem:[%s1811 + $0xb4] sm:$0xf]
        %v1858 = vld [vmem:[%s1811 + $0xb8] sm:$0xf]
        %v1859 = vld [vmem:[%s1811 + $0xbc] sm:$0xf]
        %v1908 = vunpack.c.l.b16 %v1812
        %v1909 = vunpack.c.l.b16 %v1813
        %v1910 = vunpack.c.l.b16 %v1814
        %v1911 = vunpack.c.l.b16 %v1815
        %v1912 = vunpack.c.l.b16 %v1816
        %v1913 = vunpack.c.l.b16 %v1817
        %v1914 = vunpack.c.l.b16 %v1818
        %v1915 = vunpack.c.l.b16 %v1819
        %v1916 = vunpack.c.l.b16 %v1820
        %v1917 = vunpack.c.l.b16 %v1821
        %v1918 = vunpack.c.l.b16 %v1822
        %v1919 = vunpack.c.l.b16 %v1823
        %v1920 = vunpack.c.l.b16 %v1824
        %v1921 = vunpack.c.l.b16 %v1825
        %v1922 = vunpack.c.l.b16 %v1826
        %v1923 = vunpack.c.l.b16 %v1827
        %v1924 = vunpack.c.l.b16 %v1828
        %v1925 = vunpack.c.l.b16 %v1829
        %v1926 = vunpack.c.l.b16 %v1830
        %v1927 = vunpack.c.l.b16 %v1831
        %v1928 = vunpack.c.l.b16 %v1832
        %v1929 = vunpack.c.l.b16 %v1833
        %v1930 = vunpack.c.l.b16 %v1834
        %v1931 = vunpack.c.l.b16 %v1835
        %v1932 = vunpack.c.l.b16 %v1836
        %v1933 = vunpack.c.l.b16 %v1837
        %v1934 = vunpack.c.l.b16 %v1838
        %v1935 = vunpack.c.l.b16 %v1839
        %v1936 = vunpack.c.l.b16 %v1840
        %v1937 = vunpack.c.l.b16 %v1841
        %v1938 = vunpack.c.l.b16 %v1842
        %v1939 = vunpack.c.l.b16 %v1843
        %v1940 = vunpack.c.l.b16 %v1844
        %v1941 = vunpack.c.l.b16 %v1845
        %v1942 = vunpack.c.l.b16 %v1846
        %v1943 = vunpack.c.l.b16 %v1847
        %v1944 = vunpack.c.l.b16 %v1848
        %v1945 = vunpack.c.l.b16 %v1849
        %v1946 = vunpack.c.l.b16 %v1850
        %v1947 = vunpack.c.l.b16 %v1851
        %v1948 = vunpack.c.l.b16 %v1852
        %v1949 = vunpack.c.l.b16 %v1853
        %v1950 = vunpack.c.l.b16 %v1854
        %v1951 = vunpack.c.l.b16 %v1855
        %v1952 = vunpack.c.l.b16 %v1856
        %v1953 = vunpack.c.l.b16 %v1857
        %v1954 = vunpack.c.l.b16 %v1858
        %v1955 = vunpack.c.l.b16 %v1859
        %v1956 = vpack.c.b16 %v1909, %v1908
        %v1957 = vpack.c.b16 %v1911, %v1910
        %v1958 = vpack.c.b16 %v1913, %v1912
        %v1959 = vpack.c.b16 %v1915, %v1914
        %v1960 = vpack.c.b16 %v1917, %v1916
        %v1961 = vpack.c.b16 %v1919, %v1918
        %v1962 = vpack.c.b16 %v1921, %v1920
        %v1963 = vpack.c.b16 %v1923, %v1922
        %v1964 = vpack.c.b16 %v1925, %v1924
        %v1965 = vpack.c.b16 %v1927, %v1926
        %v1966 = vpack.c.b16 %v1929, %v1928
        %v1967 = vpack.c.b16 %v1931, %v1930
        %v1968 = vpack.c.b16 %v1933, %v1932
        %v1969 = vpack.c.b16 %v1935, %v1934
        %v1970 = vpack.c.b16 %v1937, %v1936
        %v1971 = vpack.c.b16 %v1939, %v1938
        %v1972 = vpack.c.b16 %v1941, %v1940
        %v1973 = vpack.c.b16 %v1943, %v1942
        %v1974 = vpack.c.b16 %v1945, %v1944
        %v1975 = vpack.c.b16 %v1947, %v1946
        %v1976 = vpack.c.b16 %v1949, %v1948
        %v1977 = vpack.c.b16 %v1951, %v1950
        %v1978 = vpack.c.b16 %v1953, %v1952
        %v1979 = vpack.c.b16 %v1955, %v1954
        %2004 = vmatprep.subr.bf16.mxu0 0
        %2005 = vmatpush1.bf16.msra.mxu0 %v1956
        %2006 = vmatprep.subr.bf16.mxu0 0
        %2007 = vmatpush1.bf16.msra.mxu0 %v1957
        %2008 = vmatprep.subr.bf16.mxu0 0
        %2009 = vmatpush1.bf16.msra.mxu0 %v1958
        %2010 = vmatprep.subr.bf16.mxu0 0
        %2011 = vmatpush1.bf16.msra.mxu0 %v1959
        %2012 = vmatprep.subr.bf16.mxu0 0
        %2013 = vmatpush1.bf16.msra.mxu0 %v1960
        %2014 = vmatprep.subr.bf16.mxu0 0
        %2015 = vmatpush1.bf16.msra.mxu0 %v1961
        %2016 = vmatprep.subr.bf16.mxu0 0
        %2017 = vmatpush1.bf16.msra.mxu0 %v1962
        %2018 = vmatprep.subr.bf16.mxu0 0
        %2019 = vmatpush1.bf16.msra.mxu0 %v1963
        %2020 = vmatprep.subr.bf16.mxu0 0
        %2021 = vmatpush1.bf16.msra.mxu0 %v1964
        %2022 = vmatprep.subr.bf16.mxu0 0
        %2023 = vmatpush1.bf16.msra.mxu0 %v1965
        %2024 = vmatprep.subr.bf16.mxu0 0
        %2025 = vmatpush1.bf16.msra.mxu0 %v1966
        %2026 = vmatprep.subr.bf16.mxu0 0
        %2027 = vmatpush1.bf16.msra.mxu0 %v1967
        %2028 = vmatprep.subr.bf16.mxu0 0
        %2029 = vmatpush1.bf16.msra.mxu0 %v1968
        %2030 = vmatprep.subr.bf16.mxu0 0
        %2031 = vmatpush1.bf16.msra.mxu0 %v1969
        %2032 = vmatprep.subr.bf16.mxu0 0
        %2033 = vmatpush1.bf16.msra.mxu0 %v1970
        %2034 = vmatprep.subr.bf16.mxu0 0
        %2035 = vmatpush1.bf16.msra.mxu0 %v1971
        %2036 = vmatprep.mubr.bf16.mxu0 %v1764
        %2037 = vmatmul.mubr.bf16.gmra.mrb[0].mxu0 %v1763
        %v2038 = vpop.f32.mrb[0].mxu0
        %v2039 = vadd.f32 0.0, %v2038
        %v2040 = vpop.f32.mrb[0].mxu0
        %v2041 = vpop.f32.mrb[0].mxu0
        %v2042 = vadd.f32 0.0, %v2041
        %v2043 = vpop.f32.mrb[0].mxu0
        %2044 = vmatprep.mubr.bf16.mxu0 %v1767
        %2045 = vmatmul.mubr.bf16.gmra.mrb[0].mxu0 %v1766
        %v2046 = vpop.f32.mrb[0].mxu0
        %v2047 = vadd.f32 0.0, %v2046
        %v2048 = vpop.f32.mrb[0].mxu0
        %v2049 = vpop.f32.mrb[0].mxu0
        %v2050 = vadd.f32 0.0, %v2049
        %v2051 = vpop.f32.mrb[0].mxu0
        %2052 = vmatprep.mubr.bf16.mxu0 %v1770
        %2053 = vmatmul.mubr.bf16.gmra.mrb[0].mxu0 %v1769
        %v2054 = vpop.f32.mrb[0].mxu0
        %v2055 = vadd.f32 0.0, %v2054
        %v2056 = vpop.f32.mrb[0].mxu0
        %v2057 = vpop.f32.mrb[0].mxu0
        %v2058 = vadd.f32 0.0, %v2057
        %v2059 = vpop.f32.mrb[0].mxu0
        %2060 = vmatprep.mubr.bf16.mxu0 %v1773
        %2061 = vmatmul.mubr.bf16.gmra.mrb[0].mxu0 %v1772
        %v2062 = vpop.f32.mrb[0].mxu0
        %v2063 = vadd.f32 0.0, %v2062
        %v2064 = vpop.f32.mrb[0].mxu0
        %v2065 = vpop.f32.mrb[0].mxu0
        %v2066 = vadd.f32 0.0, %v2065
        %v2067 = vpop.f32.mrb[0].mxu0
        %2068 = vmatprep.mubr.bf16.mxu0 %v1776
        %2069 = vmatmul.mubr.bf16.gmra.mrb[0].mxu0 %v1775
        %v2070 = vpop.f32.mrb[0].mxu0
        %v2071 = vadd.f32 0.0, %v2070
        %v2072 = vpop.f32.mrb[0].mxu0
        %v2073 = vpop.f32.mrb[0].mxu0
        %v2074 = vadd.f32 0.0, %v2073
        %v2075 = vpop.f32.mrb[0].mxu0
        %2076 = vmatprep.mubr.bf16.mxu0 %v1779
        %2077 = vmatmul.mubr.bf16.gmra.mrb[0].mxu0 %v1778
        %v2078 = vpop.f32.mrb[0].mxu0
        %v2079 = vadd.f32 0.0, %v2078
        %v2080 = vpop.f32.mrb[0].mxu0
        %v2081 = vpop.f32.mrb[0].mxu0
        %v2082 = vadd.f32 0.0, %v2081
        %v2083 = vpop.f32.mrb[0].mxu0
        %2084 = vmatprep.mubr.bf16.mxu0 %v1782
        %2085 = vmatmul.mubr.bf16.gmra.mrb[0].mxu0 %v1781
        %v2086 = vpop.f32.mrb[0].mxu0
        %v2087 = vadd.f32 0.0, %v2086
        %v2088 = vpop.f32.mrb[0].mxu0
        %v2089 = vpop.f32.mrb[0].mxu0
        %v2090 = vadd.f32 0.0, %v2089
        %v2091 = vpop.f32.mrb[0].mxu0
        %2092 = vmatprep.mubr.bf16.mxu0 %v1785
        %2093 = vmatmul.mubr.bf16.gmra.mrb[0].mxu0 %v1784
        %v2094 = vpop.f32.mrb[0].mxu0
        %v2095 = vadd.f32 0.0, %v2094
        %v2096 = vpop.f32.mrb[0].mxu0
        %v2097 = vpop.f32.mrb[0].mxu0
        %v2098 = vadd.f32 0.0, %v2097
        %v2099 = vpop.f32.mrb[0].mxu0
        %2100 = vmatprep.mubr.bf16.mxu0 %v1788
        %2101 = vmatmul.mubr.bf16.gmra.mrb[0].mxu0 %v1787
        %v2102 = vpop.f32.mrb[0].mxu0
        %v2103 = vadd.f32 0.0, %v2102
        %v2104 = vpop.f32.mrb[0].mxu0
        %v2105 = vpop.f32.mrb[0].mxu0
        %v2106 = vadd.f32 0.0, %v2105
        %v2107 = vpop.f32.mrb[0].mxu0
        %2108 = vmatprep.mubr.bf16.mxu0 %v1791
        %2109 = vmatmul.mubr.bf16.gmra.mrb[0].mxu0 %v1790
        %v2110 = vpop.f32.mrb[0].mxu0
        %v2111 = vadd.f32 0.0, %v2110
        %v2112 = vpop.f32.mrb[0].mxu0
        %v2113 = vpop.f32.mrb[0].mxu0
        %v2114 = vadd.f32 0.0, %v2113
        %v2115 = vpop.f32.mrb[0].mxu0
        %2116 = vmatprep.mubr.bf16.mxu0 %v1794
        %2117 = vmatmul.mubr.bf16.gmra.mrb[0].mxu0 %v1793
        %v2118 = vpop.f32.mrb[0].mxu0
        %v2119 = vadd.f32 0.0, %v2118
        %v2120 = vpop.f32.mrb[0].mxu0
        %v2121 = vpop.f32.mrb[0].mxu0
        %v2122 = vadd.f32 0.0, %v2121
        %v2123 = vpop.f32.mrb[0].mxu0
        %2124 = vmatprep.mubr.bf16.mxu0 %v1797
        %2125 = vmatmul.mubr.bf16.gmra.mrb[0].mxu0 %v1796
        %v2126 = vpop.f32.mrb[0].mxu0
        %v2127 = vadd.f32 0.0, %v2126
        %v2128 = vpop.f32.mrb[0].mxu0
        %v2129 = vpop.f32.mrb[0].mxu0
        %v2130 = vadd.f32 0.0, %v2129
        %v2131 = vpop.f32.mrb[0].mxu0
        %2132 = vmatprep.mubr.bf16.mxu0 %v1800
        %2133 = vmatmul.mubr.bf16.gmra.mrb[0].mxu0 %v1799
        %v2134 = vpop.f32.mrb[0].mxu0
        %v2135 = vadd.f32 0.0, %v2134
        %v2136 = vpop.f32.mrb[0].mxu0
        %v2137 = vpop.f32.mrb[0].mxu0
        %v2138 = vadd.f32 0.0, %v2137
        %v2139 = vpop.f32.mrb[0].mxu0
        %2140 = vmatprep.mubr.bf16.mxu0 %v1803
        %2141 = vmatmul.mubr.bf16.gmra.mrb[0].mxu0 %v1802
        %v2142 = vpop.f32.mrb[0].mxu0
        %v2143 = vadd.f32 0.0, %v2142
        %v2144 = vpop.f32.mrb[0].mxu0
        %v2145 = vpop.f32.mrb[0].mxu0
        %v2146 = vadd.f32 0.0, %v2145
        %v2147 = vpop.f32.mrb[0].mxu0
        %2148 = vmatprep.mubr.bf16.mxu0 %v1806
        %2149 = vmatmul.mubr.bf16.gmra.mrb[0].mxu0 %v1805
        %v2150 = vpop.f32.mrb[0].mxu0
        %v2151 = vadd.f32 0.0, %v2150
        %v2152 = vpop.f32.mrb[0].mxu0
        %v2153 = vpop.f32.mrb[0].mxu0
        %v2154 = vadd.f32 0.0, %v2153
        %v2155 = vpop.f32.mrb[0].mxu0
        %2156 = vmatprep.mubr.bf16.mxu0 %v1809
        %2157 = vmatmul.mubr.bf16.gmra.mrb[0].mxu0 %v1808
        %v2158 = vpop.f32.mrb[0].mxu0
        %v2159 = vadd.f32 0.0, %v2158
        %v2160 = vpop.f32.mrb[0].mxu0
        %v2161 = vpop.f32.mrb[0].mxu0
        %v2162 = vadd.f32 0.0, %v2161
        %v2163 = vpop.f32.mrb[0].mxu0
        %2164 = vdwg.mxu0
        %2165 = vmatprep.subr.bf16.mxu0 0
        %2166 = vmatpush1.bf16.msra.mxu0 %v1972
        %2167 = vmatprep.subr.bf16.mxu0 0
        %2168 = vmatpush1.bf16.msra.mxu0 %v1973
        %2169 = vmatprep.subr.bf16.mxu0 0
        %2170 = vmatpush1.bf16.msra.mxu0 %v1974
        %2171 = vmatprep.subr.bf16.mxu0 0
        %2172 = vmatpush1.bf16.msra.mxu0 %v1975
        %2173 = vmatprep.subr.bf16.mxu0 0
        %2174 = vmatpush1.bf16.msra.mxu0 %v1976
        %2175 = vmatprep.subr.bf16.mxu0 0
        %2176 = vmatpush1.bf16.msra.mxu0 %v1977
        %2177 = vmatprep.subr.bf16.mxu0 0
        %2178 = vmatpush1.bf16.msra.mxu0 %v1978
        %2179 = vmatprep.subr.bf16.mxu0 0
        %2180 = vmatpush1.bf16.msra.mxu0 %v1979
        %2181 = vmatprep.subr.bf16.mxu0 0
        %2182 = vmatpush1.bf16.msra.mxu0 0
        %2183 = vmatprep.subr.bf16.mxu0 0
        %2184 = vmatpush1.bf16.msra.mxu0 0
        %2185 = vmatprep.subr.bf16.mxu0 0
        %2186 = vmatpush1.bf16.msra.mxu0 0
        %2187 = vmatprep.subr.bf16.mxu0 0
        %2188 = vmatpush1.bf16.msra.mxu0 0
        %2189 = vmatprep.subr.bf16.mxu0 0
        %2190 = vmatpush1.bf16.msra.mxu0 0
        %2191 = vmatprep.subr.bf16.mxu0 0
        %2192 = vmatpush1.bf16.msra.mxu0 0
        %2193 = vmatprep.subr.bf16.mxu0 0
        %2194 = vmatpush1.bf16.msra.mxu0 0
        %2195 = vmatprep.subr.bf16.mxu0 0
        %2196 = vmatpush1.bf16.msra.mxu0 0
        %2197 = vmatprep.mubr.bf16.mxu0 0
        %2198 = vmatmul.mubr.bf16.gmra.mrb[0].mxu0 %v1765
        %v2199 = vpop.f32.mrb[0].mxu0
        %v2200 = vadd.f32 %v2039, %v2199
        %v2201 = vpop.f32.mrb[0].mxu0
        %v2202 = vpop.f32.mrb[0].mxu0
        %v2203 = vadd.f32 %v2042, %v2202
        %v2204 = vpop.f32.mrb[0].mxu0
        %2205 = vmatprep.mubr.bf16.mxu0 0
        %2206 = vmatmul.mubr.bf16.gmra.mrb[0].mxu0 %v1768
        %v2207 = vpop.f32.mrb[0].mxu0
        %v2208 = vadd.f32 %v2047, %v2207
        %v2209 = vpop.f32.mrb[0].mxu0
        %v2210 = vpop.f32.mrb[0].mxu0
        %v2211 = vadd.f32 %v2050, %v2210
        %v2212 = vpop.f32.mrb[0].mxu0
        %2213 = vmatprep.mubr.bf16.mxu0 0
        %2214 = vmatmul.mubr.bf16.gmra.mrb[0].mxu0 %v1771
        %v2215 = vpop.f32.mrb[0].mxu0
        %v2216 = vadd.f32 %v2055, %v2215
        %v2217 = vpop.f32.mrb[0].mxu0
        %v2218 = vpop.f32.mrb[0].mxu0
        %v2219 = vadd.f32 %v2058, %v2218
        %v2220 = vpop.f32.mrb[0].mxu0
        %2221 = vmatprep.mubr.bf16.mxu0 0
        %2222 = vmatmul.mubr.bf16.gmra.mrb[0].mxu0 %v1774
        %v2223 = vpop.f32.mrb[0].mxu0
        %v2224 = vadd.f32 %v2063, %v2223
        %v2225 = vpop.f32.mrb[0].mxu0
        %v2226 = vpop.f32.mrb[0].mxu0
        %v2227 = vadd.f32 %v2066, %v2226
        %v2228 = vpop.f32.mrb[0].mxu0
        %2229 = vmatprep.mubr.bf16.mxu0 0
        %2230 = vmatmul.mubr.bf16.gmra.mrb[0].mxu0 %v1777
        %v2231 = vpop.f32.mrb[0].mxu0
        %v2232 = vadd.f32 %v2071, %v2231
        %v2233 = vpop.f32.mrb[0].mxu0
        %v2234 = vpop.f32.mrb[0].mxu0
        %v2235 = vadd.f32 %v2074, %v2234
        %v2236 = vpop.f32.mrb[0].mxu0
        %2237 = vmatprep.mubr.bf16.mxu0 0
        %2238 = vmatmul.mubr.bf16.gmra.mrb[0].mxu0 %v1780
        %v2239 = vpop.f32.mrb[0].mxu0
        %v2240 = vadd.f32 %v2079, %v2239
        %v2241 = vpop.f32.mrb[0].mxu0
        %v2242 = vpop.f32.mrb[0].mxu0
        %v2243 = vadd.f32 %v2082, %v2242
        %v2244 = vpop.f32.mrb[0].mxu0
        %2245 = vmatprep.mubr.bf16.mxu0 0
        %2246 = vmatmul.mubr.bf16.gmra.mrb[0].mxu0 %v1783
        %v2247 = vpop.f32.mrb[0].mxu0
        %v2248 = vadd.f32 %v2087, %v2247
        %v2249 = vpop.f32.mrb[0].mxu0
        %v2250 = vpop.f32.mrb[0].mxu0
        %v2251 = vadd.f32 %v2090, %v2250
        %v2252 = vpop.f32.mrb[0].mxu0
        %2253 = vmatprep.mubr.bf16.mxu0 0
        %2254 = vmatmul.mubr.bf16.gmra.mrb[0].mxu0 %v1786
        %v2255 = vpop.f32.mrb[0].mxu0
        %v2256 = vadd.f32 %v2095, %v2255
        %v2257 = vpop.f32.mrb[0].mxu0
        %v2258 = vpop.f32.mrb[0].mxu0
        %v2259 = vadd.f32 %v2098, %v2258
        %v2260 = vpop.f32.mrb[0].mxu0
        %2261 = vmatprep.mubr.bf16.mxu0 0
        %2262 = vmatmul.mubr.bf16.gmra.mrb[0].mxu0 %v1789
        %v2263 = vpop.f32.mrb[0].mxu0
        %v2264 = vadd.f32 %v2103, %v2263
        %v2265 = vpop.f32.mrb[0].mxu0
        %v2266 = vpop.f32.mrb[0].mxu0
        %v2267 = vadd.f32 %v2106, %v2266
        %v2268 = vpop.f32.mrb[0].mxu0
        %2269 = vmatprep.mubr.bf16.mxu0 0
        %2270 = vmatmul.mubr.bf16.gmra.mrb[0].mxu0 %v1792
        %v2271 = vpop.f32.mrb[0].mxu0
        %v2272 = vadd.f32 %v2111, %v2271
        %v2273 = vpop.f32.mrb[0].mxu0
        %v2274 = vpop.f32.mrb[0].mxu0
        %v2275 = vadd.f32 %v2114, %v2274
        %v2276 = vpop.f32.mrb[0].mxu0
        %2277 = vmatprep.mubr.bf16.mxu0 0
        %2278 = vmatmul.mubr.bf16.gmra.mrb[0].mxu0 %v1795
        %v2279 = vpop.f32.mrb[0].mxu0
        %v2280 = vadd.f32 %v2119, %v2279
        %v2281 = vpop.f32.mrb[0].mxu0
        %v2282 = vpop.f32.mrb[0].mxu0
        %v2283 = vadd.f32 %v2122, %v2282
        %v2284 = vpop.f32.mrb[0].mxu0
        %2285 = vmatprep.mubr.bf16.mxu0 0
        %2286 = vmatmul.mubr.bf16.gmra.mrb[0].mxu0 %v1798
        %v2287 = vpop.f32.mrb[0].mxu0
        %v2288 = vadd.f32 %v2127, %v2287
        %v2289 = vpop.f32.mrb[0].mxu0
        %v2290 = vpop.f32.mrb[0].mxu0
        %v2291 = vadd.f32 %v2130, %v2290
        %v2292 = vpop.f32.mrb[0].mxu0
        %2293 = vmatprep.mubr.bf16.mxu0 0
        %2294 = vmatmul.mubr.bf16.gmra.mrb[0].mxu0 %v1801
        %v2295 = vpop.f32.mrb[0].mxu0
        %v2296 = vadd.f32 %v2135, %v2295
        %v2297 = vpop.f32.mrb[0].mxu0
        %v2298 = vpop.f32.mrb[0].mxu0
        %v2299 = vadd.f32 %v2138, %v2298
        %v2300 = vpop.f32.mrb[0].mxu0
        %2301 = vmatprep.mubr.bf16.mxu0 0
        %2302 = vmatmul.mubr.bf16.gmra.mrb[0].mxu0 %v1804
        %v2303 = vpop.f32.mrb[0].mxu0
        %v2304 = vadd.f32 %v2143, %v2303
        %v2305 = vpop.f32.mrb[0].mxu0
        %v2306 = vpop.f32.mrb[0].mxu0
        %v2307 = vadd.f32 %v2146, %v2306
        %v2308 = vpop.f32.mrb[0].mxu0
        %2309 = vmatprep.mubr.bf16.mxu0 0
        %2310 = vmatmul.mubr.bf16.gmra.mrb[0].mxu0 %v1807
        %v2311 = vpop.f32.mrb[0].mxu0
        %v2312 = vadd.f32 %v2151, %v2311
        %v2313 = vpop.f32.mrb[0].mxu0
        %v2314 = vpop.f32.mrb[0].mxu0
        %v2315 = vadd.f32 %v2154, %v2314
        %v2316 = vpop.f32.mrb[0].mxu0
        %2317 = vmatprep.mubr.bf16.mxu0 0
        %2318 = vmatmul.mubr.bf16.gmra.mrb[0].mxu0 %v1810
        %v2319 = vpop.f32.mrb[0].mxu0
        %v2320 = vadd.f32 %v2159, %v2319
        %v2321 = vpop.f32.mrb[0].mxu0
        %v2322 = vpop.f32.mrb[0].mxu0
        %v2323 = vadd.f32 %v2162, %v2322
        %v2324 = vpop.f32.mrb[0].mxu0
        %2325 = vdwg.mxu0
        %v2326 = vadd.f32 %v1636, %v2200
        %v2327 = vadd.f32 %v1639, %v2203
        %v2328 = vadd.f32 %v1644, %v2208
        %v2329 = vadd.f32 %v1647, %v2211
        %v2330 = vadd.f32 %v1652, %v2216
        %v2331 = vadd.f32 %v1655, %v2219
        %v2332 = vadd.f32 %v1660, %v2224
        %v2333 = vadd.f32 %v1663, %v2227
        %v2334 = vadd.f32 %v1668, %v2232
        %v2335 = vadd.f32 %v1671, %v2235
        %v2336 = vadd.f32 %v1676, %v2240
        %v2337 = vadd.f32 %v1679, %v2243
        %v2338 = vadd.f32 %v1684, %v2248
        %v2339 = vadd.f32 %v1687, %v2251
        %v2340 = vadd.f32 %v1692, %v2256
        %v2341 = vadd.f32 %v1695, %v2259
        %v2342 = vadd.f32 %v1700, %v2264
        %v2343 = vadd.f32 %v1703, %v2267
        %v2344 = vadd.f32 %v1708, %v2272
        %v2345 = vadd.f32 %v1711, %v2275
        %v2346 = vadd.f32 %v1716, %v2280
        %v2347 = vadd.f32 %v1719, %v2283
        %v2348 = vadd.f32 %v1724, %v2288
        %v2349 = vadd.f32 %v1727, %v2291
        %v2350 = vadd.f32 %v1732, %v2296
        %v2351 = vadd.f32 %v1735, %v2299
        %v2352 = vadd.f32 %v1740, %v2304
        %v2353 = vadd.f32 %v1743, %v2307
        %v2354 = vadd.f32 %v1748, %v2312
        %v2355 = vadd.f32 %v1751, %v2315
        %v2356 = vadd.f32 %v1756, %v2320
        %v2357 = vadd.f32 %v1759, %v2323
        %v2358 = vpack.c.bf16 %v2327, %v2326
        %v2359 = vpack.c.bf16 %v2329, %v2328
        %v2360 = vpack.c.bf16 %v2331, %v2330
        %v2361 = vpack.c.bf16 %v2333, %v2332
        %v2362 = vpack.c.bf16 %v2335, %v2334
        %v2363 = vpack.c.bf16 %v2337, %v2336
        %v2364 = vpack.c.bf16 %v2339, %v2338
        %v2365 = vpack.c.bf16 %v2341, %v2340
        %v2366 = vpack.c.bf16 %v2343, %v2342
        %v2367 = vpack.c.bf16 %v2345, %v2344
        %v2368 = vpack.c.bf16 %v2347, %v2346
        %v2369 = vpack.c.bf16 %v2349, %v2348
        %v2370 = vpack.c.bf16 %v2351, %v2350
        %v2371 = vpack.c.bf16 %v2353, %v2352
        %v2372 = vpack.c.bf16 %v2355, %v2354
        %v2373 = vpack.c.bf16 %v2357, %v2356
        %v2390 = vunpack.c.l.b16 %v2358
        %v2391 = vunpack.c.h.b16 %v2358
        %v2392 = vunpack.c.l.b16 %v2359
        %v2393 = vunpack.c.h.b16 %v2359
        %v2394 = vunpack.c.l.b16 %v2360
        %v2395 = vunpack.c.h.b16 %v2360
        %v2396 = vunpack.c.l.b16 %v2361
        %v2397 = vunpack.c.h.b16 %v2361
        %v2398 = vunpack.c.l.b16 %v2362
        %v2399 = vunpack.c.h.b16 %v2362
        %v2400 = vunpack.c.l.b16 %v2363
        %v2401 = vunpack.c.h.b16 %v2363
        %v2402 = vunpack.c.l.b16 %v2364
        %v2403 = vunpack.c.h.b16 %v2364
        %v2404 = vunpack.c.l.b16 %v2365
        %v2405 = vunpack.c.h.b16 %v2365
        %v2406 = vunpack.c.l.b16 %v2366
        %v2407 = vunpack.c.h.b16 %v2366
        %v2408 = vunpack.c.l.b16 %v2367
        %v2409 = vunpack.c.h.b16 %v2367
        %v2410 = vunpack.c.l.b16 %v2368
        %v2411 = vunpack.c.h.b16 %v2368
        %v2412 = vunpack.c.l.b16 %v2369
        %v2413 = vunpack.c.h.b16 %v2369
        %v2414 = vunpack.c.l.b16 %v2370
        %v2415 = vunpack.c.h.b16 %v2370
        %v2416 = vunpack.c.l.b16 %v2371
        %v2417 = vunpack.c.h.b16 %v2371
        %v2418 = vunpack.c.l.b16 %v2372
        %v2419 = vunpack.c.h.b16 %v2372
        %v2420 = vunpack.c.l.b16 %v2373
        %v2421 = vunpack.c.h.b16 %v2373
        %v2422 = vpack.c.b16 %v2390, %v2390
        %v2423 = vpack.c.b16 %v2391, %v2391
        %v2424 = vpack.c.b16 %v2392, %v2392
        %v2425 = vpack.c.b16 %v2393, %v2393
        %v2426 = vpack.c.b16 %v2394, %v2394
        %v2427 = vpack.c.b16 %v2395, %v2395
        %v2428 = vpack.c.b16 %v2396, %v2396
        %v2429 = vpack.c.b16 %v2397, %v2397
        %v2430 = vpack.c.b16 %v2398, %v2398
        %v2431 = vpack.c.b16 %v2399, %v2399
        %v2432 = vpack.c.b16 %v2400, %v2400
        %v2433 = vpack.c.b16 %v2401, %v2401
        %v2434 = vpack.c.b16 %v2402, %v2402
        %v2435 = vpack.c.b16 %v2403, %v2403
        %v2436 = vpack.c.b16 %v2404, %v2404
        %v2437 = vpack.c.b16 %v2405, %v2405
        %v2438 = vpack.c.b16 %v2406, %v2406
        %v2439 = vpack.c.b16 %v2407, %v2407
        %v2440 = vpack.c.b16 %v2408, %v2408
        %v2441 = vpack.c.b16 %v2409, %v2409
        %v2442 = vpack.c.b16 %v2410, %v2410
        %v2443 = vpack.c.b16 %v2411, %v2411
        %v2444 = vpack.c.b16 %v2412, %v2412
        %v2445 = vpack.c.b16 %v2413, %v2413
        %v2446 = vpack.c.b16 %v2414, %v2414
        %v2447 = vpack.c.b16 %v2415, %v2415
        %v2448 = vpack.c.b16 %v2416, %v2416
        %v2449 = vpack.c.b16 %v2417, %v2417
        %v2450 = vpack.c.b16 %v2418, %v2418
        %v2451 = vpack.c.b16 %v2419, %v2419
        %v2452 = vpack.c.b16 %v2420, %v2420
        %v2453 = vpack.c.b16 %v2421, %v2421
        %2486 = vst [vmem:[%s230] sm:$0xf] %v2422
        %2487 = vst [vmem:[%s230 + $0x4] sm:$0xf] %v2423
        %2488 = vst [vmem:[%s230 + $0x8] sm:$0xf] %v2424
        %2489 = vst [vmem:[%s230 + $0xc] sm:$0xf] %v2425
        %2490 = vst [vmem:[%s230 + $0x10] sm:$0xf] %v2426
        %2491 = vst [vmem:[%s230 + $0x14] sm:$0xf] %v2427
        %2492 = vst [vmem:[%s230 + $0x18] sm:$0xf] %v2428
        %2493 = vst [vmem:[%s230 + $0x1c] sm:$0xf] %v2429
        %2494 = vst [vmem:[%s230 + $0x20] sm:$0xf] %v2430
        %2495 = vst [vmem:[%s230 + $0x24] sm:$0xf] %v2431
        %2496 = vst [vmem:[%s230 + $0x28] sm:$0xf] %v2432
        %2497 = vst [vmem:[%s230 + $0x2c] sm:$0xf] %v2433
        %2498 = vst [vmem:[%s230 + $0x30] sm:$0xf] %v2434
        %2499 = vst [vmem:[%s230 + $0x34] sm:$0xf] %v2435
        %2500 = vst [vmem:[%s230 + $0x38] sm:$0xf] %v2436
        %2501 = vst [vmem:[%s230 + $0x3c] sm:$0xf] %v2437
        %2502 = vst [vmem:[%s230 + $0x40] sm:$0xf] %v2438
        %2503 = vst [vmem:[%s230 + $0x44] sm:$0xf] %v2439
        %2504 = vst [vmem:[%s230 + $0x48] sm:$0xf] %v2440
        %2505 = vst [vmem:[%s230 + $0x4c] sm:$0xf] %v2441
        %2506 = vst [vmem:[%s230 + $0x50] sm:$0xf] %v2442
        %2507 = vst [vmem:[%s230 + $0x54] sm:$0xf] %v2443
        %2508 = vst [vmem:[%s230 + $0x58] sm:$0xf] %v2444
        %2509 = vst [vmem:[%s230 + $0x5c] sm:$0xf] %v2445
        %2510 = vst [vmem:[%s230 + $0x60] sm:$0xf] %v2446
        %2511 = vst [vmem:[%s230 + $0x64] sm:$0xf] %v2447
        %2512 = vst [vmem:[%s230 + $0x68] sm:$0xf] %v2448
        %2513 = vst [vmem:[%s230 + $0x6c] sm:$0xf] %v2449
        %2514 = vst [vmem:[%s230 + $0x70] sm:$0xf] %v2450
        %2515 = vst [vmem:[%s230 + $0x74] sm:$0xf] %v2451
        %2516 = vst [vmem:[%s230 + $0x78] sm:$0xf] %v2452
        %2517 = vst [vmem:[%s230 + $0x7c] sm:$0xf] %v2453
        %v2518 = vadd.f32 %v2326, %v2327
        %v2519 = vadd.f32 %v2518, %v2328
        %v2520 = vadd.f32 %v2519, %v2329
        %v2521 = vadd.f32 %v2520, %v2330
        %v2522 = vadd.f32 %v2521, %v2331
        %v2523 = vadd.f32 %v2522, %v2332
        %v2524 = vadd.f32 %v2523, %v2333
        %v2525 = vadd.f32 %v2524, %v2334
        %v2526 = vadd.f32 %v2525, %v2335
        %v2527 = vadd.f32 %v2526, %v2336
        %v2528 = vadd.f32 %v2527, %v2337
        %v2529 = vadd.f32 %v2528, %v2338
        %v2530 = vadd.f32 %v2529, %v2339
        %v2531 = vadd.f32 %v2530, %v2340
        %v2532 = vadd.f32 %v2531, %v2341
        %v2533 = vadd.f32 %v2532, %v2342
        %v2534 = vadd.f32 %v2533, %v2343
        %v2535 = vadd.f32 %v2534, %v2344
        %v2536 = vadd.f32 %v2535, %v2345
        %v2537 = vadd.f32 %v2536, %v2346
        %v2538 = vadd.f32 %v2537, %v2347
        %v2539 = vadd.f32 %v2538, %v2348
        %v2540 = vadd.f32 %v2539, %v2349
        %v2541 = vadd.f32 %v2540, %v2350
        %v2542 = vadd.f32 %v2541, %v2351
        %v2543 = vadd.f32 %v2542, %v2352
        %v2544 = vadd.f32 %v2543, %v2353
        %v2545 = vadd.f32 %v2544, %v2354
        %v2546 = vadd.f32 %v2545, %v2355
        %v2547 = vadd.f32 %v2546, %v2356
        %v2548 = vadd.f32 %v2547, %v2357
        %v2549 = vrot.slane %v2548, 4
        %v2550 = vadd.f32 %v2548, %v2549
        %v2551 = vrot.slane %v2550, 2
        %v2552 = vadd.f32 %v2550, %v2551
        %v2553 = vrot.slane %v2552, 1
        %v2554 = vadd.f32 %v2552, %v2553
        %v2555 = vmul.f32 %v2326, %v2326
        %v2556 = vmul.f32 %v2327, %v2327
        %v2557 = vmul.f32 %v2328, %v2328
        %v2558 = vmul.f32 %v2329, %v2329
        %v2559 = vmul.f32 %v2330, %v2330
        %v2560 = vmul.f32 %v2331, %v2331
        %v2561 = vmul.f32 %v2332, %v2332
        %v2562 = vmul.f32 %v2333, %v2333
        %v2563 = vmul.f32 %v2334, %v2334
        %v2564 = vmul.f32 %v2335, %v2335
        %v2565 = vmul.f32 %v2336, %v2336
        %v2566 = vmul.f32 %v2337, %v2337
        %v2567 = vmul.f32 %v2338, %v2338
        %v2568 = vmul.f32 %v2339, %v2339
        %v2569 = vmul.f32 %v2340, %v2340
        %v2570 = vmul.f32 %v2341, %v2341
        %v2571 = vmul.f32 %v2342, %v2342
        %v2572 = vmul.f32 %v2343, %v2343
        %v2573 = vmul.f32 %v2344, %v2344
        %v2574 = vmul.f32 %v2345, %v2345
        %v2575 = vmul.f32 %v2346, %v2346
        %v2576 = vmul.f32 %v2347, %v2347
        %v2577 = vmul.f32 %v2348, %v2348
        %v2578 = vmul.f32 %v2349, %v2349
        %v2579 = vmul.f32 %v2350, %v2350
        %v2580 = vmul.f32 %v2351, %v2351
        %v2581 = vmul.f32 %v2352, %v2352
        %v2582 = vmul.f32 %v2353, %v2353
        %v2583 = vmul.f32 %v2354, %v2354
        %v2584 = vmul.f32 %v2355, %v2355
        %v2585 = vmul.f32 %v2356, %v2356
        %v2586 = vmul.f32 %v2357, %v2357
        %v2587 = vadd.f32 %v2555, %v2556
        %v2588 = vadd.f32 %v2587, %v2557
        %v2589 = vadd.f32 %v2588, %v2558
        %v2590 = vadd.f32 %v2589, %v2559
        %v2591 = vadd.f32 %v2590, %v2560
        %v2592 = vadd.f32 %v2591, %v2561
        %v2593 = vadd.f32 %v2592, %v2562
        %v2594 = vadd.f32 %v2593, %v2563
        %v2595 = vadd.f32 %v2594, %v2564
        %v2596 = vadd.f32 %v2595, %v2565
        %v2597 = vadd.f32 %v2596, %v2566
        %v2598 = vadd.f32 %v2597, %v2567
        %v2599 = vadd.f32 %v2598, %v2568
        %v2600 = vadd.f32 %v2599, %v2569
        %v2601 = vadd.f32 %v2600, %v2570
        %v2602 = vadd.f32 %v2601, %v2571
        %v2603 = vadd.f32 %v2602, %v2572
        %v2604 = vadd.f32 %v2603, %v2573
        %v2605 = vadd.f32 %v2604, %v2574
        %v2606 = vadd.f32 %v2605, %v2575
        %v2607 = vadd.f32 %v2606, %v2576
        %v2608 = vadd.f32 %v2607, %v2577
        %v2609 = vadd.f32 %v2608, %v2578
        %v2610 = vadd.f32 %v2609, %v2579
        %v2611 = vadd.f32 %v2610, %v2580
        %v2612 = vadd.f32 %v2611, %v2581
        %v2613 = vadd.f32 %v2612, %v2582
        %v2614 = vadd.f32 %v2613, %v2583
        %v2615 = vadd.f32 %v2614, %v2584
        %v2616 = vadd.f32 %v2615, %v2585
        %v2617 = vadd.f32 %v2616, %v2586
        %v2618 = vrot.slane %v2617, 4
        %v2619 = vadd.f32 %v2617, %v2618
        %v2620 = vrot.slane %v2619, 2
        %v2621 = vadd.f32 %v2619, %v2620
        %v2622 = vrot.slane %v2621, 1
        %v2623 = vadd.f32 %v2621, %v2622
        %v2624 = vlaneseq
        %v2625 = vshrl.u32 %v2624, 7
        %vm2626 = vcmp.eq.s32.totalorder %v2625, 0
        %vm2627 = vcmp.eq.s32.totalorder %v2625, 1
        %v2628 = vsel %vm2627, %v2623, 0.0
        %v2629 = vsel %vm2626, %v2554, %v2628
        %2630 = vst [vmem:[%s237] sm:$0xff] %v2629
        %s2631 = sand.u32 %s99, 1
        %s2632 = scalar_lea.sflag [#allocation5], %s2631
        %s2633 = sand.u32 %s99, 1
        %s2634 = smul.addr %s2633, 128
        %s2635 = scalar_lea.vmem [#allocation8], %s2634
        %s2636 = sand.u32 %s127, 1
        %s2637 = scalar_lea.sflag [#allocation10], %s2636
        %s2638 = sand.u32 %s127, 1
        %s2639 = smul.addr %s2638, 8
        %s2640 = scalar_lea.vmem [#allocation9], %s2639
        // Predicated region
        $region37: #{basic_block_forward.4} parent=27 // pred_check
          %p2641 = pneg %p109
        $region38: #{basic_block_forward.4} parent=27 // pred_check_branch
          %2643 = sbr.rel (%p2641) target = $region40
        $region39: #{basic_block_forward.4} parent=27 // pred_region
          %s2645 = ssub.s32 2048, 2048
          %2646 = vsyncadd %s2632, %s2645
          %s2647 = smul.addr %s29, 32
          %s2648 = sadd.s32 %s30, %s2647
          %s2649 = smul.addr %s2648, 64
          %s2650 = scalar_lea.hbm %s2, %s2649
          %s2651 = sshll.u32 %s2635, 4
          %s2652 = int_to_ptr.vmem [resolvable:$true] %s2651
          %2657 = dma.vmem_to_hbm [thread:$0]  %s2652, 2048, %s2650, %s2632, 64, 64, 4
        $region40: #{basic_block_forward.4} parent=27 // pred_fallthru
          _
        // Predicated region
        $region41: #{basic_block_forward.4} parent=27 // pred_check
          %p2658 = pneg %p137
        $region42: #{basic_block_forward.4} parent=27 // pred_check_branch
          %2660 = sbr.rel (%p2658) target = $region44
        $region43: #{basic_block_forward.4} parent=27 // pred_region
          %s2662 = ssub.s32 128, 128
          %2663 = vsyncadd %s2637, %s2662
          %s2664 = sadd.s32 %s30, %s29
          %s2665 = smul.addr %s2664, 128
          %s2666 = scalar_lea.hbm %s3, %s2665
          %s2668 = sshll.u32 %s2640, 4
          %s2669 = int_to_ptr.vmem [resolvable:$true] %s2668
          %2671 = dma.vmem_to_hbm [thread:$0]  %s2669, 128, %s2666, %s2637
        $region44: #{basic_block_forward.4} parent=27 // pred_fallthru
          _
      $region28: #{basic_block_forward.4} parent=5 // pred_fallthru
        _
      %p2672 = scmp.le.s32.totalorder 2, %s20
      // Predicated region
      $region45: #{basic_block_forward.4} parent=5 // pred_check
        %p2673 = pneg %p2672
      $region46: #{basic_block_forward.4} parent=5 // pred_check_branch
        %2675 = sbr.rel (%p2673) target = $region48
      $region47: #{basic_block_forward.4} parent=5 // pred_region
        %s2676 = ssub.s32 %s20, 2
        // Predicated region
        $region49: #{basic_block_forward.4} parent=47 // pred_check
          %p2677 = pneg %p115
        $region50: #{basic_block_forward.4} parent=47 // pred_check_branch
          %2679 = sbr.rel (%p2677) target = $region52
        $region51: #{basic_block_forward.4} parent=47 // pred_region
          %s2680 = sand.u32 %s100, 1
          %s2681 = scalar_lea.sflag [#allocation5], %s2680
          %s2682 = sand.u32 %s100, 1
          %s2683 = smul.addr %s2682, 128
          %s2684 = scalar_lea.vmem [#allocation8], %s2683
          %2685 = dma.done %s2681, 2048
        $region52: #{basic_block_forward.4} parent=47 // pred_fallthru
          _
        // Predicated region
        $region53: #{basic_block_forward.4} parent=47 // pred_check
          %p2686 = pneg %p143
        $region54: #{basic_block_forward.4} parent=47 // pred_check_branch
          %2688 = sbr.rel (%p2686) target = $region56
        $region55: #{basic_block_forward.4} parent=47 // pred_region
          %s2689 = sand.u32 %s128, 1
          %s2690 = scalar_lea.sflag [#allocation10], %s2689
          %s2691 = sand.u32 %s128, 1
          %s2692 = smul.addr %s2691, 8
          %s2693 = scalar_lea.vmem [#allocation9], %s2692
          %2694 = dma.done %s2690, 128
        $region56: #{basic_block_forward.4} parent=47 // pred_fallthru
          _
      $region48: #{basic_block_forward.4} parent=5 // pred_fallthru
        _
    $region6: #{basic_block_forward.4} parent=1 // loop_footer
      %s24 = sadd.s32 1, %s20
    $region7: #{basic_block_forward.4} parent=1 // loop_footer_branch
      %19 = sbr.rel target = $region3
    $region8: #{basic_block_forward.4} parent=1 // loop_exit
      _
    %2695 = vsyncpa [#allocation4], 1
    %s2696 = scalar_lea.sflag [#allocation4], 1
    %2697 = vsyncpa %s2696, 1
    %2698 = vsyncpa [#allocation7], 1
    %2699 = vsyncpa [#allocation5], 1
    %s2700 = scalar_lea.sflag [#allocation5], 1
    %2701 = vsyncpa %s2700, 1
    %2702 = vsyncpa [#allocation10], 1
    %s2703 = scalar_lea.sflag [#allocation10], 1
    %2704 = vsyncpa %s2703, 1

// kernel: basic_block_forward.5
$region0: #{basic_block_forward.5}
  #allocation0 [shape = 'u32[]', space=smem, size = 0x4, offset = 0x4, fixed_abs, tag = 'smem constant byte address 0x4 - core index']
  #allocation1 [shape = 'u32[144,128]{1,0:T(1,128)}', space=vmem, size = 0x12000, scoped, tag = 'internal scratch']
  #allocation2 [shape = 'bf16[18,16,384]{2,1,0:T(16,128)(2,1)}', space=vmem, size = 0x36000, scoped, tag = 'scratch operand']
  %s0 = inlined_call_operand.hbm [shape: bf16[2,16,16,128], index: 0, kind: input, shape index: {}]
  %s1 = inlined_call_operand.hbm [shape: bf16[3,384,128], index: 1, kind: input, shape index: {}]
  %s2 = inlined_call_operand.hbm [shape: f32[1,128], index: 2, kind: input, shape index: {}]
  %s3 = inlined_call_operand.hbm [shape: f32[1,128], index: 3, kind: input, shape index: {}]
  %s4 = inlined_call_operand.hbm [shape: bf16[2,16,16,128], index: 4, kind: output, shape index: {0}]
  %s5 = inlined_call_operand.hbm [shape: f32[2,8,128], index: 5, kind: output, shape index: {1}]
  %6 = xla_tuple %s4, %s5
  %s7 = sld [smem:[#allocation0]]
  $region73: #{basic_block_forward.5} parent=0
    _
  %s9 = ssub.s32 1, %s7
  %s10 = scalar_select 0, %s9, %s7
  $region1: #{basic_block_forward.5} parent=0
    #allocation3 [shape = 'u8[131072]{0}', space=vmem, size = 0x20000, scoped, tag = 'input window, operand 0']
    #allocation4 [shape = 's32[2]{0}', space=sflag, size = 0x8, scoped, tag = 'scoped memory for basic_block_forward.5']
    #allocation5 [shape = 's32[2]{0}', space=sflag, size = 0x8, scoped, tag = 'scoped memory for basic_block_forward.5']
    #allocation6 [shape = 'u8[294912]{0}', space=vmem, size = 0x48000, scoped, tag = 'input window, operand 1, single buffered']
    #allocation7 [shape = 's32[1]{0}', space=sflag, size = 0x4, scoped, tag = 'scoped memory for basic_block_forward.5']
    #allocation8 [shape = 'u8[512]{0}', space=vmem, size = 0x400, scoped, tag = 'input window, operand 2, single buffered']
    #allocation9 [shape = 'u8[512]{0}', space=vmem, size = 0x400, scoped, tag = 'input window, operand 3, single buffered']
    #allocation10 [shape = 's32[1]{0}', space=sflag, size = 0x4, scoped, tag = 'scoped memory for basic_block_forward.5']
    #allocation11 [shape = 'u8[131072]{0}', space=vmem, size = 0x20000, scoped, tag = 'output window, operand 0']
    #allocation12 [shape = 'u8[8192]{0}', space=vmem, size = 0x2000, scoped, tag = 'output window, operand 1']
    #allocation13 [shape = 's32[2]{0}', space=sflag, size = 0x8, scoped, tag = 'scoped memory for basic_block_forward.5']
    %11 = vsyncpa [#allocation4], 0
    %s12 = scalar_lea.sflag [#allocation4], 1
    %13 = vsyncpa %s12, 0
    %14 = vsyncpa [#allocation7], 0
    %15 = vsyncpa [#allocation10], 0
    %16 = vsyncpa [#allocation5], 0
    %s17 = scalar_lea.sflag [#allocation5], 1
    %18 = vsyncpa %s17, 0
    %19 = vsyncpa [#allocation13], 0
    %s20 = scalar_lea.sflag [#allocation13], 1
    %21 = vsyncpa %s20, 0
    loop: start=0, step=1, limit=4
    $region2: #{basic_block_forward.5} parent=1 // loop_pre_header
      _
    $region3: #{basic_block_forward.5} parent=1 // loop_header
      %s23 = sphi 0, %s27
      %p24 = scmp.ge.s32.totalorder %s23, 4
      %s30 = sphi 0, %s42
      %s31 = sphi 0, %s38
      %s32 = sphi 0, %s30
      %s33 = sphi 0, %s31
      %s34 = sphi 0, %s32
      %s35 = sphi 0, %s33
      %s45 = sphi 0, %s47
      %s48 = sphi 0, %s45
      %s49 = sphi 0, %s48
      %s65 = sphi 0, %s49
      %s71 = sphi 0, %s73
      %s74 = sphi 0, %s71
      %s75 = sphi 0, %s74
      %s91 = sphi 0, %s75
      %s95 = sphi 0, %s95
      %s97 = sphi 0, %s95
      %s98 = sphi 0, %s97
      %s112 = sphi 0, %s98
      %s116 = sphi 0, %s116
      %s118 = sphi 0, %s116
      %s119 = sphi 0, %s118
      %s133 = sphi 0, %s119
      %s141 = sphi 0, %s143
      %s144 = sphi 0, %s141
      %s145 = sphi 0, %s144
      %s161 = sphi 0, %s145
      %s169 = sphi 0, %s171
      %s172 = sphi 0, %s169
      %s173 = sphi 0, %s172
      %s189 = sphi 0, %s173
    $region4: #{basic_block_forward.5} parent=1 // loop_header_branch
      %26 = sbr.rel (%p24) target = $region8
    $region5: #{basic_block_forward.5} parent=1 // loop_body
      %s28 = ssub.s32 %s23, 1
      %s29 = ssub.s32 %s23, 2
      %s36 = sadd.s32 1, %s31
      %p37 = scmp.ge.s32.totalorder %s36, 1
      %s38 = scalar_select %p37, 0, %s36
      %s39 = sadd.s32 1, %s30
      %s40 = scalar_select %p37, %s39, %s30
      %p41 = scmp.ge.s32.totalorder %s40, 2
      %s42 = scalar_select %p41, 0, %s40
      %s43 = ssub.s32 %s30, %s42
      %p44 = scmp.eq.s32.totalorder %s43, 0
      %s46 = sadd.s32 %s45, 1
      %s47 = scalar_select %p44, %s45, %s46
      %p50 = pneg %p44
      %p51 = scmp.eq.s32.totalorder %s23, 1
      %p52 = por %p50, %p51
      %p53 = scmp.ne.s32.totalorder %s45, %s48
      %p54 = scmp.eq.s32.totalorder %s23, 0
      %p55 = por %p53, %p54
      %p56 = scmp.ne.s32.totalorder %s45, %s48
      %p57 = scmp.eq.s32.totalorder %s28, 1
      %p58 = por %p56, %p57
      %p59 = scmp.ne.s32.totalorder %s48, %s49
      %p60 = scmp.eq.s32.totalorder %s28, 0
      %p61 = por %p59, %p60
      %p62 = scmp.ne.s32.totalorder %s48, %s49
      %p63 = scmp.eq.s32.totalorder %s29, 1
      %p64 = por %p62, %p63
      %p66 = scmp.ne.s32.totalorder %s49, %s65
      %p67 = scmp.eq.s32.totalorder %s29, 0
      %p68 = por %p66, %p67
      %s69 = ssub.s32 %s31, %s38
      %p70 = scmp.eq.s32.totalorder %s69, 0
      %s72 = sadd.s32 %s71, 1
      %s73 = scalar_select %p70, %s71, %s72
      %p76 = pneg %p70
      %p77 = scmp.eq.s32.totalorder %s23, 1
      %p78 = por %p76, %p77
      %p79 = scmp.ne.s32.totalorder %s71, %s74
      %p80 = scmp.eq.s32.totalorder %s23, 0
      %p81 = por %p79, %p80
      %p82 = scmp.ne.s32.totalorder %s71, %s74
      %p83 = scmp.eq.s32.totalorder %s28, 1
      %p84 = por %p82, %p83
      %p85 = scmp.ne.s32.totalorder %s74, %s75
      %p86 = scmp.eq.s32.totalorder %s28, 0
      %p87 = por %p85, %p86
      %p88 = scmp.ne.s32.totalorder %s74, %s75
      %p89 = scmp.eq.s32.totalorder %s29, 1
      %p90 = por %p88, %p89
      %p92 = scmp.ne.s32.totalorder %s75, %s91
      %p93 = scmp.eq.s32.totalorder %s29, 0
      %p94 = por %p92, %p93
      %s96 = sadd.s32 %s95, 1
      %p99 = scmp.eq.s32.totalorder %s23, 1
      %p100 = scmp.ne.s32.totalorder %s95, %s97
      %p101 = scmp.eq.s32.totalorder %s23, 0
      %p102 = por %p100, %p101
      %p103 = scmp.ne.s32.totalorder %s95, %s97
      %p104 = scmp.eq.s32.totalorder %s28, 1
      %p105 = por %p103, %p104
      %p106 = scmp.ne.s32.totalorder %s97, %s98
      %p107 = scmp.eq.s32.totalorder %s28, 0
      %p108 = por %p106, %p107
      %p109 = scmp.ne.s32.totalorder %s97, %s98
      %p110 = scmp.eq.s32.totalorder %s29, 1
      %p111 = por %p109, %p110
      %p113 = scmp.ne.s32.totalorder %s98, %s112
      %p114 = scmp.eq.s32.totalorder %s29, 0
      %p115 = por %p113, %p114
      %s117 = sadd.s32 %s116, 1
      %p120 = scmp.eq.s32.totalorder %s23, 1
      %p121 = scmp.ne.s32.totalorder %s116, %s118
      %p122 = scmp.eq.s32.totalorder %s23, 0
      %p123 = por %p121, %p122
      %p124 = scmp.ne.s32.totalorder %s116, %s118
      %p125 = scmp.eq.s32.totalorder %s28, 1
      %p126 = por %p124, %p125
      %p127 = scmp.ne.s32.totalorder %s118, %s119
      %p128 = scmp.eq.s32.totalorder %s28, 0
      %p129 = por %p127, %p128
      %p130 = scmp.ne.s32.totalorder %s118, %s119
      %p131 = scmp.eq.s32.totalorder %s29, 1
      %p132 = por %p130, %p131
      %p134 = scmp.ne.s32.totalorder %s119, %s133
      %p135 = scmp.eq.s32.totalorder %s29, 0
      %p136 = por %p134, %p135
      %s137 = ssub.s32 %s30, %s42
      %s138 = ssub.s32 %s31, %s38
      %s139 = sor.u32 %s137, %s138
      %p140 = scmp.eq.s32.totalorder %s139, 0
      %s142 = sadd.s32 %s141, 1
      %s143 = scalar_select %p140, %s141, %s142
      %p146 = pneg %p140
      %p147 = scmp.eq.s32.totalorder %s23, 1
      %p148 = por %p146, %p147
      %p149 = scmp.ne.s32.totalorder %s141, %s144
      %p150 = scmp.eq.s32.totalorder %s23, 0
      %p151 = por %p149, %p150
      %p152 = scmp.ne.s32.totalorder %s141, %s144
      %p153 = scmp.eq.s32.totalorder %s28, 1
      %p154 = por %p152, %p153
      %p155 = scmp.ne.s32.totalorder %s144, %s145
      %p156 = scmp.eq.s32.totalorder %s28, 0
      %p157 = por %p155, %p156
      %p158 = scmp.ne.s32.totalorder %s144, %s145
      %p159 = scmp.eq.s32.totalorder %s29, 1
      %p160 = por %p158, %p159
      %p162 = scmp.ne.s32.totalorder %s145, %s161
      %p163 = scmp.eq.s32.totalorder %s29, 0
      %p164 = por %p162, %p163
      %s165 = ssub.s32 %s30, %s42
      %s166 = ssub.s32 %s31, %s38
      %s167 = sor.u32 %s165, %s166
      %p168 = scmp.eq.s32.totalorder %s167, 0
      %s170 = sadd.s32 %s169, 1
      %s171 = scalar_select %p168, %s169, %s170
      %p174 = pneg %p168
      %p175 = scmp.eq.s32.totalorder %s23, 1
      %p176 = por %p174, %p175
      %p177 = scmp.ne.s32.totalorder %s169, %s172
      %p178 = scmp.eq.s32.totalorder %s23, 0
      %p179 = por %p177, %p178
      %p180 = scmp.ne.s32.totalorder %s169, %s172
      %p181 = scmp.eq.s32.totalorder %s28, 1
      %p182 = por %p180, %p181
      %p183 = scmp.ne.s32.totalorder %s172, %s173
      %p184 = scmp.eq.s32.totalorder %s28, 0
      %p185 = por %p183, %p184
      %p186 = scmp.ne.s32.totalorder %s172, %s173
      %p187 = scmp.eq.s32.totalorder %s29, 1
      %p188 = por %p186, %p187
      %p190 = scmp.ne.s32.totalorder %s173, %s189
      %p191 = scmp.eq.s32.totalorder %s29, 0
      %p192 = por %p190, %p191
      %p193 = scmp.le.s32.totalorder 1, %s23
      %p194 = scmp.lt.s32.totalorder %s23, 3
      %p195 = pnand %p193, %p194
      %p196 = pneg %p195
      // Predicated region
      $region9: #{basic_block_forward.5} parent=5 // pred_check
        _
      $region10: #{basic_block_forward.5} parent=5 // pred_check_branch
        %198 = sbr.rel (%p195) target = $region12
      $region11: #{basic_block_forward.5} parent=5 // pred_region
        %s199 = ssub.s32 %s23, 1
        // Predicated region
        $region13: #{basic_block_forward.5} parent=11 // pred_check
          %p200 = pneg %p87
        $region14: #{basic_block_forward.5} parent=11 // pred_check_branch
          %202 = sbr.rel (%p200) target = $region16
        $region15: #{basic_block_forward.5} parent=11 // pred_region
          %s204 = ssub.s32 9216, 9216
          %205 = vsyncadd [#allocation7], %s204
          %s206 = smul.addr %s33, 64
          %s207 = scalar_lea.hbm %s1, %s206
          %s208 = sshll.u32 [#allocation6], 4
          %s209 = int_to_ptr.vmem [resolvable:$true] %s208
          %214 = dma.hbm_to_vmem [thread:$0]  %s207, 9216, %s209, [#allocation7], 64, 64, 4
        $region16: #{basic_block_forward.5} parent=11 // pred_fallthru
          _
        // Predicated region
        $region17: #{basic_block_forward.5} parent=11 // pred_check
          %p215 = pneg %p108
        $region18: #{basic_block_forward.5} parent=11 // pred_check_branch
          %217 = sbr.rel (%p215) target = $region20
        $region19: #{basic_block_forward.5} parent=11 // pred_region
          %s219 = ssub.s32 16, 16
          %220 = vsyncadd [#allocation7], %s219
          %s222 = sshll.u32 [#allocation8], 4
          %s223 = int_to_ptr.vmem [resolvable:$true] %s222
          %225 = dma.hbm_to_vmem [thread:$0]  %s2, 16, %s223, [#allocation7]
        $region20: #{basic_block_forward.5} parent=11 // pred_fallthru
          _
        // Predicated region
        $region21: #{basic_block_forward.5} parent=11 // pred_check
          %p226 = pneg %p129
        $region22: #{basic_block_forward.5} parent=11 // pred_check_branch
          %228 = sbr.rel (%p226) target = $region24
        $region23: #{basic_block_forward.5} parent=11 // pred_region
          %s230 = ssub.s32 16, 16
          %231 = vsyncadd [#allocation10], %s230
          %s233 = sshll.u32 [#allocation9], 4
          %s234 = int_to_ptr.vmem [resolvable:$true] %s233
          %236 = dma.hbm_to_vmem [thread:$0]  %s3, 16, %s234, [#allocation10]
        $region24: #{basic_block_forward.5} parent=11 // pred_fallthru
          _
      $region12: #{basic_block_forward.5} parent=5 // pred_fallthru
        _
      %p237 = scmp.lt.s32.totalorder %s23, 2
      // Predicated region
      $region25: #{basic_block_forward.5} parent=5 // pred_check
        %p238 = pneg %p237
      $region26: #{basic_block_forward.5} parent=5 // pred_check_branch
        %240 = sbr.rel (%p238) target = $region28
      $region27: #{basic_block_forward.5} parent=5 // pred_region
        // Predicated region
        $region29: #{basic_block_forward.5} parent=27 // pred_check
          %p241 = pneg %p55
        $region30: #{basic_block_forward.5} parent=27 // pred_check_branch
          %243 = sbr.rel (%p241) target = $region32
        $region31: #{basic_block_forward.5} parent=27 // pred_region
          %s244 = sand.u32 %s45, 1
          %s245 = scalar_lea.sflag [#allocation4], %s244
          %s246 = sand.u32 %s45, 1
          %s247 = smul.addr %s246, 128
          %s248 = scalar_lea.vmem [#allocation3], %s247
          %s250 = ssub.s32 2048, 2048
          %251 = vsyncadd %s245, %s250
          %s252 = smul.addr %s30, 32
          %s253 = smul.addr %s252, 64
          %s254 = scalar_lea.hbm %s0, %s253
          %s255 = sshll.u32 %s248, 4
          %s256 = int_to_ptr.vmem [resolvable:$true] %s255
          %261 = dma.hbm_to_vmem [thread:$0]  %s254, 2048, %s256, %s245, 64, 64, 4
        $region32: #{basic_block_forward.5} parent=27 // pred_fallthru
          _
      $region28: #{basic_block_forward.5} parent=5 // pred_fallthru
        _
      %p262 = scmp.le.s32.totalorder 1, %s23
      %p263 = scmp.lt.s32.totalorder %s23, 3
      %p264 = pnand %p262, %p263
      %p265 = pneg %p264
      // Predicated region
      $region33: #{basic_block_forward.5} parent=5 // pred_check
        _
      $region34: #{basic_block_forward.5} parent=5 // pred_check_branch
        %267 = sbr.rel (%p264) target = $region36
      $region35: #{basic_block_forward.5} parent=5 // pred_region
        %s268 = ssub.s32 %s23, 1
        %s269 = sand.u32 %s48, 1
        %s270 = scalar_lea.sflag [#allocation4], %s269
        %s271 = sand.u32 %s48, 1
        %s272 = smul.addr %s271, 128
        %s273 = scalar_lea.vmem [#allocation3], %s272
        // Predicated region
        $region37: #{basic_block_forward.5} parent=35 // pred_check
          %p274 = pneg %p61
        $region38: #{basic_block_forward.5} parent=35 // pred_check_branch
          %276 = sbr.rel (%p274) target = $region40
        $region39: #{basic_block_forward.5} parent=35 // pred_region
          %277 = dma.done %s270, 2048
        $region40: #{basic_block_forward.5} parent=35 // pred_fallthru
          _
        // Predicated region
        $region41: #{basic_block_forward.5} parent=35 // pred_check
          %p278 = pneg %p87
        $region42: #{basic_block_forward.5} parent=35 // pred_check_branch
          %280 = sbr.rel (%p278) target = $region44
        $region43: #{basic_block_forward.5} parent=35 // pred_region
          %281 = dma.done [#allocation7], 9216
        $region44: #{basic_block_forward.5} parent=35 // pred_fallthru
          _
        // Predicated region
        $region45: #{basic_block_forward.5} parent=35 // pred_check
          %p282 = pneg %p108
        $region46: #{basic_block_forward.5} parent=35 // pred_check_branch
          %284 = sbr.rel (%p282) target = $region48
        $region47: #{basic_block_forward.5} parent=35 // pred_region
          %285 = dma.done [#allocation7], 16
        $region48: #{basic_block_forward.5} parent=35 // pred_fallthru
          _
        // Predicated region
        $region49: #{basic_block_forward.5} parent=35 // pred_check
          %p286 = pneg %p129
        $region50: #{basic_block_forward.5} parent=35 // pred_check_branch
          %288 = sbr.rel (%p286) target = $region52
        $region51: #{basic_block_forward.5} parent=35 // pred_region
          %289 = dma.done [#allocation10], 16
        $region52: #{basic_block_forward.5} parent=35 // pred_fallthru
          _
        %s290 = sand.u32 %s48, 1
        %s291 = scalar_lea.sflag [#allocation4], %s290
        %s292 = sand.u32 %s48, 1
        %s293 = smul.addr %s292, 128
        %s294 = scalar_lea.vmem [#allocation3], %s293
        %p295 = pneg %p61
        %p296 = pneg %p58
        %p297 = pneg %p87
        %p298 = pneg %p84
        %p299 = pneg %p108
        %p300 = pneg %p105
        %p301 = pneg %p129
        %p302 = pneg %p126
        %p303 = pneg %p157
        %p304 = pneg %p154
        %s305 = sand.u32 %s144, 1
        %s306 = scalar_lea.sflag [#allocation5], %s305
        %s307 = sand.u32 %s144, 1
        %s308 = smul.addr %s307, 128
        %s309 = scalar_lea.vmem [#allocation11], %s308
        %p310 = pneg %p185
        %p311 = pneg %p182
        %s312 = sand.u32 %s172, 1
        %s313 = scalar_lea.sflag [#allocation13], %s312
        %s314 = sand.u32 %s172, 1
        %s315 = smul.addr %s314, 8
        %s316 = scalar_lea.vmem [#allocation12], %s315
        %v318 = vld [vmem:[%s273] sm:$0xf]
        %v319 = vld [vmem:[%s273 + $0x4] sm:$0xf]
        %v320 = vld [vmem:[%s273 + $0x8] sm:$0xf]
        %v321 = vld [vmem:[%s273 + $0xc] sm:$0xf]
        %v322 = vld [vmem:[%s273 + $0x10] sm:$0xf]
        %v323 = vld [vmem:[%s273 + $0x14] sm:$0xf]
        %v324 = vld [vmem:[%s273 + $0x18] sm:$0xf]
        %v325 = vld [vmem:[%s273 + $0x1c] sm:$0xf]
        %v326 = vld [vmem:[%s273 + $0x20] sm:$0xf]
        %v327 = vld [vmem:[%s273 + $0x24] sm:$0xf]
        %v328 = vld [vmem:[%s273 + $0x28] sm:$0xf]
        %v329 = vld [vmem:[%s273 + $0x2c] sm:$0xf]
        %v330 = vld [vmem:[%s273 + $0x30] sm:$0xf]
        %v331 = vld [vmem:[%s273 + $0x34] sm:$0xf]
        %v332 = vld [vmem:[%s273 + $0x38] sm:$0xf]
        %v333 = vld [vmem:[%s273 + $0x3c] sm:$0xf]
        %v334 = vld [vmem:[%s273 + $0x40] sm:$0xf]
        %v335 = vld [vmem:[%s273 + $0x44] sm:$0xf]
        %v336 = vld [vmem:[%s273 + $0x48] sm:$0xf]
        %v337 = vld [vmem:[%s273 + $0x4c] sm:$0xf]
        %v338 = vld [vmem:[%s273 + $0x50] sm:$0xf]
        %v339 = vld [vmem:[%s273 + $0x54] sm:$0xf]
        %v340 = vld [vmem:[%s273 + $0x58] sm:$0xf]
        %v341 = vld [vmem:[%s273 + $0x5c] sm:$0xf]
        %v342 = vld [vmem:[%s273 + $0x60] sm:$0xf]
        %v343 = vld [vmem:[%s273 + $0x64] sm:$0xf]
        %v344 = vld [vmem:[%s273 + $0x68] sm:$0xf]
        %v345 = vld [vmem:[%s273 + $0x6c] sm:$0xf]
        %v346 = vld [vmem:[%s273 + $0x70] sm:$0xf]
        %v347 = vld [vmem:[%s273 + $0x74] sm:$0xf]
        %v348 = vld [vmem:[%s273 + $0x78] sm:$0xf]
        %v349 = vld [vmem:[%s273 + $0x7c] sm:$0xf]
        %v350 = vunpack.c.l.bf16 %v318
        %v351 = vunpack.c.l.bf16 %v319
        %v352 = vunpack.c.l.bf16 %v320
        %v353 = vunpack.c.l.bf16 %v321
        %v354 = vunpack.c.l.bf16 %v322
        %v355 = vunpack.c.l.bf16 %v323
        %v356 = vunpack.c.l.bf16 %v324
        %v357 = vunpack.c.l.bf16 %v325
        %v358 = vunpack.c.l.bf16 %v326
        %v359 = vunpack.c.l.bf16 %v327
        %v360 = vunpack.c.l.bf16 %v328
        %v361 = vunpack.c.l.bf16 %v329
        %v362 = vunpack.c.l.bf16 %v330
        %v363 = vunpack.c.l.bf16 %v331
        %v364 = vunpack.c.l.bf16 %v332
        %v365 = vunpack.c.l.bf16 %v333
        %v366 = vunpack.c.l.bf16 %v334
        %v367 = vunpack.c.l.bf16 %v335
        %v368 = vunpack.c.l.bf16 %v336
        %v369 = vunpack.c.l.bf16 %v337
        %v370 = vunpack.c.l.bf16 %v338
        %v371 = vunpack.c.l.bf16 %v339
        %v372 = vunpack.c.l.bf16 %v340
        %v373 = vunpack.c.l.bf16 %v341
        %v374 = vunpack.c.l.bf16 %v342
        %v375 = vunpack.c.l.bf16 %v343
        %v376 = vunpack.c.l.bf16 %v344
        %v377 = vunpack.c.l.bf16 %v345
        %v378 = vunpack.c.l.bf16 %v346
        %v379 = vunpack.c.l.bf16 %v347
        %v380 = vunpack.c.l.bf16 %v348
        %v381 = vunpack.c.l.bf16 %v349
        %v382 = vld [vmem:[#allocation8] sm:$0x1]
        %v384 = vlaneseq
        %v385 = vshrl.u32 %v384, 7
        %v386 = vsub.s32 0, %v385
        %v387 = vrot.slane %v382, %v386
        %v389 = vmul.f32 %v350, %v387
        %v390 = vmul.f32 %v351, %v387
        %v391 = vmul.f32 %v352, %v387
        %v392 = vmul.f32 %v353, %v387
        %v393 = vmul.f32 %v354, %v387
        %v394 = vmul.f32 %v355, %v387
        %v395 = vmul.f32 %v356, %v387
        %v396 = vmul.f32 %v357, %v387
        %v397 = vmul.f32 %v358, %v387
        %v398 = vmul.f32 %v359, %v387
        %v399 = vmul.f32 %v360, %v387
        %v400 = vmul.f32 %v361, %v387
        %v401 = vmul.f32 %v362, %v387
        %v402 = vmul.f32 %v363, %v387
        %v403 = vmul.f32 %v364, %v387
        %v404 = vmul.f32 %v365, %v387
        %v405 = vmul.f32 %v366, %v387
        %v406 = vmul.f32 %v367, %v387
        %v407 = vmul.f32 %v368, %v387
        %v408 = vmul.f32 %v369, %v387
        %v409 = vmul.f32 %v370, %v387
        %v410 = vmul.f32 %v371, %v387
        %v411 = vmul.f32 %v372, %v387
        %v412 = vmul.f32 %v373, %v387
        %v413 = vmul.f32 %v374, %v387
        %v414 = vmul.f32 %v375, %v387
        %v415 = vmul.f32 %v376, %v387
        %v416 = vmul.f32 %v377, %v387
        %v417 = vmul.f32 %v378, %v387
        %v418 = vmul.f32 %v379, %v387
        %v419 = vmul.f32 %v380, %v387
        %v420 = vmul.f32 %v381, %v387
        %v421 = vld [vmem:[#allocation9] sm:$0x1]
        %v423 = vlaneseq
        %v424 = vshrl.u32 %v423, 7
        %v425 = vsub.s32 0, %v424
        %v426 = vrot.slane %v421, %v425
        %v428 = vadd.f32 %v389, %v426
        %v429 = vadd.f32 %v390, %v426
        %v430 = vadd.f32 %v391, %v426
        %v431 = vadd.f32 %v392, %v426
        %v432 = vadd.f32 %v393, %v426
        %v433 = vadd.f32 %v394, %v426
        %v434 = vadd.f32 %v395, %v426
        %v435 = vadd.f32 %v396, %v426
        %v436 = vadd.f32 %v397, %v426
        %v437 = vadd.f32 %v398, %v426
        %v438 = vadd.f32 %v399, %v426
        %v439 = vadd.f32 %v400, %v426
        %v440 = vadd.f32 %v401, %v426
        %v441 = vadd.f32 %v402, %v426
        %v442 = vadd.f32 %v403, %v426
        %v443 = vadd.f32 %v404, %v426
        %v444 = vadd.f32 %v405, %v426
        %v445 = vadd.f32 %v406, %v426
        %v446 = vadd.f32 %v407, %v426
        %v447 = vadd.f32 %v408, %v426
        %v448 = vadd.f32 %v409, %v426
        %v449 = vadd.f32 %v410, %v426
        %v450 = vadd.f32 %v411, %v426
        %v451 = vadd.f32 %v412, %v426
        %v452 = vadd.f32 %v413, %v426
        %v453 = vadd.f32 %v414, %v426
        %v454 = vadd.f32 %v415, %v426
        %v455 = vadd.f32 %v416, %v426
        %v456 = vadd.f32 %v417, %v426
        %v457 = vadd.f32 %v418, %v426
        %v458 = vadd.f32 %v419, %v426
        %v459 = vadd.f32 %v420, %v426
        %v460 = vmax.f32 %v428, 0.0
        %v461 = vmax.f32 %v429, 0.0
        %v462 = vmax.f32 %v430, 0.0
        %v463 = vmax.f32 %v431, 0.0
        %v464 = vmax.f32 %v432, 0.0
        %v465 = vmax.f32 %v433, 0.0
        %v466 = vmax.f32 %v434, 0.0
        %v467 = vmax.f32 %v435, 0.0
        %v468 = vmax.f32 %v436, 0.0
        %v469 = vmax.f32 %v437, 0.0
        %v470 = vmax.f32 %v438, 0.0
        %v471 = vmax.f32 %v439, 0.0
        %v472 = vmax.f32 %v440, 0.0
        %v473 = vmax.f32 %v441, 0.0
        %v474 = vmax.f32 %v442, 0.0
        %v475 = vmax.f32 %v443, 0.0
        %v476 = vmax.f32 %v444, 0.0
        %v477 = vmax.f32 %v445, 0.0
        %v478 = vmax.f32 %v446, 0.0
        %v479 = vmax.f32 %v447, 0.0
        %v480 = vmax.f32 %v448, 0.0
        %v481 = vmax.f32 %v449, 0.0
        %v482 = vmax.f32 %v450, 0.0
        %v483 = vmax.f32 %v451, 0.0
        %v484 = vmax.f32 %v452, 0.0
        %v485 = vmax.f32 %v453, 0.0
        %v486 = vmax.f32 %v454, 0.0
        %v487 = vmax.f32 %v455, 0.0
        %v488 = vmax.f32 %v456, 0.0
        %v489 = vmax.f32 %v457, 0.0
        %v490 = vmax.f32 %v458, 0.0
        %v491 = vmax.f32 %v459, 0.0
        %v492 = vpack.c.bf16 %v461, %v460
        %v493 = vpack.c.bf16 %v463, %v462
        %v494 = vpack.c.bf16 %v465, %v464
        %v495 = vpack.c.bf16 %v467, %v466
        %v496 = vpack.c.bf16 %v469, %v468
        %v497 = vpack.c.bf16 %v471, %v470
        %v498 = vpack.c.bf16 %v473, %v472
        %v499 = vpack.c.bf16 %v475, %v474
        %v500 = vpack.c.bf16 %v477, %v476
        %v501 = vpack.c.bf16 %v479, %v478
        %v502 = vpack.c.bf16 %v481, %v480
        %v503 = vpack.c.bf16 %v483, %v482
        %v504 = vpack.c.bf16 %v485, %v484
        %v505 = vpack.c.bf16 %v487, %v486
        %v506 = vpack.c.bf16 %v489, %v488
        %v507 = vpack.c.bf16 %v491, %v490
        %508 = vst [vmem:[#allocation2] sm:$0xff] 0
        %509 = vst [vmem:[#allocation2 + $0x8] sm:$0xff] 0
        %510 = vst [vmem:[#allocation2 + $0x10] sm:$0xff] 0
        %s511 = scalar_lea.vmem [#allocation2], 408
        %512 = vst [vmem:[%s511] sm:$0xff] 0
        %513 = vst [vmem:[%s511 + $0x8] sm:$0xff] 0
        %514 = vst [vmem:[%s511 + $0x10] sm:$0xff] 0
        %v516 = vshrl.u32 %v492, 16
        %v518 = vrot.slane %v516, 7
        %v519 = vshll.u32 %v492, 16
        %v521 = vor.u32 %v518, %v519
        %v523 = vshrl.u32 %v493, 16
        %v525 = vrot.slane %v523, 7
        %v526 = vshll.u32 %v493, 16
        %v528 = vor.u32 %v525, %v526
        %v530 = vshrl.u32 %v494, 16
        %v532 = vrot.slane %v530, 7
        %v533 = vshll.u32 %v494, 16
        %v535 = vor.u32 %v532, %v533
        %v537 = vshrl.u32 %v495, 16
        %v539 = vrot.slane %v537, 7
        %v540 = vshll.u32 %v495, 16
        %v542 = vor.u32 %v539, %v540
        %v544 = vshrl.u32 %v496, 16
        %v546 = vrot.slane %v544, 7
        %v547 = vshll.u32 %v496, 16
        %v549 = vor.u32 %v546, %v547
        %v551 = vshrl.u32 %v497, 16
        %v553 = vrot.slane %v551, 7
        %v554 = vshll.u32 %v497, 16
        %v556 = vor.u32 %v553, %v554
        %v558 = vshrl.u32 %v498, 16
        %v560 = vrot.slane %v558, 7
        %v561 = vshll.u32 %v498, 16
        %v563 = vor.u32 %v560, %v561
        %v565 = vshrl.u32 %v499, 16
        %v567 = vrot.slane %v565, 7
        %v568 = vshll.u32 %v499, 16
        %v570 = vor.u32 %v567, %v568
        %v572 = vshrl.u32 %v500, 16
        %v574 = vrot.slane %v572, 7
        %v575 = vshll.u32 %v500, 16
        %v577 = vor.u32 %v574, %v575
        %v579 = vshrl.u32 %v501, 16
        %v581 = vrot.slane %v579, 7
        %v582 = vshll.u32 %v501, 16
        %v584 = vor.u32 %v581, %v582
        %v586 = vshrl.u32 %v502, 16
        %v588 = vrot.slane %v586, 7
        %v589 = vshll.u32 %v502, 16
        %v591 = vor.u32 %v588, %v589
        %v593 = vshrl.u32 %v503, 16
        %v595 = vrot.slane %v593, 7
        %v596 = vshll.u32 %v503, 16
        %v598 = vor.u32 %v595, %v596
        %v600 = vshrl.u32 %v504, 16
        %v602 = vrot.slane %v600, 7
        %v603 = vshll.u32 %v504, 16
        %v605 = vor.u32 %v602, %v603
        %v607 = vshrl.u32 %v505, 16
        %v609 = vrot.slane %v607, 7
        %v610 = vshll.u32 %v505, 16
        %v612 = vor.u32 %v609, %v610
        %v614 = vshrl.u32 %v506, 16
        %v616 = vrot.slane %v614, 7
        %v617 = vshll.u32 %v506, 16
        %v619 = vor.u32 %v616, %v617
        %v621 = vshrl.u32 %v507, 16
        %v623 = vrot.slane %v621, 7
        %v624 = vshll.u32 %v507, 16
        %v626 = vor.u32 %v623, %v624
        %vm643 = vcmask 1040384
        %vm644 = vsmask.f32 256
        %vm645 = vmand %vm643, %vm644
        %v646 = vsel %vm645, 0, %v521
        %v647 = vsel %vm645, 0, %v528
        %v648 = vsel %vm645, 0, %v535
        %v649 = vsel %vm645, 0, %v542
        %v650 = vsel %vm645, 0, %v549
        %v651 = vsel %vm645, 0, %v556
        %v652 = vsel %vm645, 0, %v563
        %v653 = vsel %vm645, 0, %v570
        %v654 = vsel %vm645, 0, %v577
        %v655 = vsel %vm645, 0, %v584
        %v656 = vsel %vm645, 0, %v591
        %v657 = vsel %vm645, 0, %v598
        %v658 = vsel %vm645, 0, %v605
        %v659 = vsel %vm645, 0, %v612
        %v660 = vsel %vm645, 0, %v619
        %v661 = vsel %vm645, 0, %v626
        %s662 = scalar_lea.vmem [#allocation2], 24
        %663 = vst [vmem:[%s662] sm:$0xff] %v646
        %664 = vst [vmem:[%s662 + $0x18] sm:$0xff] %v647
        %665 = vst [vmem:[%s662 + $0x30] sm:$0xff] %v648
        %666 = vst [vmem:[%s662 + $0x48] sm:$0xff] %v649
        %667 = vst [vmem:[%s662 + $0x60] sm:$0xff] %v650
        %668 = vst [vmem:[%s662 + $0x78] sm:$0xff] %v651
        %669 = vst [vmem:[%s662 + $0x90] sm:$0xff] %v652
        %670 = vst [vmem:[%s662 + $0xa8] sm:$0xff] %v653
        %671 = vst [vmem:[%s662 + $0xc0] sm:$0xff] %v654
        %672 = vst [vmem:[%s662 + $0xd8] sm:$0xff] %v655
        %673 = vst [vmem:[%s662 + $0xf0] sm:$0xff] %v656
        %674 = vst [vmem:[%s662 + $0x108] sm:$0xff] %v657
        %675 = vst [vmem:[%s662 + $0x120] sm:$0xff] %v658
        %676 = vst [vmem:[%s662 + $0x138] sm:$0xff] %v659
        %677 = vst [vmem:[%s662 + $0x150] sm:$0xff] %v660
        %678 = vst [vmem:[%s662 + $0x168] sm:$0xff] %v661
        %679 = vst [vmem:[%s662 + $0x8] sm:$0xff] %v492
        %680 = vst [vmem:[%s662 + $0x20] sm:$0xff] %v493
        %681 = vst [vmem:[%s662 + $0x38] sm:$0xff] %v494
        %682 = vst [vmem:[%s662 + $0x50] sm:$0xff] %v495
        %683 = vst [vmem:[%s662 + $0x68] sm:$0xff] %v496
        %684 = vst [vmem:[%s662 + $0x80] sm:$0xff] %v497
        %685 = vst [vmem:[%s662 + $0x98] sm:$0xff] %v498
        %686 = vst [vmem:[%s662 + $0xb0] sm:$0xff] %v499
        %687 = vst [vmem:[%s662 + $0xc8] sm:$0xff] %v500
        %688 = vst [vmem:[%s662 + $0xe0] sm:$0xff] %v501
        %689 = vst [vmem:[%s662 + $0xf8] sm:$0xff] %v502
        %690 = vst [vmem:[%s662 + $0x110] sm:$0xff] %v503
        %691 = vst [vmem:[%s662 + $0x128] sm:$0xff] %v504
        %692 = vst [vmem:[%s662 + $0x140] sm:$0xff] %v505
        %693 = vst [vmem:[%s662 + $0x158] sm:$0xff] %v506
        %694 = vst [vmem:[%s662 + $0x170] sm:$0xff] %v507
        %v695 = vrot.slane %v519, 1
        %v696 = vor.u32 %v516, %v695
        %v697 = vrot.slane %v526, 1
        %v698 = vor.u32 %v523, %v697
        %v699 = vrot.slane %v533, 1
        %v700 = vor.u32 %v530, %v699
        %v701 = vrot.slane %v540, 1
        %v702 = vor.u32 %v537, %v701
        %v703 = vrot.slane %v547, 1
        %v704 = vor.u32 %v544, %v703
        %v705 = vrot.slane %v554, 1
        %v706 = vor.u32 %v551, %v705
        %v707 = vrot.slane %v561, 1
        %v708 = vor.u32 %v558, %v707
        %v709 = vrot.slane %v568, 1
        %v710 = vor.u32 %v565, %v709
        %v711 = vrot.slane %v575, 1
        %v712 = vor.u32 %v572, %v711
        %v713 = vrot.slane %v582, 1
        %v714 = vor.u32 %v579, %v713
        %v715 = vrot.slane %v589, 1
        %v716 = vor.u32 %v586, %v715
        %v717 = vrot.slane %v596, 1
        %v718 = vor.u32 %v593, %v717
        %v719 = vrot.slane %v603, 1
        %v720 = vor.u32 %v600, %v719
        %v721 = vrot.slane %v610, 1
        %v722 = vor.u32 %v607, %v721
        %v723 = vrot.slane %v617, 1
        %v724 = vor.u32 %v614, %v723
        %v725 = vrot.slane %v624, 1
        %v726 = vor.u32 %v621, %v725
        %vm743 = vcmask 1047552
        %vm744 = vsmask.f32 7424
        %vm745 = vmand %vm743, %vm744
        %v746 = vsel %vm745, %v696, 0
        %v747 = vsel %vm745, %v698, 0
        %v748 = vsel %vm745, %v700, 0
        %v749 = vsel %vm745, %v702, 0
        %v750 = vsel %vm745, %v704, 0
        %v751 = vsel %vm745, %v706, 0
        %v752 = vsel %vm745, %v708, 0
        %v753 = vsel %vm745, %v710, 0
        %v754 = vsel %vm745, %v712, 0
        %v755 = vsel %vm745, %v714, 0
        %v756 = vsel %vm745, %v716, 0
        %v757 = vsel %vm745, %v718, 0
        %v758 = vsel %vm745, %v720, 0
        %v759 = vsel %vm745, %v722, 0
        %v760 = vsel %vm745, %v724, 0
        %v761 = vsel %vm745, %v726, 0
        %762 = vst [vmem:[%s662 + $0x10] sm:$0xff] %v746
        %763 = vst [vmem:[%s662 + $0x28] sm:$0xff] %v747
        %764 = vst [vmem:[%s662 + $0x40] sm:$0xff] %v748
        %765 = vst [vmem:[%s662 + $0x58] sm:$0xff] %v749
        %766 = vst [vmem:[%s662 + $0x70] sm:$0xff] %v750
        %767 = vst [vmem:[%s662 + $0x88] sm:$0xff] %v751
        %768 = vst [vmem:[%s662 + $0xa0] sm:$0xff] %v752
        %769 = vst [vmem:[%s662 + $0xb8] sm:$0xff] %v753
        %770 = vst [vmem:[%s662 + $0xd0] sm:$0xff] %v754
        %771 = vst [vmem:[%s662 + $0xe8] sm:$0xff] %v755
        %772 = vst [vmem:[%s662 + $0x100] sm:$0xff] %v756
        %773 = vst [vmem:[%s662 + $0x118] sm:$0xff] %v757
        %774 = vst [vmem:[%s662 + $0x130] sm:$0xff] %v758
        %775 = vst [vmem:[%s662 + $0x148] sm:$0xff] %v759
        %776 = vst [vmem:[%s662 + $0x160] sm:$0xff] %v760
        %777 = vst [vmem:[%s662 + $0x178] sm:$0xff] %v761
        %v778 = vld [vmem:[#allocation2] sm:$0xff]
        %v779 = vld [vmem:[#allocation2 + $0x8] sm:$0xff]
        %v780 = vld [vmem:[#allocation2 + $0x10] sm:$0xff]
        %v781 = vld [vmem:[#allocation2 + $0x18] sm:$0xff]
        %v782 = vld [vmem:[#allocation2 + $0x20] sm:$0xff]
        %v783 = vld [vmem:[#allocation2 + $0x28] sm:$0xff]
        %v784 = vld [vmem:[#allocation2 + $0x30] sm:$0xff]
        %v785 = vld [vmem:[#allocation2 + $0x38] sm:$0xff]
        %v786 = vld [vmem:[#allocation2 + $0x40] sm:$0xff]
        %v787 = vld [vmem:[#allocation2 + $0x48] sm:$0xff]
        %v788 = vld [vmem:[#allocation2 + $0x50] sm:$0xff]
        %v789 = vld [vmem:[#allocation2 + $0x58] sm:$0xff]
        %v790 = vld [vmem:[#allocation2 + $0x60] sm:$0xff]
        %v791 = vld [vmem:[#allocation2 + $0x68] sm:$0xff]
        %v792 = vld [vmem:[#allocation2 + $0x70] sm:$0xff]
        %v793 = vld [vmem:[#allocation2 + $0x78] sm:$0xff]
        %v794 = vld [vmem:[#allocation2 + $0x80] sm:$0xff]
        %v795 = vld [vmem:[#allocation2 + $0x88] sm:$0xff]
        %v796 = vld [vmem:[#allocation2 + $0x90] sm:$0xff]
        %v797 = vld [vmem:[#allocation2 + $0x98] sm:$0xff]
        %v798 = vld [vmem:[#allocation2 + $0xa0] sm:$0xff]
        %v799 = vld [vmem:[#allocation2 + $0xa8] sm:$0xff]
        %v800 = vld [vmem:[#allocation2 + $0xb0] sm:$0xff]
        %v801 = vld [vmem:[#allocation2 + $0xb8] sm:$0xff]
        %v802 = vld [vmem:[#allocation2 + $0xc0] sm:$0xff]
        %v803 = vld [vmem:[#allocation2 + $0xc8] sm:$0xff]
        %v804 = vld [vmem:[#allocation2 + $0xd0] sm:$0xff]
        %v805 = vld [vmem:[#allocation2 + $0xd8] sm:$0xff]
        %v806 = vld [vmem:[#allocation2 + $0xe0] sm:$0xff]
        %v807 = vld [vmem:[#allocation2 + $0xe8] sm:$0xff]
        %v808 = vld [vmem:[#allocation2 + $0xf0] sm:$0xff]
        %v809 = vld [vmem:[#allocation2 + $0xf8] sm:$0xff]
        %v810 = vld [vmem:[#allocation2 + $0x100] sm:$0xff]
        %v811 = vld [vmem:[#allocation2 + $0x108] sm:$0xff]
        %v812 = vld [vmem:[#allocation2 + $0x110] sm:$0xff]
        %v813 = vld [vmem:[#allocation2 + $0x118] sm:$0xff]
        %v814 = vld [vmem:[#allocation2 + $0x120] sm:$0xff]
        %v815 = vld [vmem:[#allocation2 + $0x128] sm:$0xff]
        %v816 = vld [vmem:[#allocation2 + $0x130] sm:$0xff]
        %v817 = vld [vmem:[#allocation2 + $0x138] sm:$0xff]
        %v818 = vld [vmem:[#allocation2 + $0x140] sm:$0xff]
        %v819 = vld [vmem:[#allocation2 + $0x148] sm:$0xff]
        %v820 = vld [vmem:[#allocation2 + $0x150] sm:$0xff]
        %v821 = vld [vmem:[#allocation2 + $0x158] sm:$0xff]
        %v822 = vld [vmem:[#allocation2 + $0x160] sm:$0xff]
        %v823 = vld [vmem:[#allocation2 + $0x168] sm:$0xff]
        %v824 = vld [vmem:[#allocation2 + $0x170] sm:$0xff]
        %v825 = vld [vmem:[#allocation2 + $0x178] sm:$0xff]
        %v826 = vld [vmem:[#allocation6] sm:$0xf]
        %v827 = vld [vmem:[#allocation6 + $0x4] sm:$0xf]
        %v828 = vld [vmem:[#allocation6 + $0x8] sm:$0xf]
        %v829 = vld [vmem:[#allocation6 + $0xc] sm:$0xf]
        %v830 = vld [vmem:[#allocation6 + $0x10] sm:$0xf]
        %v831 = vld [vmem:[#allocation6 + $0x14] sm:$0xf]
        %v832 = vld [vmem:[#allocation6 + $0x18] sm:$0xf]
        %v833 = vld [vmem:[#allocation6 + $0x1c] sm:$0xf]
        %v834 = vld [vmem:[#allocation6 + $0x20] sm:$0xf]
        %v835 = vld [vmem:[#allocation6 + $0x24] sm:$0xf]
        %v836 = vld [vmem:[#allocation6 + $0x28] sm:$0xf]
        %v837 = vld [vmem:[#allocation6 + $0x2c] sm:$0xf]
        %v838 = vld [vmem:[#allocation6 + $0x30] sm:$0xf]
        %v839 = vld [vmem:[#allocation6 + $0x34] sm:$0xf]
        %v840 = vld [vmem:[#allocation6 + $0x38] sm:$0xf]
        %v841 = vld [vmem:[#allocation6 + $0x3c] sm:$0xf]
        %v842 = vld [vmem:[#allocation6 + $0x40] sm:$0xf]
        %v843 = vld [vmem:[#allocation6 + $0x44] sm:$0xf]
        %v844 = vld [vmem:[#allocation6 + $0x48] sm:$0xf]
        %v845 = vld [vmem:[#allocation6 + $0x4c] sm:$0xf]
        %v846 = vld [vmem:[#allocation6 + $0x50] sm:$0xf]
        %v847 = vld [vmem:[#allocation6 + $0x54] sm:$0xf]
        %v848 = vld [vmem:[#allocation6 + $0x58] sm:$0xf]
        %v849 = vld [vmem:[#allocation6 + $0x5c] sm:$0xf]
        %v850 = vld [vmem:[#allocation6 + $0x60] sm:$0xf]
        %v851 = vld [vmem:[#allocation6 + $0x64] sm:$0xf]
        %v852 = vld [vmem:[#allocation6 + $0x68] sm:$0xf]
        %v853 = vld [vmem:[#allocation6 + $0x6c] sm:$0xf]
        %v854 = vld [vmem:[#allocation6 + $0x70] sm:$0xf]
        %v855 = vld [vmem:[#allocation6 + $0x74] sm:$0xf]
        %v856 = vld [vmem:[#allocation6 + $0x78] sm:$0xf]
        %v857 = vld [vmem:[#allocation6 + $0x7c] sm:$0xf]
        %v858 = vld [vmem:[#allocation6 + $0x80] sm:$0xf]
        %v859 = vld [vmem:[#allocation6 + $0x84] sm:$0xf]
        %v860 = vld [vmem:[#allocation6 + $0x88] sm:$0xf]
        %v861 = vld [vmem:[#allocation6 + $0x8c] sm:$0xf]
        %v862 = vld [vmem:[#allocation6 + $0x90] sm:$0xf]
        %v863 = vld [vmem:[#allocation6 + $0x94] sm:$0xf]
        %v864 = vld [vmem:[#allocation6 + $0x98] sm:$0xf]
        %v865 = vld [vmem:[#allocation6 + $0x9c] sm:$0xf]
        %v866 = vld [vmem:[#allocation6 + $0xa0] sm:$0xf]
        %v867 = vld [vmem:[#allocation6 + $0xa4] sm:$0xf]
        %v868 = vld [vmem:[#allocation6 + $0xa8] sm:$0xf]
        %v869 = vld [vmem:[#allocation6 + $0xac] sm:$0xf]
        %v870 = vld [vmem:[#allocation6 + $0xb0] sm:$0xf]
        %v871 = vld [vmem:[#allocation6 + $0xb4] sm:$0xf]
        %v872 = vld [vmem:[#allocation6 + $0xb8] sm:$0xf]
        %v873 = vld [vmem:[#allocation6 + $0xbc] sm:$0xf]
        %v874 = vld [vmem:[%s662] sm:$0xff]
        %v875 = vld [vmem:[%s662 + $0x8] sm:$0xff]
        %v876 = vld [vmem:[%s662 + $0x10] sm:$0xff]
        %v877 = vld [vmem:[%s662 + $0x18] sm:$0xff]
        %v878 = vld [vmem:[%s662 + $0x20] sm:$0xff]
        %v879 = vld [vmem:[%s662 + $0x28] sm:$0xff]
        %v880 = vld [vmem:[%s662 + $0x30] sm:$0xff]
        %v881 = vld [vmem:[%s662 + $0x38] sm:$0xff]
        %v882 = vld [vmem:[%s662 + $0x40] sm:$0xff]
        %v883 = vld [vmem:[%s662 + $0x48] sm:$0xff]
        %v884 = vld [vmem:[%s662 + $0x50] sm:$0xff]
        %v885 = vld [vmem:[%s662 + $0x58] sm:$0xff]
        %v886 = vld [vmem:[%s662 + $0x60] sm:$0xff]
        %v887 = vld [vmem:[%s662 + $0x68] sm:$0xff]
        %v888 = vld [vmem:[%s662 + $0x70] sm:$0xff]
        %v889 = vld [vmem:[%s662 + $0x78] sm:$0xff]
        %v890 = vld [vmem:[%s662 + $0x80] sm:$0xff]
        %v891 = vld [vmem:[%s662 + $0x88] sm:$0xff]
        %v892 = vld [vmem:[%s662 + $0x90] sm:$0xff]
        %v893 = vld [vmem:[%s662 + $0x98] sm:$0xff]
        %v894 = vld [vmem:[%s662 + $0xa0] sm:$0xff]
        %v895 = vld [vmem:[%s662 + $0xa8] sm:$0xff]
        %v896 = vld [vmem:[%s662 + $0xb0] sm:$0xff]
        %v897 = vld [vmem:[%s662 + $0xb8] sm:$0xff]
        %v898 = vld [vmem:[%s662 + $0xc0] sm:$0xff]
        %v899 = vld [vmem:[%s662 + $0xc8] sm:$0xff]
        %v900 = vld [vmem:[%s662 + $0xd0] sm:$0xff]
        %v901 = vld [vmem:[%s662 + $0xd8] sm:$0xff]
        %v902 = vld [vmem:[%s662 + $0xe0] sm:$0xff]
        %v903 = vld [vmem:[%s662 + $0xe8] sm:$0xff]
        %v904 = vld [vmem:[%s662 + $0xf0] sm:$0xff]
        %v905 = vld [vmem:[%s662 + $0xf8] sm:$0xff]
        %v906 = vld [vmem:[%s662 + $0x100] sm:$0xff]
        %v907 = vld [vmem:[%s662 + $0x108] sm:$0xff]
        %v908 = vld [vmem:[%s662 + $0x110] sm:$0xff]
        %v909 = vld [vmem:[%s662 + $0x118] sm:$0xff]
        %v910 = vld [vmem:[%s662 + $0x120] sm:$0xff]
        %v911 = vld [vmem:[%s662 + $0x128] sm:$0xff]
        %v912 = vld [vmem:[%s662 + $0x130] sm:$0xff]
        %v913 = vld [vmem:[%s662 + $0x138] sm:$0xff]
        %v914 = vld [vmem:[%s662 + $0x140] sm:$0xff]
        %v915 = vld [vmem:[%s662 + $0x148] sm:$0xff]
        %v916 = vld [vmem:[%s662 + $0x150] sm:$0xff]
        %v917 = vld [vmem:[%s662 + $0x158] sm:$0xff]
        %v918 = vld [vmem:[%s662 + $0x160] sm:$0xff]
        %v919 = vld [vmem:[%s662 + $0x168] sm:$0xff]
        %v920 = vld [vmem:[%s662 + $0x170] sm:$0xff]
        %v921 = vld [vmem:[%s662 + $0x178] sm:$0xff]
        %s922 = scalar_lea.vmem [#allocation6], 192
        %v923 = vld [vmem:[%s922] sm:$0xf]
        %v924 = vld [vmem:[%s922 + $0x4] sm:$0xf]
        %v925 = vld [vmem:[%s922 + $0x8] sm:$0xf]
        %v926 = vld [vmem:[%s922 + $0xc] sm:$0xf]
        %v927 = vld [vmem:[%s922 + $0x10] sm:$0xf]
        %v928 = vld [vmem:[%s922 + $0x14] sm:$0xf]
        %v929 = vld [vmem:[%s922 + $0x18] sm:$0xf]
        %v930 = vld [vmem:[%s922 + $0x1c] sm:$0xf]
        %v931 = vld [vmem:[%s922 + $0x20] sm:$0xf]
        %v932 = vld [vmem:[%s922 + $0x24] sm:$0xf]
        %v933 = vld [vmem:[%s922 + $0x28] sm:$0xf]
        %v934 = vld [vmem:[%s922 + $0x2c] sm:$0xf]
        %v935 = vld [vmem:[%s922 + $0x30] sm:$0xf]
        %v936 = vld [vmem:[%s922 + $0x34] sm:$0xf]
        %v937 = vld [vmem:[%s922 + $0x38] sm:$0xf]
        %v938 = vld [vmem:[%s922 + $0x3c] sm:$0xf]
        %v939 = vld [vmem:[%s922 + $0x40] sm:$0xf]
        %v940 = vld [vmem:[%s922 + $0x44] sm:$0xf]
        %v941 = vld [vmem:[%s922 + $0x48] sm:$0xf]
        %v942 = vld [vmem:[%s922 + $0x4c] sm:$0xf]
        %v943 = vld [vmem:[%s922 + $0x50] sm:$0xf]
        %v944 = vld [vmem:[%s922 + $0x54] sm:$0xf]
        %v945 = vld [vmem:[%s922 + $0x58] sm:$0xf]
        %v946 = vld [vmem:[%s922 + $0x5c] sm:$0xf]
        %v947 = vld [vmem:[%s922 + $0x60] sm:$0xf]
        %v948 = vld [vmem:[%s922 + $0x64] sm:$0xf]
        %v949 = vld [vmem:[%s922 + $0x68] sm:$0xf]
        %v950 = vld [vmem:[%s922 + $0x6c] sm:$0xf]
        %v951 = vld [vmem:[%s922 + $0x70] sm:$0xf]
        %v952 = vld [vmem:[%s922 + $0x74] sm:$0xf]
        %v953 = vld [vmem:[%s922 + $0x78] sm:$0xf]
        %v954 = vld [vmem:[%s922 + $0x7c] sm:$0xf]
        %v955 = vld [vmem:[%s922 + $0x80] sm:$0xf]
        %v956 = vld [vmem:[%s922 + $0x84] sm:$0xf]
        %v957 = vld [vmem:[%s922 + $0x88] sm:$0xf]
        %v958 = vld [vmem:[%s922 + $0x8c] sm:$0xf]
        %v959 = vld [vmem:[%s922 + $0x90] sm:$0xf]
        %v960 = vld [vmem:[%s922 + $0x94] sm:$0xf]
        %v961 = vld [vmem:[%s922 + $0x98] sm:$0xf]
        %v962 = vld [vmem:[%s922 + $0x9c] sm:$0xf]
        %v963 = vld [vmem:[%s922 + $0xa0] sm:$0xf]
        %v964 = vld [vmem:[%s922 + $0xa4] sm:$0xf]
        %v965 = vld [vmem:[%s922 + $0xa8] sm:$0xf]
        %v966 = vld [vmem:[%s922 + $0xac] sm:$0xf]
        %v967 = vld [vmem:[%s922 + $0xb0] sm:$0xf]
        %v968 = vld [vmem:[%s922 + $0xb4] sm:$0xf]
        %v969 = vld [vmem:[%s922 + $0xb8] sm:$0xf]
        %v970 = vld [vmem:[%s922 + $0xbc] sm:$0xf]
        %v1019 = vunpack.c.l.b16 %v923
        %v1020 = vunpack.c.l.b16 %v924
        %v1021 = vunpack.c.l.b16 %v925
        %v1022 = vunpack.c.l.b16 %v926
        %v1023 = vunpack.c.l.b16 %v927
        %v1024 = vunpack.c.l.b16 %v928
        %v1025 = vunpack.c.l.b16 %v929
        %v1026 = vunpack.c.l.b16 %v930
        %v1027 = vunpack.c.l.b16 %v931
        %v1028 = vunpack.c.l.b16 %v932
        %v1029 = vunpack.c.l.b16 %v933
        %v1030 = vunpack.c.l.b16 %v934
        %v1031 = vunpack.c.l.b16 %v935
        %v1032 = vunpack.c.l.b16 %v936
        %v1033 = vunpack.c.l.b16 %v937
        %v1034 = vunpack.c.l.b16 %v938
        %v1035 = vunpack.c.l.b16 %v939
        %v1036 = vunpack.c.l.b16 %v940
        %v1037 = vunpack.c.l.b16 %v941
        %v1038 = vunpack.c.l.b16 %v942
        %v1039 = vunpack.c.l.b16 %v943
        %v1040 = vunpack.c.l.b16 %v944
        %v1041 = vunpack.c.l.b16 %v945
        %v1042 = vunpack.c.l.b16 %v946
        %v1043 = vunpack.c.l.b16 %v947
        %v1044 = vunpack.c.l.b16 %v948
        %v1045 = vunpack.c.l.b16 %v949
        %v1046 = vunpack.c.l.b16 %v950
        %v1047 = vunpack.c.l.b16 %v951
        %v1048 = vunpack.c.l.b16 %v952
        %v1049 = vunpack.c.l.b16 %v953
        %v1050 = vunpack.c.l.b16 %v954
        %v1051 = vunpack.c.l.b16 %v955
        %v1052 = vunpack.c.l.b16 %v956
        %v1053 = vunpack.c.l.b16 %v957
        %v1054 = vunpack.c.l.b16 %v958
        %v1055 = vunpack.c.l.b16 %v959
        %v1056 = vunpack.c.l.b16 %v960
        %v1057 = vunpack.c.l.b16 %v961
        %v1058 = vunpack.c.l.b16 %v962
        %v1059 = vunpack.c.l.b16 %v963
        %v1060 = vunpack.c.l.b16 %v964
        %v1061 = vunpack.c.l.b16 %v965
        %v1062 = vunpack.c.l.b16 %v966
        %v1063 = vunpack.c.l.b16 %v967
        %v1064 = vunpack.c.l.b16 %v968
        %v1065 = vunpack.c.l.b16 %v969
        %v1066 = vunpack.c.l.b16 %v970
        %v1067 = vpack.c.b16 %v1020, %v1019
        %v1068 = vpack.c.b16 %v1022, %v1021
        %v1069 = vpack.c.b16 %v1024, %v1023
        %v1070 = vpack.c.b16 %v1026, %v1025
        %v1071 = vpack.c.b16 %v1028, %v1027
        %v1072 = vpack.c.b16 %v1030, %v1029
        %v1073 = vpack.c.b16 %v1032, %v1031
        %v1074 = vpack.c.b16 %v1034, %v1033
        %v1075 = vpack.c.b16 %v1036, %v1035
        %v1076 = vpack.c.b16 %v1038, %v1037
        %v1077 = vpack.c.b16 %v1040, %v1039
        %v1078 = vpack.c.b16 %v1042, %v1041
        %v1079 = vpack.c.b16 %v1044, %v1043
        %v1080 = vpack.c.b16 %v1046, %v1045
        %v1081 = vpack.c.b16 %v1048, %v1047
        %v1082 = vpack.c.b16 %v1050, %v1049
        %v1083 = vpack.c.b16 %v1052, %v1051
        %v1084 = vpack.c.b16 %v1054, %v1053
        %v1085 = vpack.c.b16 %v1056, %v1055
        %v1086 = vpack.c.b16 %v1058, %v1057
        %v1087 = vpack.c.b16 %v1060, %v1059
        %v1088 = vpack.c.b16 %v1062, %v1061
        %v1089 = vpack.c.b16 %v1064, %v1063
        %v1090 = vpack.c.b16 %v1066, %v1065
        %1115 = vmatprep.subr.bf16.mxu0 0
        %1116 = vmatpush1.bf16.msra.mxu0 %v1067
        %1117 = vmatprep.subr.bf16.mxu0 0
        %1118 = vmatpush1.bf16.msra.mxu0 %v1068
        %1119 = vmatprep.subr.bf16.mxu0 0
        %1120 = vmatpush1.bf16.msra.mxu0 %v1069
        %1121 = vmatprep.subr.bf16.mxu0 0
        %1122 = vmatpush1.bf16.msra.mxu0 %v1070
        %1123 = vmatprep.subr.bf16.mxu0 0
        %1124 = vmatpush1.bf16.msra.mxu0 %v1071
        %1125 = vmatprep.subr.bf16.mxu0 0
        %1126 = vmatpush1.bf16.msra.mxu0 %v1072
        %1127 = vmatprep.subr.bf16.mxu0 0
        %1128 = vmatpush1.bf16.msra.mxu0 %v1073
        %1129 = vmatprep.subr.bf16.mxu0 0
        %1130 = vmatpush1.bf16.msra.mxu0 %v1074
        %1131 = vmatprep.subr.bf16.mxu0 0
        %1132 = vmatpush1.bf16.msra.mxu0 %v1075
        %1133 = vmatprep.subr.bf16.mxu0 0
        %1134 = vmatpush1.bf16.msra.mxu0 %v1076
        %1135 = vmatprep.subr.bf16.mxu0 0
        %1136 = vmatpush1.bf16.msra.mxu0 %v1077
        %1137 = vmatprep.subr.bf16.mxu0 0
        %1138 = vmatpush1.bf16.msra.mxu0 %v1078
        %1139 = vmatprep.subr.bf16.mxu0 0
        %1140 = vmatpush1.bf16.msra.mxu0 %v1079
        %1141 = vmatprep.subr.bf16.mxu0 0
        %1142 = vmatpush1.bf16.msra.mxu0 %v1080
        %1143 = vmatprep.subr.bf16.mxu0 0
        %1144 = vmatpush1.bf16.msra.mxu0 %v1081
        %1145 = vmatprep.subr.bf16.mxu0 0
        %1146 = vmatpush1.bf16.msra.mxu0 %v1082
        %1147 = vmatprep.mubr.bf16.mxu0 %v875
        %1148 = vmatmul.mubr.bf16.gmra.mrb[0].mxu0 %v874
        %v1149 = vpop.f32.mrb[0].mxu0
        %v1150 = vadd.f32 0.0, %v1149
        %v1151 = vpop.f32.mrb[0].mxu0
        %v1152 = vpop.f32.mrb[0].mxu0
        %v1153 = vadd.f32 0.0, %v1152
        %v1154 = vpop.f32.mrb[0].mxu0
        %1155 = vmatprep.mubr.bf16.mxu0 %v878
        %1156 = vmatmul.mubr.bf16.gmra.mrb[0].mxu0 %v877
        %v1157 = vpop.f32.mrb[0].mxu0
        %v1158 = vadd.f32 0.0, %v1157
        %v1159 = vpop.f32.mrb[0].mxu0
        %v1160 = vpop.f32.mrb[0].mxu0
        %v1161 = vadd.f32 0.0, %v1160
        %v1162 = vpop.f32.mrb[0].mxu0
        %1163 = vmatprep.mubr.bf16.mxu0 %v881
        %1164 = vmatmul.mubr.bf16.gmra.mrb[0].mxu0 %v880
        %v1165 = vpop.f32.mrb[0].mxu0
        %v1166 = vadd.f32 0.0, %v1165
        %v1167 = vpop.f32.mrb[0].mxu0
        %v1168 = vpop.f32.mrb[0].mxu0
        %v1169 = vadd.f32 0.0, %v1168
        %v1170 = vpop.f32.mrb[0].mxu0
        %1171 = vmatprep.mubr.bf16.mxu0 %v884
        %1172 = vmatmul.mubr.bf16.gmra.mrb[0].mxu0 %v883
        %v1173 = vpop.f32.mrb[0].mxu0
        %v1174 = vadd.f32 0.0, %v1173
        %v1175 = vpop.f32.mrb[0].mxu0
        %v1176 = vpop.f32.mrb[0].mxu0
        %v1177 = vadd.f32 0.0, %v1176
        %v1178 = vpop.f32.mrb[0].mxu0
        %1179 = vmatprep.mubr.bf16.mxu0 %v887
        %1180 = vmatmul.mubr.bf16.gmra.mrb[0].mxu0 %v886
        %v1181 = vpop.f32.mrb[0].mxu0
        %v1182 = vadd.f32 0.0, %v1181
        %v1183 = vpop.f32.mrb[0].mxu0
        %v1184 = vpop.f32.mrb[0].mxu0
        %v1185 = vadd.f32 0.0, %v1184
        %v1186 = vpop.f32.mrb[0].mxu0
        %1187 = vmatprep.mubr.bf16.mxu0 %v890
        %1188 = vmatmul.mubr.bf16.gmra.mrb[0].mxu0 %v889
        %v1189 = vpop.f32.mrb[0].mxu0
        %v1190 = vadd.f32 0.0, %v1189
        %v1191 = vpop.f32.mrb[0].mxu0
        %v1192 = vpop.f32.mrb[0].mxu0
        %v1193 = vadd.f32 0.0, %v1192
        %v1194 = vpop.f32.mrb[0].mxu0
        %1195 = vmatprep.mubr.bf16.mxu0 %v893
        %1196 = vmatmul.mubr.bf16.gmra.mrb[0].mxu0 %v892
        %v1197 = vpop.f32.mrb[0].mxu0
        %v1198 = vadd.f32 0.0, %v1197
        %v1199 = vpop.f32.mrb[0].mxu0
        %v1200 = vpop.f32.mrb[0].mxu0
        %v1201 = vadd.f32 0.0, %v1200
        %v1202 = vpop.f32.mrb[0].mxu0
        %1203 = vmatprep.mubr.bf16.mxu0 %v896
        %1204 = vmatmul.mubr.bf16.gmra.mrb[0].mxu0 %v895
        %v1205 = vpop.f32.mrb[0].mxu0
        %v1206 = vadd.f32 0.0, %v1205
        %v1207 = vpop.f32.mrb[0].mxu0
        %v1208 = vpop.f32.mrb[0].mxu0
        %v1209 = vadd.f32 0.0, %v1208
        %v1210 = vpop.f32.mrb[0].mxu0
        %1211 = vmatprep.mubr.bf16.mxu0 %v899
        %1212 = vmatmul.mubr.bf16.gmra.mrb[0].mxu0 %v898
        %v1213 = vpop.f32.mrb[0].mxu0
        %v1214 = vadd.f32 0.0, %v1213
        %v1215 = vpop.f32.mrb[0].mxu0
        %v1216 = vpop.f32.mrb[0].mxu0
        %v1217 = vadd.f32 0.0, %v1216
        %v1218 = vpop.f32.mrb[0].mxu0
        %1219 = vmatprep.mubr.bf16.mxu0 %v902
        %1220 = vmatmul.mubr.bf16.gmra.mrb[0].mxu0 %v901
        %v1221 = vpop.f32.mrb[0].mxu0
        %v1222 = vadd.f32 0.0, %v1221
        %v1223 = vpop.f32.mrb[0].mxu0
        %v1224 = vpop.f32.mrb[0].mxu0
        %v1225 = vadd.f32 0.0, %v1224
        %v1226 = vpop.f32.mrb[0].mxu0
        %1227 = vmatprep.mubr.bf16.mxu0 %v905
        %1228 = vmatmul.mubr.bf16.gmra.mrb[0].mxu0 %v904
        %v1229 = vpop.f32.mrb[0].mxu0
        %v1230 = vadd.f32 0.0, %v1229
        %v1231 = vpop.f32.mrb[0].mxu0
        %v1232 = vpop.f32.mrb[0].mxu0
        %v1233 = vadd.f32 0.0, %v1232
        %v1234 = vpop.f32.mrb[0].mxu0
        %1235 = vmatprep.mubr.bf16.mxu0 %v908
        %1236 = vmatmul.mubr.bf16.gmra.mrb[0].mxu0 %v907
        %v1237 = vpop.f32.mrb[0].mxu0
        %v1238 = vadd.f32 0.0, %v1237
        %v1239 = vpop.f32.mrb[0].mxu0
        %v1240 = vpop.f32.mrb[0].mxu0
        %v1241 = vadd.f32 0.0, %v1240
        %v1242 = vpop.f32.mrb[0].mxu0
        %1243 = vmatprep.mubr.bf16.mxu0 %v911
        %1244 = vmatmul.mubr.bf16.gmra.mrb[0].mxu0 %v910
        %v1245 = vpop.f32.mrb[0].mxu0
        %v1246 = vadd.f32 0.0, %v1245
        %v1247 = vpop.f32.mrb[0].mxu0
        %v1248 = vpop.f32.mrb[0].mxu0
        %v1249 = vadd.f32 0.0, %v1248
        %v1250 = vpop.f32.mrb[0].mxu0
        %1251 = vmatprep.mubr.bf16.mxu0 %v914
        %1252 = vmatmul.mubr.bf16.gmra.mrb[0].mxu0 %v913
        %v1253 = vpop.f32.mrb[0].mxu0
        %v1254 = vadd.f32 0.0, %v1253
        %v1255 = vpop.f32.mrb[0].mxu0
        %v1256 = vpop.f32.mrb[0].mxu0
        %v1257 = vadd.f32 0.0, %v1256
        %v1258 = vpop.f32.mrb[0].mxu0
        %1259 = vmatprep.mubr.bf16.mxu0 %v917
        %1260 = vmatmul.mubr.bf16.gmra.mrb[0].mxu0 %v916
        %v1261 = vpop.f32.mrb[0].mxu0
        %v1262 = vadd.f32 0.0, %v1261
        %v1263 = vpop.f32.mrb[0].mxu0
        %v1264 = vpop.f32.mrb[0].mxu0
        %v1265 = vadd.f32 0.0, %v1264
        %v1266 = vpop.f32.mrb[0].mxu0
        %1267 = vmatprep.mubr.bf16.mxu0 %v920
        %1268 = vmatmul.mubr.bf16.gmra.mrb[0].mxu0 %v919
        %v1269 = vpop.f32.mrb[0].mxu0
        %v1270 = vadd.f32 0.0, %v1269
        %v1271 = vpop.f32.mrb[0].mxu0
        %v1272 = vpop.f32.mrb[0].mxu0
        %v1273 = vadd.f32 0.0, %v1272
        %v1274 = vpop.f32.mrb[0].mxu0
        %1275 = vdwg.mxu0
        %1276 = vmatprep.subr.bf16.mxu0 0
        %1277 = vmatpush1.bf16.msra.mxu0 %v1083
        %1278 = vmatprep.subr.bf16.mxu0 0
        %1279 = vmatpush1.bf16.msra.mxu0 %v1084
        %1280 = vmatprep.subr.bf16.mxu0 0
        %1281 = vmatpush1.bf16.msra.mxu0 %v1085
        %1282 = vmatprep.subr.bf16.mxu0 0
        %1283 = vmatpush1.bf16.msra.mxu0 %v1086
        %1284 = vmatprep.subr.bf16.mxu0 0
        %1285 = vmatpush1.bf16.msra.mxu0 %v1087
        %1286 = vmatprep.subr.bf16.mxu0 0
        %1287 = vmatpush1.bf16.msra.mxu0 %v1088
        %1288 = vmatprep.subr.bf16.mxu0 0
        %1289 = vmatpush1.bf16.msra.mxu0 %v1089
        %1290 = vmatprep.subr.bf16.mxu0 0
        %1291 = vmatpush1.bf16.msra.mxu0 %v1090
        %1292 = vmatprep.subr.bf16.mxu0 0
        %1293 = vmatpush1.bf16.msra.mxu0 0
        %1294 = vmatprep.subr.bf16.mxu0 0
        %1295 = vmatpush1.bf16.msra.mxu0 0
        %1296 = vmatprep.subr.bf16.mxu0 0
        %1297 = vmatpush1.bf16.msra.mxu0 0
        %1298 = vmatprep.subr.bf16.mxu0 0
        %1299 = vmatpush1.bf16.msra.mxu0 0
        %1300 = vmatprep.subr.bf16.mxu0 0
        %1301 = vmatpush1.bf16.msra.mxu0 0
        %1302 = vmatprep.subr.bf16.mxu0 0
        %1303 = vmatpush1.bf16.msra.mxu0 0
        %1304 = vmatprep.subr.bf16.mxu0 0
        %1305 = vmatpush1.bf16.msra.mxu0 0
        %1306 = vmatprep.subr.bf16.mxu0 0
        %1307 = vmatpush1.bf16.msra.mxu0 0
        %1308 = vmatprep.mubr.bf16.mxu0 0
        %1309 = vmatmul.mubr.bf16.gmra.mrb[0].mxu0 %v876
        %v1310 = vpop.f32.mrb[0].mxu0
        %v1311 = vadd.f32 %v1150, %v1310
        %v1312 = vpop.f32.mrb[0].mxu0
        %v1313 = vpop.f32.mrb[0].mxu0
        %v1314 = vadd.f32 %v1153, %v1313
        %v1315 = vpop.f32.mrb[0].mxu0
        %1316 = vmatprep.mubr.bf16.mxu0 0
        %1317 = vmatmul.mubr.bf16.gmra.mrb[0].mxu0 %v879
        %v1318 = vpop.f32.mrb[0].mxu0
        %v1319 = vadd.f32 %v1158, %v1318
        %v1320 = vpop.f32.mrb[0].mxu0
        %v1321 = vpop.f32.mrb[0].mxu0
        %v1322 = vadd.f32 %v1161, %v1321
        %v1323 = vpop.f32.mrb[0].mxu0
        %1324 = vmatprep.mubr.bf16.mxu0 0
        %1325 = vmatmul.mubr.bf16.gmra.mrb[0].mxu0 %v882
        %v1326 = vpop.f32.mrb[0].mxu0
        %v1327 = vadd.f32 %v1166, %v1326
        %v1328 = vpop.f32.mrb[0].mxu0
        %v1329 = vpop.f32.mrb[0].mxu0
        %v1330 = vadd.f32 %v1169, %v1329
        %v1331 = vpop.f32.mrb[0].mxu0
        %1332 = vmatprep.mubr.bf16.mxu0 0
        %1333 = vmatmul.mubr.bf16.gmra.mrb[0].mxu0 %v885
        %v1334 = vpop.f32.mrb[0].mxu0
        %v1335 = vadd.f32 %v1174, %v1334
        %v1336 = vpop.f32.mrb[0].mxu0
        %v1337 = vpop.f32.mrb[0].mxu0
        %v1338 = vadd.f32 %v1177, %v1337
        %v1339 = vpop.f32.mrb[0].mxu0
        %1340 = vmatprep.mubr.bf16.mxu0 0
        %1341 = vmatmul.mubr.bf16.gmra.mrb[0].mxu0 %v888
        %v1342 = vpop.f32.mrb[0].mxu0
        %v1343 = vadd.f32 %v1182, %v1342
        %v1344 = vpop.f32.mrb[0].mxu0
        %v1345 = vpop.f32.mrb[0].mxu0
        %v1346 = vadd.f32 %v1185, %v1345
        %v1347 = vpop.f32.mrb[0].mxu0
        %1348 = vmatprep.mubr.bf16.mxu0 0
        %1349 = vmatmul.mubr.bf16.gmra.mrb[0].mxu0 %v891
        %v1350 = vpop.f32.mrb[0].mxu0
        %v1351 = vadd.f32 %v1190, %v1350
        %v1352 = vpop.f32.mrb[0].mxu0
        %v1353 = vpop.f32.mrb[0].mxu0
        %v1354 = vadd.f32 %v1193, %v1353
        %v1355 = vpop.f32.mrb[0].mxu0
        %1356 = vmatprep.mubr.bf16.mxu0 0
        %1357 = vmatmul.mubr.bf16.gmra.mrb[0].mxu0 %v894
        %v1358 = vpop.f32.mrb[0].mxu0
        %v1359 = vadd.f32 %v1198, %v1358
        %v1360 = vpop.f32.mrb[0].mxu0
        %v1361 = vpop.f32.mrb[0].mxu0
        %v1362 = vadd.f32 %v1201, %v1361
        %v1363 = vpop.f32.mrb[0].mxu0
        %1364 = vmatprep.mubr.bf16.mxu0 0
        %1365 = vmatmul.mubr.bf16.gmra.mrb[0].mxu0 %v897
        %v1366 = vpop.f32.mrb[0].mxu0
        %v1367 = vadd.f32 %v1206, %v1366
        %v1368 = vpop.f32.mrb[0].mxu0
        %v1369 = vpop.f32.mrb[0].mxu0
        %v1370 = vadd.f32 %v1209, %v1369
        %v1371 = vpop.f32.mrb[0].mxu0
        %1372 = vmatprep.mubr.bf16.mxu0 0
        %1373 = vmatmul.mubr.bf16.gmra.mrb[0].mxu0 %v900
        %v1374 = vpop.f32.mrb[0].mxu0
        %v1375 = vadd.f32 %v1214, %v1374
        %v1376 = vpop.f32.mrb[0].mxu0
        %v1377 = vpop.f32.mrb[0].mxu0
        %v1378 = vadd.f32 %v1217, %v1377
        %v1379 = vpop.f32.mrb[0].mxu0
        %1380 = vmatprep.mubr.bf16.mxu0 0
        %1381 = vmatmul.mubr.bf16.gmra.mrb[0].mxu0 %v903
        %v1382 = vpop.f32.mrb[0].mxu0
        %v1383 = vadd.f32 %v1222, %v1382
        %v1384 = vpop.f32.mrb[0].mxu0
        %v1385 = vpop.f32.mrb[0].mxu0
        %v1386 = vadd.f32 %v1225, %v1385
        %v1387 = vpop.f32.mrb[0].mxu0
        %1388 = vmatprep.mubr.bf16.mxu0 0
        %1389 = vmatmul.mubr.bf16.gmra.mrb[0].mxu0 %v906
        %v1390 = vpop.f32.mrb[0].mxu0
        %v1391 = vadd.f32 %v1230, %v1390
        %v1392 = vpop.f32.mrb[0].mxu0
        %v1393 = vpop.f32.mrb[0].mxu0
        %v1394 = vadd.f32 %v1233, %v1393
        %v1395 = vpop.f32.mrb[0].mxu0
        %1396 = vmatprep.mubr.bf16.mxu0 0
        %1397 = vmatmul.mubr.bf16.gmra.mrb[0].mxu0 %v909
        %v1398 = vpop.f32.mrb[0].mxu0
        %v1399 = vadd.f32 %v1238, %v1398
        %v1400 = vpop.f32.mrb[0].mxu0
        %v1401 = vpop.f32.mrb[0].mxu0
        %v1402 = vadd.f32 %v1241, %v1401
        %v1403 = vpop.f32.mrb[0].mxu0
        %1404 = vmatprep.mubr.bf16.mxu0 0
        %1405 = vmatmul.mubr.bf16.gmra.mrb[0].mxu0 %v912
        %v1406 = vpop.f32.mrb[0].mxu0
        %v1407 = vadd.f32 %v1246, %v1406
        %v1408 = vpop.f32.mrb[0].mxu0
        %v1409 = vpop.f32.mrb[0].mxu0
        %v1410 = vadd.f32 %v1249, %v1409
        %v1411 = vpop.f32.mrb[0].mxu0
        %1412 = vmatprep.mubr.bf16.mxu0 0
        %1413 = vmatmul.mubr.bf16.gmra.mrb[0].mxu0 %v915
        %v1414 = vpop.f32.mrb[0].mxu0
        %v1415 = vadd.f32 %v1254, %v1414
        %v1416 = vpop.f32.mrb[0].mxu0
        %v1417 = vpop.f32.mrb[0].mxu0
        %v1418 = vadd.f32 %v1257, %v1417
        %v1419 = vpop.f32.mrb[0].mxu0
        %1420 = vmatprep.mubr.bf16.mxu0 0
        %1421 = vmatmul.mubr.bf16.gmra.mrb[0].mxu0 %v918
        %v1422 = vpop.f32.mrb[0].mxu0
        %v1423 = vadd.f32 %v1262, %v1422
        %v1424 = vpop.f32.mrb[0].mxu0
        %v1425 = vpop.f32.mrb[0].mxu0
        %v1426 = vadd.f32 %v1265, %v1425
        %v1427 = vpop.f32.mrb[0].mxu0
        %1428 = vmatprep.mubr.bf16.mxu0 0
        %1429 = vmatmul.mubr.bf16.gmra.mrb[0].mxu0 %v921
        %v1430 = vpop.f32.mrb[0].mxu0
        %v1431 = vadd.f32 %v1270, %v1430
        %v1432 = vpop.f32.mrb[0].mxu0
        %v1433 = vpop.f32.mrb[0].mxu0
        %v1434 = vadd.f32 %v1273, %v1433
        %v1435 = vpop.f32.mrb[0].mxu0
        %1436 = vdwg.mxu0
        %v1485 = vunpack.c.l.b16 %v826
        %v1486 = vunpack.c.l.b16 %v827
        %v1487 = vunpack.c.l.b16 %v828
        %v1488 = vunpack.c.l.b16 %v829
        %v1489 = vunpack.c.l.b16 %v830
        %v1490 = vunpack.c.l.b16 %v831
        %v1491 = vunpack.c.l.b16 %v832
        %v1492 = vunpack.c.l.b16 %v833
        %v1493 = vunpack.c.l.b16 %v834
        %v1494 = vunpack.c.l.b16 %v835
        %v1495 = vunpack.c.l.b16 %v836
        %v1496 = vunpack.c.l.b16 %v837
        %v1497 = vunpack.c.l.b16 %v838
        %v1498 = vunpack.c.l.b16 %v839
        %v1499 = vunpack.c.l.b16 %v840
        %v1500 = vunpack.c.l.b16 %v841
        %v1501 = vunpack.c.l.b16 %v842
        %v1502 = vunpack.c.l.b16 %v843
        %v1503 = vunpack.c.l.b16 %v844
        %v1504 = vunpack.c.l.b16 %v845
        %v1505 = vunpack.c.l.b16 %v846
        %v1506 = vunpack.c.l.b16 %v847
        %v1507 = vunpack.c.l.b16 %v848
        %v1508 = vunpack.c.l.b16 %v849
        %v1509 = vunpack.c.l.b16 %v850
        %v1510 = vunpack.c.l.b16 %v851
        %v1511 = vunpack.c.l.b16 %v852
        %v1512 = vunpack.c.l.b16 %v853
        %v1513 = vunpack.c.l.b16 %v854
        %v1514 = vunpack.c.l.b16 %v855
        %v1515 = vunpack.c.l.b16 %v856
        %v1516 = vunpack.c.l.b16 %v857
        %v1517 = vunpack.c.l.b16 %v858
        %v1518 = vunpack.c.l.b16 %v859
        %v1519 = vunpack.c.l.b16 %v860
        %v1520 = vunpack.c.l.b16 %v861
        %v1521 = vunpack.c.l.b16 %v862
        %v1522 = vunpack.c.l.b16 %v863
        %v1523 = vunpack.c.l.b16 %v864
        %v1524 = vunpack.c.l.b16 %v865
        %v1525 = vunpack.c.l.b16 %v866
        %v1526 = vunpack.c.l.b16 %v867
        %v1527 = vunpack.c.l.b16 %v868
        %v1528 = vunpack.c.l.b16 %v869
        %v1529 = vunpack.c.l.b16 %v870
        %v1530 = vunpack.c.l.b16 %v871
        %v1531 = vunpack.c.l.b16 %v872
        %v1532 = vunpack.c.l.b16 %v873
        %v1533 = vpack.c.b16 %v1486, %v1485
        %v1534 = vpack.c.b16 %v1488, %v1487
        %v1535 = vpack.c.b16 %v1490, %v1489
        %v1536 = vpack.c.b16 %v1492, %v1491
        %v1537 = vpack.c.b16 %v1494, %v1493
        %v1538 = vpack.c.b16 %v1496, %v1495
        %v1539 = vpack.c.b16 %v1498, %v1497
        %v1540 = vpack.c.b16 %v1500, %v1499
        %v1541 = vpack.c.b16 %v1502, %v1501
        %v1542 = vpack.c.b16 %v1504, %v1503
        %v1543 = vpack.c.b16 %v1506, %v1505
        %v1544 = vpack.c.b16 %v1508, %v1507
        %v1545 = vpack.c.b16 %v1510, %v1509
        %v1546 = vpack.c.b16 %v1512, %v1511
        %v1547 = vpack.c.b16 %v1514, %v1513
        %v1548 = vpack.c.b16 %v1516, %v1515
        %v1549 = vpack.c.b16 %v1518, %v1517
        %v1550 = vpack.c.b16 %v1520, %v1519
        %v1551 = vpack.c.b16 %v1522, %v1521
        %v1552 = vpack.c.b16 %v1524, %v1523
        %v1553 = vpack.c.b16 %v1526, %v1525
        %v1554 = vpack.c.b16 %v1528, %v1527
        %v1555 = vpack.c.b16 %v1530, %v1529
        %v1556 = vpack.c.b16 %v1532, %v1531
        %1581 = vmatprep.subr.bf16.mxu0 0
        %1582 = vmatpush1.bf16.msra.mxu0 %v1533
        %1583 = vmatprep.subr.bf16.mxu0 0
        %1584 = vmatpush1.bf16.msra.mxu0 %v1534
        %1585 = vmatprep.subr.bf16.mxu0 0
        %1586 = vmatpush1.bf16.msra.mxu0 %v1535
        %1587 = vmatprep.subr.bf16.mxu0 0
        %1588 = vmatpush1.bf16.msra.mxu0 %v1536
        %1589 = vmatprep.subr.bf16.mxu0 0
        %1590 = vmatpush1.bf16.msra.mxu0 %v1537
        %1591 = vmatprep.subr.bf16.mxu0 0
        %1592 = vmatpush1.bf16.msra.mxu0 %v1538
        %1593 = vmatprep.subr.bf16.mxu0 0
        %1594 = vmatpush1.bf16.msra.mxu0 %v1539
        %1595 = vmatprep.subr.bf16.mxu0 0
        %1596 = vmatpush1.bf16.msra.mxu0 %v1540
        %1597 = vmatprep.subr.bf16.mxu0 0
        %1598 = vmatpush1.bf16.msra.mxu0 %v1541
        %1599 = vmatprep.subr.bf16.mxu0 0
        %1600 = vmatpush1.bf16.msra.mxu0 %v1542
        %1601 = vmatprep.subr.bf16.mxu0 0
        %1602 = vmatpush1.bf16.msra.mxu0 %v1543
        %1603 = vmatprep.subr.bf16.mxu0 0
        %1604 = vmatpush1.bf16.msra.mxu0 %v1544
        %1605 = vmatprep.subr.bf16.mxu0 0
        %1606 = vmatpush1.bf16.msra.mxu0 %v1545
        %1607 = vmatprep.subr.bf16.mxu0 0
        %1608 = vmatpush1.bf16.msra.mxu0 %v1546
        %1609 = vmatprep.subr.bf16.mxu0 0
        %1610 = vmatpush1.bf16.msra.mxu0 %v1547
        %1611 = vmatprep.subr.bf16.mxu0 0
        %1612 = vmatpush1.bf16.msra.mxu0 %v1548
        %1613 = vmatprep.mubr.bf16.mxu0 %v779
        %1614 = vmatmul.mubr.bf16.gmra.mrb[0].mxu0 %v778
        %v1615 = vpop.f32.mrb[0].mxu0
        %v1616 = vadd.f32 %v1311, %v1615
        %v1617 = vpop.f32.mrb[0].mxu0
        %v1618 = vpop.f32.mrb[0].mxu0
        %v1619 = vadd.f32 %v1314, %v1618
        %v1620 = vpop.f32.mrb[0].mxu0
        %1621 = vmatprep.mubr.bf16.mxu0 %v782
        %1622 = vmatmul.mubr.bf16.gmra.mrb[0].mxu0 %v781
        %v1623 = vpop.f32.mrb[0].mxu0
        %v1624 = vadd.f32 %v1319, %v1623
        %v1625 = vpop.f32.mrb[0].mxu0
        %v1626 = vpop.f32.mrb[0].mxu0
        %v1627 = vadd.f32 %v1322, %v1626
        %v1628 = vpop.f32.mrb[0].mxu0
        %1629 = vmatprep.mubr.bf16.mxu0 %v785
        %1630 = vmatmul.mubr.bf16.gmra.mrb[0].mxu0 %v784
        %v1631 = vpop.f32.mrb[0].mxu0
        %v1632 = vadd.f32 %v1327, %v1631
        %v1633 = vpop.f32.mrb[0].mxu0
        %v1634 = vpop.f32.mrb[0].mxu0
        %v1635 = vadd.f32 %v1330, %v1634
        %v1636 = vpop.f32.mrb[0].mxu0
        %1637 = vmatprep.mubr.bf16.mxu0 %v788
        %1638 = vmatmul.mubr.bf16.gmra.mrb[0].mxu0 %v787
        %v1639 = vpop.f32.mrb[0].mxu0
        %v1640 = vadd.f32 %v1335, %v1639
        %v1641 = vpop.f32.mrb[0].mxu0
        %v1642 = vpop.f32.mrb[0].mxu0
        %v1643 = vadd.f32 %v1338, %v1642
        %v1644 = vpop.f32.mrb[0].mxu0
        %1645 = vmatprep.mubr.bf16.mxu0 %v791
        %1646 = vmatmul.mubr.bf16.gmra.mrb[0].mxu0 %v790
        %v1647 = vpop.f32.mrb[0].mxu0
        %v1648 = vadd.f32 %v1343, %v1647
        %v1649 = vpop.f32.mrb[0].mxu0
        %v1650 = vpop.f32.mrb[0].mxu0
        %v1651 = vadd.f32 %v1346, %v1650
        %v1652 = vpop.f32.mrb[0].mxu0
        %1653 = vmatprep.mubr.bf16.mxu0 %v794
        %1654 = vmatmul.mubr.bf16.gmra.mrb[0].mxu0 %v793
        %v1655 = vpop.f32.mrb[0].mxu0
        %v1656 = vadd.f32 %v1351, %v1655
        %v1657 = vpop.f32.mrb[0].mxu0
        %v1658 = vpop.f32.mrb[0].mxu0
        %v1659 = vadd.f32 %v1354, %v1658
        %v1660 = vpop.f32.mrb[0].mxu0
        %1661 = vmatprep.mubr.bf16.mxu0 %v797
        %1662 = vmatmul.mubr.bf16.gmra.mrb[0].mxu0 %v796
        %v1663 = vpop.f32.mrb[0].mxu0
        %v1664 = vadd.f32 %v1359, %v1663
        %v1665 = vpop.f32.mrb[0].mxu0
        %v1666 = vpop.f32.mrb[0].mxu0
        %v1667 = vadd.f32 %v1362, %v1666
        %v1668 = vpop.f32.mrb[0].mxu0
        %1669 = vmatprep.mubr.bf16.mxu0 %v800
        %1670 = vmatmul.mubr.bf16.gmra.mrb[0].mxu0 %v799
        %v1671 = vpop.f32.mrb[0].mxu0
        %v1672 = vadd.f32 %v1367, %v1671
        %v1673 = vpop.f32.mrb[0].mxu0
        %v1674 = vpop.f32.mrb[0].mxu0
        %v1675 = vadd.f32 %v1370, %v1674
        %v1676 = vpop.f32.mrb[0].mxu0
        %1677 = vmatprep.mubr.bf16.mxu0 %v803
        %1678 = vmatmul.mubr.bf16.gmra.mrb[0].mxu0 %v802
        %v1679 = vpop.f32.mrb[0].mxu0
        %v1680 = vadd.f32 %v1375, %v1679
        %v1681 = vpop.f32.mrb[0].mxu0
        %v1682 = vpop.f32.mrb[0].mxu0
        %v1683 = vadd.f32 %v1378, %v1682
        %v1684 = vpop.f32.mrb[0].mxu0
        %1685 = vmatprep.mubr.bf16.mxu0 %v806
        %1686 = vmatmul.mubr.bf16.gmra.mrb[0].mxu0 %v805
        %v1687 = vpop.f32.mrb[0].mxu0
        %v1688 = vadd.f32 %v1383, %v1687
        %v1689 = vpop.f32.mrb[0].mxu0
        %v1690 = vpop.f32.mrb[0].mxu0
        %v1691 = vadd.f32 %v1386, %v1690
        %v1692 = vpop.f32.mrb[0].mxu0
        %1693 = vmatprep.mubr.bf16.mxu0 %v809
        %1694 = vmatmul.mubr.bf16.gmra.mrb[0].mxu0 %v808
        %v1695 = vpop.f32.mrb[0].mxu0
        %v1696 = vadd.f32 %v1391, %v1695
        %v1697 = vpop.f32.mrb[0].mxu0
        %v1698 = vpop.f32.mrb[0].mxu0
        %v1699 = vadd.f32 %v1394, %v1698
        %v1700 = vpop.f32.mrb[0].mxu0
        %1701 = vmatprep.mubr.bf16.mxu0 %v812
        %1702 = vmatmul.mubr.bf16.gmra.mrb[0].mxu0 %v811
        %v1703 = vpop.f32.mrb[0].mxu0
        %v1704 = vadd.f32 %v1399, %v1703
        %v1705 = vpop.f32.mrb[0].mxu0
        %v1706 = vpop.f32.mrb[0].mxu0
        %v1707 = vadd.f32 %v1402, %v1706
        %v1708 = vpop.f32.mrb[0].mxu0
        %1709 = vmatprep.mubr.bf16.mxu0 %v815
        %1710 = vmatmul.mubr.bf16.gmra.mrb[0].mxu0 %v814
        %v1711 = vpop.f32.mrb[0].mxu0
        %v1712 = vadd.f32 %v1407, %v1711
        %v1713 = vpop.f32.mrb[0].mxu0
        %v1714 = vpop.f32.mrb[0].mxu0
        %v1715 = vadd.f32 %v1410, %v1714
        %v1716 = vpop.f32.mrb[0].mxu0
        %1717 = vmatprep.mubr.bf16.mxu0 %v818
        %1718 = vmatmul.mubr.bf16.gmra.mrb[0].mxu0 %v817
        %v1719 = vpop.f32.mrb[0].mxu0
        %v1720 = vadd.f32 %v1415, %v1719
        %v1721 = vpop.f32.mrb[0].mxu0
        %v1722 = vpop.f32.mrb[0].mxu0
        %v1723 = vadd.f32 %v1418, %v1722
        %v1724 = vpop.f32.mrb[0].mxu0
        %1725 = vmatprep.mubr.bf16.mxu0 %v821
        %1726 = vmatmul.mubr.bf16.gmra.mrb[0].mxu0 %v820
        %v1727 = vpop.f32.mrb[0].mxu0
        %v1728 = vadd.f32 %v1423, %v1727
        %v1729 = vpop.f32.mrb[0].mxu0
        %v1730 = vpop.f32.mrb[0].mxu0
        %v1731 = vadd.f32 %v1426, %v1730
        %v1732 = vpop.f32.mrb[0].mxu0
        %1733 = vmatprep.mubr.bf16.mxu0 %v824
        %1734 = vmatmul.mubr.bf16.gmra.mrb[0].mxu0 %v823
        %v1735 = vpop.f32.mrb[0].mxu0
        %v1736 = vadd.f32 %v1431, %v1735
        %v1737 = vpop.f32.mrb[0].mxu0
        %v1738 = vpop.f32.mrb[0].mxu0
        %v1739 = vadd.f32 %v1434, %v1738
        %v1740 = vpop.f32.mrb[0].mxu0
        %1741 = vdwg.mxu0
        %1742 = vmatprep.subr.bf16.mxu0 0
        %1743 = vmatpush1.bf16.msra.mxu0 %v1549
        %1744 = vmatprep.subr.bf16.mxu0 0
        %1745 = vmatpush1.bf16.msra.mxu0 %v1550
        %1746 = vmatprep.subr.bf16.mxu0 0
        %1747 = vmatpush1.bf16.msra.mxu0 %v1551
        %1748 = vmatprep.subr.bf16.mxu0 0
        %1749 = vmatpush1.bf16.msra.mxu0 %v1552
        %1750 = vmatprep.subr.bf16.mxu0 0
        %1751 = vmatpush1.bf16.msra.mxu0 %v1553
        %1752 = vmatprep.subr.bf16.mxu0 0
        %1753 = vmatpush1.bf16.msra.mxu0 %v1554
        %1754 = vmatprep.subr.bf16.mxu0 0
        %1755 = vmatpush1.bf16.msra.mxu0 %v1555
        %1756 = vmatprep.subr.bf16.mxu0 0
        %1757 = vmatpush1.bf16.msra.mxu0 %v1556
        %1758 = vmatprep.subr.bf16.mxu0 0
        %1759 = vmatpush1.bf16.msra.mxu0 0
        %1760 = vmatprep.subr.bf16.mxu0 0
        %1761 = vmatpush1.bf16.msra.mxu0 0
        %1762 = vmatprep.subr.bf16.mxu0 0
        %1763 = vmatpush1.bf16.msra.mxu0 0
        %1764 = vmatprep.subr.bf16.mxu0 0
        %1765 = vmatpush1.bf16.msra.mxu0 0
        %1766 = vmatprep.subr.bf16.mxu0 0
        %1767 = vmatpush1.bf16.msra.mxu0 0
        %1768 = vmatprep.subr.bf16.mxu0 0
        %1769 = vmatpush1.bf16.msra.mxu0 0
        %1770 = vmatprep.subr.bf16.mxu0 0
        %1771 = vmatpush1.bf16.msra.mxu0 0
        %1772 = vmatprep.subr.bf16.mxu0 0
        %1773 = vmatpush1.bf16.msra.mxu0 0
        %1774 = vmatprep.mubr.bf16.mxu0 0
        %1775 = vmatmul.mubr.bf16.gmra.mrb[0].mxu0 %v780
        %v1776 = vpop.f32.mrb[0].mxu0
        %v1777 = vadd.f32 %v1616, %v1776
        %v1778 = vpop.f32.mrb[0].mxu0
        %v1779 = vpop.f32.mrb[0].mxu0
        %v1780 = vadd.f32 %v1619, %v1779
        %v1781 = vpop.f32.mrb[0].mxu0
        %1782 = vmatprep.mubr.bf16.mxu0 0
        %1783 = vmatmul.mubr.bf16.gmra.mrb[0].mxu0 %v783
        %v1784 = vpop.f32.mrb[0].mxu0
        %v1785 = vadd.f32 %v1624, %v1784
        %v1786 = vpop.f32.mrb[0].mxu0
        %v1787 = vpop.f32.mrb[0].mxu0
        %v1788 = vadd.f32 %v1627, %v1787
        %v1789 = vpop.f32.mrb[0].mxu0
        %1790 = vmatprep.mubr.bf16.mxu0 0
        %1791 = vmatmul.mubr.bf16.gmra.mrb[0].mxu0 %v786
        %v1792 = vpop.f32.mrb[0].mxu0
        %v1793 = vadd.f32 %v1632, %v1792
        %v1794 = vpop.f32.mrb[0].mxu0
        %v1795 = vpop.f32.mrb[0].mxu0
        %v1796 = vadd.f32 %v1635, %v1795
        %v1797 = vpop.f32.mrb[0].mxu0
        %1798 = vmatprep.mubr.bf16.mxu0 0
        %1799 = vmatmul.mubr.bf16.gmra.mrb[0].mxu0 %v789
        %v1800 = vpop.f32.mrb[0].mxu0
        %v1801 = vadd.f32 %v1640, %v1800
        %v1802 = vpop.f32.mrb[0].mxu0
        %v1803 = vpop.f32.mrb[0].mxu0
        %v1804 = vadd.f32 %v1643, %v1803
        %v1805 = vpop.f32.mrb[0].mxu0
        %1806 = vmatprep.mubr.bf16.mxu0 0
        %1807 = vmatmul.mubr.bf16.gmra.mrb[0].mxu0 %v792
        %v1808 = vpop.f32.mrb[0].mxu0
        %v1809 = vadd.f32 %v1648, %v1808
        %v1810 = vpop.f32.mrb[0].mxu0
        %v1811 = vpop.f32.mrb[0].mxu0
        %v1812 = vadd.f32 %v1651, %v1811
        %v1813 = vpop.f32.mrb[0].mxu0
        %1814 = vmatprep.mubr.bf16.mxu0 0
        %1815 = vmatmul.mubr.bf16.gmra.mrb[0].mxu0 %v795
        %v1816 = vpop.f32.mrb[0].mxu0
        %v1817 = vadd.f32 %v1656, %v1816
        %v1818 = vpop.f32.mrb[0].mxu0
        %v1819 = vpop.f32.mrb[0].mxu0
        %v1820 = vadd.f32 %v1659, %v1819
        %v1821 = vpop.f32.mrb[0].mxu0
        %1822 = vmatprep.mubr.bf16.mxu0 0
        %1823 = vmatmul.mubr.bf16.gmra.mrb[0].mxu0 %v798
        %v1824 = vpop.f32.mrb[0].mxu0
        %v1825 = vadd.f32 %v1664, %v1824
        %v1826 = vpop.f32.mrb[0].mxu0
        %v1827 = vpop.f32.mrb[0].mxu0
        %v1828 = vadd.f32 %v1667, %v1827
        %v1829 = vpop.f32.mrb[0].mxu0
        %1830 = vmatprep.mubr.bf16.mxu0 0
        %1831 = vmatmul.mubr.bf16.gmra.mrb[0].mxu0 %v801
        %v1832 = vpop.f32.mrb[0].mxu0
        %v1833 = vadd.f32 %v1672, %v1832
        %v1834 = vpop.f32.mrb[0].mxu0
        %v1835 = vpop.f32.mrb[0].mxu0
        %v1836 = vadd.f32 %v1675, %v1835
        %v1837 = vpop.f32.mrb[0].mxu0
        %1838 = vmatprep.mubr.bf16.mxu0 0
        %1839 = vmatmul.mubr.bf16.gmra.mrb[0].mxu0 %v804
        %v1840 = vpop.f32.mrb[0].mxu0
        %v1841 = vadd.f32 %v1680, %v1840
        %v1842 = vpop.f32.mrb[0].mxu0
        %v1843 = vpop.f32.mrb[0].mxu0
        %v1844 = vadd.f32 %v1683, %v1843
        %v1845 = vpop.f32.mrb[0].mxu0
        %1846 = vmatprep.mubr.bf16.mxu0 0
        %1847 = vmatmul.mubr.bf16.gmra.mrb[0].mxu0 %v807
        %v1848 = vpop.f32.mrb[0].mxu0
        %v1849 = vadd.f32 %v1688, %v1848
        %v1850 = vpop.f32.mrb[0].mxu0
        %v1851 = vpop.f32.mrb[0].mxu0
        %v1852 = vadd.f32 %v1691, %v1851
        %v1853 = vpop.f32.mrb[0].mxu0
        %1854 = vmatprep.mubr.bf16.mxu0 0
        %1855 = vmatmul.mubr.bf16.gmra.mrb[0].mxu0 %v810
        %v1856 = vpop.f32.mrb[0].mxu0
        %v1857 = vadd.f32 %v1696, %v1856
        %v1858 = vpop.f32.mrb[0].mxu0
        %v1859 = vpop.f32.mrb[0].mxu0
        %v1860 = vadd.f32 %v1699, %v1859
        %v1861 = vpop.f32.mrb[0].mxu0
        %1862 = vmatprep.mubr.bf16.mxu0 0
        %1863 = vmatmul.mubr.bf16.gmra.mrb[0].mxu0 %v813
        %v1864 = vpop.f32.mrb[0].mxu0
        %v1865 = vadd.f32 %v1704, %v1864
        %v1866 = vpop.f32.mrb[0].mxu0
        %v1867 = vpop.f32.mrb[0].mxu0
        %v1868 = vadd.f32 %v1707, %v1867
        %v1869 = vpop.f32.mrb[0].mxu0
        %1870 = vmatprep.mubr.bf16.mxu0 0
        %1871 = vmatmul.mubr.bf16.gmra.mrb[0].mxu0 %v816
        %v1872 = vpop.f32.mrb[0].mxu0
        %v1873 = vadd.f32 %v1712, %v1872
        %v1874 = vpop.f32.mrb[0].mxu0
        %v1875 = vpop.f32.mrb[0].mxu0
        %v1876 = vadd.f32 %v1715, %v1875
        %v1877 = vpop.f32.mrb[0].mxu0
        %1878 = vmatprep.mubr.bf16.mxu0 0
        %1879 = vmatmul.mubr.bf16.gmra.mrb[0].mxu0 %v819
        %v1880 = vpop.f32.mrb[0].mxu0
        %v1881 = vadd.f32 %v1720, %v1880
        %v1882 = vpop.f32.mrb[0].mxu0
        %v1883 = vpop.f32.mrb[0].mxu0
        %v1884 = vadd.f32 %v1723, %v1883
        %v1885 = vpop.f32.mrb[0].mxu0
        %1886 = vmatprep.mubr.bf16.mxu0 0
        %1887 = vmatmul.mubr.bf16.gmra.mrb[0].mxu0 %v822
        %v1888 = vpop.f32.mrb[0].mxu0
        %v1889 = vadd.f32 %v1728, %v1888
        %v1890 = vpop.f32.mrb[0].mxu0
        %v1891 = vpop.f32.mrb[0].mxu0
        %v1892 = vadd.f32 %v1731, %v1891
        %v1893 = vpop.f32.mrb[0].mxu0
        %1894 = vmatprep.mubr.bf16.mxu0 0
        %1895 = vmatmul.mubr.bf16.gmra.mrb[0].mxu0 %v825
        %v1896 = vpop.f32.mrb[0].mxu0
        %v1897 = vadd.f32 %v1736, %v1896
        %v1898 = vpop.f32.mrb[0].mxu0
        %v1899 = vpop.f32.mrb[0].mxu0
        %v1900 = vadd.f32 %v1739, %v1899
        %v1901 = vpop.f32.mrb[0].mxu0
        %1902 = vdwg.mxu0
        %s1903 = scalar_lea.vmem [#allocation2], 48
        %v1904 = vld [vmem:[%s1903] sm:$0xff]
        %v1905 = vld [vmem:[%s1903 + $0x8] sm:$0xff]
        %v1906 = vld [vmem:[%s1903 + $0x10] sm:$0xff]
        %v1907 = vld [vmem:[%s1903 + $0x18] sm:$0xff]
        %v1908 = vld [vmem:[%s1903 + $0x20] sm:$0xff]
        %v1909 = vld [vmem:[%s1903 + $0x28] sm:$0xff]
        %v1910 = vld [vmem:[%s1903 + $0x30] sm:$0xff]
        %v1911 = vld [vmem:[%s1903 + $0x38] sm:$0xff]
        %v1912 = vld [vmem:[%s1903 + $0x40] sm:$0xff]
        %v1913 = vld [vmem:[%s1903 + $0x48] sm:$0xff]
        %v1914 = vld [vmem:[%s1903 + $0x50] sm:$0xff]
        %v1915 = vld [vmem:[%s1903 + $0x58] sm:$0xff]
        %v1916 = vld [vmem:[%s1903 + $0x60] sm:$0xff]
        %v1917 = vld [vmem:[%s1903 + $0x68] sm:$0xff]
        %v1918 = vld [vmem:[%s1903 + $0x70] sm:$0xff]
        %v1919 = vld [vmem:[%s1903 + $0x78] sm:$0xff]
        %v1920 = vld [vmem:[%s1903 + $0x80] sm:$0xff]
        %v1921 = vld [vmem:[%s1903 + $0x88] sm:$0xff]
        %v1922 = vld [vmem:[%s1903 + $0x90] sm:$0xff]
        %v1923 = vld [vmem:[%s1903 + $0x98] sm:$0xff]
        %v1924 = vld [vmem:[%s1903 + $0xa0] sm:$0xff]
        %v1925 = vld [vmem:[%s1903 + $0xa8] sm:$0xff]
        %v1926 = vld [vmem:[%s1903 + $0xb0] sm:$0xff]
        %v1927 = vld [vmem:[%s1903 + $0xb8] sm:$0xff]
        %v1928 = vld [vmem:[%s1903 + $0xc0] sm:$0xff]
        %v1929 = vld [vmem:[%s1903 + $0xc8] sm:$0xff]
        %v1930 = vld [vmem:[%s1903 + $0xd0] sm:$0xff]
        %v1931 = vld [vmem:[%s1903 + $0xd8] sm:$0xff]
        %v1932 = vld [vmem:[%s1903 + $0xe0] sm:$0xff]
        %v1933 = vld [vmem:[%s1903 + $0xe8] sm:$0xff]
        %v1934 = vld [vmem:[%s1903 + $0xf0] sm:$0xff]
        %v1935 = vld [vmem:[%s1903 + $0xf8] sm:$0xff]
        %v1936 = vld [vmem:[%s1903 + $0x100] sm:$0xff]
        %v1937 = vld [vmem:[%s1903 + $0x108] sm:$0xff]
        %v1938 = vld [vmem:[%s1903 + $0x110] sm:$0xff]
        %v1939 = vld [vmem:[%s1903 + $0x118] sm:$0xff]
        %v1940 = vld [vmem:[%s1903 + $0x120] sm:$0xff]
        %v1941 = vld [vmem:[%s1903 + $0x128] sm:$0xff]
        %v1942 = vld [vmem:[%s1903 + $0x130] sm:$0xff]
        %v1943 = vld [vmem:[%s1903 + $0x138] sm:$0xff]
        %v1944 = vld [vmem:[%s1903 + $0x140] sm:$0xff]
        %v1945 = vld [vmem:[%s1903 + $0x148] sm:$0xff]
        %v1946 = vld [vmem:[%s1903 + $0x150] sm:$0xff]
        %v1947 = vld [vmem:[%s1903 + $0x158] sm:$0xff]
        %v1948 = vld [vmem:[%s1903 + $0x160] sm:$0xff]
        %v1949 = vld [vmem:[%s1903 + $0x168] sm:$0xff]
        %v1950 = vld [vmem:[%s1903 + $0x170] sm:$0xff]
        %v1951 = vld [vmem:[%s1903 + $0x178] sm:$0xff]
        %s1952 = scalar_lea.vmem [#allocation6], 384
        %v1953 = vld [vmem:[%s1952] sm:$0xf]
        %v1954 = vld [vmem:[%s1952 + $0x4] sm:$0xf]
        %v1955 = vld [vmem:[%s1952 + $0x8] sm:$0xf]
        %v1956 = vld [vmem:[%s1952 + $0xc] sm:$0xf]
        %v1957 = vld [vmem:[%s1952 + $0x10] sm:$0xf]
        %v1958 = vld [vmem:[%s1952 + $0x14] sm:$0xf]
        %v1959 = vld [vmem:[%s1952 + $0x18] sm:$0xf]
        %v1960 = vld [vmem:[%s1952 + $0x1c] sm:$0xf]
        %v1961 = vld [vmem:[%s1952 + $0x20] sm:$0xf]
        %v1962 = vld [vmem:[%s1952 + $0x24] sm:$0xf]
        %v1963 = vld [vmem:[%s1952 + $0x28] sm:$0xf]
        %v1964 = vld [vmem:[%s1952 + $0x2c] sm:$0xf]
        %v1965 = vld [vmem:[%s1952 + $0x30] sm:$0xf]
        %v1966 = vld [vmem:[%s1952 + $0x34] sm:$0xf]
        %v1967 = vld [vmem:[%s1952 + $0x38] sm:$0xf]
        %v1968 = vld [vmem:[%s1952 + $0x3c] sm:$0xf]
        %v1969 = vld [vmem:[%s1952 + $0x40] sm:$0xf]
        %v1970 = vld [vmem:[%s1952 + $0x44] sm:$0xf]
        %v1971 = vld [vmem:[%s1952 + $0x48] sm:$0xf]
        %v1972 = vld [vmem:[%s1952 + $0x4c] sm:$0xf]
        %v1973 = vld [vmem:[%s1952 + $0x50] sm:$0xf]
        %v1974 = vld [vmem:[%s1952 + $0x54] sm:$0xf]
        %v1975 = vld [vmem:[%s1952 + $0x58] sm:$0xf]
        %v1976 = vld [vmem:[%s1952 + $0x5c] sm:$0xf]
        %v1977 = vld [vmem:[%s1952 + $0x60] sm:$0xf]
        %v1978 = vld [vmem:[%s1952 + $0x64] sm:$0xf]
        %v1979 = vld [vmem:[%s1952 + $0x68] sm:$0xf]
        %v1980 = vld [vmem:[%s1952 + $0x6c] sm:$0xf]
        %v1981 = vld [vmem:[%s1952 + $0x70] sm:$0xf]
        %v1982 = vld [vmem:[%s1952 + $0x74] sm:$0xf]
        %v1983 = vld [vmem:[%s1952 + $0x78] sm:$0xf]
        %v1984 = vld [vmem:[%s1952 + $0x7c] sm:$0xf]
        %v1985 = vld [vmem:[%s1952 + $0x80] sm:$0xf]
        %v1986 = vld [vmem:[%s1952 + $0x84] sm:$0xf]
        %v1987 = vld [vmem:[%s1952 + $0x88] sm:$0xf]
        %v1988 = vld [vmem:[%s1952 + $0x8c] sm:$0xf]
        %v1989 = vld [vmem:[%s1952 + $0x90] sm:$0xf]
        %v1990 = vld [vmem:[%s1952 + $0x94] sm:$0xf]
        %v1991 = vld [vmem:[%s1952 + $0x98] sm:$0xf]
        %v1992 = vld [vmem:[%s1952 + $0x9c] sm:$0xf]
        %v1993 = vld [vmem:[%s1952 + $0xa0] sm:$0xf]
        %v1994 = vld [vmem:[%s1952 + $0xa4] sm:$0xf]
        %v1995 = vld [vmem:[%s1952 + $0xa8] sm:$0xf]
        %v1996 = vld [vmem:[%s1952 + $0xac] sm:$0xf]
        %v1997 = vld [vmem:[%s1952 + $0xb0] sm:$0xf]
        %v1998 = vld [vmem:[%s1952 + $0xb4] sm:$0xf]
        %v1999 = vld [vmem:[%s1952 + $0xb8] sm:$0xf]
        %v2000 = vld [vmem:[%s1952 + $0xbc] sm:$0xf]
        %v2049 = vunpack.c.l.b16 %v1953
        %v2050 = vunpack.c.l.b16 %v1954
        %v2051 = vunpack.c.l.b16 %v1955
        %v2052 = vunpack.c.l.b16 %v1956
        %v2053 = vunpack.c.l.b16 %v1957
        %v2054 = vunpack.c.l.b16 %v1958
        %v2055 = vunpack.c.l.b16 %v1959
        %v2056 = vunpack.c.l.b16 %v1960
        %v2057 = vunpack.c.l.b16 %v1961
        %v2058 = vunpack.c.l.b16 %v1962
        %v2059 = vunpack.c.l.b16 %v1963
        %v2060 = vunpack.c.l.b16 %v1964
        %v2061 = vunpack.c.l.b16 %v1965
        %v2062 = vunpack.c.l.b16 %v1966
        %v2063 = vunpack.c.l.b16 %v1967
        %v2064 = vunpack.c.l.b16 %v1968
        %v2065 = vunpack.c.l.b16 %v1969
        %v2066 = vunpack.c.l.b16 %v1970
        %v2067 = vunpack.c.l.b16 %v1971
        %v2068 = vunpack.c.l.b16 %v1972
        %v2069 = vunpack.c.l.b16 %v1973
        %v2070 = vunpack.c.l.b16 %v1974
        %v2071 = vunpack.c.l.b16 %v1975
        %v2072 = vunpack.c.l.b16 %v1976
        %v2073 = vunpack.c.l.b16 %v1977
        %v2074 = vunpack.c.l.b16 %v1978
        %v2075 = vunpack.c.l.b16 %v1979
        %v2076 = vunpack.c.l.b16 %v1980
        %v2077 = vunpack.c.l.b16 %v1981
        %v2078 = vunpack.c.l.b16 %v1982
        %v2079 = vunpack.c.l.b16 %v1983
        %v2080 = vunpack.c.l.b16 %v1984
        %v2081 = vunpack.c.l.b16 %v1985
        %v2082 = vunpack.c.l.b16 %v1986
        %v2083 = vunpack.c.l.b16 %v1987
        %v2084 = vunpack.c.l.b16 %v1988
        %v2085 = vunpack.c.l.b16 %v1989
        %v2086 = vunpack.c.l.b16 %v1990
        %v2087 = vunpack.c.l.b16 %v1991
        %v2088 = vunpack.c.l.b16 %v1992
        %v2089 = vunpack.c.l.b16 %v1993
        %v2090 = vunpack.c.l.b16 %v1994
        %v2091 = vunpack.c.l.b16 %v1995
        %v2092 = vunpack.c.l.b16 %v1996
        %v2093 = vunpack.c.l.b16 %v1997
        %v2094 = vunpack.c.l.b16 %v1998
        %v2095 = vunpack.c.l.b16 %v1999
        %v2096 = vunpack.c.l.b16 %v2000
        %v2097 = vpack.c.b16 %v2050, %v2049
        %v2098 = vpack.c.b16 %v2052, %v2051
        %v2099 = vpack.c.b16 %v2054, %v2053
        %v2100 = vpack.c.b16 %v2056, %v2055
        %v2101 = vpack.c.b16 %v2058, %v2057
        %v2102 = vpack.c.b16 %v2060, %v2059
        %v2103 = vpack.c.b16 %v2062, %v2061
        %v2104 = vpack.c.b16 %v2064, %v2063
        %v2105 = vpack.c.b16 %v2066, %v2065
        %v2106 = vpack.c.b16 %v2068, %v2067
        %v2107 = vpack.c.b16 %v2070, %v2069
        %v2108 = vpack.c.b16 %v2072, %v2071
        %v2109 = vpack.c.b16 %v2074, %v2073
        %v2110 = vpack.c.b16 %v2076, %v2075
        %v2111 = vpack.c.b16 %v2078, %v2077
        %v2112 = vpack.c.b16 %v2080, %v2079
        %v2113 = vpack.c.b16 %v2082, %v2081
        %v2114 = vpack.c.b16 %v2084, %v2083
        %v2115 = vpack.c.b16 %v2086, %v2085
        %v2116 = vpack.c.b16 %v2088, %v2087
        %v2117 = vpack.c.b16 %v2090, %v2089
        %v2118 = vpack.c.b16 %v2092, %v2091
        %v2119 = vpack.c.b16 %v2094, %v2093
        %v2120 = vpack.c.b16 %v2096, %v2095
        %2145 = vmatprep.subr.bf16.mxu0 0
        %2146 = vmatpush1.bf16.msra.mxu0 %v2097
        %2147 = vmatprep.subr.bf16.mxu0 0
        %2148 = vmatpush1.bf16.msra.mxu0 %v2098
        %2149 = vmatprep.subr.bf16.mxu0 0
        %2150 = vmatpush1.bf16.msra.mxu0 %v2099
        %2151 = vmatprep.subr.bf16.mxu0 0
        %2152 = vmatpush1.bf16.msra.mxu0 %v2100
        %2153 = vmatprep.subr.bf16.mxu0 0
        %2154 = vmatpush1.bf16.msra.mxu0 %v2101
        %2155 = vmatprep.subr.bf16.mxu0 0
        %2156 = vmatpush1.bf16.msra.mxu0 %v2102
        %2157 = vmatprep.subr.bf16.mxu0 0
        %2158 = vmatpush1.bf16.msra.mxu0 %v2103
        %2159 = vmatprep.subr.bf16.mxu0 0
        %2160 = vmatpush1.bf16.msra.mxu0 %v2104
        %2161 = vmatprep.subr.bf16.mxu0 0
        %2162 = vmatpush1.bf16.msra.mxu0 %v2105
        %2163 = vmatprep.subr.bf16.mxu0 0
        %2164 = vmatpush1.bf16.msra.mxu0 %v2106
        %2165 = vmatprep.subr.bf16.mxu0 0
        %2166 = vmatpush1.bf16.msra.mxu0 %v2107
        %2167 = vmatprep.subr.bf16.mxu0 0
        %2168 = vmatpush1.bf16.msra.mxu0 %v2108
        %2169 = vmatprep.subr.bf16.mxu0 0
        %2170 = vmatpush1.bf16.msra.mxu0 %v2109
        %2171 = vmatprep.subr.bf16.mxu0 0
        %2172 = vmatpush1.bf16.msra.mxu0 %v2110
        %2173 = vmatprep.subr.bf16.mxu0 0
        %2174 = vmatpush1.bf16.msra.mxu0 %v2111
        %2175 = vmatprep.subr.bf16.mxu0 0
        %2176 = vmatpush1.bf16.msra.mxu0 %v2112
        %2177 = vmatprep.mubr.bf16.mxu0 %v1905
        %2178 = vmatmul.mubr.bf16.gmra.mrb[0].mxu0 %v1904
        %v2179 = vpop.f32.mrb[0].mxu0
        %v2180 = vadd.f32 0.0, %v2179
        %v2181 = vpop.f32.mrb[0].mxu0
        %v2182 = vpop.f32.mrb[0].mxu0
        %v2183 = vadd.f32 0.0, %v2182
        %v2184 = vpop.f32.mrb[0].mxu0
        %2185 = vmatprep.mubr.bf16.mxu0 %v1908
        %2186 = vmatmul.mubr.bf16.gmra.mrb[0].mxu0 %v1907
        %v2187 = vpop.f32.mrb[0].mxu0
        %v2188 = vadd.f32 0.0, %v2187
        %v2189 = vpop.f32.mrb[0].mxu0
        %v2190 = vpop.f32.mrb[0].mxu0
        %v2191 = vadd.f32 0.0, %v2190
        %v2192 = vpop.f32.mrb[0].mxu0
        %2193 = vmatprep.mubr.bf16.mxu0 %v1911
        %2194 = vmatmul.mubr.bf16.gmra.mrb[0].mxu0 %v1910
        %v2195 = vpop.f32.mrb[0].mxu0
        %v2196 = vadd.f32 0.0, %v2195
        %v2197 = vpop.f32.mrb[0].mxu0
        %v2198 = vpop.f32.mrb[0].mxu0
        %v2199 = vadd.f32 0.0, %v2198
        %v2200 = vpop.f32.mrb[0].mxu0
        %2201 = vmatprep.mubr.bf16.mxu0 %v1914
        %2202 = vmatmul.mubr.bf16.gmra.mrb[0].mxu0 %v1913
        %v2203 = vpop.f32.mrb[0].mxu0
        %v2204 = vadd.f32 0.0, %v2203
        %v2205 = vpop.f32.mrb[0].mxu0
        %v2206 = vpop.f32.mrb[0].mxu0
        %v2207 = vadd.f32 0.0, %v2206
        %v2208 = vpop.f32.mrb[0].mxu0
        %2209 = vmatprep.mubr.bf16.mxu0 %v1917
        %2210 = vmatmul.mubr.bf16.gmra.mrb[0].mxu0 %v1916
        %v2211 = vpop.f32.mrb[0].mxu0
        %v2212 = vadd.f32 0.0, %v2211
        %v2213 = vpop.f32.mrb[0].mxu0
        %v2214 = vpop.f32.mrb[0].mxu0
        %v2215 = vadd.f32 0.0, %v2214
        %v2216 = vpop.f32.mrb[0].mxu0
        %2217 = vmatprep.mubr.bf16.mxu0 %v1920
        %2218 = vmatmul.mubr.bf16.gmra.mrb[0].mxu0 %v1919
        %v2219 = vpop.f32.mrb[0].mxu0
        %v2220 = vadd.f32 0.0, %v2219
        %v2221 = vpop.f32.mrb[0].mxu0
        %v2222 = vpop.f32.mrb[0].mxu0
        %v2223 = vadd.f32 0.0, %v2222
        %v2224 = vpop.f32.mrb[0].mxu0
        %2225 = vmatprep.mubr.bf16.mxu0 %v1923
        %2226 = vmatmul.mubr.bf16.gmra.mrb[0].mxu0 %v1922
        %v2227 = vpop.f32.mrb[0].mxu0
        %v2228 = vadd.f32 0.0, %v2227
        %v2229 = vpop.f32.mrb[0].mxu0
        %v2230 = vpop.f32.mrb[0].mxu0
        %v2231 = vadd.f32 0.0, %v2230
        %v2232 = vpop.f32.mrb[0].mxu0
        %2233 = vmatprep.mubr.bf16.mxu0 %v1926
        %2234 = vmatmul.mubr.bf16.gmra.mrb[0].mxu0 %v1925
        %v2235 = vpop.f32.mrb[0].mxu0
        %v2236 = vadd.f32 0.0, %v2235
        %v2237 = vpop.f32.mrb[0].mxu0
        %v2238 = vpop.f32.mrb[0].mxu0
        %v2239 = vadd.f32 0.0, %v2238
        %v2240 = vpop.f32.mrb[0].mxu0
        %2241 = vmatprep.mubr.bf16.mxu0 %v1929
        %2242 = vmatmul.mubr.bf16.gmra.mrb[0].mxu0 %v1928
        %v2243 = vpop.f32.mrb[0].mxu0
        %v2244 = vadd.f32 0.0, %v2243
        %v2245 = vpop.f32.mrb[0].mxu0
        %v2246 = vpop.f32.mrb[0].mxu0
        %v2247 = vadd.f32 0.0, %v2246
        %v2248 = vpop.f32.mrb[0].mxu0
        %2249 = vmatprep.mubr.bf16.mxu0 %v1932
        %2250 = vmatmul.mubr.bf16.gmra.mrb[0].mxu0 %v1931
        %v2251 = vpop.f32.mrb[0].mxu0
        %v2252 = vadd.f32 0.0, %v2251
        %v2253 = vpop.f32.mrb[0].mxu0
        %v2254 = vpop.f32.mrb[0].mxu0
        %v2255 = vadd.f32 0.0, %v2254
        %v2256 = vpop.f32.mrb[0].mxu0
        %2257 = vmatprep.mubr.bf16.mxu0 %v1935
        %2258 = vmatmul.mubr.bf16.gmra.mrb[0].mxu0 %v1934
        %v2259 = vpop.f32.mrb[0].mxu0
        %v2260 = vadd.f32 0.0, %v2259
        %v2261 = vpop.f32.mrb[0].mxu0
        %v2262 = vpop.f32.mrb[0].mxu0
        %v2263 = vadd.f32 0.0, %v2262
        %v2264 = vpop.f32.mrb[0].mxu0
        %2265 = vmatprep.mubr.bf16.mxu0 %v1938
        %2266 = vmatmul.mubr.bf16.gmra.mrb[0].mxu0 %v1937
        %v2267 = vpop.f32.mrb[0].mxu0
        %v2268 = vadd.f32 0.0, %v2267
        %v2269 = vpop.f32.mrb[0].mxu0
        %v2270 = vpop.f32.mrb[0].mxu0
        %v2271 = vadd.f32 0.0, %v2270
        %v2272 = vpop.f32.mrb[0].mxu0
        %2273 = vmatprep.mubr.bf16.mxu0 %v1941
        %2274 = vmatmul.mubr.bf16.gmra.mrb[0].mxu0 %v1940
        %v2275 = vpop.f32.mrb[0].mxu0
        %v2276 = vadd.f32 0.0, %v2275
        %v2277 = vpop.f32.mrb[0].mxu0
        %v2278 = vpop.f32.mrb[0].mxu0
        %v2279 = vadd.f32 0.0, %v2278
        %v2280 = vpop.f32.mrb[0].mxu0
        %2281 = vmatprep.mubr.bf16.mxu0 %v1944
        %2282 = vmatmul.mubr.bf16.gmra.mrb[0].mxu0 %v1943
        %v2283 = vpop.f32.mrb[0].mxu0
        %v2284 = vadd.f32 0.0, %v2283
        %v2285 = vpop.f32.mrb[0].mxu0
        %v2286 = vpop.f32.mrb[0].mxu0
        %v2287 = vadd.f32 0.0, %v2286
        %v2288 = vpop.f32.mrb[0].mxu0
        %2289 = vmatprep.mubr.bf16.mxu0 %v1947
        %2290 = vmatmul.mubr.bf16.gmra.mrb[0].mxu0 %v1946
        %v2291 = vpop.f32.mrb[0].mxu0
        %v2292 = vadd.f32 0.0, %v2291
        %v2293 = vpop.f32.mrb[0].mxu0
        %v2294 = vpop.f32.mrb[0].mxu0
        %v2295 = vadd.f32 0.0, %v2294
        %v2296 = vpop.f32.mrb[0].mxu0
        %2297 = vmatprep.mubr.bf16.mxu0 %v1950
        %2298 = vmatmul.mubr.bf16.gmra.mrb[0].mxu0 %v1949
        %v2299 = vpop.f32.mrb[0].mxu0
        %v2300 = vadd.f32 0.0, %v2299
        %v2301 = vpop.f32.mrb[0].mxu0
        %v2302 = vpop.f32.mrb[0].mxu0
        %v2303 = vadd.f32 0.0, %v2302
        %v2304 = vpop.f32.mrb[0].mxu0
        %2305 = vdwg.mxu0
        %2306 = vmatprep.subr.bf16.mxu0 0
        %2307 = vmatpush1.bf16.msra.mxu0 %v2113
        %2308 = vmatprep.subr.bf16.mxu0 0
        %2309 = vmatpush1.bf16.msra.mxu0 %v2114
        %2310 = vmatprep.subr.bf16.mxu0 0
        %2311 = vmatpush1.bf16.msra.mxu0 %v2115
        %2312 = vmatprep.subr.bf16.mxu0 0
        %2313 = vmatpush1.bf16.msra.mxu0 %v2116
        %2314 = vmatprep.subr.bf16.mxu0 0
        %2315 = vmatpush1.bf16.msra.mxu0 %v2117
        %2316 = vmatprep.subr.bf16.mxu0 0
        %2317 = vmatpush1.bf16.msra.mxu0 %v2118
        %2318 = vmatprep.subr.bf16.mxu0 0
        %2319 = vmatpush1.bf16.msra.mxu0 %v2119
        %2320 = vmatprep.subr.bf16.mxu0 0
        %2321 = vmatpush1.bf16.msra.mxu0 %v2120
        %2322 = vmatprep.subr.bf16.mxu0 0
        %2323 = vmatpush1.bf16.msra.mxu0 0
        %2324 = vmatprep.subr.bf16.mxu0 0
        %2325 = vmatpush1.bf16.msra.mxu0 0
        %2326 = vmatprep.subr.bf16.mxu0 0
        %2327 = vmatpush1.bf16.msra.mxu0 0
        %2328 = vmatprep.subr.bf16.mxu0 0
        %2329 = vmatpush1.bf16.msra.mxu0 0
        %2330 = vmatprep.subr.bf16.mxu0 0
        %2331 = vmatpush1.bf16.msra.mxu0 0
        %2332 = vmatprep.subr.bf16.mxu0 0
        %2333 = vmatpush1.bf16.msra.mxu0 0
        %2334 = vmatprep.subr.bf16.mxu0 0
        %2335 = vmatpush1.bf16.msra.mxu0 0
        %2336 = vmatprep.subr.bf16.mxu0 0
        %2337 = vmatpush1.bf16.msra.mxu0 0
        %2338 = vmatprep.mubr.bf16.mxu0 0
        %2339 = vmatmul.mubr.bf16.gmra.mrb[0].mxu0 %v1906
        %v2340 = vpop.f32.mrb[0].mxu0
        %v2341 = vadd.f32 %v2180, %v2340
        %v2342 = vpop.f32.mrb[0].mxu0
        %v2343 = vpop.f32.mrb[0].mxu0
        %v2344 = vadd.f32 %v2183, %v2343
        %v2345 = vpop.f32.mrb[0].mxu0
        %2346 = vmatprep.mubr.bf16.mxu0 0
        %2347 = vmatmul.mubr.bf16.gmra.mrb[0].mxu0 %v1909
        %v2348 = vpop.f32.mrb[0].mxu0
        %v2349 = vadd.f32 %v2188, %v2348
        %v2350 = vpop.f32.mrb[0].mxu0
        %v2351 = vpop.f32.mrb[0].mxu0
        %v2352 = vadd.f32 %v2191, %v2351
        %v2353 = vpop.f32.mrb[0].mxu0
        %2354 = vmatprep.mubr.bf16.mxu0 0
        %2355 = vmatmul.mubr.bf16.gmra.mrb[0].mxu0 %v1912
        %v2356 = vpop.f32.mrb[0].mxu0
        %v2357 = vadd.f32 %v2196, %v2356
        %v2358 = vpop.f32.mrb[0].mxu0
        %v2359 = vpop.f32.mrb[0].mxu0
        %v2360 = vadd.f32 %v2199, %v2359
        %v2361 = vpop.f32.mrb[0].mxu0
        %2362 = vmatprep.mubr.bf16.mxu0 0
        %2363 = vmatmul.mubr.bf16.gmra.mrb[0].mxu0 %v1915
        %v2364 = vpop.f32.mrb[0].mxu0
        %v2365 = vadd.f32 %v2204, %v2364
        %v2366 = vpop.f32.mrb[0].mxu0
        %v2367 = vpop.f32.mrb[0].mxu0
        %v2368 = vadd.f32 %v2207, %v2367
        %v2369 = vpop.f32.mrb[0].mxu0
        %2370 = vmatprep.mubr.bf16.mxu0 0
        %2371 = vmatmul.mubr.bf16.gmra.mrb[0].mxu0 %v1918
        %v2372 = vpop.f32.mrb[0].mxu0
        %v2373 = vadd.f32 %v2212, %v2372
        %v2374 = vpop.f32.mrb[0].mxu0
        %v2375 = vpop.f32.mrb[0].mxu0
        %v2376 = vadd.f32 %v2215, %v2375
        %v2377 = vpop.f32.mrb[0].mxu0
        %2378 = vmatprep.mubr.bf16.mxu0 0
        %2379 = vmatmul.mubr.bf16.gmra.mrb[0].mxu0 %v1921
        %v2380 = vpop.f32.mrb[0].mxu0
        %v2381 = vadd.f32 %v2220, %v2380
        %v2382 = vpop.f32.mrb[0].mxu0
        %v2383 = vpop.f32.mrb[0].mxu0
        %v2384 = vadd.f32 %v2223, %v2383
        %v2385 = vpop.f32.mrb[0].mxu0
        %2386 = vmatprep.mubr.bf16.mxu0 0
        %2387 = vmatmul.mubr.bf16.gmra.mrb[0].mxu0 %v1924
        %v2388 = vpop.f32.mrb[0].mxu0
        %v2389 = vadd.f32 %v2228, %v2388
        %v2390 = vpop.f32.mrb[0].mxu0
        %v2391 = vpop.f32.mrb[0].mxu0
        %v2392 = vadd.f32 %v2231, %v2391
        %v2393 = vpop.f32.mrb[0].mxu0
        %2394 = vmatprep.mubr.bf16.mxu0 0
        %2395 = vmatmul.mubr.bf16.gmra.mrb[0].mxu0 %v1927
        %v2396 = vpop.f32.mrb[0].mxu0
        %v2397 = vadd.f32 %v2236, %v2396
        %v2398 = vpop.f32.mrb[0].mxu0
        %v2399 = vpop.f32.mrb[0].mxu0
        %v2400 = vadd.f32 %v2239, %v2399
        %v2401 = vpop.f32.mrb[0].mxu0
        %2402 = vmatprep.mubr.bf16.mxu0 0
        %2403 = vmatmul.mubr.bf16.gmra.mrb[0].mxu0 %v1930
        %v2404 = vpop.f32.mrb[0].mxu0
        %v2405 = vadd.f32 %v2244, %v2404
        %v2406 = vpop.f32.mrb[0].mxu0
        %v2407 = vpop.f32.mrb[0].mxu0
        %v2408 = vadd.f32 %v2247, %v2407
        %v2409 = vpop.f32.mrb[0].mxu0
        %2410 = vmatprep.mubr.bf16.mxu0 0
        %2411 = vmatmul.mubr.bf16.gmra.mrb[0].mxu0 %v1933
        %v2412 = vpop.f32.mrb[0].mxu0
        %v2413 = vadd.f32 %v2252, %v2412
        %v2414 = vpop.f32.mrb[0].mxu0
        %v2415 = vpop.f32.mrb[0].mxu0
        %v2416 = vadd.f32 %v2255, %v2415
        %v2417 = vpop.f32.mrb[0].mxu0
        %2418 = vmatprep.mubr.bf16.mxu0 0
        %2419 = vmatmul.mubr.bf16.gmra.mrb[0].mxu0 %v1936
        %v2420 = vpop.f32.mrb[0].mxu0
        %v2421 = vadd.f32 %v2260, %v2420
        %v2422 = vpop.f32.mrb[0].mxu0
        %v2423 = vpop.f32.mrb[0].mxu0
        %v2424 = vadd.f32 %v2263, %v2423
        %v2425 = vpop.f32.mrb[0].mxu0
        %2426 = vmatprep.mubr.bf16.mxu0 0
        %2427 = vmatmul.mubr.bf16.gmra.mrb[0].mxu0 %v1939
        %v2428 = vpop.f32.mrb[0].mxu0
        %v2429 = vadd.f32 %v2268, %v2428
        %v2430 = vpop.f32.mrb[0].mxu0
        %v2431 = vpop.f32.mrb[0].mxu0
        %v2432 = vadd.f32 %v2271, %v2431
        %v2433 = vpop.f32.mrb[0].mxu0
        %2434 = vmatprep.mubr.bf16.mxu0 0
        %2435 = vmatmul.mubr.bf16.gmra.mrb[0].mxu0 %v1942
        %v2436 = vpop.f32.mrb[0].mxu0
        %v2437 = vadd.f32 %v2276, %v2436
        %v2438 = vpop.f32.mrb[0].mxu0
        %v2439 = vpop.f32.mrb[0].mxu0
        %v2440 = vadd.f32 %v2279, %v2439
        %v2441 = vpop.f32.mrb[0].mxu0
        %2442 = vmatprep.mubr.bf16.mxu0 0
        %2443 = vmatmul.mubr.bf16.gmra.mrb[0].mxu0 %v1945
        %v2444 = vpop.f32.mrb[0].mxu0
        %v2445 = vadd.f32 %v2284, %v2444
        %v2446 = vpop.f32.mrb[0].mxu0
        %v2447 = vpop.f32.mrb[0].mxu0
        %v2448 = vadd.f32 %v2287, %v2447
        %v2449 = vpop.f32.mrb[0].mxu0
        %2450 = vmatprep.mubr.bf16.mxu0 0
        %2451 = vmatmul.mubr.bf16.gmra.mrb[0].mxu0 %v1948
        %v2452 = vpop.f32.mrb[0].mxu0
        %v2453 = vadd.f32 %v2292, %v2452
        %v2454 = vpop.f32.mrb[0].mxu0
        %v2455 = vpop.f32.mrb[0].mxu0
        %v2456 = vadd.f32 %v2295, %v2455
        %v2457 = vpop.f32.mrb[0].mxu0
        %2458 = vmatprep.mubr.bf16.mxu0 0
        %2459 = vmatmul.mubr.bf16.gmra.mrb[0].mxu0 %v1951
        %v2460 = vpop.f32.mrb[0].mxu0
        %v2461 = vadd.f32 %v2300, %v2460
        %v2462 = vpop.f32.mrb[0].mxu0
        %v2463 = vpop.f32.mrb[0].mxu0
        %v2464 = vadd.f32 %v2303, %v2463
        %v2465 = vpop.f32.mrb[0].mxu0
        %2466 = vdwg.mxu0
        %v2467 = vadd.f32 %v1777, %v2341
        %v2468 = vadd.f32 %v1780, %v2344
        %v2469 = vadd.f32 %v1785, %v2349
        %v2470 = vadd.f32 %v1788, %v2352
        %v2471 = vadd.f32 %v1793, %v2357
        %v2472 = vadd.f32 %v1796, %v2360
        %v2473 = vadd.f32 %v1801, %v2365
        %v2474 = vadd.f32 %v1804, %v2368
        %v2475 = vadd.f32 %v1809, %v2373
        %v2476 = vadd.f32 %v1812, %v2376
        %v2477 = vadd.f32 %v1817, %v2381
        %v2478 = vadd.f32 %v1820, %v2384
        %v2479 = vadd.f32 %v1825, %v2389
        %v2480 = vadd.f32 %v1828, %v2392
        %v2481 = vadd.f32 %v1833, %v2397
        %v2482 = vadd.f32 %v1836, %v2400
        %v2483 = vadd.f32 %v1841, %v2405
        %v2484 = vadd.f32 %v1844, %v2408
        %v2485 = vadd.f32 %v1849, %v2413
        %v2486 = vadd.f32 %v1852, %v2416
        %v2487 = vadd.f32 %v1857, %v2421
        %v2488 = vadd.f32 %v1860, %v2424
        %v2489 = vadd.f32 %v1865, %v2429
        %v2490 = vadd.f32 %v1868, %v2432
        %v2491 = vadd.f32 %v1873, %v2437
        %v2492 = vadd.f32 %v1876, %v2440
        %v2493 = vadd.f32 %v1881, %v2445
        %v2494 = vadd.f32 %v1884, %v2448
        %v2495 = vadd.f32 %v1889, %v2453
        %v2496 = vadd.f32 %v1892, %v2456
        %v2497 = vadd.f32 %v1897, %v2461
        %v2498 = vadd.f32 %v1900, %v2464
        %v2499 = vpack.c.bf16 %v2468, %v2467
        %v2500 = vpack.c.bf16 %v2470, %v2469
        %v2501 = vpack.c.bf16 %v2472, %v2471
        %v2502 = vpack.c.bf16 %v2474, %v2473
        %v2503 = vpack.c.bf16 %v2476, %v2475
        %v2504 = vpack.c.bf16 %v2478, %v2477
        %v2505 = vpack.c.bf16 %v2480, %v2479
        %v2506 = vpack.c.bf16 %v2482, %v2481
        %v2507 = vpack.c.bf16 %v2484, %v2483
        %v2508 = vpack.c.bf16 %v2486, %v2485
        %v2509 = vpack.c.bf16 %v2488, %v2487
        %v2510 = vpack.c.bf16 %v2490, %v2489
        %v2511 = vpack.c.bf16 %v2492, %v2491
        %v2512 = vpack.c.bf16 %v2494, %v2493
        %v2513 = vpack.c.bf16 %v2496, %v2495
        %v2514 = vpack.c.bf16 %v2498, %v2497
        %v2531 = vunpack.c.l.b16 %v2499
        %v2532 = vunpack.c.h.b16 %v2499
        %v2533 = vunpack.c.l.b16 %v2500
        %v2534 = vunpack.c.h.b16 %v2500
        %v2535 = vunpack.c.l.b16 %v2501
        %v2536 = vunpack.c.h.b16 %v2501
        %v2537 = vunpack.c.l.b16 %v2502
        %v2538 = vunpack.c.h.b16 %v2502
        %v2539 = vunpack.c.l.b16 %v2503
        %v2540 = vunpack.c.h.b16 %v2503
        %v2541 = vunpack.c.l.b16 %v2504
        %v2542 = vunpack.c.h.b16 %v2504
        %v2543 = vunpack.c.l.b16 %v2505
        %v2544 = vunpack.c.h.b16 %v2505
        %v2545 = vunpack.c.l.b16 %v2506
        %v2546 = vunpack.c.h.b16 %v2506
        %v2547 = vunpack.c.l.b16 %v2507
        %v2548 = vunpack.c.h.b16 %v2507
        %v2549 = vunpack.c.l.b16 %v2508
        %v2550 = vunpack.c.h.b16 %v2508
        %v2551 = vunpack.c.l.b16 %v2509
        %v2552 = vunpack.c.h.b16 %v2509
        %v2553 = vunpack.c.l.b16 %v2510
        %v2554 = vunpack.c.h.b16 %v2510
        %v2555 = vunpack.c.l.b16 %v2511
        %v2556 = vunpack.c.h.b16 %v2511
        %v2557 = vunpack.c.l.b16 %v2512
        %v2558 = vunpack.c.h.b16 %v2512
        %v2559 = vunpack.c.l.b16 %v2513
        %v2560 = vunpack.c.h.b16 %v2513
        %v2561 = vunpack.c.l.b16 %v2514
        %v2562 = vunpack.c.h.b16 %v2514
        %v2563 = vpack.c.b16 %v2531, %v2531
        %v2564 = vpack.c.b16 %v2532, %v2532
        %v2565 = vpack.c.b16 %v2533, %v2533
        %v2566 = vpack.c.b16 %v2534, %v2534
        %v2567 = vpack.c.b16 %v2535, %v2535
        %v2568 = vpack.c.b16 %v2536, %v2536
        %v2569 = vpack.c.b16 %v2537, %v2537
        %v2570 = vpack.c.b16 %v2538, %v2538
        %v2571 = vpack.c.b16 %v2539, %v2539
        %v2572 = vpack.c.b16 %v2540, %v2540
        %v2573 = vpack.c.b16 %v2541, %v2541
        %v2574 = vpack.c.b16 %v2542, %v2542
        %v2575 = vpack.c.b16 %v2543, %v2543
        %v2576 = vpack.c.b16 %v2544, %v2544
        %v2577 = vpack.c.b16 %v2545, %v2545
        %v2578 = vpack.c.b16 %v2546, %v2546
        %v2579 = vpack.c.b16 %v2547, %v2547
        %v2580 = vpack.c.b16 %v2548, %v2548
        %v2581 = vpack.c.b16 %v2549, %v2549
        %v2582 = vpack.c.b16 %v2550, %v2550
        %v2583 = vpack.c.b16 %v2551, %v2551
        %v2584 = vpack.c.b16 %v2552, %v2552
        %v2585 = vpack.c.b16 %v2553, %v2553
        %v2586 = vpack.c.b16 %v2554, %v2554
        %v2587 = vpack.c.b16 %v2555, %v2555
        %v2588 = vpack.c.b16 %v2556, %v2556
        %v2589 = vpack.c.b16 %v2557, %v2557
        %v2590 = vpack.c.b16 %v2558, %v2558
        %v2591 = vpack.c.b16 %v2559, %v2559
        %v2592 = vpack.c.b16 %v2560, %v2560
        %v2593 = vpack.c.b16 %v2561, %v2561
        %v2594 = vpack.c.b16 %v2562, %v2562
        %2627 = vst [vmem:[%s309] sm:$0xf] %v2563
        %2628 = vst [vmem:[%s309 + $0x4] sm:$0xf] %v2564
        %2629 = vst [vmem:[%s309 + $0x8] sm:$0xf] %v2565
        %2630 = vst [vmem:[%s309 + $0xc] sm:$0xf] %v2566
        %2631 = vst [vmem:[%s309 + $0x10] sm:$0xf] %v2567
        %2632 = vst [vmem:[%s309 + $0x14] sm:$0xf] %v2568
        %2633 = vst [vmem:[%s309 + $0x18] sm:$0xf] %v2569
        %2634 = vst [vmem:[%s309 + $0x1c] sm:$0xf] %v2570
        %2635 = vst [vmem:[%s309 + $0x20] sm:$0xf] %v2571
        %2636 = vst [vmem:[%s309 + $0x24] sm:$0xf] %v2572
        %2637 = vst [vmem:[%s309 + $0x28] sm:$0xf] %v2573
        %2638 = vst [vmem:[%s309 + $0x2c] sm:$0xf] %v2574
        %2639 = vst [vmem:[%s309 + $0x30] sm:$0xf] %v2575
        %2640 = vst [vmem:[%s309 + $0x34] sm:$0xf] %v2576
        %2641 = vst [vmem:[%s309 + $0x38] sm:$0xf] %v2577
        %2642 = vst [vmem:[%s309 + $0x3c] sm:$0xf] %v2578
        %2643 = vst [vmem:[%s309 + $0x40] sm:$0xf] %v2579
        %2644 = vst [vmem:[%s309 + $0x44] sm:$0xf] %v2580
        %2645 = vst [vmem:[%s309 + $0x48] sm:$0xf] %v2581
        %2646 = vst [vmem:[%s309 + $0x4c] sm:$0xf] %v2582
        %2647 = vst [vmem:[%s309 + $0x50] sm:$0xf] %v2583
        %2648 = vst [vmem:[%s309 + $0x54] sm:$0xf] %v2584
        %2649 = vst [vmem:[%s309 + $0x58] sm:$0xf] %v2585
        %2650 = vst [vmem:[%s309 + $0x5c] sm:$0xf] %v2586
        %2651 = vst [vmem:[%s309 + $0x60] sm:$0xf] %v2587
        %2652 = vst [vmem:[%s309 + $0x64] sm:$0xf] %v2588
        %2653 = vst [vmem:[%s309 + $0x68] sm:$0xf] %v2589
        %2654 = vst [vmem:[%s309 + $0x6c] sm:$0xf] %v2590
        %2655 = vst [vmem:[%s309 + $0x70] sm:$0xf] %v2591
        %2656 = vst [vmem:[%s309 + $0x74] sm:$0xf] %v2592
        %2657 = vst [vmem:[%s309 + $0x78] sm:$0xf] %v2593
        %2658 = vst [vmem:[%s309 + $0x7c] sm:$0xf] %v2594
        %v2659 = vadd.f32 %v2467, %v2468
        %v2660 = vadd.f32 %v2659, %v2469
        %v2661 = vadd.f32 %v2660, %v2470
        %v2662 = vadd.f32 %v2661, %v2471
        %v2663 = vadd.f32 %v2662, %v2472
        %v2664 = vadd.f32 %v2663, %v2473
        %v2665 = vadd.f32 %v2664, %v2474
        %v2666 = vadd.f32 %v2665, %v2475
        %v2667 = vadd.f32 %v2666, %v2476
        %v2668 = vadd.f32 %v2667, %v2477
        %v2669 = vadd.f32 %v2668, %v2478
        %v2670 = vadd.f32 %v2669, %v2479
        %v2671 = vadd.f32 %v2670, %v2480
        %v2672 = vadd.f32 %v2671, %v2481
        %v2673 = vadd.f32 %v2672, %v2482
        %v2674 = vadd.f32 %v2673, %v2483
        %v2675 = vadd.f32 %v2674, %v2484
        %v2676 = vadd.f32 %v2675, %v2485
        %v2677 = vadd.f32 %v2676, %v2486
        %v2678 = vadd.f32 %v2677, %v2487
        %v2679 = vadd.f32 %v2678, %v2488
        %v2680 = vadd.f32 %v2679, %v2489
        %v2681 = vadd.f32 %v2680, %v2490
        %v2682 = vadd.f32 %v2681, %v2491
        %v2683 = vadd.f32 %v2682, %v2492
        %v2684 = vadd.f32 %v2683, %v2493
        %v2685 = vadd.f32 %v2684, %v2494
        %v2686 = vadd.f32 %v2685, %v2495
        %v2687 = vadd.f32 %v2686, %v2496
        %v2688 = vadd.f32 %v2687, %v2497
        %v2689 = vadd.f32 %v2688, %v2498
        %v2690 = vrot.slane %v2689, 4
        %v2691 = vadd.f32 %v2689, %v2690
        %v2692 = vrot.slane %v2691, 2
        %v2693 = vadd.f32 %v2691, %v2692
        %v2694 = vrot.slane %v2693, 1
        %v2695 = vadd.f32 %v2693, %v2694
        %v2696 = vmul.f32 %v2467, %v2467
        %v2697 = vmul.f32 %v2468, %v2468
        %v2698 = vmul.f32 %v2469, %v2469
        %v2699 = vmul.f32 %v2470, %v2470
        %v2700 = vmul.f32 %v2471, %v2471
        %v2701 = vmul.f32 %v2472, %v2472
        %v2702 = vmul.f32 %v2473, %v2473
        %v2703 = vmul.f32 %v2474, %v2474
        %v2704 = vmul.f32 %v2475, %v2475
        %v2705 = vmul.f32 %v2476, %v2476
        %v2706 = vmul.f32 %v2477, %v2477
        %v2707 = vmul.f32 %v2478, %v2478
        %v2708 = vmul.f32 %v2479, %v2479
        %v2709 = vmul.f32 %v2480, %v2480
        %v2710 = vmul.f32 %v2481, %v2481
        %v2711 = vmul.f32 %v2482, %v2482
        %v2712 = vmul.f32 %v2483, %v2483
        %v2713 = vmul.f32 %v2484, %v2484
        %v2714 = vmul.f32 %v2485, %v2485
        %v2715 = vmul.f32 %v2486, %v2486
        %v2716 = vmul.f32 %v2487, %v2487
        %v2717 = vmul.f32 %v2488, %v2488
        %v2718 = vmul.f32 %v2489, %v2489
        %v2719 = vmul.f32 %v2490, %v2490
        %v2720 = vmul.f32 %v2491, %v2491
        %v2721 = vmul.f32 %v2492, %v2492
        %v2722 = vmul.f32 %v2493, %v2493
        %v2723 = vmul.f32 %v2494, %v2494
        %v2724 = vmul.f32 %v2495, %v2495
        %v2725 = vmul.f32 %v2496, %v2496
        %v2726 = vmul.f32 %v2497, %v2497
        %v2727 = vmul.f32 %v2498, %v2498
        %v2728 = vadd.f32 %v2696, %v2697
        %v2729 = vadd.f32 %v2728, %v2698
        %v2730 = vadd.f32 %v2729, %v2699
        %v2731 = vadd.f32 %v2730, %v2700
        %v2732 = vadd.f32 %v2731, %v2701
        %v2733 = vadd.f32 %v2732, %v2702
        %v2734 = vadd.f32 %v2733, %v2703
        %v2735 = vadd.f32 %v2734, %v2704
        %v2736 = vadd.f32 %v2735, %v2705
        %v2737 = vadd.f32 %v2736, %v2706
        %v2738 = vadd.f32 %v2737, %v2707
        %v2739 = vadd.f32 %v2738, %v2708
        %v2740 = vadd.f32 %v2739, %v2709
        %v2741 = vadd.f32 %v2740, %v2710
        %v2742 = vadd.f32 %v2741, %v2711
        %v2743 = vadd.f32 %v2742, %v2712
        %v2744 = vadd.f32 %v2743, %v2713
        %v2745 = vadd.f32 %v2744, %v2714
        %v2746 = vadd.f32 %v2745, %v2715
        %v2747 = vadd.f32 %v2746, %v2716
        %v2748 = vadd.f32 %v2747, %v2717
        %v2749 = vadd.f32 %v2748, %v2718
        %v2750 = vadd.f32 %v2749, %v2719
        %v2751 = vadd.f32 %v2750, %v2720
        %v2752 = vadd.f32 %v2751, %v2721
        %v2753 = vadd.f32 %v2752, %v2722
        %v2754 = vadd.f32 %v2753, %v2723
        %v2755 = vadd.f32 %v2754, %v2724
        %v2756 = vadd.f32 %v2755, %v2725
        %v2757 = vadd.f32 %v2756, %v2726
        %v2758 = vadd.f32 %v2757, %v2727
        %v2759 = vrot.slane %v2758, 4
        %v2760 = vadd.f32 %v2758, %v2759
        %v2761 = vrot.slane %v2760, 2
        %v2762 = vadd.f32 %v2760, %v2761
        %v2763 = vrot.slane %v2762, 1
        %v2764 = vadd.f32 %v2762, %v2763
        %v2765 = vlaneseq
        %v2766 = vshrl.u32 %v2765, 7
        %vm2767 = vcmp.eq.s32.totalorder %v2766, 0
        %vm2768 = vcmp.eq.s32.totalorder %v2766, 1
        %v2769 = vsel %vm2768, %v2764, 0.0
        %v2770 = vsel %vm2767, %v2695, %v2769
        %2771 = vst [vmem:[%s316] sm:$0xff] %v2770
        %s2772 = sand.u32 %s144, 1
        %s2773 = scalar_lea.sflag [#allocation5], %s2772
        %s2774 = sand.u32 %s144, 1
        %s2775 = smul.addr %s2774, 128
        %s2776 = scalar_lea.vmem [#allocation11], %s2775
        %s2777 = sand.u32 %s172, 1
        %s2778 = scalar_lea.sflag [#allocation13], %s2777
        %s2779 = sand.u32 %s172, 1
        %s2780 = smul.addr %s2779, 8
        %s2781 = scalar_lea.vmem [#allocation12], %s2780
        // Predicated region
        $region53: #{basic_block_forward.5} parent=35 // pred_check
          %p2782 = pneg %p154
        $region54: #{basic_block_forward.5} parent=35 // pred_check_branch
          %2784 = sbr.rel (%p2782) target = $region56
        $region55: #{basic_block_forward.5} parent=35 // pred_region
          %s2786 = ssub.s32 2048, 2048
          %2787 = vsyncadd %s2773, %s2786
          %s2788 = smul.addr %s32, 32
          %s2789 = sadd.s32 %s33, %s2788
          %s2790 = smul.addr %s2789, 64
          %s2791 = scalar_lea.hbm %s4, %s2790
          %s2792 = sshll.u32 %s2776, 4
          %s2793 = int_to_ptr.vmem [resolvable:$true] %s2792
          %2798 = dma.vmem_to_hbm [thread:$0]  %s2793, 2048, %s2791, %s2773, 64, 64, 4
        $region56: #{basic_block_forward.5} parent=35 // pred_fallthru
          _
        // Predicated region
        $region57: #{basic_block_forward.5} parent=35 // pred_check
          %p2799 = pneg %p182
        $region58: #{basic_block_forward.5} parent=35 // pred_check_branch
          %2801 = sbr.rel (%p2799) target = $region60
        $region59: #{basic_block_forward.5} parent=35 // pred_region
          %s2803 = ssub.s32 128, 128
          %2804 = vsyncadd %s2778, %s2803
          %s2805 = sadd.s32 %s33, %s32
          %s2806 = smul.addr %s2805, 128
          %s2807 = scalar_lea.hbm %s5, %s2806
          %s2809 = sshll.u32 %s2781, 4
          %s2810 = int_to_ptr.vmem [resolvable:$true] %s2809
          %2812 = dma.vmem_to_hbm [thread:$0]  %s2810, 128, %s2807, %s2778
        $region60: #{basic_block_forward.5} parent=35 // pred_fallthru
          _
      $region36: #{basic_block_forward.5} parent=5 // pred_fallthru
        _
      %p2813 = scmp.le.s32.totalorder 2, %s23
      // Predicated region
      $region61: #{basic_block_forward.5} parent=5 // pred_check
        %p2814 = pneg %p2813
      $region62: #{basic_block_forward.5} parent=5 // pred_check_branch
        %2816 = sbr.rel (%p2814) target = $region64
      $region63: #{basic_block_forward.5} parent=5 // pred_region
        %s2817 = ssub.s32 %s23, 2
        // Predicated region
        $region65: #{basic_block_forward.5} parent=63 // pred_check
          %p2818 = pneg %p160
        $region66: #{basic_block_forward.5} parent=63 // pred_check_branch
          %2820 = sbr.rel (%p2818) target = $region68
        $region67: #{basic_block_forward.5} parent=63 // pred_region
          %s2821 = sand.u32 %s145, 1
          %s2822 = scalar_lea.sflag [#allocation5], %s2821
          %s2823 = sand.u32 %s145, 1
          %s2824 = smul.addr %s2823, 128
          %s2825 = scalar_lea.vmem [#allocation11], %s2824
          %2826 = dma.done %s2822, 2048
        $region68: #{basic_block_forward.5} parent=63 // pred_fallthru
          _
        // Predicated region
        $region69: #{basic_block_forward.5} parent=63 // pred_check
          %p2827 = pneg %p188
        $region70: #{basic_block_forward.5} parent=63 // pred_check_branch
          %2829 = sbr.rel (%p2827) target = $region72
        $region71: #{basic_block_forward.5} parent=63 // pred_region
          %s2830 = sand.u32 %s173, 1
          %s2831 = scalar_lea.sflag [#allocation13], %s2830
          %s2832 = sand.u32 %s173, 1
          %s2833 = smul.addr %s2832, 8
          %s2834 = scalar_lea.vmem [#allocation12], %s2833
          %2835 = dma.done %s2831, 128
        $region72: #{basic_block_forward.5} parent=63 // pred_fallthru
          _
      $region64: #{basic_block_forward.5} parent=5 // pred_fallthru
        _
    $region6: #{basic_block_forward.5} parent=1 // loop_footer
      %s27 = sadd.s32 1, %s23
    $region7: #{basic_block_forward.5} parent=1 // loop_footer_branch
      %22 = sbr.rel target = $region3
    $region8: #{basic_block_forward.5} parent=1 // loop_exit
      _
    %2836 = vsyncpa [#allocation4], 1
    %s2837 = scalar_lea.sflag [#allocation4], 1
    %2838 = vsyncpa %s2837, 1
    %2839 = vsyncpa [#allocation7], 1
    %2840 = vsyncpa [#allocation10], 1
    %2841 = vsyncpa [#allocation5], 1
    %s2842 = scalar_lea.sflag [#allocation5], 1
    %2843 = vsyncpa %s2842, 1
    %2844 = vsyncpa [#allocation13], 1
    %s2845 = scalar_lea.sflag [#allocation13], 1
    %2846 = vsyncpa %s2845, 1

</llo_original>
